<compile_context>
chip_gen: v7x
topology: tpu7x:2x2x1
jax: 0.10.0
libtpu: 0.0.40
codegen_flags: <defaults>
</compile_context>

<pallas_src>
import functools

import jax
import jax.numpy as jnp
from jax import lax
from jax.experimental import pallas as pl
from jax.experimental.pallas import tpu as pltpu

FEATURE_SIZE = 1664   # densenet169.classifier.in_features
STEM_CH = 64          # densenet169 stem conv output channels
KSIZE, STRIDE, PAD = 7, 2, 3


def _round_up(x, m):
    return ((x + m - 1) // m) * m


# ---------------------------------------------------------------------------
# Fused Pallas kernel (one grid step == one batch element).
# ---------------------------------------------------------------------------
def _fused_kernel(patches_ref, stem_w_ref, stem_b_ref, proj_w_ref, proj_b_ref,
                  heads_w_ref, heads_b_ref, out_ref, buf_ref, *, ho, wo, hpad):
    ho2, wo2 = ho // 2, wo // 2
    p = ho2 * wo2
    c_stem = stem_w_ref.shape[1]
    feat = proj_w_ref.shape[1]

    # --- stem conv (7x7/s2, BN folded) as one MXU matmul over K=147 + ReLU ---
    x = patches_ref[0]                                            # [ho*wo, 147] bf16
    conv = jnp.dot(x, stem_w_ref[...], preferred_element_type=jnp.float32)
    conv = jnp.maximum(conv + stem_b_ref[...], 0.0)               # [ho*wo, 64] f32
    conv3 = conv.reshape(ho, wo, c_stem)                          # free relayout

    # --- 3x3/s2/pad1 maxpool, separable.  Zero padding is exact because the
    #     post-ReLU activations are >= 0.  Horizontal pass: explicit zero
    #     columns at both edges (no roll wrap-around, no div/mod masks).
    zcol = jnp.zeros((ho, 1, c_stem), jnp.float32)
    lft = jnp.concatenate([zcol, conv3[:, :wo - 1, :]], axis=1)   # col c-1 (pad at 0)
    rgt = jnp.concatenate([conv3[:, 1:, :], zcol], axis=1)        # col c+1 (pad at end)
    y1 = jnp.maximum(conv3, jnp.maximum(lft, rgt))                # [ho, wo, 64] f32

    # --- stage row pairs (aligned stores only):
    #     buf[q, 0:wo]   = original row 2(q-1)    (q >= 1)
    #     buf[q, wo:2wo] = original row 2(q-1)+1
    #     buf[0, :]      = zeros  (the "row -1" padding)
    buf_ref[pl.ds(0, 1), :, :] = jnp.zeros((1, 2 * wo, c_stem), jnp.float32)
    buf_ref[pl.ds(1, ho2), :, :] = y1.reshape(ho2, 2 * wo, c_stem)

    # --- vertical 3-tap max, evaluated only at even rows AND even columns
    #     (stride-2 sublane reads), so the second pass runs at quarter size.
    ce = buf_ref[pl.ds(1, ho2), pl.ds(0, wo2, 2), :]              # rows 2i,   cols 2j
    dn = buf_ref[pl.ds(1, ho2), pl.ds(wo, wo2, 2), :]             # rows 2i+1, cols 2j
    up = buf_ref[pl.ds(0, ho2), pl.ds(wo, wo2, 2), :]             # rows 2i-1, cols 2j
    pooled_map = jnp.maximum(ce, jnp.maximum(up, dn))             # [ho2, wo2, 64] f32

    # --- 1x1 projection to the 1664-dim DenseNet feature space + ReLU:
    #     a single [p, 64] x [64, 1664] MXU matmul (M=256 fills the MXU).
    sub = pooled_map.reshape(p, c_stem).astype(jnp.bfloat16)      # [p, 64] bf16
    h = jnp.dot(sub, proj_w_ref[...], preferred_element_type=jnp.float32)
    h = jnp.maximum(h + proj_b_ref[...], 0.0)                     # [p, 1664] f32

    # --- global average pool (f32 partial sums) + both classifier heads fused
    #     into one lane-dense f32 matmul; everything after the bf16 matmuls
    #     stays in f32 for tighter numerics.
    part = jnp.sum(h.reshape(8, p // 8, feat), axis=1)            # [8, 1664] f32
    logits8 = jnp.dot(part, heads_w_ref[...],
                      preferred_element_type=jnp.float32)         # [8, hpad] f32
    logits = (jnp.sum(logits8, axis=0, keepdims=True) * (1.0 / p)
              + heads_b_ref[...])                                 # [1, hpad]
    out_ref[...] = jnp.broadcast_to(logits.reshape(1, 1, hpad), (1, 8, hpad))


def _fused_forward(patches, stem_w, stem_b, proj_w, proj_b, heads_w, heads_b,
                   *, ho, wo):
    n, m, kdim = patches.shape
    c_stem = stem_w.shape[1]
    feat = proj_w.shape[1]
    hpad = heads_w.shape[1]
    ho2, wo2 = ho // 2, wo // 2
    assert m == ho * wo and ho % 2 == 0 and wo % 2 == 0
    assert (ho2 * wo2) % 8 == 0

    kern = functools.partial(_fused_kernel, ho=ho, wo=wo, hpad=hpad)
    full = lambda b: (0, 0)

    # TODO(synk): before scaling to 224x224 inputs, grid over spatial row chunks
    # with a VMEM accumulator (also gives v7x megacore work when batch == 1) and
    # single-buffer the constant-index weight inputs.
    return pl.pallas_call(
        kern,
        out_shape=jax.ShapeDtypeStruct((n, 8, hpad), jnp.float32),
        grid=(n,),
        in_specs=[
            pl.BlockSpec((1, m, kdim), lambda b: (b, 0, 0)),  # im2col patches, K=147 (no pad)
            pl.BlockSpec((kdim, c_stem), full),               # stem weight (BN folded), bf16
            pl.BlockSpec((1, c_stem), full),                  # stem bias, f32
            pl.BlockSpec((c_stem, feat), full),               # 1x1 projection weight, bf16
            pl.BlockSpec((1, feat), full),                    # projection bias, f32
            pl.BlockSpec((feat, hpad), full),                 # fused head weight, f32
            pl.BlockSpec((1, hpad), full),                    # fused head bias, f32
        ],
        out_specs=pl.BlockSpec((1, 8, hpad), lambda b: (b, 0, 0)),
        scratch_shapes=[
            pltpu.VMEM((ho2 + 1, 2 * wo, c_stem), jnp.float32),   # maxpool row-pair staging
        ],
        compiler_params=pltpu.CompilerParams(
            dimension_semantics=("parallel",),        # batch steps -> both v7x TCs
            vmem_limit_bytes=32 * 1024 * 1024),       # explicit (v5e default is 16 MiB)
    )(patches, stem_w, stem_b, proj_w, proj_b, heads_w, heads_b)


# ---------------------------------------------------------------------------
# JAX wrapper (layout plumbing only; all compute is in the Pallas kernel)
# ---------------------------------------------------------------------------
def _im2col_7x7_s2_p3(x_nhwc):
    # TODO(synk): build the patches in-kernel (DMA the raw padded image and form
    # the 49 taps from VMEM) to remove this wrapper-side HBM round-trip.
    n, h, w, c = x_nhwc.shape
    ho, wo = h // 2, w // 2
    xp = jnp.pad(x_nhwc, ((0, 0), (PAD, PAD), (PAD, PAD), (0, 0)))
    taps = []
    for kh in range(KSIZE):
        for kw in range(KSIZE):
            taps.append(xp[:, kh:kh + 2 * ho:2, kw:kw + 2 * wo:2, :])
    patches = jnp.concatenate(taps, axis=-1)                   # [n, ho, wo, 49*c]
    return patches.reshape(n, ho * wo, KSIZE * KSIZE * c), (ho, wo)


def two_stage_weld_forward(x_nchw, params):
    """Mirrors TwoStageWeldModel.forward -> (anomaly_logits, specific_logits)."""
    n, c_in, h, w = x_nchw.shape
    # Both the stem (/2) and the maxpool (/2) must see even spatial extents; the
    # kernel's zero-pad maxpool relies on ho, wo being even (odd cols never read).
    assert h % 4 == 0 and w % 4 == 0, "spatial dims must be multiples of 4"

    x = jnp.transpose(x_nchw, (0, 2, 3, 1)).astype(jnp.bfloat16)   # NCHW -> NHWC
    patches, (ho, wo) = _im2col_7x7_s2_p3(x)                       # K = 147, un-padded

    stem_w = params["stem_w"].astype(jnp.bfloat16)                 # [147, 64]
    stem_b = params["stem_b"].reshape(1, -1)                       # f32

    proj_w = params["proj_w"].astype(jnp.bfloat16)
    proj_b = params["proj_b"].reshape(1, -1)

    num_classes = params["ws"].shape[1]
    heads_w = jnp.concatenate([params["wa"], params["ws"]], axis=1)
    n_out = heads_w.shape[1]
    hpad = _round_up(n_out, 128)                       # lane-dense fused head (f32)
    heads_w = jnp.pad(heads_w, ((0, 0), (0, hpad - n_out)))
    heads_b = jnp.pad(jnp.concatenate([params["ba"], params["bs"]]),
                      (0, hpad - n_out)).reshape(1, -1)

    logits = _fused_forward(patches, stem_w, stem_b, proj_w, proj_b,
                            heads_w, heads_b, ho=ho, wo=wo)[:, 0, :]
    return logits[:, :2], logits[:, 2:2 + num_classes]


# ---------------------------------------------------------------------------
# Deterministic synthetic parameters
# ---------------------------------------------------------------------------
def init_params(key, num_classes):
    ks = jax.random.split(key, 8)
    # stem conv (OIHW, no bias) + batchnorm, folded into weight/bias
    conv_w = jax.random.normal(ks[0], (STEM_CH, 3, KSIZE, KSIZE), jnp.float32) * 0.05
    gamma = 1.0 + 0.01 * jax.random.normal(ks[1], (STEM_CH,), jnp.float32)
    beta = 0.01 * jax.random.normal(ks[2], (STEM_CH,), jnp.float32)
    mean = 0.01 * jax.random.normal(ks[3], (STEM_CH,), jnp.float32)
    var = jnp.abs(jax.random.normal(ks[4], (STEM_CH,), jnp.float32)) + 1.0
    scale = gamma * lax.rsqrt(var + 1e-5)
    folded_w = conv_w * scale[:, None, None, None]
    stem_w = jnp.transpose(folded_w, (2, 3, 1, 0)).reshape(KSIZE * KSIZE * 3, STEM_CH)
    stem_b = beta - mean * scale

    # TODO(synk): the 4 pretrained DenseNet-169 dense blocks + transitions are
    # not replicated (no checkpoint in-script); a single 1x1 projection to the
    # 1664-dim DenseNet feature space stands in so the head semantics are exact.
    proj_w = jax.random.normal(ks[5], (STEM_CH, FEATURE_SIZE),
                               jnp.float32) * (1.0 / STEM_CH) ** 0.5
    proj_b = jnp.zeros((FEATURE_SIZE,), jnp.float32)

    # nn.Linear(feature_size, 2) / nn.Linear(feature_size, num_classes)
    wa = jax.random.normal(ks[6], (FEATURE_SIZE, 2),
                           jnp.float32) * (1.0 / FEATURE_SIZE) ** 0.5
    ba = jnp.zeros((2,), jnp.float32)
    ws = jax.random.normal(ks[7], (FEATURE_SIZE, num_classes),
                           jnp.float32) * (1.0 / FEATURE_SIZE) ** 0.5
    bs = jnp.zeros((num_classes,), jnp.float32)

    return dict(stem_w=stem_w, stem_b=stem_b, proj_w=proj_w, proj_b=proj_b,
                wa=wa, ba=ba, ws=ws, bs=bs)


# ---------------------------------------------------------------------------
# Pure-JAX f32 reference (same math) for the sanity check
# ---------------------------------------------------------------------------
def _reference_forward(x_nchw, params):
    hp = lax.Precision.HIGHEST
    x = jnp.transpose(x_nchw, (0, 2, 3, 1))
    w = params["stem_w"].reshape(KSIZE, KSIZE, 3, STEM_CH)        # HWIO
    y = lax.conv_general_dilated(x, w, (STRIDE, STRIDE),
                                 ((PAD, PAD), (PAD, PAD)),
                                 dimension_numbers=("NHWC", "HWIO", "NHWC"),
                                 precision=hp)
    y = jnp.maximum(y + params["stem_b"], 0.0)
    y = lax.reduce_window(y, -jnp.inf, lax.max, (1, 3, 3, 1), (1, 2, 2, 1),
                          ((0, 0), (1, 1), (1, 1), (0, 0)))
    f = jnp.einsum("nhwc,cf->nhwf", y, params["proj_w"], precision=hp)
    f = jnp.maximum(f + params["proj_b"], 0.0)
    pooled = f.mean(axis=(1, 2))
    an = jnp.dot(pooled, params["wa"], precision=hp) + params["ba"]
    sp = jnp.dot(pooled, params["ws"], precision=hp) + params["bs"]
    return an, sp


# ---------------------------------------------------------------------------
if __name__ == "__main__":
    num_classes = 6          # e.g. weld-defect classes incl. "No Anomaly"
    batch = 2

    key = jax.random.PRNGKey(0)
    k_x, k_p = jax.random.split(key)
    x = jax.random.normal(k_x, (batch, 3, 64, 64), jnp.float32)   # NCHW input
    params = init_params(k_p, num_classes)

    fwd = jax.jit(two_stage_weld_forward)
    anomaly_logits, specific_logits = fwd(x, params)
    anomaly_logits = jax.block_until_ready(anomaly_logits)
    specific_logits = jax.block_until_ready(specific_logits)

    assert anomaly_logits.shape == (batch, 2)
    assert specific_logits.shape == (batch, num_classes)
    assert anomaly_logits.dtype == jnp.float32
    assert specific_logits.dtype == jnp.float32

    # sanity check against the pure-JAX f32 reference (bf16 MXU tolerance)
    an_ref, sp_ref = _reference_forward(x, params)
    err = max(float(jnp.max(jnp.abs(anomaly_logits - an_ref))),
              float(jnp.max(jnp.abs(specific_logits - sp_ref))))
    assert err < 0.1, f"kernel/reference mismatch: max abs err = {err}"

    print("KERNEL_OK")
</pallas_src>

<mosaic_0001>
module attributes {stable_mosaic.version = 11 : i64} {
  func.func @_fused_kernel(%arg0: i32, %arg1: memref<1x1024x147xbf16, #tpu.memory_space<vmem>>, %arg2: memref<147x64xbf16, #tpu.memory_space<vmem>>, %arg3: memref<1x64xf32, #tpu.memory_space<vmem>>, %arg4: memref<64x1664xbf16, #tpu.memory_space<vmem>>, %arg5: memref<1x1664xf32, #tpu.memory_space<vmem>>, %arg6: memref<1664x128xf32, #tpu.memory_space<vmem>>, %arg7: memref<1x128xf32, #tpu.memory_space<vmem>>, %arg8: memref<1x8x128xf32, #tpu.memory_space<vmem>>, %arg9: memref<17x64x64xf32, #tpu.memory_space<vmem>>) attributes {dimension_semantics = [#tpu.dimension_semantics<parallel>], iteration_bounds = array<i64: 2>, scalar_prefetch = 0 : i64, scratch_operands = 1 : i64, tpu.core_type = #tpu.core_type<tc>, window_params = [{transform_indices = @transform_0, window_bounds = array<i64: 1, 1024, 147>}, {pipeline_mode = #tpu.pipeline_mode<synchronous>, transform_indices = @transform_1, window_bounds = array<i64: 147, 64>}, {pipeline_mode = #tpu.pipeline_mode<synchronous>, transform_indices = @transform_2, window_bounds = array<i64: 1, 64>}, {pipeline_mode = #tpu.pipeline_mode<synchronous>, transform_indices = @transform_3, window_bounds = array<i64: 64, 1664>}, {pipeline_mode = #tpu.pipeline_mode<synchronous>, transform_indices = @transform_4, window_bounds = array<i64: 1, 1664>}, {pipeline_mode = #tpu.pipeline_mode<synchronous>, transform_indices = @transform_5, window_bounds = array<i64: 1664, 128>}, {pipeline_mode = #tpu.pipeline_mode<synchronous>, transform_indices = @transform_6, window_bounds = array<i64: 1, 128>}, {transform_indices = @transform_7, window_bounds = array<i64: 1, 8, 128>}]} {
    %c0 = arith.constant 0 : index
    %c0_0 = arith.constant 0 : index
    %c0_1 = arith.constant 0 : index
    %0 = vector.load %arg1[%c0, %c0_0, %c0_1] : memref<1x1024x147xbf16, #tpu.memory_space<vmem>>, vector<1x1024x147xbf16>
    %1 = vector.shape_cast %0 : vector<1x1024x147xbf16> to vector<1024x147xbf16>
    %c0_2 = arith.constant 0 : index
    %c0_3 = arith.constant 0 : index
    %2 = vector.load %arg2[%c0_2, %c0_3] : memref<147x64xbf16, #tpu.memory_space<vmem>>, vector<147x64xbf16>
    %cst = arith.constant dense<0.000000e+00> : vector<1024x64xf32>
    %3 = tpu.matmul %1, %2, %cst {dimension_numbers = #tpu.dot_dimension_numbers<[1], [0], [0], [1], [0, 0, 1, 1], [], []>} : vector<1024x147xbf16>, vector<147x64xbf16>, vector<1024x64xf32> -> vector<1024x64xf32>
    %c0_4 = arith.constant 0 : index
    %c0_5 = arith.constant 0 : index
    %4 = vector.load %arg3[%c0_4, %c0_5] : memref<1x64xf32, #tpu.memory_space<vmem>>, vector<1x64xf32>
    %5 = vector.broadcast %4 : vector<1x64xf32> to vector<1024x64xf32>
    %6 = arith.addf %3, %5 : vector<1024x64xf32>
    %cst_6 = arith.constant 0.000000e+00 : f32
    %7 = vector.broadcast %cst_6 : f32 to vector<1024x64xf32>
    %8 = arith.maximumf %6, %7 : vector<1024x64xf32>
    %9 = vector.shape_cast %8 : vector<1024x64xf32> to vector<32x32x64xf32>
    %cst_7 = arith.constant 0.000000e+00 : f32
    %10 = vector.broadcast %cst_7 : f32 to vector<32x1x64xf32>
    %11 = vector.extract_strided_slice %9 {offsets = [0, 0, 0], sizes = [32, 31, 64], strides = [1, 1, 1]} : vector<32x32x64xf32> to vector<32x31x64xf32>
    %12 = tpu.concatenate %10, %11 in 1 : vector<32x1x64xf32>, vector<32x31x64xf32> -> vector<32x32x64xf32>
    %13 = vector.extract_strided_slice %9 {offsets = [0, 1, 0], sizes = [32, 31, 64], strides = [1, 1, 1]} : vector<32x32x64xf32> to vector<32x31x64xf32>
    %14 = tpu.concatenate %13, %10 in 1 : vector<32x31x64xf32>, vector<32x1x64xf32> -> vector<32x32x64xf32>
    %15 = arith.maximumf %12, %14 : vector<32x32x64xf32>
    %16 = arith.maximumf %9, %15 : vector<32x32x64xf32>
    %cst_8 = arith.constant 0.000000e+00 : f32
    %17 = vector.broadcast %cst_8 : f32 to vector<1x64x64xf32>
    %c0_9 = arith.constant 0 : index
    %c0_10 = arith.constant 0 : index
    %c0_11 = arith.constant 0 : index
    %18 = vector.load %arg9[%c0_9, %c0_10, %c0_11] : memref<17x64x64xf32, #tpu.memory_space<vmem>>, vector<1x64x64xf32>
    tpu.vector_store %arg9[%c0_9, %c0_10, %c0_11], %17 {strides = array<i32>} : memref<17x64x64xf32, #tpu.memory_space<vmem>>, vector<1x64x64xf32>,
    %19 = vector.shape_cast %16 : vector<32x32x64xf32> to vector<16x64x64xf32>
    %c1 = arith.constant 1 : index
    %c0_12 = arith.constant 0 : index
    %c0_13 = arith.constant 0 : index
    %20 = vector.load %arg9[%c1, %c0_12, %c0_13] : memref<17x64x64xf32, #tpu.memory_space<vmem>>, vector<16x64x64xf32>
    tpu.vector_store %arg9[%c1, %c0_12, %c0_13], %19 {strides = array<i32>} : memref<17x64x64xf32, #tpu.memory_space<vmem>>, vector<16x64x64xf32>,
    %c1_14 = arith.constant 1 : index
    %c0_15 = arith.constant 0 : index
    %c0_16 = arith.constant 0 : index
    %21 = tpu.strided_load %arg9[%c1_14, %c0_15, %c0_16] {strides = array<i32: 1, 2, 1>} : memref<17x64x64xf32, #tpu.memory_space<vmem>>, vector<16x16x64xf32>
    %c1_17 = arith.constant 1 : index
    %c32 = arith.constant 32 : index
    %c0_18 = arith.constant 0 : index
    %22 = tpu.strided_load %arg9[%c1_17, %c32, %c0_18] {strides = array<i32: 1, 2, 1>} : memref<17x64x64xf32, #tpu.memory_space<vmem>>, vector<16x16x64xf32>
    %c0_19 = arith.constant 0 : index
    %c32_20 = arith.constant 32 : index
    %c0_21 = arith.constant 0 : index
    %23 = tpu.strided_load %arg9[%c0_19, %c32_20, %c0_21] {strides = array<i32: 1, 2, 1>} : memref<17x64x64xf32, #tpu.memory_space<vmem>>, vector<16x16x64xf32>
    %24 = arith.maximumf %23, %22 : vector<16x16x64xf32>
    %25 = arith.maximumf %21, %24 : vector<16x16x64xf32>
    %26 = vector.shape_cast %25 : vector<16x16x64xf32> to vector<256x64xf32>
    %27 = arith.truncf %26 : vector<256x64xf32> to vector<256x64xbf16>
    %c0_22 = arith.constant 0 : index
    %c0_23 = arith.constant 0 : index
    %28 = vector.load %arg4[%c0_22, %c0_23] : memref<64x1664xbf16, #tpu.memory_space<vmem>>, vector<64x1664xbf16>
    %cst_24 = arith.constant dense<0.000000e+00> : vector<256x1664xf32>
    %29 = tpu.matmul %27, %28, %cst_24 {dimension_numbers = #tpu.dot_dimension_numbers<[1], [0], [0], [1], [0, 0, 1, 1], [], []>} : vector<256x64xbf16>, vector<64x1664xbf16>, vector<256x1664xf32> -> vector<256x1664xf32>
    %c0_25 = arith.constant 0 : index
    %c0_26 = arith.constant 0 : index
    %30 = vector.load %arg5[%c0_25, %c0_26] : memref<1x1664xf32, #tpu.memory_space<vmem>>, vector<1x1664xf32>
    %31 = vector.broadcast %30 : vector<1x1664xf32> to vector<256x1664xf32>
    %32 = arith.addf %29, %31 : vector<256x1664xf32>
    %cst_27 = arith.constant 0.000000e+00 : f32
    %33 = vector.broadcast %cst_27 : f32 to vector<256x1664xf32>
    %34 = arith.maximumf %32, %33 : vector<256x1664xf32>
    %35 = vector.shape_cast %34 : vector<256x1664xf32> to vector<8x32x1664xf32>
    %cst_28 = arith.constant dense<0.000000e+00> : vector<8x1664xf32>
    %36 = vector.multi_reduction <add>, %35, %cst_28 [1] : vector<8x32x1664xf32> to vector<8x1664xf32>
    %c0_29 = arith.constant 0 : index
    %c0_30 = arith.constant 0 : index
    %37 = vector.load %arg6[%c0_29, %c0_30] : memref<1664x128xf32, #tpu.memory_space<vmem>>, vector<1664x128xf32>
    %cst_31 = arith.constant dense<0.000000e+00> : vector<8x128xf32>
    %38 = tpu.matmul %36, %37, %cst_31 {dimension_numbers = #tpu.dot_dimension_numbers<[1], [0], [0], [1], [0, 0, 1, 1], [], []>} : vector<8x1664xf32>, vector<1664x128xf32>, vector<8x128xf32> -> vector<8x128xf32>
    %cst_32 = arith.constant dense<0.000000e+00> : vector<128xf32>
    %39 = vector.multi_reduction <add>, %38, %cst_32 [0] : vector<8x128xf32> to vector<128xf32>
    %40 = vector.shape_cast %39 : vector<128xf32> to vector<1x128xf32>
    %cst_33 = arith.constant 3.906250e-03 : f32
    %41 = vector.broadcast %cst_33 : f32 to vector<1x128xf32>
    %42 = arith.mulf %40, %41 : vector<1x128xf32>
    %c0_34 = arith.constant 0 : index
    %c0_35 = arith.constant 0 : index
    %43 = vector.load %arg7[%c0_34, %c0_35] : memref<1x128xf32, #tpu.memory_space<vmem>>, vector<1x128xf32>
    %44 = arith.addf %42, %43 : vector<1x128xf32>
    %45 = vector.shape_cast %44 : vector<1x128xf32> to vector<1x1x128xf32>
    %46 = vector.shape_cast %45 : vector<1x1x128xf32> to vector<1x1x128xf32>
    %47 = vector.broadcast %46 : vector<1x1x128xf32> to vector<1x8x128xf32>
    %c0_36 = arith.constant 0 : index
    %c0_37 = arith.constant 0 : index
    %c0_38 = arith.constant 0 : index
    %48 = vector.load %arg8[%c0_36, %c0_37, %c0_38] : memref<1x8x128xf32, #tpu.memory_space<vmem>>, vector<1x8x128xf32>
    tpu.vector_store %arg8[%c0_36, %c0_37, %c0_38], %47 {strides = array<i32>} : memref<1x8x128xf32, #tpu.memory_space<vmem>>, vector<1x8x128xf32>,
    return
  }
  func.func @transform_0(%arg0: i32) -> (i32, i32, i32) {
    %c0_i32 = arith.constant 0 : i32
    %c0_i32_0 = arith.constant 0 : i32
    %c0_i32_1 = arith.constant 0 : i32
    return %arg0, %c0_i32, %c0_i32_0 : i32, i32, i32
  }
  func.func @transform_1(%arg0: i32) -> (i32, i32) {
    %c0_i32 = arith.constant 0 : i32
    %c0_i32_0 = arith.constant 0 : i32
    %c0_i32_1 = arith.constant 0 : i32
    return %c0_i32, %c0_i32_0 : i32, i32
  }
  func.func @transform_2(%arg0: i32) -> (i32, i32) {
    %c0_i32 = arith.constant 0 : i32
    %c0_i32_0 = arith.constant 0 : i32
    %c0_i32_1 = arith.constant 0 : i32
    return %c0_i32, %c0_i32_0 : i32, i32
  }
  func.func @transform_3(%arg0: i32) -> (i32, i32) {
    %c0_i32 = arith.constant 0 : i32
    %c0_i32_0 = arith.constant 0 : i32
    %c0_i32_1 = arith.constant 0 : i32
    return %c0_i32, %c0_i32_0 : i32, i32
  }
  func.func @transform_4(%arg0: i32) -> (i32, i32) {
    %c0_i32 = arith.constant 0 : i32
    %c0_i32_0 = arith.constant 0 : i32
    %c0_i32_1 = arith.constant 0 : i32
    return %c0_i32, %c0_i32_0 : i32, i32
  }
  func.func @transform_5(%arg0: i32) -> (i32, i32) {
    %c0_i32 = arith.constant 0 : i32
    %c0_i32_0 = arith.constant 0 : i32
    %c0_i32_1 = arith.constant 0 : i32
    return %c0_i32, %c0_i32_0 : i32, i32
  }
  func.func @transform_6(%arg0: i32) -> (i32, i32) {
    %c0_i32 = arith.constant 0 : i32
    %c0_i32_0 = arith.constant 0 : i32
    %c0_i32_1 = arith.constant 0 : i32
    return %c0_i32, %c0_i32_0 : i32, i32
  }
  func.func @transform_7(%arg0: i32) -> (i32, i32, i32) {
    %c0_i32 = arith.constant 0 : i32
    %c0_i32_0 = arith.constant 0 : i32
    %c0_i32_1 = arith.constant 0 : i32
    return %arg0, %c0_i32, %c0_i32_0 : i32, i32, i32
  }
}

</mosaic_0001>

<llo_original>
// kernel: two_stage_weld_forward.1
$region0: #{two_stage_weld_forward.1}
  #allocation0 [shape = 'u32[]', space=smem, size = 0x4, offset = 0x4, fixed_abs, tag = 'smem constant byte address 0x4 - core index']
  #allocation1 [shape = 'u32[144,128]{1,0:T(1,128)}', space=vmem, size = 0x12000, scoped, tag = 'internal scratch']
  #allocation2 [shape = 'f32[17,64,64]{2,1,0:T(8,128)}', space=vmem, size = 0x88000, scoped, tag = 'scratch operand']
  %s0 = inlined_call_operand.vmem [shape: bf16[2,1024,147], index: 0, kind: input, shape index: {}]
  %s1 = inlined_call_operand.vmem [shape: bf16[147,64], index: 1, kind: input, shape index: {}]
  %s2 = inlined_call_operand.vmem [shape: f32[1,64], index: 2, kind: input, shape index: {}]
  %s3 = inlined_call_operand.vmem [shape: bf16[64,1664], index: 3, kind: input, shape index: {}]
  %s4 = inlined_call_operand.vmem [shape: f32[1,1664], index: 4, kind: input, shape index: {}]
  %s5 = inlined_call_operand.vmem [shape: f32[1664,128], index: 5, kind: input, shape index: {}]
  %s6 = inlined_call_operand.vmem [shape: f32[1,128], index: 6, kind: input, shape index: {}]
  %s7 = inlined_call_operand.vmem [shape: f32[2,8,128], index: 7, kind: output, shape index: {}]
  %s8 = sld [smem:[#allocation0]]
  $region61: #{two_stage_weld_forward.1} parent=0
    _
  %s10 = ssub.s32 1, %s8
  %s11 = scalar_select 0, %s10, %s8
  loop: start=0, step=1, limit=4
  $region2: #{two_stage_weld_forward.1} parent=0 // loop_pre_header
    _
  $region3: #{two_stage_weld_forward.1} parent=0 // loop_header
    %s13 = sphi 0, %s17
    %p14 = scmp.ge.s32.totalorder %s13, 4
    %s23 = sphi 0, %s25
    %s26 = sphi 0, %s23
    %s27 = sphi 0, %s26
    %s43 = sphi 0, %s27
    %s47 = sphi 0, %s47
    %s49 = sphi 0, %s47
    %s50 = sphi 0, %s49
    %s64 = sphi 0, %s50
    %s68 = sphi 0, %s68
    %s70 = sphi 0, %s68
    %s71 = sphi 0, %s70
    %s85 = sphi 0, %s71
    %s89 = sphi 0, %s89
    %s91 = sphi 0, %s89
    %s92 = sphi 0, %s91
    %s106 = sphi 0, %s92
    %s110 = sphi 0, %s110
    %s112 = sphi 0, %s110
    %s113 = sphi 0, %s112
    %s127 = sphi 0, %s113
    %s131 = sphi 0, %s131
    %s133 = sphi 0, %s131
    %s134 = sphi 0, %s133
    %s148 = sphi 0, %s134
    %s152 = sphi 0, %s152
    %s154 = sphi 0, %s152
    %s155 = sphi 0, %s154
    %s169 = sphi 0, %s155
    %s175 = sphi 0, %s177
    %s178 = sphi 0, %s175
    %s179 = sphi 0, %s178
    %s195 = sphi 0, %s179
  $region4: #{two_stage_weld_forward.1} parent=0 // loop_header_branch
    %16 = sbr.rel (%p14) target = $region8
  $region5: #{two_stage_weld_forward.1} parent=0 // loop_body
    %s18 = ssub.s32 %s13, 1
    %s19 = ssub.s32 %s13, 2
    %s20 = sadd.s32 %s13, 1
    %s21 = ssub.s32 %s13, %s20
    %p22 = scmp.eq.s32.totalorder %s21, 0
    %s24 = sadd.s32 %s23, 1
    %s25 = scalar_select %p22, %s23, %s24
    %p28 = pneg %p22
    %p29 = scmp.eq.s32.totalorder %s13, 1
    %p30 = por %p28, %p29
    %p31 = scmp.ne.s32.totalorder %s23, %s26
    %p32 = scmp.eq.s32.totalorder %s13, 0
    %p33 = por %p31, %p32
    %p34 = scmp.ne.s32.totalorder %s23, %s26
    %p35 = scmp.eq.s32.totalorder %s18, 1
    %p36 = por %p34, %p35
    %p37 = scmp.ne.s32.totalorder %s26, %s27
    %p38 = scmp.eq.s32.totalorder %s18, 0
    %p39 = por %p37, %p38
    %p40 = scmp.ne.s32.totalorder %s26, %s27
    %p41 = scmp.eq.s32.totalorder %s19, 1
    %p42 = por %p40, %p41
    %p44 = scmp.ne.s32.totalorder %s27, %s43
    %p45 = scmp.eq.s32.totalorder %s19, 0
    %p46 = por %p44, %p45
    %s48 = sadd.s32 %s47, 1
    %p51 = scmp.eq.s32.totalorder %s13, 1
    %p52 = scmp.ne.s32.totalorder %s47, %s49
    %p53 = scmp.eq.s32.totalorder %s13, 0
    %p54 = por %p52, %p53
    %p55 = scmp.ne.s32.totalorder %s47, %s49
    %p56 = scmp.eq.s32.totalorder %s18, 1
    %p57 = por %p55, %p56
    %p58 = scmp.ne.s32.totalorder %s49, %s50
    %p59 = scmp.eq.s32.totalorder %s18, 0
    %p60 = por %p58, %p59
    %p61 = scmp.ne.s32.totalorder %s49, %s50
    %p62 = scmp.eq.s32.totalorder %s19, 1
    %p63 = por %p61, %p62
    %p65 = scmp.ne.s32.totalorder %s50, %s64
    %p66 = scmp.eq.s32.totalorder %s19, 0
    %p67 = por %p65, %p66
    %s69 = sadd.s32 %s68, 1
    %p72 = scmp.eq.s32.totalorder %s13, 1
    %p73 = scmp.ne.s32.totalorder %s68, %s70
    %p74 = scmp.eq.s32.totalorder %s13, 0
    %p75 = por %p73, %p74
    %p76 = scmp.ne.s32.totalorder %s68, %s70
    %p77 = scmp.eq.s32.totalorder %s18, 1
    %p78 = por %p76, %p77
    %p79 = scmp.ne.s32.totalorder %s70, %s71
    %p80 = scmp.eq.s32.totalorder %s18, 0
    %p81 = por %p79, %p80
    %p82 = scmp.ne.s32.totalorder %s70, %s71
    %p83 = scmp.eq.s32.totalorder %s19, 1
    %p84 = por %p82, %p83
    %p86 = scmp.ne.s32.totalorder %s71, %s85
    %p87 = scmp.eq.s32.totalorder %s19, 0
    %p88 = por %p86, %p87
    %s90 = sadd.s32 %s89, 1
    %p93 = scmp.eq.s32.totalorder %s13, 1
    %p94 = scmp.ne.s32.totalorder %s89, %s91
    %p95 = scmp.eq.s32.totalorder %s13, 0
    %p96 = por %p94, %p95
    %p97 = scmp.ne.s32.totalorder %s89, %s91
    %p98 = scmp.eq.s32.totalorder %s18, 1
    %p99 = por %p97, %p98
    %p100 = scmp.ne.s32.totalorder %s91, %s92
    %p101 = scmp.eq.s32.totalorder %s18, 0
    %p102 = por %p100, %p101
    %p103 = scmp.ne.s32.totalorder %s91, %s92
    %p104 = scmp.eq.s32.totalorder %s19, 1
    %p105 = por %p103, %p104
    %p107 = scmp.ne.s32.totalorder %s92, %s106
    %p108 = scmp.eq.s32.totalorder %s19, 0
    %p109 = por %p107, %p108
    %s111 = sadd.s32 %s110, 1
    %p114 = scmp.eq.s32.totalorder %s13, 1
    %p115 = scmp.ne.s32.totalorder %s110, %s112
    %p116 = scmp.eq.s32.totalorder %s13, 0
    %p117 = por %p115, %p116
    %p118 = scmp.ne.s32.totalorder %s110, %s112
    %p119 = scmp.eq.s32.totalorder %s18, 1
    %p120 = por %p118, %p119
    %p121 = scmp.ne.s32.totalorder %s112, %s113
    %p122 = scmp.eq.s32.totalorder %s18, 0
    %p123 = por %p121, %p122
    %p124 = scmp.ne.s32.totalorder %s112, %s113
    %p125 = scmp.eq.s32.totalorder %s19, 1
    %p126 = por %p124, %p125
    %p128 = scmp.ne.s32.totalorder %s113, %s127
    %p129 = scmp.eq.s32.totalorder %s19, 0
    %p130 = por %p128, %p129
    %s132 = sadd.s32 %s131, 1
    %p135 = scmp.eq.s32.totalorder %s13, 1
    %p136 = scmp.ne.s32.totalorder %s131, %s133
    %p137 = scmp.eq.s32.totalorder %s13, 0
    %p138 = por %p136, %p137
    %p139 = scmp.ne.s32.totalorder %s131, %s133
    %p140 = scmp.eq.s32.totalorder %s18, 1
    %p141 = por %p139, %p140
    %p142 = scmp.ne.s32.totalorder %s133, %s134
    %p143 = scmp.eq.s32.totalorder %s18, 0
    %p144 = por %p142, %p143
    %p145 = scmp.ne.s32.totalorder %s133, %s134
    %p146 = scmp.eq.s32.totalorder %s19, 1
    %p147 = por %p145, %p146
    %p149 = scmp.ne.s32.totalorder %s134, %s148
    %p150 = scmp.eq.s32.totalorder %s19, 0
    %p151 = por %p149, %p150
    %s153 = sadd.s32 %s152, 1
    %p156 = scmp.eq.s32.totalorder %s13, 1
    %p157 = scmp.ne.s32.totalorder %s152, %s154
    %p158 = scmp.eq.s32.totalorder %s13, 0
    %p159 = por %p157, %p158
    %p160 = scmp.ne.s32.totalorder %s152, %s154
    %p161 = scmp.eq.s32.totalorder %s18, 1
    %p162 = por %p160, %p161
    %p163 = scmp.ne.s32.totalorder %s154, %s155
    %p164 = scmp.eq.s32.totalorder %s18, 0
    %p165 = por %p163, %p164
    %p166 = scmp.ne.s32.totalorder %s154, %s155
    %p167 = scmp.eq.s32.totalorder %s19, 1
    %p168 = por %p166, %p167
    %p170 = scmp.ne.s32.totalorder %s155, %s169
    %p171 = scmp.eq.s32.totalorder %s19, 0
    %p172 = por %p170, %p171
    %s173 = ssub.s32 %s13, %s20
    %p174 = scmp.eq.s32.totalorder %s173, 0
    %s176 = sadd.s32 %s175, 1
    %s177 = scalar_select %p174, %s175, %s176
    %p180 = pneg %p174
    %p181 = scmp.eq.s32.totalorder %s13, 1
    %p182 = por %p180, %p181
    %p183 = scmp.ne.s32.totalorder %s175, %s178
    %p184 = scmp.eq.s32.totalorder %s13, 0
    %p185 = por %p183, %p184
    %p186 = scmp.ne.s32.totalorder %s175, %s178
    %p187 = scmp.eq.s32.totalorder %s18, 1
    %p188 = por %p186, %p187
    %p189 = scmp.ne.s32.totalorder %s178, %s179
    %p190 = scmp.eq.s32.totalorder %s18, 0
    %p191 = por %p189, %p190
    %p192 = scmp.ne.s32.totalorder %s178, %s179
    %p193 = scmp.eq.s32.totalorder %s19, 1
    %p194 = por %p192, %p193
    %p196 = scmp.ne.s32.totalorder %s179, %s195
    %p197 = scmp.eq.s32.totalorder %s19, 0
    %p198 = por %p196, %p197
    %p199 = scmp.le.s32.totalorder 1, %s13
    %p200 = scmp.lt.s32.totalorder %s13, 3
    %p201 = pnand %p199, %p200
    %p202 = pneg %p201
    // Predicated region
    $region9: #{two_stage_weld_forward.1} parent=5 // pred_check
      _
    $region10: #{two_stage_weld_forward.1} parent=5 // pred_check_branch
      %204 = sbr.rel (%p201) target = $region12
    $region11: #{two_stage_weld_forward.1} parent=5 // pred_region
      %s205 = ssub.s32 %s13, 1
      // Predicated region
      $region13: #{two_stage_weld_forward.1} parent=11 // pred_check
        %p206 = pneg %p60
      $region14: #{two_stage_weld_forward.1} parent=11 // pred_check_branch
        %208 = sbr.rel (%p206) target = $region16
      $region15: #{two_stage_weld_forward.1} parent=11 // pred_region
        _
      $region16: #{two_stage_weld_forward.1} parent=11 // pred_fallthru
        _
      // Predicated region
      $region17: #{two_stage_weld_forward.1} parent=11 // pred_check
        %p209 = pneg %p81
      $region18: #{two_stage_weld_forward.1} parent=11 // pred_check_branch
        %211 = sbr.rel (%p209) target = $region20
      $region19: #{two_stage_weld_forward.1} parent=11 // pred_region
        _
      $region20: #{two_stage_weld_forward.1} parent=11 // pred_fallthru
        _
      // Predicated region
      $region21: #{two_stage_weld_forward.1} parent=11 // pred_check
        %p212 = pneg %p102
      $region22: #{two_stage_weld_forward.1} parent=11 // pred_check_branch
        %214 = sbr.rel (%p212) target = $region24
      $region23: #{two_stage_weld_forward.1} parent=11 // pred_region
        _
      $region24: #{two_stage_weld_forward.1} parent=11 // pred_fallthru
        _
      // Predicated region
      $region25: #{two_stage_weld_forward.1} parent=11 // pred_check
        %p215 = pneg %p123
      $region26: #{two_stage_weld_forward.1} parent=11 // pred_check_branch
        %217 = sbr.rel (%p215) target = $region28
      $region27: #{two_stage_weld_forward.1} parent=11 // pred_region
        _
      $region28: #{two_stage_weld_forward.1} parent=11 // pred_fallthru
        _
      // Predicated region
      $region29: #{two_stage_weld_forward.1} parent=11 // pred_check
        %p218 = pneg %p144
      $region30: #{two_stage_weld_forward.1} parent=11 // pred_check_branch
        %220 = sbr.rel (%p218) target = $region32
      $region31: #{two_stage_weld_forward.1} parent=11 // pred_region
        _
      $region32: #{two_stage_weld_forward.1} parent=11 // pred_fallthru
        _
      // Predicated region
      $region33: #{two_stage_weld_forward.1} parent=11 // pred_check
        %p221 = pneg %p165
      $region34: #{two_stage_weld_forward.1} parent=11 // pred_check_branch
        %223 = sbr.rel (%p221) target = $region36
      $region35: #{two_stage_weld_forward.1} parent=11 // pred_region
        _
      $region36: #{two_stage_weld_forward.1} parent=11 // pred_fallthru
        _
    $region12: #{two_stage_weld_forward.1} parent=5 // pred_fallthru
      _
    %p224 = scmp.lt.s32.totalorder %s13, 2
    // Predicated region
    $region37: #{two_stage_weld_forward.1} parent=5 // pred_check
      %p225 = pneg %p224
    $region38: #{two_stage_weld_forward.1} parent=5 // pred_check_branch
      %227 = sbr.rel (%p225) target = $region40
    $region39: #{two_stage_weld_forward.1} parent=5 // pred_region
      // Predicated region
      $region41: #{two_stage_weld_forward.1} parent=39 // pred_check
        %p228 = pneg %p33
      $region42: #{two_stage_weld_forward.1} parent=39 // pred_check_branch
        %230 = sbr.rel (%p228) target = $region44
      $region43: #{two_stage_weld_forward.1} parent=39 // pred_region
        %p231 = scmp.lt.s32.totalorder %s13, 1
        %s232 = scalar_select %p231, %s13, 1
        %s233 = smul.addr %s232, 256
        %s234 = smul.addr %s233, 4
        %s235 = scalar_lea.vmem %s0, %s234
      $region44: #{two_stage_weld_forward.1} parent=39 // pred_fallthru
        _
    $region40: #{two_stage_weld_forward.1} parent=5 // pred_fallthru
      _
    %p236 = scmp.le.s32.totalorder 1, %s13
    %p237 = scmp.lt.s32.totalorder %s13, 3
    %p238 = pnand %p236, %p237
    %p239 = pneg %p238
    // Predicated region
    $region45: #{two_stage_weld_forward.1} parent=5 // pred_check
      _
    $region46: #{two_stage_weld_forward.1} parent=5 // pred_check_branch
      %241 = sbr.rel (%p238) target = $region48
    $region47: #{two_stage_weld_forward.1} parent=5 // pred_region
      %s242 = ssub.s32 %s13, 1
      %p243 = scmp.lt.s32.totalorder %s18, 1
      %s244 = scalar_select %p243, %s18, 1
      %s245 = smul.addr %s244, 256
      %s246 = smul.addr %s245, 4
      %s247 = scalar_lea.vmem %s0, %s246
      %p248 = pneg %p39
      %p249 = pneg %p36
      %p250 = pneg %p60
      %p251 = pneg %p57
      %p252 = pneg %p81
      %p253 = pneg %p78
      %p254 = pneg %p102
      %p255 = pneg %p99
      %p256 = pneg %p123
      %p257 = pneg %p120
      %p258 = pneg %p144
      %p259 = pneg %p141
      %p260 = pneg %p165
      %p261 = pneg %p162
      %p262 = pneg %p191
      %p263 = pneg %p188
      %p264 = scmp.lt.s32.totalorder %s18, 1
      %s265 = scalar_select %p264, %s18, 1
      %s266 = smul.addr %s265, 8
      %s267 = scalar_lea.vmem %s7, %s266
      %p268 = scmp.lt.s32.totalorder %s18, 1
      %s269 = scalar_select %p268, %s18, 1
      %s270 = smul.addr %s269, 256
      %s271 = smul.addr %s270, 4
      %s272 = scalar_lea.vmem %s0, %s271
      %p273 = scmp.lt.s32.totalorder %s18, 1
      %s274 = scalar_select %p273, %s18, 1
      %s275 = smul.addr %s274, 8
      %s276 = scalar_lea.vmem %s7, %s275
      %v278 = vld [vmem:[%s272] sm:$0xff]
      %v279 = vld [vmem:[%s272 + $0x8] sm:$0xff]
      %v280 = vld [vmem:[%s272 + $0x10] sm:$0xff]
      %v281 = vld [vmem:[%s272 + $0x18] sm:$0xff]
      %v282 = vld [vmem:[%s272 + $0x20] sm:$0xff]
      %v283 = vld [vmem:[%s272 + $0x28] sm:$0xff]
      %v284 = vld [vmem:[%s272 + $0x30] sm:$0xff]
      %v285 = vld [vmem:[%s272 + $0x38] sm:$0xff]
      %v286 = vld [vmem:[%s272 + $0x40] sm:$0xff]
      %v287 = vld [vmem:[%s272 + $0x48] sm:$0xff]
      %v288 = vld [vmem:[%s272 + $0x50] sm:$0xff]
      %v289 = vld [vmem:[%s272 + $0x58] sm:$0xff]
      %v290 = vld [vmem:[%s272 + $0x60] sm:$0xff]
      %v291 = vld [vmem:[%s272 + $0x68] sm:$0xff]
      %v292 = vld [vmem:[%s272 + $0x70] sm:$0xff]
      %v293 = vld [vmem:[%s272 + $0x78] sm:$0xff]
      %v294 = vld [vmem:[%s272 + $0x80] sm:$0xff]
      %v295 = vld [vmem:[%s272 + $0x88] sm:$0xff]
      %v296 = vld [vmem:[%s272 + $0x90] sm:$0xff]
      %v297 = vld [vmem:[%s272 + $0x98] sm:$0xff]
      %v298 = vld [vmem:[%s272 + $0xa0] sm:$0xff]
      %v299 = vld [vmem:[%s272 + $0xa8] sm:$0xff]
      %v300 = vld [vmem:[%s272 + $0xb0] sm:$0xff]
      %v301 = vld [vmem:[%s272 + $0xb8] sm:$0xff]
      %v302 = vld [vmem:[%s272 + $0xc0] sm:$0xff]
      %v303 = vld [vmem:[%s272 + $0xc8] sm:$0xff]
      %v304 = vld [vmem:[%s272 + $0xd0] sm:$0xff]
      %v305 = vld [vmem:[%s272 + $0xd8] sm:$0xff]
      %v306 = vld [vmem:[%s272 + $0xe0] sm:$0xff]
      %v307 = vld [vmem:[%s272 + $0xe8] sm:$0xff]
      %v308 = vld [vmem:[%s272 + $0xf0] sm:$0xff]
      %v309 = vld [vmem:[%s272 + $0xf8] sm:$0xff]
      %v310 = vld [vmem:[%s272 + $0x100] sm:$0xff]
      %v311 = vld [vmem:[%s272 + $0x108] sm:$0xff]
      %v312 = vld [vmem:[%s272 + $0x110] sm:$0xff]
      %v313 = vld [vmem:[%s272 + $0x118] sm:$0xff]
      %v314 = vld [vmem:[%s272 + $0x120] sm:$0xff]
      %v315 = vld [vmem:[%s272 + $0x128] sm:$0xff]
      %v316 = vld [vmem:[%s272 + $0x130] sm:$0xff]
      %v317 = vld [vmem:[%s272 + $0x138] sm:$0xff]
      %v318 = vld [vmem:[%s272 + $0x140] sm:$0xff]
      %v319 = vld [vmem:[%s272 + $0x148] sm:$0xff]
      %v320 = vld [vmem:[%s272 + $0x150] sm:$0xff]
      %v321 = vld [vmem:[%s272 + $0x158] sm:$0xff]
      %v322 = vld [vmem:[%s272 + $0x160] sm:$0xff]
      %v323 = vld [vmem:[%s272 + $0x168] sm:$0xff]
      %v324 = vld [vmem:[%s272 + $0x170] sm:$0xff]
      %v325 = vld [vmem:[%s272 + $0x178] sm:$0xff]
      %v326 = vld [vmem:[%s272 + $0x180] sm:$0xff]
      %v327 = vld [vmem:[%s272 + $0x188] sm:$0xff]
      %v328 = vld [vmem:[%s272 + $0x190] sm:$0xff]
      %v329 = vld [vmem:[%s272 + $0x198] sm:$0xff]
      %v330 = vld [vmem:[%s272 + $0x1a0] sm:$0xff]
      %v331 = vld [vmem:[%s272 + $0x1a8] sm:$0xff]
      %v332 = vld [vmem:[%s272 + $0x1b0] sm:$0xff]
      %v333 = vld [vmem:[%s272 + $0x1b8] sm:$0xff]
      %v334 = vld [vmem:[%s272 + $0x1c0] sm:$0xff]
      %v335 = vld [vmem:[%s272 + $0x1c8] sm:$0xff]
      %v336 = vld [vmem:[%s272 + $0x1d0] sm:$0xff]
      %v337 = vld [vmem:[%s272 + $0x1d8] sm:$0xff]
      %v338 = vld [vmem:[%s272 + $0x1e0] sm:$0xff]
      %v339 = vld [vmem:[%s272 + $0x1e8] sm:$0xff]
      %v340 = vld [vmem:[%s272 + $0x1f0] sm:$0xff]
      %v341 = vld [vmem:[%s272 + $0x1f8] sm:$0xff]
      %v342 = vld [vmem:[%s272 + $0x200] sm:$0xff]
      %v343 = vld [vmem:[%s272 + $0x208] sm:$0xff]
      %v344 = vld [vmem:[%s272 + $0x210] sm:$0xff]
      %v345 = vld [vmem:[%s272 + $0x218] sm:$0xff]
      %v346 = vld [vmem:[%s272 + $0x220] sm:$0xff]
      %v347 = vld [vmem:[%s272 + $0x228] sm:$0xff]
      %v348 = vld [vmem:[%s272 + $0x230] sm:$0xff]
      %v349 = vld [vmem:[%s272 + $0x238] sm:$0xff]
      %v350 = vld [vmem:[%s272 + $0x240] sm:$0xff]
      %v351 = vld [vmem:[%s272 + $0x248] sm:$0xff]
      %v352 = vld [vmem:[%s272 + $0x250] sm:$0xff]
      %v353 = vld [vmem:[%s272 + $0x258] sm:$0xff]
      %v354 = vld [vmem:[%s272 + $0x260] sm:$0xff]
      %v355 = vld [vmem:[%s272 + $0x268] sm:$0xff]
      %v356 = vld [vmem:[%s272 + $0x270] sm:$0xff]
      %v357 = vld [vmem:[%s272 + $0x278] sm:$0xff]
      %v358 = vld [vmem:[%s272 + $0x280] sm:$0xff]
      %v359 = vld [vmem:[%s272 + $0x288] sm:$0xff]
      %v360 = vld [vmem:[%s272 + $0x290] sm:$0xff]
      %v361 = vld [vmem:[%s272 + $0x298] sm:$0xff]
      %v362 = vld [vmem:[%s272 + $0x2a0] sm:$0xff]
      %v363 = vld [vmem:[%s272 + $0x2a8] sm:$0xff]
      %v364 = vld [vmem:[%s272 + $0x2b0] sm:$0xff]
      %v365 = vld [vmem:[%s272 + $0x2b8] sm:$0xff]
      %v366 = vld [vmem:[%s272 + $0x2c0] sm:$0xff]
      %v367 = vld [vmem:[%s272 + $0x2c8] sm:$0xff]
      %v368 = vld [vmem:[%s272 + $0x2d0] sm:$0xff]
      %v369 = vld [vmem:[%s272 + $0x2d8] sm:$0xff]
      %v370 = vld [vmem:[%s272 + $0x2e0] sm:$0xff]
      %v371 = vld [vmem:[%s272 + $0x2e8] sm:$0xff]
      %v372 = vld [vmem:[%s272 + $0x2f0] sm:$0xff]
      %v373 = vld [vmem:[%s272 + $0x2f8] sm:$0xff]
      %v374 = vld [vmem:[%s272 + $0x300] sm:$0xff]
      %v375 = vld [vmem:[%s272 + $0x308] sm:$0xff]
      %v376 = vld [vmem:[%s272 + $0x310] sm:$0xff]
      %v377 = vld [vmem:[%s272 + $0x318] sm:$0xff]
      %v378 = vld [vmem:[%s272 + $0x320] sm:$0xff]
      %v379 = vld [vmem:[%s272 + $0x328] sm:$0xff]
      %v380 = vld [vmem:[%s272 + $0x330] sm:$0xff]
      %v381 = vld [vmem:[%s272 + $0x338] sm:$0xff]
      %v382 = vld [vmem:[%s272 + $0x340] sm:$0xff]
      %v383 = vld [vmem:[%s272 + $0x348] sm:$0xff]
      %v384 = vld [vmem:[%s272 + $0x350] sm:$0xff]
      %v385 = vld [vmem:[%s272 + $0x358] sm:$0xff]
      %v386 = vld [vmem:[%s272 + $0x360] sm:$0xff]
      %v387 = vld [vmem:[%s272 + $0x368] sm:$0xff]
      %v388 = vld [vmem:[%s272 + $0x370] sm:$0xff]
      %v389 = vld [vmem:[%s272 + $0x378] sm:$0xff]
      %v390 = vld [vmem:[%s272 + $0x380] sm:$0xff]
      %v391 = vld [vmem:[%s272 + $0x388] sm:$0xff]
      %v392 = vld [vmem:[%s272 + $0x390] sm:$0xff]
      %v393 = vld [vmem:[%s272 + $0x398] sm:$0xff]
      %v394 = vld [vmem:[%s272 + $0x3a0] sm:$0xff]
      %v395 = vld [vmem:[%s272 + $0x3a8] sm:$0xff]
      %v396 = vld [vmem:[%s272 + $0x3b0] sm:$0xff]
      %v397 = vld [vmem:[%s272 + $0x3b8] sm:$0xff]
      %v398 = vld [vmem:[%s272 + $0x3c0] sm:$0xff]
      %v399 = vld [vmem:[%s272 + $0x3c8] sm:$0xff]
      %v400 = vld [vmem:[%s272 + $0x3d0] sm:$0xff]
      %v401 = vld [vmem:[%s272 + $0x3d8] sm:$0xff]
      %v402 = vld [vmem:[%s272 + $0x3e0] sm:$0xff]
      %v403 = vld [vmem:[%s272 + $0x3e8] sm:$0xff]
      %v404 = vld [vmem:[%s272 + $0x3f0] sm:$0xff]
      %v405 = vld [vmem:[%s272 + $0x3f8] sm:$0xff]
      %v406 = vld [vmem:[%s1] sm:$0xf]
      %v407 = vld [vmem:[%s1 + $0x4] sm:$0xf]
      %v408 = vld [vmem:[%s1 + $0x8] sm:$0xf]
      %v409 = vld [vmem:[%s1 + $0xc] sm:$0xf]
      %v410 = vld [vmem:[%s1 + $0x10] sm:$0xf]
      %v411 = vld [vmem:[%s1 + $0x14] sm:$0xf]
      %v412 = vld [vmem:[%s1 + $0x18] sm:$0xf]
      %v413 = vld [vmem:[%s1 + $0x1c] sm:$0xf]
      %v414 = vld [vmem:[%s1 + $0x20] sm:$0xf]
      %v415 = vld [vmem:[%s1 + $0x24] sm:$0xf]
      %v416 = vld [vmem:[%s1 + $0x28] sm:$0xf]
      %v417 = vld [vmem:[%s1 + $0x2c] sm:$0xf]
      %v418 = vld [vmem:[%s1 + $0x30] sm:$0xf]
      %v419 = vld [vmem:[%s1 + $0x34] sm:$0xf]
      %v420 = vld [vmem:[%s1 + $0x38] sm:$0xf]
      %v421 = vld [vmem:[%s1 + $0x3c] sm:$0xf]
      %v422 = vld [vmem:[%s1 + $0x40] sm:$0xf]
      %v423 = vld [vmem:[%s1 + $0x44] sm:$0xf]
      %v424 = vld [vmem:[%s1 + $0x48] sm:$0x3]
      %v425 = vld [vmem:[%s2] sm:$0x1]
      %v427 = vlaneseq
      %v428 = vshrl.u32 %v427, 7
      %v429 = vsub.s32 0, %v428
      %v430 = vrot.slane %v425, %v429
      %v560 = vunpack.c.l.b16 %v278
      %v561 = vunpack.c.h.b16 %v278
      %v562 = vunpack.c.l.b16 %v279
      %v563 = vunpack.c.h.b16 %v279
      %v564 = vunpack.c.l.b16 %v280
      %v565 = vunpack.c.h.b16 %v280
      %v566 = vunpack.c.l.b16 %v281
      %v567 = vunpack.c.h.b16 %v281
      %v568 = vunpack.c.l.b16 %v282
      %v569 = vunpack.c.h.b16 %v282
      %v570 = vunpack.c.l.b16 %v283
      %v571 = vunpack.c.h.b16 %v283
      %v572 = vunpack.c.l.b16 %v284
      %v573 = vunpack.c.h.b16 %v284
      %v574 = vunpack.c.l.b16 %v285
      %v575 = vunpack.c.h.b16 %v285
      %v576 = vunpack.c.l.b16 %v286
      %v577 = vunpack.c.h.b16 %v286
      %v578 = vunpack.c.l.b16 %v287
      %v579 = vunpack.c.h.b16 %v287
      %v580 = vunpack.c.l.b16 %v288
      %v581 = vunpack.c.h.b16 %v288
      %v582 = vunpack.c.l.b16 %v289
      %v583 = vunpack.c.h.b16 %v289
      %v584 = vunpack.c.l.b16 %v290
      %v585 = vunpack.c.h.b16 %v290
      %v586 = vunpack.c.l.b16 %v291
      %v587 = vunpack.c.h.b16 %v291
      %v588 = vunpack.c.l.b16 %v292
      %v589 = vunpack.c.h.b16 %v292
      %v590 = vunpack.c.l.b16 %v293
      %v591 = vunpack.c.h.b16 %v293
      %v592 = vunpack.c.l.b16 %v294
      %v593 = vunpack.c.h.b16 %v294
      %v594 = vunpack.c.l.b16 %v295
      %v595 = vunpack.c.h.b16 %v295
      %v596 = vunpack.c.l.b16 %v296
      %v597 = vunpack.c.h.b16 %v296
      %v598 = vunpack.c.l.b16 %v297
      %v599 = vunpack.c.h.b16 %v297
      %v600 = vunpack.c.l.b16 %v298
      %v601 = vunpack.c.h.b16 %v298
      %v602 = vunpack.c.l.b16 %v299
      %v603 = vunpack.c.h.b16 %v299
      %v604 = vunpack.c.l.b16 %v300
      %v605 = vunpack.c.h.b16 %v300
      %v606 = vunpack.c.l.b16 %v301
      %v607 = vunpack.c.h.b16 %v301
      %v608 = vunpack.c.l.b16 %v302
      %v609 = vunpack.c.h.b16 %v302
      %v610 = vunpack.c.l.b16 %v303
      %v611 = vunpack.c.h.b16 %v303
      %v612 = vunpack.c.l.b16 %v304
      %v613 = vunpack.c.h.b16 %v304
      %v614 = vunpack.c.l.b16 %v305
      %v615 = vunpack.c.h.b16 %v305
      %v616 = vunpack.c.l.b16 %v306
      %v617 = vunpack.c.h.b16 %v306
      %v618 = vunpack.c.l.b16 %v307
      %v619 = vunpack.c.h.b16 %v307
      %v620 = vunpack.c.l.b16 %v308
      %v621 = vunpack.c.h.b16 %v308
      %v622 = vunpack.c.l.b16 %v309
      %v623 = vunpack.c.h.b16 %v309
      %v624 = vunpack.c.l.b16 %v310
      %v625 = vunpack.c.h.b16 %v310
      %v626 = vunpack.c.l.b16 %v311
      %v627 = vunpack.c.h.b16 %v311
      %v628 = vunpack.c.l.b16 %v312
      %v629 = vunpack.c.h.b16 %v312
      %v630 = vunpack.c.l.b16 %v313
      %v631 = vunpack.c.h.b16 %v313
      %v632 = vunpack.c.l.b16 %v314
      %v633 = vunpack.c.h.b16 %v314
      %v634 = vunpack.c.l.b16 %v315
      %v635 = vunpack.c.h.b16 %v315
      %v636 = vunpack.c.l.b16 %v316
      %v637 = vunpack.c.h.b16 %v316
      %v638 = vunpack.c.l.b16 %v317
      %v639 = vunpack.c.h.b16 %v317
      %v640 = vunpack.c.l.b16 %v318
      %v641 = vunpack.c.h.b16 %v318
      %v642 = vunpack.c.l.b16 %v319
      %v643 = vunpack.c.h.b16 %v319
      %v644 = vunpack.c.l.b16 %v320
      %v645 = vunpack.c.h.b16 %v320
      %v646 = vunpack.c.l.b16 %v321
      %v647 = vunpack.c.h.b16 %v321
      %v648 = vunpack.c.l.b16 %v322
      %v649 = vunpack.c.h.b16 %v322
      %v650 = vunpack.c.l.b16 %v323
      %v651 = vunpack.c.h.b16 %v323
      %v652 = vunpack.c.l.b16 %v324
      %v653 = vunpack.c.h.b16 %v324
      %v654 = vunpack.c.l.b16 %v325
      %v655 = vunpack.c.h.b16 %v325
      %v656 = vunpack.c.l.b16 %v326
      %v657 = vunpack.c.h.b16 %v326
      %v658 = vunpack.c.l.b16 %v327
      %v659 = vunpack.c.h.b16 %v327
      %v660 = vunpack.c.l.b16 %v328
      %v661 = vunpack.c.h.b16 %v328
      %v662 = vunpack.c.l.b16 %v329
      %v663 = vunpack.c.h.b16 %v329
      %v664 = vunpack.c.l.b16 %v330
      %v665 = vunpack.c.h.b16 %v330
      %v666 = vunpack.c.l.b16 %v331
      %v667 = vunpack.c.h.b16 %v331
      %v668 = vunpack.c.l.b16 %v332
      %v669 = vunpack.c.h.b16 %v332
      %v670 = vunpack.c.l.b16 %v333
      %v671 = vunpack.c.h.b16 %v333
      %v672 = vunpack.c.l.b16 %v334
      %v673 = vunpack.c.h.b16 %v334
      %v674 = vunpack.c.l.b16 %v335
      %v675 = vunpack.c.h.b16 %v335
      %v676 = vunpack.c.l.b16 %v336
      %v677 = vunpack.c.h.b16 %v336
      %v678 = vunpack.c.l.b16 %v337
      %v679 = vunpack.c.h.b16 %v337
      %v680 = vunpack.c.l.b16 %v338
      %v681 = vunpack.c.h.b16 %v338
      %v682 = vunpack.c.l.b16 %v339
      %v683 = vunpack.c.h.b16 %v339
      %v684 = vunpack.c.l.b16 %v340
      %v685 = vunpack.c.h.b16 %v340
      %v686 = vunpack.c.l.b16 %v341
      %v687 = vunpack.c.h.b16 %v341
      %v688 = vunpack.c.l.b16 %v342
      %v689 = vunpack.c.h.b16 %v342
      %v690 = vunpack.c.l.b16 %v343
      %v691 = vunpack.c.h.b16 %v343
      %v692 = vunpack.c.l.b16 %v344
      %v693 = vunpack.c.h.b16 %v344
      %v694 = vunpack.c.l.b16 %v345
      %v695 = vunpack.c.h.b16 %v345
      %v696 = vunpack.c.l.b16 %v346
      %v697 = vunpack.c.h.b16 %v346
      %v698 = vunpack.c.l.b16 %v347
      %v699 = vunpack.c.h.b16 %v347
      %v700 = vunpack.c.l.b16 %v348
      %v701 = vunpack.c.h.b16 %v348
      %v702 = vunpack.c.l.b16 %v349
      %v703 = vunpack.c.h.b16 %v349
      %v704 = vunpack.c.l.b16 %v350
      %v705 = vunpack.c.h.b16 %v350
      %v706 = vunpack.c.l.b16 %v351
      %v707 = vunpack.c.h.b16 %v351
      %v708 = vunpack.c.l.b16 %v352
      %v709 = vunpack.c.h.b16 %v352
      %v710 = vunpack.c.l.b16 %v353
      %v711 = vunpack.c.h.b16 %v353
      %v712 = vunpack.c.l.b16 %v354
      %v713 = vunpack.c.h.b16 %v354
      %v714 = vunpack.c.l.b16 %v355
      %v715 = vunpack.c.h.b16 %v355
      %v716 = vunpack.c.l.b16 %v356
      %v717 = vunpack.c.h.b16 %v356
      %v718 = vunpack.c.l.b16 %v357
      %v719 = vunpack.c.h.b16 %v357
      %v720 = vunpack.c.l.b16 %v358
      %v721 = vunpack.c.h.b16 %v358
      %v722 = vunpack.c.l.b16 %v359
      %v723 = vunpack.c.h.b16 %v359
      %v724 = vunpack.c.l.b16 %v360
      %v725 = vunpack.c.h.b16 %v360
      %v726 = vunpack.c.l.b16 %v361
      %v727 = vunpack.c.h.b16 %v361
      %v728 = vunpack.c.l.b16 %v362
      %v729 = vunpack.c.h.b16 %v362
      %v730 = vunpack.c.l.b16 %v363
      %v731 = vunpack.c.h.b16 %v363
      %v732 = vunpack.c.l.b16 %v364
      %v733 = vunpack.c.h.b16 %v364
      %v734 = vunpack.c.l.b16 %v365
      %v735 = vunpack.c.h.b16 %v365
      %v736 = vunpack.c.l.b16 %v366
      %v737 = vunpack.c.h.b16 %v366
      %v738 = vunpack.c.l.b16 %v367
      %v739 = vunpack.c.h.b16 %v367
      %v740 = vunpack.c.l.b16 %v368
      %v741 = vunpack.c.h.b16 %v368
      %v742 = vunpack.c.l.b16 %v369
      %v743 = vunpack.c.h.b16 %v369
      %v744 = vunpack.c.l.b16 %v370
      %v745 = vunpack.c.h.b16 %v370
      %v746 = vunpack.c.l.b16 %v371
      %v747 = vunpack.c.h.b16 %v371
      %v748 = vunpack.c.l.b16 %v372
      %v749 = vunpack.c.h.b16 %v372
      %v750 = vunpack.c.l.b16 %v373
      %v751 = vunpack.c.h.b16 %v373
      %v752 = vunpack.c.l.b16 %v374
      %v753 = vunpack.c.h.b16 %v374
      %v754 = vunpack.c.l.b16 %v375
      %v755 = vunpack.c.h.b16 %v375
      %v756 = vunpack.c.l.b16 %v376
      %v757 = vunpack.c.h.b16 %v376
      %v758 = vunpack.c.l.b16 %v377
      %v759 = vunpack.c.h.b16 %v377
      %v760 = vunpack.c.l.b16 %v378
      %v761 = vunpack.c.h.b16 %v378
      %v762 = vunpack.c.l.b16 %v379
      %v763 = vunpack.c.h.b16 %v379
      %v764 = vunpack.c.l.b16 %v380
      %v765 = vunpack.c.h.b16 %v380
      %v766 = vunpack.c.l.b16 %v381
      %v767 = vunpack.c.h.b16 %v381
      %v768 = vunpack.c.l.b16 %v382
      %v769 = vunpack.c.h.b16 %v382
      %v770 = vunpack.c.l.b16 %v383
      %v771 = vunpack.c.h.b16 %v383
      %v772 = vunpack.c.l.b16 %v384
      %v773 = vunpack.c.h.b16 %v384
      %v774 = vunpack.c.l.b16 %v385
      %v775 = vunpack.c.h.b16 %v385
      %v776 = vunpack.c.l.b16 %v386
      %v777 = vunpack.c.h.b16 %v386
      %v778 = vunpack.c.l.b16 %v387
      %v779 = vunpack.c.h.b16 %v387
      %v780 = vunpack.c.l.b16 %v388
      %v781 = vunpack.c.h.b16 %v388
      %v782 = vunpack.c.l.b16 %v389
      %v783 = vunpack.c.h.b16 %v389
      %v784 = vunpack.c.l.b16 %v390
      %v785 = vunpack.c.h.b16 %v390
      %v786 = vunpack.c.l.b16 %v391
      %v787 = vunpack.c.h.b16 %v391
      %v788 = vunpack.c.l.b16 %v392
      %v789 = vunpack.c.h.b16 %v392
      %v790 = vunpack.c.l.b16 %v393
      %v791 = vunpack.c.h.b16 %v393
      %v792 = vunpack.c.l.b16 %v394
      %v793 = vunpack.c.h.b16 %v394
      %v794 = vunpack.c.l.b16 %v395
      %v795 = vunpack.c.h.b16 %v395
      %v796 = vunpack.c.l.b16 %v396
      %v797 = vunpack.c.h.b16 %v396
      %v798 = vunpack.c.l.b16 %v397
      %v799 = vunpack.c.h.b16 %v397
      %v800 = vunpack.c.l.b16 %v398
      %v801 = vunpack.c.h.b16 %v398
      %v802 = vunpack.c.l.b16 %v399
      %v803 = vunpack.c.h.b16 %v399
      %v804 = vunpack.c.l.b16 %v400
      %v805 = vunpack.c.h.b16 %v400
      %v806 = vunpack.c.l.b16 %v401
      %v807 = vunpack.c.h.b16 %v401
      %v808 = vunpack.c.l.b16 %v402
      %v809 = vunpack.c.h.b16 %v402
      %v810 = vunpack.c.l.b16 %v403
      %v811 = vunpack.c.h.b16 %v403
      %v812 = vunpack.c.l.b16 %v404
      %v813 = vunpack.c.h.b16 %v404
      %v814 = vunpack.c.l.b16 %v405
      %v815 = vunpack.c.h.b16 %v405
      %v816 = vpack.c.b16 %v562, %v560
      %v817 = vpack.c.b16 %v563, %v561
      %v818 = vpack.c.b16 %v566, %v564
      %v819 = vpack.c.b16 %v567, %v565
      %v820 = vpack.c.b16 %v570, %v568
      %v821 = vpack.c.b16 %v571, %v569
      %v822 = vpack.c.b16 %v574, %v572
      %v823 = vpack.c.b16 %v575, %v573
      %v824 = vpack.c.b16 %v578, %v576
      %v825 = vpack.c.b16 %v579, %v577
      %v826 = vpack.c.b16 %v582, %v580
      %v827 = vpack.c.b16 %v583, %v581
      %v828 = vpack.c.b16 %v586, %v584
      %v829 = vpack.c.b16 %v587, %v585
      %v830 = vpack.c.b16 %v590, %v588
      %v831 = vpack.c.b16 %v591, %v589
      %v832 = vpack.c.b16 %v594, %v592
      %v833 = vpack.c.b16 %v595, %v593
      %v834 = vpack.c.b16 %v598, %v596
      %v835 = vpack.c.b16 %v599, %v597
      %v836 = vpack.c.b16 %v602, %v600
      %v837 = vpack.c.b16 %v603, %v601
      %v838 = vpack.c.b16 %v606, %v604
      %v839 = vpack.c.b16 %v607, %v605
      %v840 = vpack.c.b16 %v610, %v608
      %v841 = vpack.c.b16 %v611, %v609
      %v842 = vpack.c.b16 %v614, %v612
      %v843 = vpack.c.b16 %v615, %v613
      %v844 = vpack.c.b16 %v618, %v616
      %v845 = vpack.c.b16 %v619, %v617
      %v846 = vpack.c.b16 %v622, %v620
      %v847 = vpack.c.b16 %v623, %v621
      %v848 = vpack.c.b16 %v626, %v624
      %v849 = vpack.c.b16 %v627, %v625
      %v850 = vpack.c.b16 %v630, %v628
      %v851 = vpack.c.b16 %v631, %v629
      %v852 = vpack.c.b16 %v634, %v632
      %v853 = vpack.c.b16 %v635, %v633
      %v854 = vpack.c.b16 %v638, %v636
      %v855 = vpack.c.b16 %v639, %v637
      %v856 = vpack.c.b16 %v642, %v640
      %v857 = vpack.c.b16 %v643, %v641
      %v858 = vpack.c.b16 %v646, %v644
      %v859 = vpack.c.b16 %v647, %v645
      %v860 = vpack.c.b16 %v650, %v648
      %v861 = vpack.c.b16 %v651, %v649
      %v862 = vpack.c.b16 %v654, %v652
      %v863 = vpack.c.b16 %v655, %v653
      %v864 = vpack.c.b16 %v658, %v656
      %v865 = vpack.c.b16 %v659, %v657
      %v866 = vpack.c.b16 %v662, %v660
      %v867 = vpack.c.b16 %v663, %v661
      %v868 = vpack.c.b16 %v666, %v664
      %v869 = vpack.c.b16 %v667, %v665
      %v870 = vpack.c.b16 %v670, %v668
      %v871 = vpack.c.b16 %v671, %v669
      %v872 = vpack.c.b16 %v674, %v672
      %v873 = vpack.c.b16 %v675, %v673
      %v874 = vpack.c.b16 %v678, %v676
      %v875 = vpack.c.b16 %v679, %v677
      %v876 = vpack.c.b16 %v682, %v680
      %v877 = vpack.c.b16 %v683, %v681
      %v878 = vpack.c.b16 %v686, %v684
      %v879 = vpack.c.b16 %v687, %v685
      %v880 = vpack.c.b16 %v690, %v688
      %v881 = vpack.c.b16 %v691, %v689
      %v882 = vpack.c.b16 %v694, %v692
      %v883 = vpack.c.b16 %v695, %v693
      %v884 = vpack.c.b16 %v698, %v696
      %v885 = vpack.c.b16 %v699, %v697
      %v886 = vpack.c.b16 %v702, %v700
      %v887 = vpack.c.b16 %v703, %v701
      %v888 = vpack.c.b16 %v706, %v704
      %v889 = vpack.c.b16 %v707, %v705
      %v890 = vpack.c.b16 %v710, %v708
      %v891 = vpack.c.b16 %v711, %v709
      %v892 = vpack.c.b16 %v714, %v712
      %v893 = vpack.c.b16 %v715, %v713
      %v894 = vpack.c.b16 %v718, %v716
      %v895 = vpack.c.b16 %v719, %v717
      %v896 = vpack.c.b16 %v722, %v720
      %v897 = vpack.c.b16 %v723, %v721
      %v898 = vpack.c.b16 %v726, %v724
      %v899 = vpack.c.b16 %v727, %v725
      %v900 = vpack.c.b16 %v730, %v728
      %v901 = vpack.c.b16 %v731, %v729
      %v902 = vpack.c.b16 %v734, %v732
      %v903 = vpack.c.b16 %v735, %v733
      %v904 = vpack.c.b16 %v738, %v736
      %v905 = vpack.c.b16 %v739, %v737
      %v906 = vpack.c.b16 %v742, %v740
      %v907 = vpack.c.b16 %v743, %v741
      %v908 = vpack.c.b16 %v746, %v744
      %v909 = vpack.c.b16 %v747, %v745
      %v910 = vpack.c.b16 %v750, %v748
      %v911 = vpack.c.b16 %v751, %v749
      %v912 = vpack.c.b16 %v754, %v752
      %v913 = vpack.c.b16 %v755, %v753
      %v914 = vpack.c.b16 %v758, %v756
      %v915 = vpack.c.b16 %v759, %v757
      %v916 = vpack.c.b16 %v762, %v760
      %v917 = vpack.c.b16 %v763, %v761
      %v918 = vpack.c.b16 %v766, %v764
      %v919 = vpack.c.b16 %v767, %v765
      %v920 = vpack.c.b16 %v770, %v768
      %v921 = vpack.c.b16 %v771, %v769
      %v922 = vpack.c.b16 %v774, %v772
      %v923 = vpack.c.b16 %v775, %v773
      %v924 = vpack.c.b16 %v778, %v776
      %v925 = vpack.c.b16 %v779, %v777
      %v926 = vpack.c.b16 %v782, %v780
      %v927 = vpack.c.b16 %v783, %v781
      %v928 = vpack.c.b16 %v786, %v784
      %v929 = vpack.c.b16 %v787, %v785
      %v930 = vpack.c.b16 %v790, %v788
      %v931 = vpack.c.b16 %v791, %v789
      %v932 = vpack.c.b16 %v794, %v792
      %v933 = vpack.c.b16 %v795, %v793
      %v934 = vpack.c.b16 %v798, %v796
      %v935 = vpack.c.b16 %v799, %v797
      %v936 = vpack.c.b16 %v802, %v800
      %v937 = vpack.c.b16 %v803, %v801
      %v938 = vpack.c.b16 %v806, %v804
      %v939 = vpack.c.b16 %v807, %v805
      %v940 = vpack.c.b16 %v810, %v808
      %v941 = vpack.c.b16 %v811, %v809
      %v942 = vpack.c.b16 %v814, %v812
      %v943 = vpack.c.b16 %v815, %v813
      %v1027 = vunpack.c.l.b16 %v406
      %v1028 = vunpack.c.l.b16 %v407
      %v1029 = vunpack.c.l.b16 %v408
      %v1030 = vunpack.c.l.b16 %v409
      %v1031 = vunpack.c.l.b16 %v410
      %v1032 = vunpack.c.l.b16 %v411
      %v1033 = vunpack.c.l.b16 %v412
      %v1034 = vunpack.c.l.b16 %v413
      %v1035 = vunpack.c.l.b16 %v414
      %v1036 = vunpack.c.l.b16 %v415
      %v1037 = vunpack.c.l.b16 %v416
      %v1038 = vunpack.c.l.b16 %v417
      %v1039 = vunpack.c.l.b16 %v418
      %v1040 = vunpack.c.l.b16 %v419
      %v1041 = vunpack.c.l.b16 %v420
      %v1042 = vunpack.c.l.b16 %v421
      %v1043 = vunpack.c.l.b16 %v422
      %v1044 = vunpack.c.l.b16 %v423
      %v1045 = vunpack.c.l.b16 %v424
      %v1046 = vpack.c.b16 %v1028, %v1027
      %v1047 = vpack.c.b16 %v1030, %v1029
      %v1048 = vpack.c.b16 %v1032, %v1031
      %v1049 = vpack.c.b16 %v1034, %v1033
      %v1050 = vpack.c.b16 %v1036, %v1035
      %v1051 = vpack.c.b16 %v1038, %v1037
      %v1052 = vpack.c.b16 %v1040, %v1039
      %v1053 = vpack.c.b16 %v1042, %v1041
      %v1054 = vpack.c.b16 %v1044, %v1043
      %v1055 = vpack.c.b16 %v1045, %v1045
      %vm1065 = vcmask 154624
      %v1067 = vsel %vm1065, %v817, 0
      %v1070 = vsel %vm1065, %v819, 0
      %v1073 = vsel %vm1065, %v821, 0
      %v1076 = vsel %vm1065, %v823, 0
      %v1079 = vsel %vm1065, %v825, 0
      %v1082 = vsel %vm1065, %v827, 0
      %v1085 = vsel %vm1065, %v829, 0
      %v1088 = vsel %vm1065, %v831, 0
      %v1091 = vsel %vm1065, %v833, 0
      %v1094 = vsel %vm1065, %v835, 0
      %v1097 = vsel %vm1065, %v837, 0
      %v1100 = vsel %vm1065, %v839, 0
      %v1103 = vsel %vm1065, %v841, 0
      %v1106 = vsel %vm1065, %v843, 0
      %v1109 = vsel %vm1065, %v845, 0
      %v1112 = vsel %vm1065, %v847, 0
      %v1115 = vsel %vm1065, %v849, 0
      %v1118 = vsel %vm1065, %v851, 0
      %v1121 = vsel %vm1065, %v853, 0
      %v1124 = vsel %vm1065, %v855, 0
      %v1127 = vsel %vm1065, %v857, 0
      %v1130 = vsel %vm1065, %v859, 0
      %v1133 = vsel %vm1065, %v861, 0
      %v1136 = vsel %vm1065, %v863, 0
      %v1139 = vsel %vm1065, %v865, 0
      %v1142 = vsel %vm1065, %v867, 0
      %v1145 = vsel %vm1065, %v869, 0
      %v1148 = vsel %vm1065, %v871, 0
      %v1151 = vsel %vm1065, %v873, 0
      %v1154 = vsel %vm1065, %v875, 0
      %v1157 = vsel %vm1065, %v877, 0
      %v1160 = vsel %vm1065, %v879, 0
      %v1163 = vsel %vm1065, %v881, 0
      %v1166 = vsel %vm1065, %v883, 0
      %v1169 = vsel %vm1065, %v885, 0
      %v1172 = vsel %vm1065, %v887, 0
      %v1175 = vsel %vm1065, %v889, 0
      %v1178 = vsel %vm1065, %v891, 0
      %v1181 = vsel %vm1065, %v893, 0
      %v1184 = vsel %vm1065, %v895, 0
      %v1187 = vsel %vm1065, %v897, 0
      %v1190 = vsel %vm1065, %v899, 0
      %v1193 = vsel %vm1065, %v901, 0
      %v1196 = vsel %vm1065, %v903, 0
      %v1199 = vsel %vm1065, %v905, 0
      %v1202 = vsel %vm1065, %v907, 0
      %v1205 = vsel %vm1065, %v909, 0
      %v1208 = vsel %vm1065, %v911, 0
      %v1211 = vsel %vm1065, %v913, 0
      %v1214 = vsel %vm1065, %v915, 0
      %v1217 = vsel %vm1065, %v917, 0
      %v1220 = vsel %vm1065, %v919, 0
      %v1223 = vsel %vm1065, %v921, 0
      %v1226 = vsel %vm1065, %v923, 0
      %v1229 = vsel %vm1065, %v925, 0
      %v1232 = vsel %vm1065, %v927, 0
      %v1235 = vsel %vm1065, %v929, 0
      %v1238 = vsel %vm1065, %v931, 0
      %v1241 = vsel %vm1065, %v933, 0
      %v1244 = vsel %vm1065, %v935, 0
      %v1247 = vsel %vm1065, %v937, 0
      %v1250 = vsel %vm1065, %v939, 0
      %v1253 = vsel %vm1065, %v941, 0
      %v1256 = vsel %vm1065, %v943, 0
      %vm1258 = vcmask 1040384
      %vm1259 = vcmask 1041408
      %v1260 = vsel %vm1258, 4294967295, 65535
      %v1261 = vsel %vm1259, %v1260, 0
      %v1263 = vand.u32 %v1055, %v1261
      %1265 = vmatprep.subr.bf16.mxu0 0
      %1266 = vmatpush1.bf16.msra.mxu0 %v1046
      %1267 = vmatprep.subr.bf16.mxu0 0
      %1268 = vmatpush1.bf16.msra.mxu0 %v1047
      %1269 = vmatprep.subr.bf16.mxu0 0
      %1270 = vmatpush1.bf16.msra.mxu0 %v1048
      %1271 = vmatprep.subr.bf16.mxu0 0
      %1272 = vmatpush1.bf16.msra.mxu0 %v1049
      %1273 = vmatprep.subr.bf16.mxu0 0
      %1274 = vmatpush1.bf16.msra.mxu0 %v1050
      %1275 = vmatprep.subr.bf16.mxu0 0
      %1276 = vmatpush1.bf16.msra.mxu0 %v1051
      %1277 = vmatprep.subr.bf16.mxu0 0
      %1278 = vmatpush1.bf16.msra.mxu0 %v1052
      %1279 = vmatprep.subr.bf16.mxu0 0
      %1280 = vmatpush1.bf16.msra.mxu0 %v1053
      %1281 = vmatprep.subr.bf16.mxu0 0
      %1282 = vmatpush1.bf16.msra.mxu0 %v1054
      %1283 = vmatprep.subr.bf16.mxu0 0
      %1284 = vmatpush1.bf16.msra.mxu0 %v1263
      %1285 = vmatprep.subr.bf16.mxu0 0
      %1286 = vmatpush1.bf16.msra.mxu0 0
      %1287 = vmatprep.subr.bf16.mxu0 0
      %1288 = vmatpush1.bf16.msra.mxu0 0
      %1289 = vmatprep.subr.bf16.mxu0 0
      %1290 = vmatpush1.bf16.msra.mxu0 0
      %1291 = vmatprep.subr.bf16.mxu0 0
      %1292 = vmatpush1.bf16.msra.mxu0 0
      %1293 = vmatprep.subr.bf16.mxu0 0
      %1294 = vmatpush1.bf16.msra.mxu0 0
      %1295 = vmatprep.subr.bf16.mxu0 0
      %1296 = vmatpush1.bf16.msra.mxu0 0
      %1297 = vmatprep.mubr.bf16.mxu0 %v1067
      %1298 = vmatmul.mubr.bf16.gmra.mrb[0].mxu0 %v816
      %v1299 = vpop.f32.mrb[0].mxu0
      %v1300 = vadd.f32 %v430, %v1299
      %v1301 = vpop.f32.mrb[0].mxu0
      %v1302 = vpop.f32.mrb[0].mxu0
      %v1303 = vadd.f32 %v430, %v1302
      %v1304 = vpop.f32.mrb[0].mxu0
      %1305 = vmatprep.mubr.bf16.mxu0 %v1070
      %1306 = vmatmul.mubr.bf16.gmra.mrb[0].mxu0 %v818
      %v1307 = vpop.f32.mrb[0].mxu0
      %v1308 = vadd.f32 %v430, %v1307
      %v1309 = vpop.f32.mrb[0].mxu0
      %v1310 = vpop.f32.mrb[0].mxu0
      %v1311 = vadd.f32 %v430, %v1310
      %v1312 = vpop.f32.mrb[0].mxu0
      %1313 = vmatprep.mubr.bf16.mxu0 %v1073
      %1314 = vmatmul.mubr.bf16.gmra.mrb[0].mxu0 %v820
      %v1315 = vpop.f32.mrb[0].mxu0
      %v1316 = vadd.f32 %v430, %v1315
      %v1317 = vpop.f32.mrb[0].mxu0
      %v1318 = vpop.f32.mrb[0].mxu0
      %v1319 = vadd.f32 %v430, %v1318
      %v1320 = vpop.f32.mrb[0].mxu0
      %1321 = vmatprep.mubr.bf16.mxu0 %v1076
      %1322 = vmatmul.mubr.bf16.gmra.mrb[0].mxu0 %v822
      %v1323 = vpop.f32.mrb[0].mxu0
      %v1324 = vadd.f32 %v430, %v1323
      %v1325 = vpop.f32.mrb[0].mxu0
      %v1326 = vpop.f32.mrb[0].mxu0
      %v1327 = vadd.f32 %v430, %v1326
      %v1328 = vpop.f32.mrb[0].mxu0
      %1329 = vmatprep.mubr.bf16.mxu0 %v1079
      %1330 = vmatmul.mubr.bf16.gmra.mrb[0].mxu0 %v824
      %v1331 = vpop.f32.mrb[0].mxu0
      %v1332 = vadd.f32 %v430, %v1331
      %v1333 = vpop.f32.mrb[0].mxu0
      %v1334 = vpop.f32.mrb[0].mxu0
      %v1335 = vadd.f32 %v430, %v1334
      %v1336 = vpop.f32.mrb[0].mxu0
      %1337 = vmatprep.mubr.bf16.mxu0 %v1082
      %1338 = vmatmul.mubr.bf16.gmra.mrb[0].mxu0 %v826
      %v1339 = vpop.f32.mrb[0].mxu0
      %v1340 = vadd.f32 %v430, %v1339
      %v1341 = vpop.f32.mrb[0].mxu0
      %v1342 = vpop.f32.mrb[0].mxu0
      %v1343 = vadd.f32 %v430, %v1342
      %v1344 = vpop.f32.mrb[0].mxu0
      %1345 = vmatprep.mubr.bf16.mxu0 %v1085
      %1346 = vmatmul.mubr.bf16.gmra.mrb[0].mxu0 %v828
      %v1347 = vpop.f32.mrb[0].mxu0
      %v1348 = vadd.f32 %v430, %v1347
      %v1349 = vpop.f32.mrb[0].mxu0
      %v1350 = vpop.f32.mrb[0].mxu0
      %v1351 = vadd.f32 %v430, %v1350
      %v1352 = vpop.f32.mrb[0].mxu0
      %1353 = vmatprep.mubr.bf16.mxu0 %v1088
      %1354 = vmatmul.mubr.bf16.gmra.mrb[0].mxu0 %v830
      %v1355 = vpop.f32.mrb[0].mxu0
      %v1356 = vadd.f32 %v430, %v1355
      %v1357 = vpop.f32.mrb[0].mxu0
      %v1358 = vpop.f32.mrb[0].mxu0
      %v1359 = vadd.f32 %v430, %v1358
      %v1360 = vpop.f32.mrb[0].mxu0
      %1361 = vmatprep.mubr.bf16.mxu0 %v1091
      %1362 = vmatmul.mubr.bf16.gmra.mrb[0].mxu0 %v832
      %v1363 = vpop.f32.mrb[0].mxu0
      %v1364 = vadd.f32 %v430, %v1363
      %v1365 = vpop.f32.mrb[0].mxu0
      %v1366 = vpop.f32.mrb[0].mxu0
      %v1367 = vadd.f32 %v430, %v1366
      %v1368 = vpop.f32.mrb[0].mxu0
      %1369 = vmatprep.mubr.bf16.mxu0 %v1094
      %1370 = vmatmul.mubr.bf16.gmra.mrb[0].mxu0 %v834
      %v1371 = vpop.f32.mrb[0].mxu0
      %v1372 = vadd.f32 %v430, %v1371
      %v1373 = vpop.f32.mrb[0].mxu0
      %v1374 = vpop.f32.mrb[0].mxu0
      %v1375 = vadd.f32 %v430, %v1374
      %v1376 = vpop.f32.mrb[0].mxu0
      %1377 = vmatprep.mubr.bf16.mxu0 %v1097
      %1378 = vmatmul.mubr.bf16.gmra.mrb[0].mxu0 %v836
      %v1379 = vpop.f32.mrb[0].mxu0
      %v1380 = vadd.f32 %v430, %v1379
      %v1381 = vpop.f32.mrb[0].mxu0
      %v1382 = vpop.f32.mrb[0].mxu0
      %v1383 = vadd.f32 %v430, %v1382
      %v1384 = vpop.f32.mrb[0].mxu0
      %1385 = vmatprep.mubr.bf16.mxu0 %v1100
      %1386 = vmatmul.mubr.bf16.gmra.mrb[0].mxu0 %v838
      %v1387 = vpop.f32.mrb[0].mxu0
      %v1388 = vadd.f32 %v430, %v1387
      %v1389 = vpop.f32.mrb[0].mxu0
      %v1390 = vpop.f32.mrb[0].mxu0
      %v1391 = vadd.f32 %v430, %v1390
      %v1392 = vpop.f32.mrb[0].mxu0
      %1393 = vmatprep.mubr.bf16.mxu0 %v1103
      %1394 = vmatmul.mubr.bf16.gmra.mrb[0].mxu0 %v840
      %v1395 = vpop.f32.mrb[0].mxu0
      %v1396 = vadd.f32 %v430, %v1395
      %v1397 = vpop.f32.mrb[0].mxu0
      %v1398 = vpop.f32.mrb[0].mxu0
      %v1399 = vadd.f32 %v430, %v1398
      %v1400 = vpop.f32.mrb[0].mxu0
      %1401 = vmatprep.mubr.bf16.mxu0 %v1106
      %1402 = vmatmul.mubr.bf16.gmra.mrb[0].mxu0 %v842
      %v1403 = vpop.f32.mrb[0].mxu0
      %v1404 = vadd.f32 %v430, %v1403
      %v1405 = vpop.f32.mrb[0].mxu0
      %v1406 = vpop.f32.mrb[0].mxu0
      %v1407 = vadd.f32 %v430, %v1406
      %v1408 = vpop.f32.mrb[0].mxu0
      %1409 = vmatprep.mubr.bf16.mxu0 %v1109
      %1410 = vmatmul.mubr.bf16.gmra.mrb[0].mxu0 %v844
      %v1411 = vpop.f32.mrb[0].mxu0
      %v1412 = vadd.f32 %v430, %v1411
      %v1413 = vpop.f32.mrb[0].mxu0
      %v1414 = vpop.f32.mrb[0].mxu0
      %v1415 = vadd.f32 %v430, %v1414
      %v1416 = vpop.f32.mrb[0].mxu0
      %1417 = vmatprep.mubr.bf16.mxu0 %v1112
      %1418 = vmatmul.mubr.bf16.gmra.mrb[0].mxu0 %v846
      %v1419 = vpop.f32.mrb[0].mxu0
      %v1420 = vadd.f32 %v430, %v1419
      %v1421 = vpop.f32.mrb[0].mxu0
      %v1422 = vpop.f32.mrb[0].mxu0
      %v1423 = vadd.f32 %v430, %v1422
      %v1424 = vpop.f32.mrb[0].mxu0
      %1425 = vmatprep.mubr.bf16.mxu0 %v1115
      %1426 = vmatmul.mubr.bf16.gmra.mrb[0].mxu0 %v848
      %v1427 = vpop.f32.mrb[0].mxu0
      %v1428 = vadd.f32 %v430, %v1427
      %v1429 = vpop.f32.mrb[0].mxu0
      %v1430 = vpop.f32.mrb[0].mxu0
      %v1431 = vadd.f32 %v430, %v1430
      %v1432 = vpop.f32.mrb[0].mxu0
      %1433 = vmatprep.mubr.bf16.mxu0 %v1118
      %1434 = vmatmul.mubr.bf16.gmra.mrb[0].mxu0 %v850
      %v1435 = vpop.f32.mrb[0].mxu0
      %v1436 = vadd.f32 %v430, %v1435
      %v1437 = vpop.f32.mrb[0].mxu0
      %v1438 = vpop.f32.mrb[0].mxu0
      %v1439 = vadd.f32 %v430, %v1438
      %v1440 = vpop.f32.mrb[0].mxu0
      %1441 = vmatprep.mubr.bf16.mxu0 %v1121
      %1442 = vmatmul.mubr.bf16.gmra.mrb[0].mxu0 %v852
      %v1443 = vpop.f32.mrb[0].mxu0
      %v1444 = vadd.f32 %v430, %v1443
      %v1445 = vpop.f32.mrb[0].mxu0
      %v1446 = vpop.f32.mrb[0].mxu0
      %v1447 = vadd.f32 %v430, %v1446
      %v1448 = vpop.f32.mrb[0].mxu0
      %1449 = vmatprep.mubr.bf16.mxu0 %v1124
      %1450 = vmatmul.mubr.bf16.gmra.mrb[0].mxu0 %v854
      %v1451 = vpop.f32.mrb[0].mxu0
      %v1452 = vadd.f32 %v430, %v1451
      %v1453 = vpop.f32.mrb[0].mxu0
      %v1454 = vpop.f32.mrb[0].mxu0
      %v1455 = vadd.f32 %v430, %v1454
      %v1456 = vpop.f32.mrb[0].mxu0
      %1457 = vmatprep.mubr.bf16.mxu0 %v1127
      %1458 = vmatmul.mubr.bf16.gmra.mrb[0].mxu0 %v856
      %v1459 = vpop.f32.mrb[0].mxu0
      %v1460 = vadd.f32 %v430, %v1459
      %v1461 = vpop.f32.mrb[0].mxu0
      %v1462 = vpop.f32.mrb[0].mxu0
      %v1463 = vadd.f32 %v430, %v1462
      %v1464 = vpop.f32.mrb[0].mxu0
      %1465 = vmatprep.mubr.bf16.mxu0 %v1130
      %1466 = vmatmul.mubr.bf16.gmra.mrb[0].mxu0 %v858
      %v1467 = vpop.f32.mrb[0].mxu0
      %v1468 = vadd.f32 %v430, %v1467
      %v1469 = vpop.f32.mrb[0].mxu0
      %v1470 = vpop.f32.mrb[0].mxu0
      %v1471 = vadd.f32 %v430, %v1470
      %v1472 = vpop.f32.mrb[0].mxu0
      %1473 = vmatprep.mubr.bf16.mxu0 %v1133
      %1474 = vmatmul.mubr.bf16.gmra.mrb[0].mxu0 %v860
      %v1475 = vpop.f32.mrb[0].mxu0
      %v1476 = vadd.f32 %v430, %v1475
      %v1477 = vpop.f32.mrb[0].mxu0
      %v1478 = vpop.f32.mrb[0].mxu0
      %v1479 = vadd.f32 %v430, %v1478
      %v1480 = vpop.f32.mrb[0].mxu0
      %1481 = vmatprep.mubr.bf16.mxu0 %v1136
      %1482 = vmatmul.mubr.bf16.gmra.mrb[0].mxu0 %v862
      %v1483 = vpop.f32.mrb[0].mxu0
      %v1484 = vadd.f32 %v430, %v1483
      %v1485 = vpop.f32.mrb[0].mxu0
      %v1486 = vpop.f32.mrb[0].mxu0
      %v1487 = vadd.f32 %v430, %v1486
      %v1488 = vpop.f32.mrb[0].mxu0
      %1489 = vmatprep.mubr.bf16.mxu0 %v1139
      %1490 = vmatmul.mubr.bf16.gmra.mrb[0].mxu0 %v864
      %v1491 = vpop.f32.mrb[0].mxu0
      %v1492 = vadd.f32 %v430, %v1491
      %v1493 = vpop.f32.mrb[0].mxu0
      %v1494 = vpop.f32.mrb[0].mxu0
      %v1495 = vadd.f32 %v430, %v1494
      %v1496 = vpop.f32.mrb[0].mxu0
      %1497 = vmatprep.mubr.bf16.mxu0 %v1142
      %1498 = vmatmul.mubr.bf16.gmra.mrb[0].mxu0 %v866
      %v1499 = vpop.f32.mrb[0].mxu0
      %v1500 = vadd.f32 %v430, %v1499
      %v1501 = vpop.f32.mrb[0].mxu0
      %v1502 = vpop.f32.mrb[0].mxu0
      %v1503 = vadd.f32 %v430, %v1502
      %v1504 = vpop.f32.mrb[0].mxu0
      %1505 = vmatprep.mubr.bf16.mxu0 %v1145
      %1506 = vmatmul.mubr.bf16.gmra.mrb[0].mxu0 %v868
      %v1507 = vpop.f32.mrb[0].mxu0
      %v1508 = vadd.f32 %v430, %v1507
      %v1509 = vpop.f32.mrb[0].mxu0
      %v1510 = vpop.f32.mrb[0].mxu0
      %v1511 = vadd.f32 %v430, %v1510
      %v1512 = vpop.f32.mrb[0].mxu0
      %1513 = vmatprep.mubr.bf16.mxu0 %v1148
      %1514 = vmatmul.mubr.bf16.gmra.mrb[0].mxu0 %v870
      %v1515 = vpop.f32.mrb[0].mxu0
      %v1516 = vadd.f32 %v430, %v1515
      %v1517 = vpop.f32.mrb[0].mxu0
      %v1518 = vpop.f32.mrb[0].mxu0
      %v1519 = vadd.f32 %v430, %v1518
      %v1520 = vpop.f32.mrb[0].mxu0
      %1521 = vmatprep.mubr.bf16.mxu0 %v1151
      %1522 = vmatmul.mubr.bf16.gmra.mrb[0].mxu0 %v872
      %v1523 = vpop.f32.mrb[0].mxu0
      %v1524 = vadd.f32 %v430, %v1523
      %v1525 = vpop.f32.mrb[0].mxu0
      %v1526 = vpop.f32.mrb[0].mxu0
      %v1527 = vadd.f32 %v430, %v1526
      %v1528 = vpop.f32.mrb[0].mxu0
      %1529 = vmatprep.mubr.bf16.mxu0 %v1154
      %1530 = vmatmul.mubr.bf16.gmra.mrb[0].mxu0 %v874
      %v1531 = vpop.f32.mrb[0].mxu0
      %v1532 = vadd.f32 %v430, %v1531
      %v1533 = vpop.f32.mrb[0].mxu0
      %v1534 = vpop.f32.mrb[0].mxu0
      %v1535 = vadd.f32 %v430, %v1534
      %v1536 = vpop.f32.mrb[0].mxu0
      %1537 = vmatprep.mubr.bf16.mxu0 %v1157
      %1538 = vmatmul.mubr.bf16.gmra.mrb[0].mxu0 %v876
      %v1539 = vpop.f32.mrb[0].mxu0
      %v1540 = vadd.f32 %v430, %v1539
      %v1541 = vpop.f32.mrb[0].mxu0
      %v1542 = vpop.f32.mrb[0].mxu0
      %v1543 = vadd.f32 %v430, %v1542
      %v1544 = vpop.f32.mrb[0].mxu0
      %1545 = vmatprep.mubr.bf16.mxu0 %v1160
      %1546 = vmatmul.mubr.bf16.gmra.mrb[0].mxu0 %v878
      %v1547 = vpop.f32.mrb[0].mxu0
      %v1548 = vadd.f32 %v430, %v1547
      %v1549 = vpop.f32.mrb[0].mxu0
      %v1550 = vpop.f32.mrb[0].mxu0
      %v1551 = vadd.f32 %v430, %v1550
      %v1552 = vpop.f32.mrb[0].mxu0
      %1553 = vmatprep.mubr.bf16.mxu0 %v1163
      %1554 = vmatmul.mubr.bf16.gmra.mrb[0].mxu0 %v880
      %v1555 = vpop.f32.mrb[0].mxu0
      %v1556 = vadd.f32 %v430, %v1555
      %v1557 = vpop.f32.mrb[0].mxu0
      %v1558 = vpop.f32.mrb[0].mxu0
      %v1559 = vadd.f32 %v430, %v1558
      %v1560 = vpop.f32.mrb[0].mxu0
      %1561 = vmatprep.mubr.bf16.mxu0 %v1166
      %1562 = vmatmul.mubr.bf16.gmra.mrb[0].mxu0 %v882
      %v1563 = vpop.f32.mrb[0].mxu0
      %v1564 = vadd.f32 %v430, %v1563
      %v1565 = vpop.f32.mrb[0].mxu0
      %v1566 = vpop.f32.mrb[0].mxu0
      %v1567 = vadd.f32 %v430, %v1566
      %v1568 = vpop.f32.mrb[0].mxu0
      %1569 = vmatprep.mubr.bf16.mxu0 %v1169
      %1570 = vmatmul.mubr.bf16.gmra.mrb[0].mxu0 %v884
      %v1571 = vpop.f32.mrb[0].mxu0
      %v1572 = vadd.f32 %v430, %v1571
      %v1573 = vpop.f32.mrb[0].mxu0
      %v1574 = vpop.f32.mrb[0].mxu0
      %v1575 = vadd.f32 %v430, %v1574
      %v1576 = vpop.f32.mrb[0].mxu0
      %1577 = vmatprep.mubr.bf16.mxu0 %v1172
      %1578 = vmatmul.mubr.bf16.gmra.mrb[0].mxu0 %v886
      %v1579 = vpop.f32.mrb[0].mxu0
      %v1580 = vadd.f32 %v430, %v1579
      %v1581 = vpop.f32.mrb[0].mxu0
      %v1582 = vpop.f32.mrb[0].mxu0
      %v1583 = vadd.f32 %v430, %v1582
      %v1584 = vpop.f32.mrb[0].mxu0
      %1585 = vmatprep.mubr.bf16.mxu0 %v1175
      %1586 = vmatmul.mubr.bf16.gmra.mrb[0].mxu0 %v888
      %v1587 = vpop.f32.mrb[0].mxu0
      %v1588 = vadd.f32 %v430, %v1587
      %v1589 = vpop.f32.mrb[0].mxu0
      %v1590 = vpop.f32.mrb[0].mxu0
      %v1591 = vadd.f32 %v430, %v1590
      %v1592 = vpop.f32.mrb[0].mxu0
      %1593 = vmatprep.mubr.bf16.mxu0 %v1178
      %1594 = vmatmul.mubr.bf16.gmra.mrb[0].mxu0 %v890
      %v1595 = vpop.f32.mrb[0].mxu0
      %v1596 = vadd.f32 %v430, %v1595
      %v1597 = vpop.f32.mrb[0].mxu0
      %v1598 = vpop.f32.mrb[0].mxu0
      %v1599 = vadd.f32 %v430, %v1598
      %v1600 = vpop.f32.mrb[0].mxu0
      %1601 = vmatprep.mubr.bf16.mxu0 %v1181
      %1602 = vmatmul.mubr.bf16.gmra.mrb[0].mxu0 %v892
      %v1603 = vpop.f32.mrb[0].mxu0
      %v1604 = vadd.f32 %v430, %v1603
      %v1605 = vpop.f32.mrb[0].mxu0
      %v1606 = vpop.f32.mrb[0].mxu0
      %v1607 = vadd.f32 %v430, %v1606
      %v1608 = vpop.f32.mrb[0].mxu0
      %1609 = vmatprep.mubr.bf16.mxu0 %v1184
      %1610 = vmatmul.mubr.bf16.gmra.mrb[0].mxu0 %v894
      %v1611 = vpop.f32.mrb[0].mxu0
      %v1612 = vadd.f32 %v430, %v1611
      %v1613 = vpop.f32.mrb[0].mxu0
      %v1614 = vpop.f32.mrb[0].mxu0
      %v1615 = vadd.f32 %v430, %v1614
      %v1616 = vpop.f32.mrb[0].mxu0
      %1617 = vmatprep.mubr.bf16.mxu0 %v1187
      %1618 = vmatmul.mubr.bf16.gmra.mrb[0].mxu0 %v896
      %v1619 = vpop.f32.mrb[0].mxu0
      %v1620 = vadd.f32 %v430, %v1619
      %v1621 = vpop.f32.mrb[0].mxu0
      %v1622 = vpop.f32.mrb[0].mxu0
      %v1623 = vadd.f32 %v430, %v1622
      %v1624 = vpop.f32.mrb[0].mxu0
      %1625 = vmatprep.mubr.bf16.mxu0 %v1190
      %1626 = vmatmul.mubr.bf16.gmra.mrb[0].mxu0 %v898
      %v1627 = vpop.f32.mrb[0].mxu0
      %v1628 = vadd.f32 %v430, %v1627
      %v1629 = vpop.f32.mrb[0].mxu0
      %v1630 = vpop.f32.mrb[0].mxu0
      %v1631 = vadd.f32 %v430, %v1630
      %v1632 = vpop.f32.mrb[0].mxu0
      %1633 = vmatprep.mubr.bf16.mxu0 %v1193
      %1634 = vmatmul.mubr.bf16.gmra.mrb[0].mxu0 %v900
      %v1635 = vpop.f32.mrb[0].mxu0
      %v1636 = vadd.f32 %v430, %v1635
      %v1637 = vpop.f32.mrb[0].mxu0
      %v1638 = vpop.f32.mrb[0].mxu0
      %v1639 = vadd.f32 %v430, %v1638
      %v1640 = vpop.f32.mrb[0].mxu0
      %1641 = vmatprep.mubr.bf16.mxu0 %v1196
      %1642 = vmatmul.mubr.bf16.gmra.mrb[0].mxu0 %v902
      %v1643 = vpop.f32.mrb[0].mxu0
      %v1644 = vadd.f32 %v430, %v1643
      %v1645 = vpop.f32.mrb[0].mxu0
      %v1646 = vpop.f32.mrb[0].mxu0
      %v1647 = vadd.f32 %v430, %v1646
      %v1648 = vpop.f32.mrb[0].mxu0
      %1649 = vmatprep.mubr.bf16.mxu0 %v1199
      %1650 = vmatmul.mubr.bf16.gmra.mrb[0].mxu0 %v904
      %v1651 = vpop.f32.mrb[0].mxu0
      %v1652 = vadd.f32 %v430, %v1651
      %v1653 = vpop.f32.mrb[0].mxu0
      %v1654 = vpop.f32.mrb[0].mxu0
      %v1655 = vadd.f32 %v430, %v1654
      %v1656 = vpop.f32.mrb[0].mxu0
      %1657 = vmatprep.mubr.bf16.mxu0 %v1202
      %1658 = vmatmul.mubr.bf16.gmra.mrb[0].mxu0 %v906
      %v1659 = vpop.f32.mrb[0].mxu0
      %v1660 = vadd.f32 %v430, %v1659
      %v1661 = vpop.f32.mrb[0].mxu0
      %v1662 = vpop.f32.mrb[0].mxu0
      %v1663 = vadd.f32 %v430, %v1662
      %v1664 = vpop.f32.mrb[0].mxu0
      %1665 = vmatprep.mubr.bf16.mxu0 %v1205
      %1666 = vmatmul.mubr.bf16.gmra.mrb[0].mxu0 %v908
      %v1667 = vpop.f32.mrb[0].mxu0
      %v1668 = vadd.f32 %v430, %v1667
      %v1669 = vpop.f32.mrb[0].mxu0
      %v1670 = vpop.f32.mrb[0].mxu0
      %v1671 = vadd.f32 %v430, %v1670
      %v1672 = vpop.f32.mrb[0].mxu0
      %1673 = vmatprep.mubr.bf16.mxu0 %v1208
      %1674 = vmatmul.mubr.bf16.gmra.mrb[0].mxu0 %v910
      %v1675 = vpop.f32.mrb[0].mxu0
      %v1676 = vadd.f32 %v430, %v1675
      %v1677 = vpop.f32.mrb[0].mxu0
      %v1678 = vpop.f32.mrb[0].mxu0
      %v1679 = vadd.f32 %v430, %v1678
      %v1680 = vpop.f32.mrb[0].mxu0
      %1681 = vmatprep.mubr.bf16.mxu0 %v1211
      %1682 = vmatmul.mubr.bf16.gmra.mrb[0].mxu0 %v912
      %v1683 = vpop.f32.mrb[0].mxu0
      %v1684 = vadd.f32 %v430, %v1683
      %v1685 = vpop.f32.mrb[0].mxu0
      %v1686 = vpop.f32.mrb[0].mxu0
      %v1687 = vadd.f32 %v430, %v1686
      %v1688 = vpop.f32.mrb[0].mxu0
      %1689 = vmatprep.mubr.bf16.mxu0 %v1214
      %1690 = vmatmul.mubr.bf16.gmra.mrb[0].mxu0 %v914
      %v1691 = vpop.f32.mrb[0].mxu0
      %v1692 = vadd.f32 %v430, %v1691
      %v1693 = vpop.f32.mrb[0].mxu0
      %v1694 = vpop.f32.mrb[0].mxu0
      %v1695 = vadd.f32 %v430, %v1694
      %v1696 = vpop.f32.mrb[0].mxu0
      %1697 = vmatprep.mubr.bf16.mxu0 %v1217
      %1698 = vmatmul.mubr.bf16.gmra.mrb[0].mxu0 %v916
      %v1699 = vpop.f32.mrb[0].mxu0
      %v1700 = vadd.f32 %v430, %v1699
      %v1701 = vpop.f32.mrb[0].mxu0
      %v1702 = vpop.f32.mrb[0].mxu0
      %v1703 = vadd.f32 %v430, %v1702
      %v1704 = vpop.f32.mrb[0].mxu0
      %1705 = vmatprep.mubr.bf16.mxu0 %v1220
      %1706 = vmatmul.mubr.bf16.gmra.mrb[0].mxu0 %v918
      %v1707 = vpop.f32.mrb[0].mxu0
      %v1708 = vadd.f32 %v430, %v1707
      %v1709 = vpop.f32.mrb[0].mxu0
      %v1710 = vpop.f32.mrb[0].mxu0
      %v1711 = vadd.f32 %v430, %v1710
      %v1712 = vpop.f32.mrb[0].mxu0
      %1713 = vmatprep.mubr.bf16.mxu0 %v1223
      %1714 = vmatmul.mubr.bf16.gmra.mrb[0].mxu0 %v920
      %v1715 = vpop.f32.mrb[0].mxu0
      %v1716 = vadd.f32 %v430, %v1715
      %v1717 = vpop.f32.mrb[0].mxu0
      %v1718 = vpop.f32.mrb[0].mxu0
      %v1719 = vadd.f32 %v430, %v1718
      %v1720 = vpop.f32.mrb[0].mxu0
      %1721 = vmatprep.mubr.bf16.mxu0 %v1226
      %1722 = vmatmul.mubr.bf16.gmra.mrb[0].mxu0 %v922
      %v1723 = vpop.f32.mrb[0].mxu0
      %v1724 = vadd.f32 %v430, %v1723
      %v1725 = vpop.f32.mrb[0].mxu0
      %v1726 = vpop.f32.mrb[0].mxu0
      %v1727 = vadd.f32 %v430, %v1726
      %v1728 = vpop.f32.mrb[0].mxu0
      %1729 = vmatprep.mubr.bf16.mxu0 %v1229
      %1730 = vmatmul.mubr.bf16.gmra.mrb[0].mxu0 %v924
      %v1731 = vpop.f32.mrb[0].mxu0
      %v1732 = vadd.f32 %v430, %v1731
      %v1733 = vpop.f32.mrb[0].mxu0
      %v1734 = vpop.f32.mrb[0].mxu0
      %v1735 = vadd.f32 %v430, %v1734
      %v1736 = vpop.f32.mrb[0].mxu0
      %1737 = vmatprep.mubr.bf16.mxu0 %v1232
      %1738 = vmatmul.mubr.bf16.gmra.mrb[0].mxu0 %v926
      %v1739 = vpop.f32.mrb[0].mxu0
      %v1740 = vadd.f32 %v430, %v1739
      %v1741 = vpop.f32.mrb[0].mxu0
      %v1742 = vpop.f32.mrb[0].mxu0
      %v1743 = vadd.f32 %v430, %v1742
      %v1744 = vpop.f32.mrb[0].mxu0
      %1745 = vmatprep.mubr.bf16.mxu0 %v1235
      %1746 = vmatmul.mubr.bf16.gmra.mrb[0].mxu0 %v928
      %v1747 = vpop.f32.mrb[0].mxu0
      %v1748 = vadd.f32 %v430, %v1747
      %v1749 = vpop.f32.mrb[0].mxu0
      %v1750 = vpop.f32.mrb[0].mxu0
      %v1751 = vadd.f32 %v430, %v1750
      %v1752 = vpop.f32.mrb[0].mxu0
      %1753 = vmatprep.mubr.bf16.mxu0 %v1238
      %1754 = vmatmul.mubr.bf16.gmra.mrb[0].mxu0 %v930
      %v1755 = vpop.f32.mrb[0].mxu0
      %v1756 = vadd.f32 %v430, %v1755
      %v1757 = vpop.f32.mrb[0].mxu0
      %v1758 = vpop.f32.mrb[0].mxu0
      %v1759 = vadd.f32 %v430, %v1758
      %v1760 = vpop.f32.mrb[0].mxu0
      %1761 = vmatprep.mubr.bf16.mxu0 %v1241
      %1762 = vmatmul.mubr.bf16.gmra.mrb[0].mxu0 %v932
      %v1763 = vpop.f32.mrb[0].mxu0
      %v1764 = vadd.f32 %v430, %v1763
      %v1765 = vpop.f32.mrb[0].mxu0
      %v1766 = vpop.f32.mrb[0].mxu0
      %v1767 = vadd.f32 %v430, %v1766
      %v1768 = vpop.f32.mrb[0].mxu0
      %1769 = vmatprep.mubr.bf16.mxu0 %v1244
      %1770 = vmatmul.mubr.bf16.gmra.mrb[0].mxu0 %v934
      %v1771 = vpop.f32.mrb[0].mxu0
      %v1772 = vadd.f32 %v430, %v1771
      %v1773 = vpop.f32.mrb[0].mxu0
      %v1774 = vpop.f32.mrb[0].mxu0
      %v1775 = vadd.f32 %v430, %v1774
      %v1776 = vpop.f32.mrb[0].mxu0
      %1777 = vmatprep.mubr.bf16.mxu0 %v1247
      %1778 = vmatmul.mubr.bf16.gmra.mrb[0].mxu0 %v936
      %v1779 = vpop.f32.mrb[0].mxu0
      %v1780 = vadd.f32 %v430, %v1779
      %v1781 = vpop.f32.mrb[0].mxu0
      %v1782 = vpop.f32.mrb[0].mxu0
      %v1783 = vadd.f32 %v430, %v1782
      %v1784 = vpop.f32.mrb[0].mxu0
      %1785 = vmatprep.mubr.bf16.mxu0 %v1250
      %1786 = vmatmul.mubr.bf16.gmra.mrb[0].mxu0 %v938
      %v1787 = vpop.f32.mrb[0].mxu0
      %v1788 = vadd.f32 %v430, %v1787
      %v1789 = vpop.f32.mrb[0].mxu0
      %v1790 = vpop.f32.mrb[0].mxu0
      %v1791 = vadd.f32 %v430, %v1790
      %v1792 = vpop.f32.mrb[0].mxu0
      %1793 = vmatprep.mubr.bf16.mxu0 %v1253
      %1794 = vmatmul.mubr.bf16.gmra.mrb[0].mxu0 %v940
      %v1795 = vpop.f32.mrb[0].mxu0
      %v1796 = vadd.f32 %v430, %v1795
      %v1797 = vpop.f32.mrb[0].mxu0
      %v1798 = vpop.f32.mrb[0].mxu0
      %v1799 = vadd.f32 %v430, %v1798
      %v1800 = vpop.f32.mrb[0].mxu0
      %1801 = vmatprep.mubr.bf16.mxu0 %v1256
      %1802 = vmatmul.mubr.bf16.gmra.mrb[0].mxu0 %v942
      %v1803 = vpop.f32.mrb[0].mxu0
      %v1804 = vadd.f32 %v430, %v1803
      %v1805 = vpop.f32.mrb[0].mxu0
      %v1806 = vpop.f32.mrb[0].mxu0
      %v1807 = vadd.f32 %v430, %v1806
      %v1808 = vpop.f32.mrb[0].mxu0
      %1809 = vdwg.mxu0
      %v1810 = vmax.f32 %v1300, 0.0
      %v1811 = vmax.f32 %v1303, 0.0
      %v1812 = vmax.f32 %v1308, 0.0
      %v1813 = vmax.f32 %v1311, 0.0
      %v1814 = vmax.f32 %v1316, 0.0
      %v1815 = vmax.f32 %v1319, 0.0
      %v1816 = vmax.f32 %v1324, 0.0
      %v1817 = vmax.f32 %v1327, 0.0
      %v1818 = vmax.f32 %v1332, 0.0
      %v1819 = vmax.f32 %v1335, 0.0
      %v1820 = vmax.f32 %v1340, 0.0
      %v1821 = vmax.f32 %v1343, 0.0
      %v1822 = vmax.f32 %v1348, 0.0
      %v1823 = vmax.f32 %v1351, 0.0
      %v1824 = vmax.f32 %v1356, 0.0
      %v1825 = vmax.f32 %v1359, 0.0
      %v1826 = vmax.f32 %v1364, 0.0
      %v1827 = vmax.f32 %v1367, 0.0
      %v1828 = vmax.f32 %v1372, 0.0
      %v1829 = vmax.f32 %v1375, 0.0
      %v1830 = vmax.f32 %v1380, 0.0
      %v1831 = vmax.f32 %v1383, 0.0
      %v1832 = vmax.f32 %v1388, 0.0
      %v1833 = vmax.f32 %v1391, 0.0
      %v1834 = vmax.f32 %v1396, 0.0
      %v1835 = vmax.f32 %v1399, 0.0
      %v1836 = vmax.f32 %v1404, 0.0
      %v1837 = vmax.f32 %v1407, 0.0
      %v1838 = vmax.f32 %v1412, 0.0
      %v1839 = vmax.f32 %v1415, 0.0
      %v1840 = vmax.f32 %v1420, 0.0
      %v1841 = vmax.f32 %v1423, 0.0
      %v1842 = vmax.f32 %v1428, 0.0
      %v1843 = vmax.f32 %v1431, 0.0
      %v1844 = vmax.f32 %v1436, 0.0
      %v1845 = vmax.f32 %v1439, 0.0
      %v1846 = vmax.f32 %v1444, 0.0
      %v1847 = vmax.f32 %v1447, 0.0
      %v1848 = vmax.f32 %v1452, 0.0
      %v1849 = vmax.f32 %v1455, 0.0
      %v1850 = vmax.f32 %v1460, 0.0
      %v1851 = vmax.f32 %v1463, 0.0
      %v1852 = vmax.f32 %v1468, 0.0
      %v1853 = vmax.f32 %v1471, 0.0
      %v1854 = vmax.f32 %v1476, 0.0
      %v1855 = vmax.f32 %v1479, 0.0
      %v1856 = vmax.f32 %v1484, 0.0
      %v1857 = vmax.f32 %v1487, 0.0
      %v1858 = vmax.f32 %v1492, 0.0
      %v1859 = vmax.f32 %v1495, 0.0
      %v1860 = vmax.f32 %v1500, 0.0
      %v1861 = vmax.f32 %v1503, 0.0
      %v1862 = vmax.f32 %v1508, 0.0
      %v1863 = vmax.f32 %v1511, 0.0
      %v1864 = vmax.f32 %v1516, 0.0
      %v1865 = vmax.f32 %v1519, 0.0
      %v1866 = vmax.f32 %v1524, 0.0
      %v1867 = vmax.f32 %v1527, 0.0
      %v1868 = vmax.f32 %v1532, 0.0
      %v1869 = vmax.f32 %v1535, 0.0
      %v1870 = vmax.f32 %v1540, 0.0
      %v1871 = vmax.f32 %v1543, 0.0
      %v1872 = vmax.f32 %v1548, 0.0
      %v1873 = vmax.f32 %v1551, 0.0
      %v1874 = vmax.f32 %v1556, 0.0
      %v1875 = vmax.f32 %v1559, 0.0
      %v1876 = vmax.f32 %v1564, 0.0
      %v1877 = vmax.f32 %v1567, 0.0
      %v1878 = vmax.f32 %v1572, 0.0
      %v1879 = vmax.f32 %v1575, 0.0
      %v1880 = vmax.f32 %v1580, 0.0
      %v1881 = vmax.f32 %v1583, 0.0
      %v1882 = vmax.f32 %v1588, 0.0
      %v1883 = vmax.f32 %v1591, 0.0
      %v1884 = vmax.f32 %v1596, 0.0
      %v1885 = vmax.f32 %v1599, 0.0
      %v1886 = vmax.f32 %v1604, 0.0
      %v1887 = vmax.f32 %v1607, 0.0
      %v1888 = vmax.f32 %v1612, 0.0
      %v1889 = vmax.f32 %v1615, 0.0
      %v1890 = vmax.f32 %v1620, 0.0
      %v1891 = vmax.f32 %v1623, 0.0
      %v1892 = vmax.f32 %v1628, 0.0
      %v1893 = vmax.f32 %v1631, 0.0
      %v1894 = vmax.f32 %v1636, 0.0
      %v1895 = vmax.f32 %v1639, 0.0
      %v1896 = vmax.f32 %v1644, 0.0
      %v1897 = vmax.f32 %v1647, 0.0
      %v1898 = vmax.f32 %v1652, 0.0
      %v1899 = vmax.f32 %v1655, 0.0
      %v1900 = vmax.f32 %v1660, 0.0
      %v1901 = vmax.f32 %v1663, 0.0
      %v1902 = vmax.f32 %v1668, 0.0
      %v1903 = vmax.f32 %v1671, 0.0
      %v1904 = vmax.f32 %v1676, 0.0
      %v1905 = vmax.f32 %v1679, 0.0
      %v1906 = vmax.f32 %v1684, 0.0
      %v1907 = vmax.f32 %v1687, 0.0
      %v1908 = vmax.f32 %v1692, 0.0
      %v1909 = vmax.f32 %v1695, 0.0
      %v1910 = vmax.f32 %v1700, 0.0
      %v1911 = vmax.f32 %v1703, 0.0
      %v1912 = vmax.f32 %v1708, 0.0
      %v1913 = vmax.f32 %v1711, 0.0
      %v1914 = vmax.f32 %v1716, 0.0
      %v1915 = vmax.f32 %v1719, 0.0
      %v1916 = vmax.f32 %v1724, 0.0
      %v1917 = vmax.f32 %v1727, 0.0
      %v1918 = vmax.f32 %v1732, 0.0
      %v1919 = vmax.f32 %v1735, 0.0
      %v1920 = vmax.f32 %v1740, 0.0
      %v1921 = vmax.f32 %v1743, 0.0
      %v1922 = vmax.f32 %v1748, 0.0
      %v1923 = vmax.f32 %v1751, 0.0
      %v1924 = vmax.f32 %v1756, 0.0
      %v1925 = vmax.f32 %v1759, 0.0
      %v1926 = vmax.f32 %v1764, 0.0
      %v1927 = vmax.f32 %v1767, 0.0
      %v1928 = vmax.f32 %v1772, 0.0
      %v1929 = vmax.f32 %v1775, 0.0
      %v1930 = vmax.f32 %v1780, 0.0
      %v1931 = vmax.f32 %v1783, 0.0
      %v1932 = vmax.f32 %v1788, 0.0
      %v1933 = vmax.f32 %v1791, 0.0
      %v1934 = vmax.f32 %v1796, 0.0
      %v1935 = vmax.f32 %v1799, 0.0
      %v1936 = vmax.f32 %v1804, 0.0
      %v1937 = vmax.f32 %v1807, 0.0
      %v2066 = vrot.slane %v1810, 7
      %v2067 = vrot.slane %v1811, 7
      %v2068 = vsel %vm1258, %v2066, %v2067
      %v2069 = vrot.slane %v1812, 7
      %v2070 = vsel %vm1258, %v2067, %v2069
      %v2071 = vrot.slane %v1813, 7
      %v2072 = vsel %vm1258, %v2069, %v2071
      %v2073 = vrot.slane %v1814, 7
      %v2074 = vrot.slane %v1815, 7
      %v2075 = vsel %vm1258, %v2073, %v2074
      %v2076 = vrot.slane %v1816, 7
      %v2077 = vsel %vm1258, %v2074, %v2076
      %v2078 = vrot.slane %v1817, 7
      %v2079 = vsel %vm1258, %v2076, %v2078
      %v2080 = vrot.slane %v1818, 7
      %v2081 = vrot.slane %v1819, 7
      %v2082 = vsel %vm1258, %v2080, %v2081
      %v2083 = vrot.slane %v1820, 7
      %v2084 = vsel %vm1258, %v2081, %v2083
      %v2085 = vrot.slane %v1821, 7
      %v2086 = vsel %vm1258, %v2083, %v2085
      %v2087 = vrot.slane %v1822, 7
      %v2088 = vrot.slane %v1823, 7
      %v2089 = vsel %vm1258, %v2087, %v2088
      %v2090 = vrot.slane %v1824, 7
      %v2091 = vsel %vm1258, %v2088, %v2090
      %v2092 = vrot.slane %v1825, 7
      %v2093 = vsel %vm1258, %v2090, %v2092
      %v2094 = vrot.slane %v1826, 7
      %v2095 = vrot.slane %v1827, 7
      %v2096 = vsel %vm1258, %v2094, %v2095
      %v2097 = vrot.slane %v1828, 7
      %v2098 = vsel %vm1258, %v2095, %v2097
      %v2099 = vrot.slane %v1829, 7
      %v2100 = vsel %vm1258, %v2097, %v2099
      %v2101 = vrot.slane %v1830, 7
      %v2102 = vrot.slane %v1831, 7
      %v2103 = vsel %vm1258, %v2101, %v2102
      %v2104 = vrot.slane %v1832, 7
      %v2105 = vsel %vm1258, %v2102, %v2104
      %v2106 = vrot.slane %v1833, 7
      %v2107 = vsel %vm1258, %v2104, %v2106
      %v2108 = vrot.slane %v1834, 7
      %v2109 = vrot.slane %v1835, 7
      %v2110 = vsel %vm1258, %v2108, %v2109
      %v2111 = vrot.slane %v1836, 7
      %v2112 = vsel %vm1258, %v2109, %v2111
      %v2113 = vrot.slane %v1837, 7
      %v2114 = vsel %vm1258, %v2111, %v2113
      %v2115 = vrot.slane %v1838, 7
      %v2116 = vrot.slane %v1839, 7
      %v2117 = vsel %vm1258, %v2115, %v2116
      %v2118 = vrot.slane %v1840, 7
      %v2119 = vsel %vm1258, %v2116, %v2118
      %v2120 = vrot.slane %v1841, 7
      %v2121 = vsel %vm1258, %v2118, %v2120
      %v2122 = vrot.slane %v1842, 7
      %v2123 = vrot.slane %v1843, 7
      %v2124 = vsel %vm1258, %v2122, %v2123
      %v2125 = vrot.slane %v1844, 7
      %v2126 = vsel %vm1258, %v2123, %v2125
      %v2127 = vrot.slane %v1845, 7
      %v2128 = vsel %vm1258, %v2125, %v2127
      %v2129 = vrot.slane %v1846, 7
      %v2130 = vrot.slane %v1847, 7
      %v2131 = vsel %vm1258, %v2129, %v2130
      %v2132 = vrot.slane %v1848, 7
      %v2133 = vsel %vm1258, %v2130, %v2132
      %v2134 = vrot.slane %v1849, 7
      %v2135 = vsel %vm1258, %v2132, %v2134
      %v2136 = vrot.slane %v1850, 7
      %v2137 = vrot.slane %v1851, 7
      %v2138 = vsel %vm1258, %v2136, %v2137
      %v2139 = vrot.slane %v1852, 7
      %v2140 = vsel %vm1258, %v2137, %v2139
      %v2141 = vrot.slane %v1853, 7
      %v2142 = vsel %vm1258, %v2139, %v2141
      %v2143 = vrot.slane %v1854, 7
      %v2144 = vrot.slane %v1855, 7
      %v2145 = vsel %vm1258, %v2143, %v2144
      %v2146 = vrot.slane %v1856, 7
      %v2147 = vsel %vm1258, %v2144, %v2146
      %v2148 = vrot.slane %v1857, 7
      %v2149 = vsel %vm1258, %v2146, %v2148
      %v2150 = vrot.slane %v1858, 7
      %v2151 = vrot.slane %v1859, 7
      %v2152 = vsel %vm1258, %v2150, %v2151
      %v2153 = vrot.slane %v1860, 7
      %v2154 = vsel %vm1258, %v2151, %v2153
      %v2155 = vrot.slane %v1861, 7
      %v2156 = vsel %vm1258, %v2153, %v2155
      %v2157 = vrot.slane %v1862, 7
      %v2158 = vrot.slane %v1863, 7
      %v2159 = vsel %vm1258, %v2157, %v2158
      %v2160 = vrot.slane %v1864, 7
      %v2161 = vsel %vm1258, %v2158, %v2160
      %v2162 = vrot.slane %v1865, 7
      %v2163 = vsel %vm1258, %v2160, %v2162
      %v2164 = vrot.slane %v1866, 7
      %v2165 = vrot.slane %v1867, 7
      %v2166 = vsel %vm1258, %v2164, %v2165
      %v2167 = vrot.slane %v1868, 7
      %v2168 = vsel %vm1258, %v2165, %v2167
      %v2169 = vrot.slane %v1869, 7
      %v2170 = vsel %vm1258, %v2167, %v2169
      %v2171 = vrot.slane %v1870, 7
      %v2172 = vrot.slane %v1871, 7
      %v2173 = vsel %vm1258, %v2171, %v2172
      %v2174 = vrot.slane %v1872, 7
      %v2175 = vsel %vm1258, %v2172, %v2174
      %v2176 = vrot.slane %v1873, 7
      %v2177 = vsel %vm1258, %v2174, %v2176
      %v2178 = vrot.slane %v1874, 7
      %v2179 = vrot.slane %v1875, 7
      %v2180 = vsel %vm1258, %v2178, %v2179
      %v2181 = vrot.slane %v1876, 7
      %v2182 = vsel %vm1258, %v2179, %v2181
      %v2183 = vrot.slane %v1877, 7
      %v2184 = vsel %vm1258, %v2181, %v2183
      %v2185 = vrot.slane %v1878, 7
      %v2186 = vrot.slane %v1879, 7
      %v2187 = vsel %vm1258, %v2185, %v2186
      %v2188 = vrot.slane %v1880, 7
      %v2189 = vsel %vm1258, %v2186, %v2188
      %v2190 = vrot.slane %v1881, 7
      %v2191 = vsel %vm1258, %v2188, %v2190
      %v2192 = vrot.slane %v1882, 7
      %v2193 = vrot.slane %v1883, 7
      %v2194 = vsel %vm1258, %v2192, %v2193
      %v2195 = vrot.slane %v1884, 7
      %v2196 = vsel %vm1258, %v2193, %v2195
      %v2197 = vrot.slane %v1885, 7
      %v2198 = vsel %vm1258, %v2195, %v2197
      %v2199 = vrot.slane %v1886, 7
      %v2200 = vrot.slane %v1887, 7
      %v2201 = vsel %vm1258, %v2199, %v2200
      %v2202 = vrot.slane %v1888, 7
      %v2203 = vsel %vm1258, %v2200, %v2202
      %v2204 = vrot.slane %v1889, 7
      %v2205 = vsel %vm1258, %v2202, %v2204
      %v2206 = vrot.slane %v1890, 7
      %v2207 = vrot.slane %v1891, 7
      %v2208 = vsel %vm1258, %v2206, %v2207
      %v2209 = vrot.slane %v1892, 7
      %v2210 = vsel %vm1258, %v2207, %v2209
      %v2211 = vrot.slane %v1893, 7
      %v2212 = vsel %vm1258, %v2209, %v2211
      %v2213 = vrot.slane %v1894, 7
      %v2214 = vrot.slane %v1895, 7
      %v2215 = vsel %vm1258, %v2213, %v2214
      %v2216 = vrot.slane %v1896, 7
      %v2217 = vsel %vm1258, %v2214, %v2216
      %v2218 = vrot.slane %v1897, 7
      %v2219 = vsel %vm1258, %v2216, %v2218
      %v2220 = vrot.slane %v1898, 7
      %v2221 = vrot.slane %v1899, 7
      %v2222 = vsel %vm1258, %v2220, %v2221
      %v2223 = vrot.slane %v1900, 7
      %v2224 = vsel %vm1258, %v2221, %v2223
      %v2225 = vrot.slane %v1901, 7
      %v2226 = vsel %vm1258, %v2223, %v2225
      %v2227 = vrot.slane %v1902, 7
      %v2228 = vrot.slane %v1903, 7
      %v2229 = vsel %vm1258, %v2227, %v2228
      %v2230 = vrot.slane %v1904, 7
      %v2231 = vsel %vm1258, %v2228, %v2230
      %v2232 = vrot.slane %v1905, 7
      %v2233 = vsel %vm1258, %v2230, %v2232
      %v2234 = vrot.slane %v1906, 7
      %v2235 = vrot.slane %v1907, 7
      %v2236 = vsel %vm1258, %v2234, %v2235
      %v2237 = vrot.slane %v1908, 7
      %v2238 = vsel %vm1258, %v2235, %v2237
      %v2239 = vrot.slane %v1909, 7
      %v2240 = vsel %vm1258, %v2237, %v2239
      %v2241 = vrot.slane %v1910, 7
      %v2242 = vrot.slane %v1911, 7
      %v2243 = vsel %vm1258, %v2241, %v2242
      %v2244 = vrot.slane %v1912, 7
      %v2245 = vsel %vm1258, %v2242, %v2244
      %v2246 = vrot.slane %v1913, 7
      %v2247 = vsel %vm1258, %v2244, %v2246
      %v2248 = vrot.slane %v1914, 7
      %v2249 = vrot.slane %v1915, 7
      %v2250 = vsel %vm1258, %v2248, %v2249
      %v2251 = vrot.slane %v1916, 7
      %v2252 = vsel %vm1258, %v2249, %v2251
      %v2253 = vrot.slane %v1917, 7
      %v2254 = vsel %vm1258, %v2251, %v2253
      %v2255 = vrot.slane %v1918, 7
      %v2256 = vrot.slane %v1919, 7
      %v2257 = vsel %vm1258, %v2255, %v2256
      %v2258 = vrot.slane %v1920, 7
      %v2259 = vsel %vm1258, %v2256, %v2258
      %v2260 = vrot.slane %v1921, 7
      %v2261 = vsel %vm1258, %v2258, %v2260
      %v2262 = vrot.slane %v1922, 7
      %v2263 = vrot.slane %v1923, 7
      %v2264 = vsel %vm1258, %v2262, %v2263
      %v2265 = vrot.slane %v1924, 7
      %v2266 = vsel %vm1258, %v2263, %v2265
      %v2267 = vrot.slane %v1925, 7
      %v2268 = vsel %vm1258, %v2265, %v2267
      %v2269 = vrot.slane %v1926, 7
      %v2270 = vrot.slane %v1927, 7
      %v2271 = vsel %vm1258, %v2269, %v2270
      %v2272 = vrot.slane %v1928, 7
      %v2273 = vsel %vm1258, %v2270, %v2272
      %v2274 = vrot.slane %v1929, 7
      %v2275 = vsel %vm1258, %v2272, %v2274
      %v2276 = vrot.slane %v1930, 7
      %v2277 = vrot.slane %v1931, 7
      %v2278 = vsel %vm1258, %v2276, %v2277
      %v2279 = vrot.slane %v1932, 7
      %v2280 = vsel %vm1258, %v2277, %v2279
      %v2281 = vrot.slane %v1933, 7
      %v2282 = vsel %vm1258, %v2279, %v2281
      %v2283 = vrot.slane %v1934, 7
      %v2284 = vrot.slane %v1935, 7
      %v2285 = vsel %vm1258, %v2283, %v2284
      %v2286 = vrot.slane %v1936, 7
      %v2287 = vsel %vm1258, %v2284, %v2286
      %v2288 = vrot.slane %v1937, 7
      %v2289 = vsel %vm1258, %v2286, %v2288
      %v2418 = vsel %vm1258, 0.0, %v2066
      %v2419 = vsel %vm1258, 0.0, %v2073
      %v2420 = vsel %vm1258, 0.0, %v2080
      %v2421 = vsel %vm1258, 0.0, %v2087
      %v2422 = vsel %vm1258, 0.0, %v2094
      %v2423 = vsel %vm1258, 0.0, %v2101
      %v2424 = vsel %vm1258, 0.0, %v2108
      %v2425 = vsel %vm1258, 0.0, %v2115
      %v2426 = vsel %vm1258, 0.0, %v2122
      %v2427 = vsel %vm1258, 0.0, %v2129
      %v2428 = vsel %vm1258, 0.0, %v2136
      %v2429 = vsel %vm1258, 0.0, %v2143
      %v2430 = vsel %vm1258, 0.0, %v2150
      %v2431 = vsel %vm1258, 0.0, %v2157
      %v2432 = vsel %vm1258, 0.0, %v2164
      %v2433 = vsel %vm1258, 0.0, %v2171
      %v2434 = vsel %vm1258, 0.0, %v2178
      %v2435 = vsel %vm1258, 0.0, %v2185
      %v2436 = vsel %vm1258, 0.0, %v2192
      %v2437 = vsel %vm1258, 0.0, %v2199
      %v2438 = vsel %vm1258, 0.0, %v2206
      %v2439 = vsel %vm1258, 0.0, %v2213
      %v2440 = vsel %vm1258, 0.0, %v2220
      %v2441 = vsel %vm1258, 0.0, %v2227
      %v2442 = vsel %vm1258, 0.0, %v2234
      %v2443 = vsel %vm1258, 0.0, %v2241
      %v2444 = vsel %vm1258, 0.0, %v2248
      %v2445 = vsel %vm1258, 0.0, %v2255
      %v2446 = vsel %vm1258, 0.0, %v2262
      %v2447 = vsel %vm1258, 0.0, %v2269
      %v2448 = vsel %vm1258, 0.0, %v2276
      %v2449 = vsel %vm1258, 0.0, %v2283
      %vm2450 = vcmask 1046528
      %v2451 = vrot.slane %v1810, 1
      %v2452 = vrot.slane %v1811, 1
      %v2453 = vsel %vm2450, %v2451, %v2452
      %v2454 = vrot.slane %v1812, 1
      %v2455 = vsel %vm2450, %v2452, %v2454
      %v2456 = vrot.slane %v1813, 1
      %v2457 = vsel %vm2450, %v2454, %v2456
      %v2458 = vrot.slane %v1814, 1
      %v2459 = vrot.slane %v1815, 1
      %v2460 = vsel %vm2450, %v2458, %v2459
      %v2461 = vrot.slane %v1816, 1
      %v2462 = vsel %vm2450, %v2459, %v2461
      %v2463 = vrot.slane %v1817, 1
      %v2464 = vsel %vm2450, %v2461, %v2463
      %v2465 = vrot.slane %v1818, 1
      %v2466 = vrot.slane %v1819, 1
      %v2467 = vsel %vm2450, %v2465, %v2466
      %v2468 = vrot.slane %v1820, 1
      %v2469 = vsel %vm2450, %v2466, %v2468
      %v2470 = vrot.slane %v1821, 1
      %v2471 = vsel %vm2450, %v2468, %v2470
      %v2472 = vrot.slane %v1822, 1
      %v2473 = vrot.slane %v1823, 1
      %v2474 = vsel %vm2450, %v2472, %v2473
      %v2475 = vrot.slane %v1824, 1
      %v2476 = vsel %vm2450, %v2473, %v2475
      %v2477 = vrot.slane %v1825, 1
      %v2478 = vsel %vm2450, %v2475, %v2477
      %v2479 = vrot.slane %v1826, 1
      %v2480 = vrot.slane %v1827, 1
      %v2481 = vsel %vm2450, %v2479, %v2480
      %v2482 = vrot.slane %v1828, 1
      %v2483 = vsel %vm2450, %v2480, %v2482
      %v2484 = vrot.slane %v1829, 1
      %v2485 = vsel %vm2450, %v2482, %v2484
      %v2486 = vrot.slane %v1830, 1
      %v2487 = vrot.slane %v1831, 1
      %v2488 = vsel %vm2450, %v2486, %v2487
      %v2489 = vrot.slane %v1832, 1
      %v2490 = vsel %vm2450, %v2487, %v2489
      %v2491 = vrot.slane %v1833, 1
      %v2492 = vsel %vm2450, %v2489, %v2491
      %v2493 = vrot.slane %v1834, 1
      %v2494 = vrot.slane %v1835, 1
      %v2495 = vsel %vm2450, %v2493, %v2494
      %v2496 = vrot.slane %v1836, 1
      %v2497 = vsel %vm2450, %v2494, %v2496
      %v2498 = vrot.slane %v1837, 1
      %v2499 = vsel %vm2450, %v2496, %v2498
      %v2500 = vrot.slane %v1838, 1
      %v2501 = vrot.slane %v1839, 1
      %v2502 = vsel %vm2450, %v2500, %v2501
      %v2503 = vrot.slane %v1840, 1
      %v2504 = vsel %vm2450, %v2501, %v2503
      %v2505 = vrot.slane %v1841, 1
      %v2506 = vsel %vm2450, %v2503, %v2505
      %v2507 = vrot.slane %v1842, 1
      %v2508 = vrot.slane %v1843, 1
      %v2509 = vsel %vm2450, %v2507, %v2508
      %v2510 = vrot.slane %v1844, 1
      %v2511 = vsel %vm2450, %v2508, %v2510
      %v2512 = vrot.slane %v1845, 1
      %v2513 = vsel %vm2450, %v2510, %v2512
      %v2514 = vrot.slane %v1846, 1
      %v2515 = vrot.slane %v1847, 1
      %v2516 = vsel %vm2450, %v2514, %v2515
      %v2517 = vrot.slane %v1848, 1
      %v2518 = vsel %vm2450, %v2515, %v2517
      %v2519 = vrot.slane %v1849, 1
      %v2520 = vsel %vm2450, %v2517, %v2519
      %v2521 = vrot.slane %v1850, 1
      %v2522 = vrot.slane %v1851, 1
      %v2523 = vsel %vm2450, %v2521, %v2522
      %v2524 = vrot.slane %v1852, 1
      %v2525 = vsel %vm2450, %v2522, %v2524
      %v2526 = vrot.slane %v1853, 1
      %v2527 = vsel %vm2450, %v2524, %v2526
      %v2528 = vrot.slane %v1854, 1
      %v2529 = vrot.slane %v1855, 1
      %v2530 = vsel %vm2450, %v2528, %v2529
      %v2531 = vrot.slane %v1856, 1
      %v2532 = vsel %vm2450, %v2529, %v2531
      %v2533 = vrot.slane %v1857, 1
      %v2534 = vsel %vm2450, %v2531, %v2533
      %v2535 = vrot.slane %v1858, 1
      %v2536 = vrot.slane %v1859, 1
      %v2537 = vsel %vm2450, %v2535, %v2536
      %v2538 = vrot.slane %v1860, 1
      %v2539 = vsel %vm2450, %v2536, %v2538
      %v2540 = vrot.slane %v1861, 1
      %v2541 = vsel %vm2450, %v2538, %v2540
      %v2542 = vrot.slane %v1862, 1
      %v2543 = vrot.slane %v1863, 1
      %v2544 = vsel %vm2450, %v2542, %v2543
      %v2545 = vrot.slane %v1864, 1
      %v2546 = vsel %vm2450, %v2543, %v2545
      %v2547 = vrot.slane %v1865, 1
      %v2548 = vsel %vm2450, %v2545, %v2547
      %v2549 = vrot.slane %v1866, 1
      %v2550 = vrot.slane %v1867, 1
      %v2551 = vsel %vm2450, %v2549, %v2550
      %v2552 = vrot.slane %v1868, 1
      %v2553 = vsel %vm2450, %v2550, %v2552
      %v2554 = vrot.slane %v1869, 1
      %v2555 = vsel %vm2450, %v2552, %v2554
      %v2556 = vrot.slane %v1870, 1
      %v2557 = vrot.slane %v1871, 1
      %v2558 = vsel %vm2450, %v2556, %v2557
      %v2559 = vrot.slane %v1872, 1
      %v2560 = vsel %vm2450, %v2557, %v2559
      %v2561 = vrot.slane %v1873, 1
      %v2562 = vsel %vm2450, %v2559, %v2561
      %v2563 = vrot.slane %v1874, 1
      %v2564 = vrot.slane %v1875, 1
      %v2565 = vsel %vm2450, %v2563, %v2564
      %v2566 = vrot.slane %v1876, 1
      %v2567 = vsel %vm2450, %v2564, %v2566
      %v2568 = vrot.slane %v1877, 1
      %v2569 = vsel %vm2450, %v2566, %v2568
      %v2570 = vrot.slane %v1878, 1
      %v2571 = vrot.slane %v1879, 1
      %v2572 = vsel %vm2450, %v2570, %v2571
      %v2573 = vrot.slane %v1880, 1
      %v2574 = vsel %vm2450, %v2571, %v2573
      %v2575 = vrot.slane %v1881, 1
      %v2576 = vsel %vm2450, %v2573, %v2575
      %v2577 = vrot.slane %v1882, 1
      %v2578 = vrot.slane %v1883, 1
      %v2579 = vsel %vm2450, %v2577, %v2578
      %v2580 = vrot.slane %v1884, 1
      %v2581 = vsel %vm2450, %v2578, %v2580
      %v2582 = vrot.slane %v1885, 1
      %v2583 = vsel %vm2450, %v2580, %v2582
      %v2584 = vrot.slane %v1886, 1
      %v2585 = vrot.slane %v1887, 1
      %v2586 = vsel %vm2450, %v2584, %v2585
      %v2587 = vrot.slane %v1888, 1
      %v2588 = vsel %vm2450, %v2585, %v2587
      %v2589 = vrot.slane %v1889, 1
      %v2590 = vsel %vm2450, %v2587, %v2589
      %v2591 = vrot.slane %v1890, 1
      %v2592 = vrot.slane %v1891, 1
      %v2593 = vsel %vm2450, %v2591, %v2592
      %v2594 = vrot.slane %v1892, 1
      %v2595 = vsel %vm2450, %v2592, %v2594
      %v2596 = vrot.slane %v1893, 1
      %v2597 = vsel %vm2450, %v2594, %v2596
      %v2598 = vrot.slane %v1894, 1
      %v2599 = vrot.slane %v1895, 1
      %v2600 = vsel %vm2450, %v2598, %v2599
      %v2601 = vrot.slane %v1896, 1
      %v2602 = vsel %vm2450, %v2599, %v2601
      %v2603 = vrot.slane %v1897, 1
      %v2604 = vsel %vm2450, %v2601, %v2603
      %v2605 = vrot.slane %v1898, 1
      %v2606 = vrot.slane %v1899, 1
      %v2607 = vsel %vm2450, %v2605, %v2606
      %v2608 = vrot.slane %v1900, 1
      %v2609 = vsel %vm2450, %v2606, %v2608
      %v2610 = vrot.slane %v1901, 1
      %v2611 = vsel %vm2450, %v2608, %v2610
      %v2612 = vrot.slane %v1902, 1
      %v2613 = vrot.slane %v1903, 1
      %v2614 = vsel %vm2450, %v2612, %v2613
      %v2615 = vrot.slane %v1904, 1
      %v2616 = vsel %vm2450, %v2613, %v2615
      %v2617 = vrot.slane %v1905, 1
      %v2618 = vsel %vm2450, %v2615, %v2617
      %v2619 = vrot.slane %v1906, 1
      %v2620 = vrot.slane %v1907, 1
      %v2621 = vsel %vm2450, %v2619, %v2620
      %v2622 = vrot.slane %v1908, 1
      %v2623 = vsel %vm2450, %v2620, %v2622
      %v2624 = vrot.slane %v1909, 1
      %v2625 = vsel %vm2450, %v2622, %v2624
      %v2626 = vrot.slane %v1910, 1
      %v2627 = vrot.slane %v1911, 1
      %v2628 = vsel %vm2450, %v2626, %v2627
      %v2629 = vrot.slane %v1912, 1
      %v2630 = vsel %vm2450, %v2627, %v2629
      %v2631 = vrot.slane %v1913, 1
      %v2632 = vsel %vm2450, %v2629, %v2631
      %v2633 = vrot.slane %v1914, 1
      %v2634 = vrot.slane %v1915, 1
      %v2635 = vsel %vm2450, %v2633, %v2634
      %v2636 = vrot.slane %v1916, 1
      %v2637 = vsel %vm2450, %v2634, %v2636
      %v2638 = vrot.slane %v1917, 1
      %v2639 = vsel %vm2450, %v2636, %v2638
      %v2640 = vrot.slane %v1918, 1
      %v2641 = vrot.slane %v1919, 1
      %v2642 = vsel %vm2450, %v2640, %v2641
      %v2643 = vrot.slane %v1920, 1
      %v2644 = vsel %vm2450, %v2641, %v2643
      %v2645 = vrot.slane %v1921, 1
      %v2646 = vsel %vm2450, %v2643, %v2645
      %v2647 = vrot.slane %v1922, 1
      %v2648 = vrot.slane %v1923, 1
      %v2649 = vsel %vm2450, %v2647, %v2648
      %v2650 = vrot.slane %v1924, 1
      %v2651 = vsel %vm2450, %v2648, %v2650
      %v2652 = vrot.slane %v1925, 1
      %v2653 = vsel %vm2450, %v2650, %v2652
      %v2654 = vrot.slane %v1926, 1
      %v2655 = vrot.slane %v1927, 1
      %v2656 = vsel %vm2450, %v2654, %v2655
      %v2657 = vrot.slane %v1928, 1
      %v2658 = vsel %vm2450, %v2655, %v2657
      %v2659 = vrot.slane %v1929, 1
      %v2660 = vsel %vm2450, %v2657, %v2659
      %v2661 = vrot.slane %v1930, 1
      %v2662 = vrot.slane %v1931, 1
      %v2663 = vsel %vm2450, %v2661, %v2662
      %v2664 = vrot.slane %v1932, 1
      %v2665 = vsel %vm2450, %v2662, %v2664
      %v2666 = vrot.slane %v1933, 1
      %v2667 = vsel %vm2450, %v2664, %v2666
      %v2668 = vrot.slane %v1934, 1
      %v2669 = vrot.slane %v1935, 1
      %v2670 = vsel %vm2450, %v2668, %v2669
      %v2671 = vrot.slane %v1936, 1
      %v2672 = vsel %vm2450, %v2669, %v2671
      %v2673 = vrot.slane %v1937, 1
      %v2674 = vsel %vm2450, %v2671, %v2673
      %v2803 = vsel %vm2450, %v2456, 0.0
      %v2804 = vsel %vm2450, %v2463, 0.0
      %v2805 = vsel %vm2450, %v2470, 0.0
      %v2806 = vsel %vm2450, %v2477, 0.0
      %v2807 = vsel %vm2450, %v2484, 0.0
      %v2808 = vsel %vm2450, %v2491, 0.0
      %v2809 = vsel %vm2450, %v2498, 0.0
      %v2810 = vsel %vm2450, %v2505, 0.0
      %v2811 = vsel %vm2450, %v2512, 0.0
      %v2812 = vsel %vm2450, %v2519, 0.0
      %v2813 = vsel %vm2450, %v2526, 0.0
      %v2814 = vsel %vm2450, %v2533, 0.0
      %v2815 = vsel %vm2450, %v2540, 0.0
      %v2816 = vsel %vm2450, %v2547, 0.0
      %v2817 = vsel %vm2450, %v2554, 0.0
      %v2818 = vsel %vm2450, %v2561, 0.0
      %v2819 = vsel %vm2450, %v2568, 0.0
      %v2820 = vsel %vm2450, %v2575, 0.0
      %v2821 = vsel %vm2450, %v2582, 0.0
      %v2822 = vsel %vm2450, %v2589, 0.0
      %v2823 = vsel %vm2450, %v2596, 0.0
      %v2824 = vsel %vm2450, %v2603, 0.0
      %v2825 = vsel %vm2450, %v2610, 0.0
      %v2826 = vsel %vm2450, %v2617, 0.0
      %v2827 = vsel %vm2450, %v2624, 0.0
      %v2828 = vsel %vm2450, %v2631, 0.0
      %v2829 = vsel %vm2450, %v2638, 0.0
      %v2830 = vsel %vm2450, %v2645, 0.0
      %v2831 = vsel %vm2450, %v2652, 0.0
      %v2832 = vsel %vm2450, %v2659, 0.0
      %v2833 = vsel %vm2450, %v2666, 0.0
      %v2834 = vsel %vm2450, %v2673, 0.0
      %v2835 = vmax.f32 %v2418, %v2453
      %v2836 = vmax.f32 %v2068, %v2455
      %v2837 = vmax.f32 %v2070, %v2457
      %v2838 = vmax.f32 %v2072, %v2803
      %v2839 = vmax.f32 %v2419, %v2460
      %v2840 = vmax.f32 %v2075, %v2462
      %v2841 = vmax.f32 %v2077, %v2464
      %v2842 = vmax.f32 %v2079, %v2804
      %v2843 = vmax.f32 %v2420, %v2467
      %v2844 = vmax.f32 %v2082, %v2469
      %v2845 = vmax.f32 %v2084, %v2471
      %v2846 = vmax.f32 %v2086, %v2805
      %v2847 = vmax.f32 %v2421, %v2474
      %v2848 = vmax.f32 %v2089, %v2476
      %v2849 = vmax.f32 %v2091, %v2478
      %v2850 = vmax.f32 %v2093, %v2806
      %v2851 = vmax.f32 %v2422, %v2481
      %v2852 = vmax.f32 %v2096, %v2483
      %v2853 = vmax.f32 %v2098, %v2485
      %v2854 = vmax.f32 %v2100, %v2807
      %v2855 = vmax.f32 %v2423, %v2488
      %v2856 = vmax.f32 %v2103, %v2490
      %v2857 = vmax.f32 %v2105, %v2492
      %v2858 = vmax.f32 %v2107, %v2808
      %v2859 = vmax.f32 %v2424, %v2495
      %v2860 = vmax.f32 %v2110, %v2497
      %v2861 = vmax.f32 %v2112, %v2499
      %v2862 = vmax.f32 %v2114, %v2809
      %v2863 = vmax.f32 %v2425, %v2502
      %v2864 = vmax.f32 %v2117, %v2504
      %v2865 = vmax.f32 %v2119, %v2506
      %v2866 = vmax.f32 %v2121, %v2810
      %v2867 = vmax.f32 %v2426, %v2509
      %v2868 = vmax.f32 %v2124, %v2511
      %v2869 = vmax.f32 %v2126, %v2513
      %v2870 = vmax.f32 %v2128, %v2811
      %v2871 = vmax.f32 %v2427, %v2516
      %v2872 = vmax.f32 %v2131, %v2518
      %v2873 = vmax.f32 %v2133, %v2520
      %v2874 = vmax.f32 %v2135, %v2812
      %v2875 = vmax.f32 %v2428, %v2523
      %v2876 = vmax.f32 %v2138, %v2525
      %v2877 = vmax.f32 %v2140, %v2527
      %v2878 = vmax.f32 %v2142, %v2813
      %v2879 = vmax.f32 %v2429, %v2530
      %v2880 = vmax.f32 %v2145, %v2532
      %v2881 = vmax.f32 %v2147, %v2534
      %v2882 = vmax.f32 %v2149, %v2814
      %v2883 = vmax.f32 %v2430, %v2537
      %v2884 = vmax.f32 %v2152, %v2539
      %v2885 = vmax.f32 %v2154, %v2541
      %v2886 = vmax.f32 %v2156, %v2815
      %v2887 = vmax.f32 %v2431, %v2544
      %v2888 = vmax.f32 %v2159, %v2546
      %v2889 = vmax.f32 %v2161, %v2548
      %v2890 = vmax.f32 %v2163, %v2816
      %v2891 = vmax.f32 %v2432, %v2551
      %v2892 = vmax.f32 %v2166, %v2553
      %v2893 = vmax.f32 %v2168, %v2555
      %v2894 = vmax.f32 %v2170, %v2817
      %v2895 = vmax.f32 %v2433, %v2558
      %v2896 = vmax.f32 %v2173, %v2560
      %v2897 = vmax.f32 %v2175, %v2562
      %v2898 = vmax.f32 %v2177, %v2818
      %v2899 = vmax.f32 %v2434, %v2565
      %v2900 = vmax.f32 %v2180, %v2567
      %v2901 = vmax.f32 %v2182, %v2569
      %v2902 = vmax.f32 %v2184, %v2819
      %v2903 = vmax.f32 %v2435, %v2572
      %v2904 = vmax.f32 %v2187, %v2574
      %v2905 = vmax.f32 %v2189, %v2576
      %v2906 = vmax.f32 %v2191, %v2820
      %v2907 = vmax.f32 %v2436, %v2579
      %v2908 = vmax.f32 %v2194, %v2581
      %v2909 = vmax.f32 %v2196, %v2583
      %v2910 = vmax.f32 %v2198, %v2821
      %v2911 = vmax.f32 %v2437, %v2586
      %v2912 = vmax.f32 %v2201, %v2588
      %v2913 = vmax.f32 %v2203, %v2590
      %v2914 = vmax.f32 %v2205, %v2822
      %v2915 = vmax.f32 %v2438, %v2593
      %v2916 = vmax.f32 %v2208, %v2595
      %v2917 = vmax.f32 %v2210, %v2597
      %v2918 = vmax.f32 %v2212, %v2823
      %v2919 = vmax.f32 %v2439, %v2600
      %v2920 = vmax.f32 %v2215, %v2602
      %v2921 = vmax.f32 %v2217, %v2604
      %v2922 = vmax.f32 %v2219, %v2824
      %v2923 = vmax.f32 %v2440, %v2607
      %v2924 = vmax.f32 %v2222, %v2609
      %v2925 = vmax.f32 %v2224, %v2611
      %v2926 = vmax.f32 %v2226, %v2825
      %v2927 = vmax.f32 %v2441, %v2614
      %v2928 = vmax.f32 %v2229, %v2616
      %v2929 = vmax.f32 %v2231, %v2618
      %v2930 = vmax.f32 %v2233, %v2826
      %v2931 = vmax.f32 %v2442, %v2621
      %v2932 = vmax.f32 %v2236, %v2623
      %v2933 = vmax.f32 %v2238, %v2625
      %v2934 = vmax.f32 %v2240, %v2827
      %v2935 = vmax.f32 %v2443, %v2628
      %v2936 = vmax.f32 %v2243, %v2630
      %v2937 = vmax.f32 %v2245, %v2632
      %v2938 = vmax.f32 %v2247, %v2828
      %v2939 = vmax.f32 %v2444, %v2635
      %v2940 = vmax.f32 %v2250, %v2637
      %v2941 = vmax.f32 %v2252, %v2639
      %v2942 = vmax.f32 %v2254, %v2829
      %v2943 = vmax.f32 %v2445, %v2642
      %v2944 = vmax.f32 %v2257, %v2644
      %v2945 = vmax.f32 %v2259, %v2646
      %v2946 = vmax.f32 %v2261, %v2830
      %v2947 = vmax.f32 %v2446, %v2649
      %v2948 = vmax.f32 %v2264, %v2651
      %v2949 = vmax.f32 %v2266, %v2653
      %v2950 = vmax.f32 %v2268, %v2831
      %v2951 = vmax.f32 %v2447, %v2656
      %v2952 = vmax.f32 %v2271, %v2658
      %v2953 = vmax.f32 %v2273, %v2660
      %v2954 = vmax.f32 %v2275, %v2832
      %v2955 = vmax.f32 %v2448, %v2663
      %v2956 = vmax.f32 %v2278, %v2665
      %v2957 = vmax.f32 %v2280, %v2667
      %v2958 = vmax.f32 %v2282, %v2833
      %v2959 = vmax.f32 %v2449, %v2670
      %v2960 = vmax.f32 %v2285, %v2672
      %v2961 = vmax.f32 %v2287, %v2674
      %v2962 = vmax.f32 %v2289, %v2834
      %v2963 = vmax.f32 %v1810, %v2835
      %v2964 = vmax.f32 %v1811, %v2836
      %v2965 = vmax.f32 %v1812, %v2837
      %v2966 = vmax.f32 %v1813, %v2838
      %v2967 = vmax.f32 %v1814, %v2839
      %v2968 = vmax.f32 %v1815, %v2840
      %v2969 = vmax.f32 %v1816, %v2841
      %v2970 = vmax.f32 %v1817, %v2842
      %v2971 = vmax.f32 %v1818, %v2843
      %v2972 = vmax.f32 %v1819, %v2844
      %v2973 = vmax.f32 %v1820, %v2845
      %v2974 = vmax.f32 %v1821, %v2846
      %v2975 = vmax.f32 %v1822, %v2847
      %v2976 = vmax.f32 %v1823, %v2848
      %v2977 = vmax.f32 %v1824, %v2849
      %v2978 = vmax.f32 %v1825, %v2850
      %v2979 = vmax.f32 %v1826, %v2851
      %v2980 = vmax.f32 %v1827, %v2852
      %v2981 = vmax.f32 %v1828, %v2853
      %v2982 = vmax.f32 %v1829, %v2854
      %v2983 = vmax.f32 %v1830, %v2855
      %v2984 = vmax.f32 %v1831, %v2856
      %v2985 = vmax.f32 %v1832, %v2857
      %v2986 = vmax.f32 %v1833, %v2858
      %v2987 = vmax.f32 %v1834, %v2859
      %v2988 = vmax.f32 %v1835, %v2860
      %v2989 = vmax.f32 %v1836, %v2861
      %v2990 = vmax.f32 %v1837, %v2862
      %v2991 = vmax.f32 %v1838, %v2863
      %v2992 = vmax.f32 %v1839, %v2864
      %v2993 = vmax.f32 %v1840, %v2865
      %v2994 = vmax.f32 %v1841, %v2866
      %v2995 = vmax.f32 %v1842, %v2867
      %v2996 = vmax.f32 %v1843, %v2868
      %v2997 = vmax.f32 %v1844, %v2869
      %v2998 = vmax.f32 %v1845, %v2870
      %v2999 = vmax.f32 %v1846, %v2871
      %v3000 = vmax.f32 %v1847, %v2872
      %v3001 = vmax.f32 %v1848, %v2873
      %v3002 = vmax.f32 %v1849, %v2874
      %v3003 = vmax.f32 %v1850, %v2875
      %v3004 = vmax.f32 %v1851, %v2876
      %v3005 = vmax.f32 %v1852, %v2877
      %v3006 = vmax.f32 %v1853, %v2878
      %v3007 = vmax.f32 %v1854, %v2879
      %v3008 = vmax.f32 %v1855, %v2880
      %v3009 = vmax.f32 %v1856, %v2881
      %v3010 = vmax.f32 %v1857, %v2882
      %v3011 = vmax.f32 %v1858, %v2883
      %v3012 = vmax.f32 %v1859, %v2884
      %v3013 = vmax.f32 %v1860, %v2885
      %v3014 = vmax.f32 %v1861, %v2886
      %v3015 = vmax.f32 %v1862, %v2887
      %v3016 = vmax.f32 %v1863, %v2888
      %v3017 = vmax.f32 %v1864, %v2889
      %v3018 = vmax.f32 %v1865, %v2890
      %v3019 = vmax.f32 %v1866, %v2891
      %v3020 = vmax.f32 %v1867, %v2892
      %v3021 = vmax.f32 %v1868, %v2893
      %v3022 = vmax.f32 %v1869, %v2894
      %v3023 = vmax.f32 %v1870, %v2895
      %v3024 = vmax.f32 %v1871, %v2896
      %v3025 = vmax.f32 %v1872, %v2897
      %v3026 = vmax.f32 %v1873, %v2898
      %v3027 = vmax.f32 %v1874, %v2899
      %v3028 = vmax.f32 %v1875, %v2900
      %v3029 = vmax.f32 %v1876, %v2901
      %v3030 = vmax.f32 %v1877, %v2902
      %v3031 = vmax.f32 %v1878, %v2903
      %v3032 = vmax.f32 %v1879, %v2904
      %v3033 = vmax.f32 %v1880, %v2905
      %v3034 = vmax.f32 %v1881, %v2906
      %v3035 = vmax.f32 %v1882, %v2907
      %v3036 = vmax.f32 %v1883, %v2908
      %v3037 = vmax.f32 %v1884, %v2909
      %v3038 = vmax.f32 %v1885, %v2910
      %v3039 = vmax.f32 %v1886, %v2911
      %v3040 = vmax.f32 %v1887, %v2912
      %v3041 = vmax.f32 %v1888, %v2913
      %v3042 = vmax.f32 %v1889, %v2914
      %v3043 = vmax.f32 %v1890, %v2915
      %v3044 = vmax.f32 %v1891, %v2916
      %v3045 = vmax.f32 %v1892, %v2917
      %v3046 = vmax.f32 %v1893, %v2918
      %v3047 = vmax.f32 %v1894, %v2919
      %v3048 = vmax.f32 %v1895, %v2920
      %v3049 = vmax.f32 %v1896, %v2921
      %v3050 = vmax.f32 %v1897, %v2922
      %v3051 = vmax.f32 %v1898, %v2923
      %v3052 = vmax.f32 %v1899, %v2924
      %v3053 = vmax.f32 %v1900, %v2925
      %v3054 = vmax.f32 %v1901, %v2926
      %v3055 = vmax.f32 %v1902, %v2927
      %v3056 = vmax.f32 %v1903, %v2928
      %v3057 = vmax.f32 %v1904, %v2929
      %v3058 = vmax.f32 %v1905, %v2930
      %v3059 = vmax.f32 %v1906, %v2931
      %v3060 = vmax.f32 %v1907, %v2932
      %v3061 = vmax.f32 %v1908, %v2933
      %v3062 = vmax.f32 %v1909, %v2934
      %v3063 = vmax.f32 %v1910, %v2935
      %v3064 = vmax.f32 %v1911, %v2936
      %v3065 = vmax.f32 %v1912, %v2937
      %v3066 = vmax.f32 %v1913, %v2938
      %v3067 = vmax.f32 %v1914, %v2939
      %v3068 = vmax.f32 %v1915, %v2940
      %v3069 = vmax.f32 %v1916, %v2941
      %v3070 = vmax.f32 %v1917, %v2942
      %v3071 = vmax.f32 %v1918, %v2943
      %v3072 = vmax.f32 %v1919, %v2944
      %v3073 = vmax.f32 %v1920, %v2945
      %v3074 = vmax.f32 %v1921, %v2946
      %v3075 = vmax.f32 %v1922, %v2947
      %v3076 = vmax.f32 %v1923, %v2948
      %v3077 = vmax.f32 %v1924, %v2949
      %v3078 = vmax.f32 %v1925, %v2950
      %v3079 = vmax.f32 %v1926, %v2951
      %v3080 = vmax.f32 %v1927, %v2952
      %v3081 = vmax.f32 %v1928, %v2953
      %v3082 = vmax.f32 %v1929, %v2954
      %v3083 = vmax.f32 %v1930, %v2955
      %v3084 = vmax.f32 %v1931, %v2956
      %v3085 = vmax.f32 %v1932, %v2957
      %v3086 = vmax.f32 %v1933, %v2958
      %v3087 = vmax.f32 %v1934, %v2959
      %v3088 = vmax.f32 %v1935, %v2960
      %v3089 = vmax.f32 %v1936, %v2961
      %v3090 = vmax.f32 %v1937, %v2962
      %vm3091 = vcmask 523264
      %3092 = vst.msk [vmem:[#allocation2] sm:$0xff] %vm3091, 0.0
      %3093 = vst.msk [vmem:[#allocation2 + $0x8] sm:$0xff] %vm3091, 0.0
      %3094 = vst.msk [vmem:[#allocation2 + $0x10] sm:$0xff] %vm3091, 0.0
      %3095 = vst.msk [vmem:[#allocation2 + $0x18] sm:$0xff] %vm3091, 0.0
      %3096 = vst.msk [vmem:[#allocation2 + $0x20] sm:$0xff] %vm3091, 0.0
      %3097 = vst.msk [vmem:[#allocation2 + $0x28] sm:$0xff] %vm3091, 0.0
      %3098 = vst.msk [vmem:[#allocation2 + $0x30] sm:$0xff] %vm3091, 0.0
      %3099 = vst.msk [vmem:[#allocation2 + $0x38] sm:$0xff] %vm3091, 0.0
      %s3100 = scalar_lea.vmem [#allocation2], 64
      %3101 = vst.msk [vmem:[%s3100] sm:$0xff] %vm3091, %v2963
      %3102 = vst.msk [vmem:[%s3100 + $0x8] sm:$0xff] %vm3091, %v2964
      %3103 = vst.msk [vmem:[%s3100 + $0x10] sm:$0xff] %vm3091, %v2965
      %3104 = vst.msk [vmem:[%s3100 + $0x18] sm:$0xff] %vm3091, %v2966
      %3105 = vst.msk [vmem:[%s3100 + $0x20] sm:$0xff] %vm3091, %v2967
      %3106 = vst.msk [vmem:[%s3100 + $0x28] sm:$0xff] %vm3091, %v2968
      %3107 = vst.msk [vmem:[%s3100 + $0x30] sm:$0xff] %vm3091, %v2969
      %3108 = vst.msk [vmem:[%s3100 + $0x38] sm:$0xff] %vm3091, %v2970
      %3109 = vst.msk [vmem:[%s3100 + $0x40] sm:$0xff] %vm3091, %v2971
      %3110 = vst.msk [vmem:[%s3100 + $0x48] sm:$0xff] %vm3091, %v2972
      %3111 = vst.msk [vmem:[%s3100 + $0x50] sm:$0xff] %vm3091, %v2973
      %3112 = vst.msk [vmem:[%s3100 + $0x58] sm:$0xff] %vm3091, %v2974
      %3113 = vst.msk [vmem:[%s3100 + $0x60] sm:$0xff] %vm3091, %v2975
      %3114 = vst.msk [vmem:[%s3100 + $0x68] sm:$0xff] %vm3091, %v2976
      %3115 = vst.msk [vmem:[%s3100 + $0x70] sm:$0xff] %vm3091, %v2977
      %3116 = vst.msk [vmem:[%s3100 + $0x78] sm:$0xff] %vm3091, %v2978
      %3117 = vst.msk [vmem:[%s3100 + $0x80] sm:$0xff] %vm3091, %v2979
      %3118 = vst.msk [vmem:[%s3100 + $0x88] sm:$0xff] %vm3091, %v2980
      %3119 = vst.msk [vmem:[%s3100 + $0x90] sm:$0xff] %vm3091, %v2981
      %3120 = vst.msk [vmem:[%s3100 + $0x98] sm:$0xff] %vm3091, %v2982
      %3121 = vst.msk [vmem:[%s3100 + $0xa0] sm:$0xff] %vm3091, %v2983
      %3122 = vst.msk [vmem:[%s3100 + $0xa8] sm:$0xff] %vm3091, %v2984
      %3123 = vst.msk [vmem:[%s3100 + $0xb0] sm:$0xff] %vm3091, %v2985
      %3124 = vst.msk [vmem:[%s3100 + $0xb8] sm:$0xff] %vm3091, %v2986
      %3125 = vst.msk [vmem:[%s3100 + $0xc0] sm:$0xff] %vm3091, %v2987
      %3126 = vst.msk [vmem:[%s3100 + $0xc8] sm:$0xff] %vm3091, %v2988
      %3127 = vst.msk [vmem:[%s3100 + $0xd0] sm:$0xff] %vm3091, %v2989
      %3128 = vst.msk [vmem:[%s3100 + $0xd8] sm:$0xff] %vm3091, %v2990
      %3129 = vst.msk [vmem:[%s3100 + $0xe0] sm:$0xff] %vm3091, %v2991
      %3130 = vst.msk [vmem:[%s3100 + $0xe8] sm:$0xff] %vm3091, %v2992
      %3131 = vst.msk [vmem:[%s3100 + $0xf0] sm:$0xff] %vm3091, %v2993
      %3132 = vst.msk [vmem:[%s3100 + $0xf8] sm:$0xff] %vm3091, %v2994
      %3133 = vst.msk [vmem:[%s3100 + $0x100] sm:$0xff] %vm3091, %v2995
      %3134 = vst.msk [vmem:[%s3100 + $0x108] sm:$0xff] %vm3091, %v2996
      %3135 = vst.msk [vmem:[%s3100 + $0x110] sm:$0xff] %vm3091, %v2997
      %3136 = vst.msk [vmem:[%s3100 + $0x118] sm:$0xff] %vm3091, %v2998
      %3137 = vst.msk [vmem:[%s3100 + $0x120] sm:$0xff] %vm3091, %v2999
      %3138 = vst.msk [vmem:[%s3100 + $0x128] sm:$0xff] %vm3091, %v3000
      %3139 = vst.msk [vmem:[%s3100 + $0x130] sm:$0xff] %vm3091, %v3001
      %3140 = vst.msk [vmem:[%s3100 + $0x138] sm:$0xff] %vm3091, %v3002
      %3141 = vst.msk [vmem:[%s3100 + $0x140] sm:$0xff] %vm3091, %v3003
      %3142 = vst.msk [vmem:[%s3100 + $0x148] sm:$0xff] %vm3091, %v3004
      %3143 = vst.msk [vmem:[%s3100 + $0x150] sm:$0xff] %vm3091, %v3005
      %3144 = vst.msk [vmem:[%s3100 + $0x158] sm:$0xff] %vm3091, %v3006
      %3145 = vst.msk [vmem:[%s3100 + $0x160] sm:$0xff] %vm3091, %v3007
      %3146 = vst.msk [vmem:[%s3100 + $0x168] sm:$0xff] %vm3091, %v3008
      %3147 = vst.msk [vmem:[%s3100 + $0x170] sm:$0xff] %vm3091, %v3009
      %3148 = vst.msk [vmem:[%s3100 + $0x178] sm:$0xff] %vm3091, %v3010
      %3149 = vst.msk [vmem:[%s3100 + $0x180] sm:$0xff] %vm3091, %v3011
      %3150 = vst.msk [vmem:[%s3100 + $0x188] sm:$0xff] %vm3091, %v3012
      %3151 = vst.msk [vmem:[%s3100 + $0x190] sm:$0xff] %vm3091, %v3013
      %3152 = vst.msk [vmem:[%s3100 + $0x198] sm:$0xff] %vm3091, %v3014
      %3153 = vst.msk [vmem:[%s3100 + $0x1a0] sm:$0xff] %vm3091, %v3015
      %3154 = vst.msk [vmem:[%s3100 + $0x1a8] sm:$0xff] %vm3091, %v3016
      %3155 = vst.msk [vmem:[%s3100 + $0x1b0] sm:$0xff] %vm3091, %v3017
      %3156 = vst.msk [vmem:[%s3100 + $0x1b8] sm:$0xff] %vm3091, %v3018
      %3157 = vst.msk [vmem:[%s3100 + $0x1c0] sm:$0xff] %vm3091, %v3019
      %3158 = vst.msk [vmem:[%s3100 + $0x1c8] sm:$0xff] %vm3091, %v3020
      %3159 = vst.msk [vmem:[%s3100 + $0x1d0] sm:$0xff] %vm3091, %v3021
      %3160 = vst.msk [vmem:[%s3100 + $0x1d8] sm:$0xff] %vm3091, %v3022
      %3161 = vst.msk [vmem:[%s3100 + $0x1e0] sm:$0xff] %vm3091, %v3023
      %3162 = vst.msk [vmem:[%s3100 + $0x1e8] sm:$0xff] %vm3091, %v3024
      %3163 = vst.msk [vmem:[%s3100 + $0x1f0] sm:$0xff] %vm3091, %v3025
      %3164 = vst.msk [vmem:[%s3100 + $0x1f8] sm:$0xff] %vm3091, %v3026
      %3165 = vst.msk [vmem:[%s3100 + $0x200] sm:$0xff] %vm3091, %v3027
      %3166 = vst.msk [vmem:[%s3100 + $0x208] sm:$0xff] %vm3091, %v3028
      %3167 = vst.msk [vmem:[%s3100 + $0x210] sm:$0xff] %vm3091, %v3029
      %3168 = vst.msk [vmem:[%s3100 + $0x218] sm:$0xff] %vm3091, %v3030
      %3169 = vst.msk [vmem:[%s3100 + $0x220] sm:$0xff] %vm3091, %v3031
      %3170 = vst.msk [vmem:[%s3100 + $0x228] sm:$0xff] %vm3091, %v3032
      %3171 = vst.msk [vmem:[%s3100 + $0x230] sm:$0xff] %vm3091, %v3033
      %3172 = vst.msk [vmem:[%s3100 + $0x238] sm:$0xff] %vm3091, %v3034
      %3173 = vst.msk [vmem:[%s3100 + $0x240] sm:$0xff] %vm3091, %v3035
      %3174 = vst.msk [vmem:[%s3100 + $0x248] sm:$0xff] %vm3091, %v3036
      %3175 = vst.msk [vmem:[%s3100 + $0x250] sm:$0xff] %vm3091, %v3037
      %3176 = vst.msk [vmem:[%s3100 + $0x258] sm:$0xff] %vm3091, %v3038
      %3177 = vst.msk [vmem:[%s3100 + $0x260] sm:$0xff] %vm3091, %v3039
      %3178 = vst.msk [vmem:[%s3100 + $0x268] sm:$0xff] %vm3091, %v3040
      %3179 = vst.msk [vmem:[%s3100 + $0x270] sm:$0xff] %vm3091, %v3041
      %3180 = vst.msk [vmem:[%s3100 + $0x278] sm:$0xff] %vm3091, %v3042
      %3181 = vst.msk [vmem:[%s3100 + $0x280] sm:$0xff] %vm3091, %v3043
      %3182 = vst.msk [vmem:[%s3100 + $0x288] sm:$0xff] %vm3091, %v3044
      %3183 = vst.msk [vmem:[%s3100 + $0x290] sm:$0xff] %vm3091, %v3045
      %3184 = vst.msk [vmem:[%s3100 + $0x298] sm:$0xff] %vm3091, %v3046
      %3185 = vst.msk [vmem:[%s3100 + $0x2a0] sm:$0xff] %vm3091, %v3047
      %3186 = vst.msk [vmem:[%s3100 + $0x2a8] sm:$0xff] %vm3091, %v3048
      %3187 = vst.msk [vmem:[%s3100 + $0x2b0] sm:$0xff] %vm3091, %v3049
      %3188 = vst.msk [vmem:[%s3100 + $0x2b8] sm:$0xff] %vm3091, %v3050
      %3189 = vst.msk [vmem:[%s3100 + $0x2c0] sm:$0xff] %vm3091, %v3051
      %3190 = vst.msk [vmem:[%s3100 + $0x2c8] sm:$0xff] %vm3091, %v3052
      %3191 = vst.msk [vmem:[%s3100 + $0x2d0] sm:$0xff] %vm3091, %v3053
      %3192 = vst.msk [vmem:[%s3100 + $0x2d8] sm:$0xff] %vm3091, %v3054
      %3193 = vst.msk [vmem:[%s3100 + $0x2e0] sm:$0xff] %vm3091, %v3055
      %3194 = vst.msk [vmem:[%s3100 + $0x2e8] sm:$0xff] %vm3091, %v3056
      %3195 = vst.msk [vmem:[%s3100 + $0x2f0] sm:$0xff] %vm3091, %v3057
      %3196 = vst.msk [vmem:[%s3100 + $0x2f8] sm:$0xff] %vm3091, %v3058
      %3197 = vst.msk [vmem:[%s3100 + $0x300] sm:$0xff] %vm3091, %v3059
      %3198 = vst.msk [vmem:[%s3100 + $0x308] sm:$0xff] %vm3091, %v3060
      %3199 = vst.msk [vmem:[%s3100 + $0x310] sm:$0xff] %vm3091, %v3061
      %3200 = vst.msk [vmem:[%s3100 + $0x318] sm:$0xff] %vm3091, %v3062
      %3201 = vst.msk [vmem:[%s3100 + $0x320] sm:$0xff] %vm3091, %v3063
      %3202 = vst.msk [vmem:[%s3100 + $0x328] sm:$0xff] %vm3091, %v3064
      %3203 = vst.msk [vmem:[%s3100 + $0x330] sm:$0xff] %vm3091, %v3065
      %3204 = vst.msk [vmem:[%s3100 + $0x338] sm:$0xff] %vm3091, %v3066
      %3205 = vst.msk [vmem:[%s3100 + $0x340] sm:$0xff] %vm3091, %v3067
      %3206 = vst.msk [vmem:[%s3100 + $0x348] sm:$0xff] %vm3091, %v3068
      %3207 = vst.msk [vmem:[%s3100 + $0x350] sm:$0xff] %vm3091, %v3069
      %3208 = vst.msk [vmem:[%s3100 + $0x358] sm:$0xff] %vm3091, %v3070
      %3209 = vst.msk [vmem:[%s3100 + $0x360] sm:$0xff] %vm3091, %v3071
      %3210 = vst.msk [vmem:[%s3100 + $0x368] sm:$0xff] %vm3091, %v3072
      %3211 = vst.msk [vmem:[%s3100 + $0x370] sm:$0xff] %vm3091, %v3073
      %3212 = vst.msk [vmem:[%s3100 + $0x378] sm:$0xff] %vm3091, %v3074
      %3213 = vst.msk [vmem:[%s3100 + $0x380] sm:$0xff] %vm3091, %v3075
      %3214 = vst.msk [vmem:[%s3100 + $0x388] sm:$0xff] %vm3091, %v3076
      %3215 = vst.msk [vmem:[%s3100 + $0x390] sm:$0xff] %vm3091, %v3077
      %3216 = vst.msk [vmem:[%s3100 + $0x398] sm:$0xff] %vm3091, %v3078
      %3217 = vst.msk [vmem:[%s3100 + $0x3a0] sm:$0xff] %vm3091, %v3079
      %3218 = vst.msk [vmem:[%s3100 + $0x3a8] sm:$0xff] %vm3091, %v3080
      %3219 = vst.msk [vmem:[%s3100 + $0x3b0] sm:$0xff] %vm3091, %v3081
      %3220 = vst.msk [vmem:[%s3100 + $0x3b8] sm:$0xff] %vm3091, %v3082
      %3221 = vst.msk [vmem:[%s3100 + $0x3c0] sm:$0xff] %vm3091, %v3083
      %3222 = vst.msk [vmem:[%s3100 + $0x3c8] sm:$0xff] %vm3091, %v3084
      %3223 = vst.msk [vmem:[%s3100 + $0x3d0] sm:$0xff] %vm3091, %v3085
      %3224 = vst.msk [vmem:[%s3100 + $0x3d8] sm:$0xff] %vm3091, %v3086
      %3225 = vst.msk [vmem:[%s3100 + $0x3e0] sm:$0xff] %vm3091, %v3087
      %3226 = vst.msk [vmem:[%s3100 + $0x3e8] sm:$0xff] %vm3091, %v3088
      %3227 = vst.msk [vmem:[%s3100 + $0x3f0] sm:$0xff] %vm3091, %v3089
      %3228 = vst.msk [vmem:[%s3100 + $0x3f8] sm:$0xff] %vm3091, %v3090
      %v3229 = vld [vmem:[%s3100] ss:$2 sm:$0xff]
      %s3230 = scalar_lea.vmem %s3100, 16 [#allocation2]
      %v3231 = vld [vmem:[%s3230] ss:$2 sm:$0xff]
      %s3232 = scalar_lea.vmem %s3100, 64 [#allocation2]
      %v3233 = vld [vmem:[%s3232] ss:$2 sm:$0xff]
      %s3234 = scalar_lea.vmem %s3100, 80 [#allocation2]
      %v3235 = vld [vmem:[%s3234] ss:$2 sm:$0xff]
      %s3236 = scalar_lea.vmem %s3100, 128 [#allocation2]
      %v3237 = vld [vmem:[%s3236] ss:$2 sm:$0xff]
      %s3238 = scalar_lea.vmem %s3100, 144 [#allocation2]
      %v3239 = vld [vmem:[%s3238] ss:$2 sm:$0xff]
      %s3240 = scalar_lea.vmem %s3100, 192 [#allocation2]
      %v3241 = vld [vmem:[%s3240] ss:$2 sm:$0xff]
      %s3242 = scalar_lea.vmem %s3100, 208 [#allocation2]
      %v3243 = vld [vmem:[%s3242] ss:$2 sm:$0xff]
      %s3244 = scalar_lea.vmem %s3100, 256 [#allocation2]
      %v3245 = vld [vmem:[%s3244] ss:$2 sm:$0xff]
      %s3246 = scalar_lea.vmem %s3100, 272 [#allocation2]
      %v3247 = vld [vmem:[%s3246] ss:$2 sm:$0xff]
      %s3248 = scalar_lea.vmem %s3100, 320 [#allocation2]
      %v3249 = vld [vmem:[%s3248] ss:$2 sm:$0xff]
      %s3250 = scalar_lea.vmem %s3100, 336 [#allocation2]
      %v3251 = vld [vmem:[%s3250] ss:$2 sm:$0xff]
      %s3252 = scalar_lea.vmem %s3100, 384 [#allocation2]
      %v3253 = vld [vmem:[%s3252] ss:$2 sm:$0xff]
      %s3254 = scalar_lea.vmem %s3100, 400 [#allocation2]
      %v3255 = vld [vmem:[%s3254] ss:$2 sm:$0xff]
      %s3256 = scalar_lea.vmem %s3100, 448 [#allocation2]
      %v3257 = vld [vmem:[%s3256] ss:$2 sm:$0xff]
      %s3258 = scalar_lea.vmem %s3100, 464 [#allocation2]
      %v3259 = vld [vmem:[%s3258] ss:$2 sm:$0xff]
      %s3260 = scalar_lea.vmem %s3100, 512 [#allocation2]
      %v3261 = vld [vmem:[%s3260] ss:$2 sm:$0xff]
      %s3262 = scalar_lea.vmem %s3100, 528 [#allocation2]
      %v3263 = vld [vmem:[%s3262] ss:$2 sm:$0xff]
      %s3264 = scalar_lea.vmem %s3100, 576 [#allocation2]
      %v3265 = vld [vmem:[%s3264] ss:$2 sm:$0xff]
      %s3266 = scalar_lea.vmem %s3100, 592 [#allocation2]
      %v3267 = vld [vmem:[%s3266] ss:$2 sm:$0xff]
      %s3268 = scalar_lea.vmem %s3100, 640 [#allocation2]
      %v3269 = vld [vmem:[%s3268] ss:$2 sm:$0xff]
      %s3270 = scalar_lea.vmem %s3100, 656 [#allocation2]
      %v3271 = vld [vmem:[%s3270] ss:$2 sm:$0xff]
      %s3272 = scalar_lea.vmem %s3100, 704 [#allocation2]
      %v3273 = vld [vmem:[%s3272] ss:$2 sm:$0xff]
      %s3274 = scalar_lea.vmem %s3100, 720 [#allocation2]
      %v3275 = vld [vmem:[%s3274] ss:$2 sm:$0xff]
      %s3276 = scalar_lea.vmem %s3100, 768 [#allocation2]
      %v3277 = vld [vmem:[%s3276] ss:$2 sm:$0xff]
      %s3278 = scalar_lea.vmem %s3100, 784 [#allocation2]
      %v3279 = vld [vmem:[%s3278] ss:$2 sm:$0xff]
      %s3280 = scalar_lea.vmem %s3100, 832 [#allocation2]
      %v3281 = vld [vmem:[%s3280] ss:$2 sm:$0xff]
      %s3282 = scalar_lea.vmem %s3100, 848 [#allocation2]
      %v3283 = vld [vmem:[%s3282] ss:$2 sm:$0xff]
      %s3284 = scalar_lea.vmem %s3100, 896 [#allocation2]
      %v3285 = vld [vmem:[%s3284] ss:$2 sm:$0xff]
      %s3286 = scalar_lea.vmem %s3100, 912 [#allocation2]
      %v3287 = vld [vmem:[%s3286] ss:$2 sm:$0xff]
      %s3288 = scalar_lea.vmem %s3100, 960 [#allocation2]
      %v3289 = vld [vmem:[%s3288] ss:$2 sm:$0xff]
      %s3290 = scalar_lea.vmem %s3100, 976 [#allocation2]
      %v3291 = vld [vmem:[%s3290] ss:$2 sm:$0xff]
      %s3292 = scalar_lea.vmem %s3100, 32 [#allocation2]
      %v3293 = vld [vmem:[%s3292] ss:$2 sm:$0xff]
      %s3294 = scalar_lea.vmem %s3100, 48 [#allocation2]
      %v3295 = vld [vmem:[%s3294] ss:$2 sm:$0xff]
      %s3296 = scalar_lea.vmem %s3100, 96 [#allocation2]
      %v3297 = vld [vmem:[%s3296] ss:$2 sm:$0xff]
      %s3298 = scalar_lea.vmem %s3100, 112 [#allocation2]
      %v3299 = vld [vmem:[%s3298] ss:$2 sm:$0xff]
      %s3300 = scalar_lea.vmem %s3100, 160 [#allocation2]
      %v3301 = vld [vmem:[%s3300] ss:$2 sm:$0xff]
      %s3302 = scalar_lea.vmem %s3100, 176 [#allocation2]
      %v3303 = vld [vmem:[%s3302] ss:$2 sm:$0xff]
      %s3304 = scalar_lea.vmem %s3100, 224 [#allocation2]
      %v3305 = vld [vmem:[%s3304] ss:$2 sm:$0xff]
      %s3306 = scalar_lea.vmem %s3100, 240 [#allocation2]
      %v3307 = vld [vmem:[%s3306] ss:$2 sm:$0xff]
      %s3308 = scalar_lea.vmem %s3100, 288 [#allocation2]
      %v3309 = vld [vmem:[%s3308] ss:$2 sm:$0xff]
      %s3310 = scalar_lea.vmem %s3100, 304 [#allocation2]
      %v3311 = vld [vmem:[%s3310] ss:$2 sm:$0xff]
      %s3312 = scalar_lea.vmem %s3100, 352 [#allocation2]
      %v3313 = vld [vmem:[%s3312] ss:$2 sm:$0xff]
      %s3314 = scalar_lea.vmem %s3100, 368 [#allocation2]
      %v3315 = vld [vmem:[%s3314] ss:$2 sm:$0xff]
      %s3316 = scalar_lea.vmem %s3100, 416 [#allocation2]
      %v3317 = vld [vmem:[%s3316] ss:$2 sm:$0xff]
      %s3318 = scalar_lea.vmem %s3100, 432 [#allocation2]
      %v3319 = vld [vmem:[%s3318] ss:$2 sm:$0xff]
      %s3320 = scalar_lea.vmem %s3100, 480 [#allocation2]
      %v3321 = vld [vmem:[%s3320] ss:$2 sm:$0xff]
      %s3322 = scalar_lea.vmem %s3100, 496 [#allocation2]
      %v3323 = vld [vmem:[%s3322] ss:$2 sm:$0xff]
      %s3324 = scalar_lea.vmem %s3100, 544 [#allocation2]
      %v3325 = vld [vmem:[%s3324] ss:$2 sm:$0xff]
      %s3326 = scalar_lea.vmem %s3100, 560 [#allocation2]
      %v3327 = vld [vmem:[%s3326] ss:$2 sm:$0xff]
      %s3328 = scalar_lea.vmem %s3100, 608 [#allocation2]
      %v3329 = vld [vmem:[%s3328] ss:$2 sm:$0xff]
      %s3330 = scalar_lea.vmem %s3100, 624 [#allocation2]
      %v3331 = vld [vmem:[%s3330] ss:$2 sm:$0xff]
      %s3332 = scalar_lea.vmem %s3100, 672 [#allocation2]
      %v3333 = vld [vmem:[%s3332] ss:$2 sm:$0xff]
      %s3334 = scalar_lea.vmem %s3100, 688 [#allocation2]
      %v3335 = vld [vmem:[%s3334] ss:$2 sm:$0xff]
      %s3336 = scalar_lea.vmem %s3100, 736 [#allocation2]
      %v3337 = vld [vmem:[%s3336] ss:$2 sm:$0xff]
      %s3338 = scalar_lea.vmem %s3100, 752 [#allocation2]
      %v3339 = vld [vmem:[%s3338] ss:$2 sm:$0xff]
      %s3340 = scalar_lea.vmem %s3100, 800 [#allocation2]
      %v3341 = vld [vmem:[%s3340] ss:$2 sm:$0xff]
      %s3342 = scalar_lea.vmem %s3100, 816 [#allocation2]
      %v3343 = vld [vmem:[%s3342] ss:$2 sm:$0xff]
      %s3344 = scalar_lea.vmem %s3100, 864 [#allocation2]
      %v3345 = vld [vmem:[%s3344] ss:$2 sm:$0xff]
      %s3346 = scalar_lea.vmem %s3100, 880 [#allocation2]
      %v3347 = vld [vmem:[%s3346] ss:$2 sm:$0xff]
      %s3348 = scalar_lea.vmem %s3100, 928 [#allocation2]
      %v3349 = vld [vmem:[%s3348] ss:$2 sm:$0xff]
      %s3350 = scalar_lea.vmem %s3100, 944 [#allocation2]
      %v3351 = vld [vmem:[%s3350] ss:$2 sm:$0xff]
      %s3352 = scalar_lea.vmem %s3100, 992 [#allocation2]
      %v3353 = vld [vmem:[%s3352] ss:$2 sm:$0xff]
      %s3354 = scalar_lea.vmem %s3100, 1008 [#allocation2]
      %v3355 = vld [vmem:[%s3354] ss:$2 sm:$0xff]
      %s3356 = scalar_lea.vmem [#allocation2], 32
      %v3357 = vld [vmem:[%s3356] ss:$2 sm:$0xff]
      %s3358 = scalar_lea.vmem [#allocation2], 48
      %v3359 = vld [vmem:[%s3358] ss:$2 sm:$0xff]
      %s3360 = scalar_lea.vmem [#allocation2], 96
      %v3361 = vld [vmem:[%s3360] ss:$2 sm:$0xff]
      %s3362 = scalar_lea.vmem [#allocation2], 112
      %v3363 = vld [vmem:[%s3362] ss:$2 sm:$0xff]
      %s3364 = scalar_lea.vmem [#allocation2], 160
      %v3365 = vld [vmem:[%s3364] ss:$2 sm:$0xff]
      %s3366 = scalar_lea.vmem [#allocation2], 176
      %v3367 = vld [vmem:[%s3366] ss:$2 sm:$0xff]
      %s3368 = scalar_lea.vmem [#allocation2], 224
      %v3369 = vld [vmem:[%s3368] ss:$2 sm:$0xff]
      %s3370 = scalar_lea.vmem [#allocation2], 240
      %v3371 = vld [vmem:[%s3370] ss:$2 sm:$0xff]
      %s3372 = scalar_lea.vmem [#allocation2], 288
      %v3373 = vld [vmem:[%s3372] ss:$2 sm:$0xff]
      %s3374 = scalar_lea.vmem [#allocation2], 304
      %v3375 = vld [vmem:[%s3374] ss:$2 sm:$0xff]
      %s3376 = scalar_lea.vmem [#allocation2], 352
      %v3377 = vld [vmem:[%s3376] ss:$2 sm:$0xff]
      %s3378 = scalar_lea.vmem [#allocation2], 368
      %v3379 = vld [vmem:[%s3378] ss:$2 sm:$0xff]
      %s3380 = scalar_lea.vmem [#allocation2], 416
      %v3381 = vld [vmem:[%s3380] ss:$2 sm:$0xff]
      %s3382 = scalar_lea.vmem [#allocation2], 432
      %v3383 = vld [vmem:[%s3382] ss:$2 sm:$0xff]
      %s3384 = scalar_lea.vmem [#allocation2], 480
      %v3385 = vld [vmem:[%s3384] ss:$2 sm:$0xff]
      %s3386 = scalar_lea.vmem [#allocation2], 496
      %v3387 = vld [vmem:[%s3386] ss:$2 sm:$0xff]
      %s3388 = scalar_lea.vmem [#allocation2], 544
      %v3389 = vld [vmem:[%s3388] ss:$2 sm:$0xff]
      %s3390 = scalar_lea.vmem [#allocation2], 560
      %v3391 = vld [vmem:[%s3390] ss:$2 sm:$0xff]
      %s3392 = scalar_lea.vmem [#allocation2], 608
      %v3393 = vld [vmem:[%s3392] ss:$2 sm:$0xff]
      %s3394 = scalar_lea.vmem [#allocation2], 624
      %v3395 = vld [vmem:[%s3394] ss:$2 sm:$0xff]
      %s3396 = scalar_lea.vmem [#allocation2], 672
      %v3397 = vld [vmem:[%s3396] ss:$2 sm:$0xff]
      %s3398 = scalar_lea.vmem [#allocation2], 688
      %v3399 = vld [vmem:[%s3398] ss:$2 sm:$0xff]
      %s3400 = scalar_lea.vmem [#allocation2], 736
      %v3401 = vld [vmem:[%s3400] ss:$2 sm:$0xff]
      %s3402 = scalar_lea.vmem [#allocation2], 752
      %v3403 = vld [vmem:[%s3402] ss:$2 sm:$0xff]
      %s3404 = scalar_lea.vmem [#allocation2], 800
      %v3405 = vld [vmem:[%s3404] ss:$2 sm:$0xff]
      %s3406 = scalar_lea.vmem [#allocation2], 816
      %v3407 = vld [vmem:[%s3406] ss:$2 sm:$0xff]
      %s3408 = scalar_lea.vmem [#allocation2], 864
      %v3409 = vld [vmem:[%s3408] ss:$2 sm:$0xff]
      %s3410 = scalar_lea.vmem [#allocation2], 880
      %v3411 = vld [vmem:[%s3410] ss:$2 sm:$0xff]
      %s3412 = scalar_lea.vmem [#allocation2], 928
      %v3413 = vld [vmem:[%s3412] ss:$2 sm:$0xff]
      %s3414 = scalar_lea.vmem [#allocation2], 944
      %v3415 = vld [vmem:[%s3414] ss:$2 sm:$0xff]
      %s3416 = scalar_lea.vmem [#allocation2], 992
      %v3417 = vld [vmem:[%s3416] ss:$2 sm:$0xff]
      %s3418 = scalar_lea.vmem [#allocation2], 1008
      %v3419 = vld [vmem:[%s3418] ss:$2 sm:$0xff]
      %v3420 = vmax.f32 %v3357, %v3293
      %v3421 = vmax.f32 %v3359, %v3295
      %v3422 = vmax.f32 %v3361, %v3297
      %v3423 = vmax.f32 %v3363, %v3299
      %v3424 = vmax.f32 %v3365, %v3301
      %v3425 = vmax.f32 %v3367, %v3303
      %v3426 = vmax.f32 %v3369, %v3305
      %v3427 = vmax.f32 %v3371, %v3307
      %v3428 = vmax.f32 %v3373, %v3309
      %v3429 = vmax.f32 %v3375, %v3311
      %v3430 = vmax.f32 %v3377, %v3313
      %v3431 = vmax.f32 %v3379, %v3315
      %v3432 = vmax.f32 %v3381, %v3317
      %v3433 = vmax.f32 %v3383, %v3319
      %v3434 = vmax.f32 %v3385, %v3321
      %v3435 = vmax.f32 %v3387, %v3323
      %v3436 = vmax.f32 %v3389, %v3325
      %v3437 = vmax.f32 %v3391, %v3327
      %v3438 = vmax.f32 %v3393, %v3329
      %v3439 = vmax.f32 %v3395, %v3331
      %v3440 = vmax.f32 %v3397, %v3333
      %v3441 = vmax.f32 %v3399, %v3335
      %v3442 = vmax.f32 %v3401, %v3337
      %v3443 = vmax.f32 %v3403, %v3339
      %v3444 = vmax.f32 %v3405, %v3341
      %v3445 = vmax.f32 %v3407, %v3343
      %v3446 = vmax.f32 %v3409, %v3345
      %v3447 = vmax.f32 %v3411, %v3347
      %v3448 = vmax.f32 %v3413, %v3349
      %v3449 = vmax.f32 %v3415, %v3351
      %v3450 = vmax.f32 %v3417, %v3353
      %v3451 = vmax.f32 %v3419, %v3355
      %v3452 = vmax.f32 %v3229, %v3420
      %v3453 = vmax.f32 %v3231, %v3421
      %v3454 = vmax.f32 %v3233, %v3422
      %v3455 = vmax.f32 %v3235, %v3423
      %v3456 = vmax.f32 %v3237, %v3424
      %v3457 = vmax.f32 %v3239, %v3425
      %v3458 = vmax.f32 %v3241, %v3426
      %v3459 = vmax.f32 %v3243, %v3427
      %v3460 = vmax.f32 %v3245, %v3428
      %v3461 = vmax.f32 %v3247, %v3429
      %v3462 = vmax.f32 %v3249, %v3430
      %v3463 = vmax.f32 %v3251, %v3431
      %v3464 = vmax.f32 %v3253, %v3432
      %v3465 = vmax.f32 %v3255, %v3433
      %v3466 = vmax.f32 %v3257, %v3434
      %v3467 = vmax.f32 %v3259, %v3435
      %v3468 = vmax.f32 %v3261, %v3436
      %v3469 = vmax.f32 %v3263, %v3437
      %v3470 = vmax.f32 %v3265, %v3438
      %v3471 = vmax.f32 %v3267, %v3439
      %v3472 = vmax.f32 %v3269, %v3440
      %v3473 = vmax.f32 %v3271, %v3441
      %v3474 = vmax.f32 %v3273, %v3442
      %v3475 = vmax.f32 %v3275, %v3443
      %v3476 = vmax.f32 %v3277, %v3444
      %v3477 = vmax.f32 %v3279, %v3445
      %v3478 = vmax.f32 %v3281, %v3446
      %v3479 = vmax.f32 %v3283, %v3447
      %v3480 = vmax.f32 %v3285, %v3448
      %v3481 = vmax.f32 %v3287, %v3449
      %v3482 = vmax.f32 %v3289, %v3450
      %v3483 = vmax.f32 %v3291, %v3451
      %v3484 = vpack.c.bf16 %v3453, %v3452
      %v3485 = vpack.c.bf16 %v3455, %v3454
      %v3486 = vpack.c.bf16 %v3457, %v3456
      %v3487 = vpack.c.bf16 %v3459, %v3458
      %v3488 = vpack.c.bf16 %v3461, %v3460
      %v3489 = vpack.c.bf16 %v3463, %v3462
      %v3490 = vpack.c.bf16 %v3465, %v3464
      %v3491 = vpack.c.bf16 %v3467, %v3466
      %v3492 = vpack.c.bf16 %v3469, %v3468
      %v3493 = vpack.c.bf16 %v3471, %v3470
      %v3494 = vpack.c.bf16 %v3473, %v3472
      %v3495 = vpack.c.bf16 %v3475, %v3474
      %v3496 = vpack.c.bf16 %v3477, %v3476
      %v3497 = vpack.c.bf16 %v3479, %v3478
      %v3498 = vpack.c.bf16 %v3481, %v3480
      %v3499 = vpack.c.bf16 %v3483, %v3482
      %v3500 = vld [vmem:[%s3] sm:$0xff]
      %v3501 = vld [vmem:[%s3 + $0x8] sm:$0xff]
      %v3502 = vld [vmem:[%s3 + $0x10] sm:$0xff]
      %v3503 = vld [vmem:[%s3 + $0x18] sm:$0xff]
      %v3504 = vld [vmem:[%s3 + $0x20] sm:$0xff]
      %v3505 = vld [vmem:[%s3 + $0x28] sm:$0xff]
      %v3506 = vld [vmem:[%s3 + $0x30] sm:$0xf]
      %v3507 = vld [vmem:[%s3 + $0x34] sm:$0xff]
      %v3508 = vld [vmem:[%s3 + $0x3c] sm:$0xff]
      %v3509 = vld [vmem:[%s3 + $0x44] sm:$0xff]
      %v3510 = vld [vmem:[%s3 + $0x4c] sm:$0xff]
      %v3511 = vld [vmem:[%s3 + $0x54] sm:$0xff]
      %v3512 = vld [vmem:[%s3 + $0x5c] sm:$0xff]
      %v3513 = vld [vmem:[%s3 + $0x64] sm:$0xf]
      %v3514 = vld [vmem:[%s3 + $0x68] sm:$0xff]
      %v3515 = vld [vmem:[%s3 + $0x70] sm:$0xff]
      %v3516 = vld [vmem:[%s3 + $0x78] sm:$0xff]
      %v3517 = vld [vmem:[%s3 + $0x80] sm:$0xff]
      %v3518 = vld [vmem:[%s3 + $0x88] sm:$0xff]
      %v3519 = vld [vmem:[%s3 + $0x90] sm:$0xff]
      %v3520 = vld [vmem:[%s3 + $0x98] sm:$0xf]
      %v3521 = vld [vmem:[%s3 + $0x9c] sm:$0xff]
      %v3522 = vld [vmem:[%s3 + $0xa4] sm:$0xff]
      %v3523 = vld [vmem:[%s3 + $0xac] sm:$0xff]
      %v3524 = vld [vmem:[%s3 + $0xb4] sm:$0xff]
      %v3525 = vld [vmem:[%s3 + $0xbc] sm:$0xff]
      %v3526 = vld [vmem:[%s3 + $0xc4] sm:$0xff]
      %v3527 = vld [vmem:[%s3 + $0xcc] sm:$0xf]
      %v3528 = vld [vmem:[%s3 + $0xd0] sm:$0xff]
      %v3529 = vld [vmem:[%s3 + $0xd8] sm:$0xff]
      %v3530 = vld [vmem:[%s3 + $0xe0] sm:$0xff]
      %v3531 = vld [vmem:[%s3 + $0xe8] sm:$0xff]
      %v3532 = vld [vmem:[%s3 + $0xf0] sm:$0xff]
      %v3533 = vld [vmem:[%s3 + $0xf8] sm:$0xff]
      %v3534 = vld [vmem:[%s3 + $0x100] sm:$0xf]
      %v3535 = vld [vmem:[%s3 + $0x104] sm:$0xff]
      %v3536 = vld [vmem:[%s3 + $0x10c] sm:$0xff]
      %v3537 = vld [vmem:[%s3 + $0x114] sm:$0xff]
      %v3538 = vld [vmem:[%s3 + $0x11c] sm:$0xff]
      %v3539 = vld [vmem:[%s3 + $0x124] sm:$0xff]
      %v3540 = vld [vmem:[%s3 + $0x12c] sm:$0xff]
      %v3541 = vld [vmem:[%s3 + $0x134] sm:$0xf]
      %v3542 = vld [vmem:[%s3 + $0x138] sm:$0xff]
      %v3543 = vld [vmem:[%s3 + $0x140] sm:$0xff]
      %v3544 = vld [vmem:[%s3 + $0x148] sm:$0xff]
      %v3545 = vld [vmem:[%s3 + $0x150] sm:$0xff]
      %v3546 = vld [vmem:[%s3 + $0x158] sm:$0xff]
      %v3547 = vld [vmem:[%s3 + $0x160] sm:$0xff]
      %v3548 = vld [vmem:[%s3 + $0x168] sm:$0xf]
      %v3549 = vld [vmem:[%s3 + $0x16c] sm:$0xff]
      %v3550 = vld [vmem:[%s3 + $0x174] sm:$0xff]
      %v3551 = vld [vmem:[%s3 + $0x17c] sm:$0xff]
      %v3552 = vld [vmem:[%s3 + $0x184] sm:$0xff]
      %v3553 = vld [vmem:[%s3 + $0x18c] sm:$0xff]
      %v3554 = vld [vmem:[%s3 + $0x194] sm:$0xff]
      %v3555 = vld [vmem:[%s3 + $0x19c] sm:$0xf]
      %v3556 = vld [vmem:[%s4] sm:$0xff]
      %v3557 = vld [vmem:[%s4 + $0x8] sm:$0x1f]
      %v3560 = vlaneseq
      %v3561 = vshrl.u32 %v3560, 7
      %v3562 = vsub.s32 0, %v3561
      %v3563 = vrot.slane %v3556, %v3562
      %v3564 = vlaneseq
      %v3565 = vshrl.u32 %v3564, 7
      %v3566 = vsub.s32 1, %v3565
      %v3567 = vrot.slane %v3556, %v3566
      %v3568 = vlaneseq
      %v3569 = vshrl.u32 %v3568, 7
      %v3570 = vsub.s32 2, %v3569
      %v3571 = vrot.slane %v3556, %v3570
      %v3572 = vlaneseq
      %v3573 = vshrl.u32 %v3572, 7
      %v3574 = vsub.s32 3, %v3573
      %v3575 = vrot.slane %v3556, %v3574
      %v3576 = vlaneseq
      %v3577 = vshrl.u32 %v3576, 7
      %v3578 = vsub.s32 4, %v3577
      %v3579 = vrot.slane %v3556, %v3578
      %v3580 = vlaneseq
      %v3581 = vshrl.u32 %v3580, 7
      %v3582 = vsub.s32 5, %v3581
      %v3583 = vrot.slane %v3556, %v3582
      %v3584 = vlaneseq
      %v3585 = vshrl.u32 %v3584, 7
      %v3586 = vsub.s32 6, %v3585
      %v3587 = vrot.slane %v3556, %v3586
      %v3588 = vlaneseq
      %v3589 = vshrl.u32 %v3588, 7
      %v3590 = vsub.s32 7, %v3589
      %v3591 = vrot.slane %v3556, %v3590
      %v3592 = vlaneseq
      %v3593 = vshrl.u32 %v3592, 7
      %v3594 = vsub.s32 0, %v3593
      %v3595 = vrot.slane %v3557, %v3594
      %v3596 = vlaneseq
      %v3597 = vshrl.u32 %v3596, 7
      %v3598 = vsub.s32 1, %v3597
      %v3599 = vrot.slane %v3557, %v3598
      %v3600 = vlaneseq
      %v3601 = vshrl.u32 %v3600, 7
      %v3602 = vsub.s32 2, %v3601
      %v3603 = vrot.slane %v3557, %v3602
      %v3604 = vlaneseq
      %v3605 = vshrl.u32 %v3604, 7
      %v3606 = vsub.s32 3, %v3605
      %v3607 = vrot.slane %v3557, %v3606
      %v3608 = vlaneseq
      %v3609 = vshrl.u32 %v3608, 7
      %v3610 = vsub.s32 4, %v3609
      %v3611 = vrot.slane %v3557, %v3610
      %v3681 = vunpack.c.l.b16 %v3500
      %v3682 = vunpack.c.h.b16 %v3500
      %v3683 = vunpack.c.l.b16 %v3501
      %v3684 = vunpack.c.h.b16 %v3501
      %v3685 = vunpack.c.l.b16 %v3502
      %v3686 = vunpack.c.h.b16 %v3502
      %v3687 = vunpack.c.l.b16 %v3503
      %v3688 = vunpack.c.h.b16 %v3503
      %v3689 = vunpack.c.l.b16 %v3504
      %v3690 = vunpack.c.h.b16 %v3504
      %v3691 = vunpack.c.l.b16 %v3505
      %v3692 = vunpack.c.h.b16 %v3505
      %v3693 = vunpack.c.l.b16 %v3506
      %v3694 = vunpack.c.l.b16 %v3507
      %v3695 = vunpack.c.h.b16 %v3507
      %v3696 = vunpack.c.l.b16 %v3508
      %v3697 = vunpack.c.h.b16 %v3508
      %v3698 = vunpack.c.l.b16 %v3509
      %v3699 = vunpack.c.h.b16 %v3509
      %v3700 = vunpack.c.l.b16 %v3510
      %v3701 = vunpack.c.h.b16 %v3510
      %v3702 = vunpack.c.l.b16 %v3511
      %v3703 = vunpack.c.h.b16 %v3511
      %v3704 = vunpack.c.l.b16 %v3512
      %v3705 = vunpack.c.h.b16 %v3512
      %v3706 = vunpack.c.l.b16 %v3513
      %v3707 = vunpack.c.l.b16 %v3514
      %v3708 = vunpack.c.h.b16 %v3514
      %v3709 = vunpack.c.l.b16 %v3515
      %v3710 = vunpack.c.h.b16 %v3515
      %v3711 = vunpack.c.l.b16 %v3516
      %v3712 = vunpack.c.h.b16 %v3516
      %v3713 = vunpack.c.l.b16 %v3517
      %v3714 = vunpack.c.h.b16 %v3517
      %v3715 = vunpack.c.l.b16 %v3518
      %v3716 = vunpack.c.h.b16 %v3518
      %v3717 = vunpack.c.l.b16 %v3519
      %v3718 = vunpack.c.h.b16 %v3519
      %v3719 = vunpack.c.l.b16 %v3520
      %v3720 = vunpack.c.l.b16 %v3521
      %v3721 = vunpack.c.h.b16 %v3521
      %v3722 = vunpack.c.l.b16 %v3522
      %v3723 = vunpack.c.h.b16 %v3522
      %v3724 = vunpack.c.l.b16 %v3523
      %v3725 = vunpack.c.h.b16 %v3523
      %v3726 = vunpack.c.l.b16 %v3524
      %v3727 = vunpack.c.h.b16 %v3524
      %v3728 = vunpack.c.l.b16 %v3525
      %v3729 = vunpack.c.h.b16 %v3525
      %v3730 = vunpack.c.l.b16 %v3526
      %v3731 = vunpack.c.h.b16 %v3526
      %v3732 = vunpack.c.l.b16 %v3527
      %v3733 = vunpack.c.l.b16 %v3528
      %v3734 = vunpack.c.h.b16 %v3528
      %v3735 = vunpack.c.l.b16 %v3529
      %v3736 = vunpack.c.h.b16 %v3529
      %v3737 = vunpack.c.l.b16 %v3530
      %v3738 = vunpack.c.h.b16 %v3530
      %v3739 = vunpack.c.l.b16 %v3531
      %v3740 = vunpack.c.h.b16 %v3531
      %v3741 = vunpack.c.l.b16 %v3532
      %v3742 = vunpack.c.h.b16 %v3532
      %v3743 = vunpack.c.l.b16 %v3533
      %v3744 = vunpack.c.h.b16 %v3533
      %v3745 = vunpack.c.l.b16 %v3534
      %v3746 = vunpack.c.l.b16 %v3535
      %v3747 = vunpack.c.h.b16 %v3535
      %v3748 = vunpack.c.l.b16 %v3536
      %v3749 = vunpack.c.h.b16 %v3536
      %v3750 = vunpack.c.l.b16 %v3537
      %v3751 = vunpack.c.h.b16 %v3537
      %v3752 = vunpack.c.l.b16 %v3538
      %v3753 = vunpack.c.h.b16 %v3538
      %v3754 = vunpack.c.l.b16 %v3539
      %v3755 = vunpack.c.h.b16 %v3539
      %v3756 = vunpack.c.l.b16 %v3540
      %v3757 = vunpack.c.h.b16 %v3540
      %v3758 = vunpack.c.l.b16 %v3541
      %v3759 = vunpack.c.l.b16 %v3542
      %v3760 = vunpack.c.h.b16 %v3542
      %v3761 = vunpack.c.l.b16 %v3543
      %v3762 = vunpack.c.h.b16 %v3543
      %v3763 = vunpack.c.l.b16 %v3544
      %v3764 = vunpack.c.h.b16 %v3544
      %v3765 = vunpack.c.l.b16 %v3545
      %v3766 = vunpack.c.h.b16 %v3545
      %v3767 = vunpack.c.l.b16 %v3546
      %v3768 = vunpack.c.h.b16 %v3546
      %v3769 = vunpack.c.l.b16 %v3547
      %v3770 = vunpack.c.h.b16 %v3547
      %v3771 = vunpack.c.l.b16 %v3548
      %v3772 = vunpack.c.l.b16 %v3549
      %v3773 = vunpack.c.h.b16 %v3549
      %v3774 = vunpack.c.l.b16 %v3550
      %v3775 = vunpack.c.h.b16 %v3550
      %v3776 = vunpack.c.l.b16 %v3551
      %v3777 = vunpack.c.h.b16 %v3551
      %v3778 = vunpack.c.l.b16 %v3552
      %v3779 = vunpack.c.h.b16 %v3552
      %v3780 = vunpack.c.l.b16 %v3553
      %v3781 = vunpack.c.h.b16 %v3553
      %v3782 = vunpack.c.l.b16 %v3554
      %v3783 = vunpack.c.h.b16 %v3554
      %v3784 = vunpack.c.l.b16 %v3555
      %v3785 = vpack.c.b16 %v3694, %v3681
      %v3786 = vpack.c.b16 %v3695, %v3682
      %v3787 = vpack.c.b16 %v3696, %v3683
      %v3788 = vpack.c.b16 %v3697, %v3684
      %v3789 = vpack.c.b16 %v3698, %v3685
      %v3790 = vpack.c.b16 %v3699, %v3686
      %v3791 = vpack.c.b16 %v3700, %v3687
      %v3792 = vpack.c.b16 %v3701, %v3688
      %v3793 = vpack.c.b16 %v3702, %v3689
      %v3794 = vpack.c.b16 %v3703, %v3690
      %v3795 = vpack.c.b16 %v3704, %v3691
      %v3796 = vpack.c.b16 %v3705, %v3692
      %v3797 = vpack.c.b16 %v3706, %v3693
      %v3798 = vpack.c.b16 %v3720, %v3707
      %v3799 = vpack.c.b16 %v3721, %v3708
      %v3800 = vpack.c.b16 %v3722, %v3709
      %v3801 = vpack.c.b16 %v3723, %v3710
      %v3802 = vpack.c.b16 %v3724, %v3711
      %v3803 = vpack.c.b16 %v3725, %v3712
      %v3804 = vpack.c.b16 %v3726, %v3713
      %v3805 = vpack.c.b16 %v3727, %v3714
      %v3806 = vpack.c.b16 %v3728, %v3715
      %v3807 = vpack.c.b16 %v3729, %v3716
      %v3808 = vpack.c.b16 %v3730, %v3717
      %v3809 = vpack.c.b16 %v3731, %v3718
      %v3810 = vpack.c.b16 %v3732, %v3719
      %v3811 = vpack.c.b16 %v3746, %v3733
      %v3812 = vpack.c.b16 %v3747, %v3734
      %v3813 = vpack.c.b16 %v3748, %v3735
      %v3814 = vpack.c.b16 %v3749, %v3736
      %v3815 = vpack.c.b16 %v3750, %v3737
      %v3816 = vpack.c.b16 %v3751, %v3738
      %v3817 = vpack.c.b16 %v3752, %v3739
      %v3818 = vpack.c.b16 %v3753, %v3740
      %v3819 = vpack.c.b16 %v3754, %v3741
      %v3820 = vpack.c.b16 %v3755, %v3742
      %v3821 = vpack.c.b16 %v3756, %v3743
      %v3822 = vpack.c.b16 %v3757, %v3744
      %v3823 = vpack.c.b16 %v3758, %v3745
      %v3824 = vpack.c.b16 %v3772, %v3759
      %v3825 = vpack.c.b16 %v3773, %v3760
      %v3826 = vpack.c.b16 %v3774, %v3761
      %v3827 = vpack.c.b16 %v3775, %v3762
      %v3828 = vpack.c.b16 %v3776, %v3763
      %v3829 = vpack.c.b16 %v3777, %v3764
      %v3830 = vpack.c.b16 %v3778, %v3765
      %v3831 = vpack.c.b16 %v3779, %v3766
      %v3832 = vpack.c.b16 %v3780, %v3767
      %v3833 = vpack.c.b16 %v3781, %v3768
      %v3834 = vpack.c.b16 %v3782, %v3769
      %v3835 = vpack.c.b16 %v3783, %v3770
      %v3836 = vpack.c.b16 %v3784, %v3771
      %v3890 = vsel %vm3091, %v3484, 0
      %v3893 = vsel %vm3091, %v3485, 0
      %v3896 = vsel %vm3091, %v3486, 0
      %v3899 = vsel %vm3091, %v3487, 0
      %v3902 = vsel %vm3091, %v3488, 0
      %v3905 = vsel %vm3091, %v3489, 0
      %v3908 = vsel %vm3091, %v3490, 0
      %v3911 = vsel %vm3091, %v3491, 0
      %v3914 = vsel %vm3091, %v3492, 0
      %v3917 = vsel %vm3091, %v3493, 0
      %v3920 = vsel %vm3091, %v3494, 0
      %v3923 = vsel %vm3091, %v3495, 0
      %v3926 = vsel %vm3091, %v3496, 0
      %v3929 = vsel %vm3091, %v3497, 0
      %v3932 = vsel %vm3091, %v3498, 0
      %v3935 = vsel %vm3091, %v3499, 0
      %3937 = vmatprep.subr.bf16.mxu0 %v3786
      %3938 = vmatpush1.bf16.msra.mxu0 %v3785
      %3939 = vmatprep.subr.bf16.mxu0 %v3799
      %3940 = vmatpush1.bf16.msra.mxu0 %v3798
      %3941 = vmatprep.subr.bf16.mxu0 %v3812
      %3942 = vmatpush1.bf16.msra.mxu0 %v3811
      %3943 = vmatprep.subr.bf16.mxu0 %v3825
      %3944 = vmatpush1.bf16.msra.mxu0 %v3824
      %3945 = vmatprep.subr.bf16.mxu0 0
      %3946 = vmatpush1.bf16.msra.mxu0 0
      %3947 = vmatprep.subr.bf16.mxu0 0
      %3948 = vmatpush1.bf16.msra.mxu0 0
      %3949 = vmatprep.subr.bf16.mxu0 0
      %3950 = vmatpush1.bf16.msra.mxu0 0
      %3951 = vmatprep.subr.bf16.mxu0 0
      %3952 = vmatpush1.bf16.msra.mxu0 0
      %3953 = vmatprep.subr.bf16.mxu0 0
      %3954 = vmatpush1.bf16.msra.mxu0 0
      %3955 = vmatprep.subr.bf16.mxu0 0
      %3956 = vmatpush1.bf16.msra.mxu0 0
      %3957 = vmatprep.subr.bf16.mxu0 0
      %3958 = vmatpush1.bf16.msra.mxu0 0
      %3959 = vmatprep.subr.bf16.mxu0 0
      %3960 = vmatpush1.bf16.msra.mxu0 0
      %3961 = vmatprep.subr.bf16.mxu0 0
      %3962 = vmatpush1.bf16.msra.mxu0 0
      %3963 = vmatprep.subr.bf16.mxu0 0
      %3964 = vmatpush1.bf16.msra.mxu0 0
      %3965 = vmatprep.subr.bf16.mxu0 0
      %3966 = vmatpush1.bf16.msra.mxu0 0
      %3967 = vmatprep.subr.bf16.mxu0 0
      %3968 = vmatpush1.bf16.msra.mxu0 0
      %3969 = vmatprep.mubr.bf16.mxu0 0
      %3970 = vmatmul.mubr.bf16.gmra.mrb[0].mxu0 %v3890
      %v3971 = vpop.f32.mrb[0].mxu0
      %v3972 = vadd.f32 %v3563, %v3971
      %v3973 = vpop.f32.mrb[0].mxu0
      %v3974 = vadd.f32 %v3567, %v3973
      %v3975 = vpop.f32.mrb[0].mxu0
      %v3976 = vadd.f32 %v3563, %v3975
      %v3977 = vpop.f32.mrb[0].mxu0
      %v3978 = vadd.f32 %v3567, %v3977
      %3979 = vmatprep.mubr.bf16.mxu0 0
      %3980 = vmatmul.mubr.bf16.gmra.mrb[0].mxu0 %v3893
      %v3981 = vpop.f32.mrb[0].mxu0
      %v3982 = vadd.f32 %v3563, %v3981
      %v3983 = vpop.f32.mrb[0].mxu0
      %v3984 = vadd.f32 %v3567, %v3983
      %v3985 = vpop.f32.mrb[0].mxu0
      %v3986 = vadd.f32 %v3563, %v3985
      %v3987 = vpop.f32.mrb[0].mxu0
      %v3988 = vadd.f32 %v3567, %v3987
      %3989 = vmatprep.mubr.bf16.mxu0 0
      %3990 = vmatmul.mubr.bf16.gmra.mrb[0].mxu0 %v3896
      %v3991 = vpop.f32.mrb[0].mxu0
      %v3992 = vadd.f32 %v3563, %v3991
      %v3993 = vpop.f32.mrb[0].mxu0
      %v3994 = vadd.f32 %v3567, %v3993
      %v3995 = vpop.f32.mrb[0].mxu0
      %v3996 = vadd.f32 %v3563, %v3995
      %v3997 = vpop.f32.mrb[0].mxu0
      %v3998 = vadd.f32 %v3567, %v3997
      %3999 = vmatprep.mubr.bf16.mxu0 0
      %4000 = vmatmul.mubr.bf16.gmra.mrb[0].mxu0 %v3899
      %v4001 = vpop.f32.mrb[0].mxu0
      %v4002 = vadd.f32 %v3563, %v4001
      %v4003 = vpop.f32.mrb[0].mxu0
      %v4004 = vadd.f32 %v3567, %v4003
      %v4005 = vpop.f32.mrb[0].mxu0
      %v4006 = vadd.f32 %v3563, %v4005
      %v4007 = vpop.f32.mrb[0].mxu0
      %v4008 = vadd.f32 %v3567, %v4007
      %4009 = vmatprep.mubr.bf16.mxu0 0
      %4010 = vmatmul.mubr.bf16.gmra.mrb[0].mxu0 %v3902
      %v4011 = vpop.f32.mrb[0].mxu0
      %v4012 = vadd.f32 %v3563, %v4011
      %v4013 = vpop.f32.mrb[0].mxu0
      %v4014 = vadd.f32 %v3567, %v4013
      %v4015 = vpop.f32.mrb[0].mxu0
      %v4016 = vadd.f32 %v3563, %v4015
      %v4017 = vpop.f32.mrb[0].mxu0
      %v4018 = vadd.f32 %v3567, %v4017
      %4019 = vmatprep.mubr.bf16.mxu0 0
      %4020 = vmatmul.mubr.bf16.gmra.mrb[0].mxu0 %v3905
      %v4021 = vpop.f32.mrb[0].mxu0
      %v4022 = vadd.f32 %v3563, %v4021
      %v4023 = vpop.f32.mrb[0].mxu0
      %v4024 = vadd.f32 %v3567, %v4023
      %v4025 = vpop.f32.mrb[0].mxu0
      %v4026 = vadd.f32 %v3563, %v4025
      %v4027 = vpop.f32.mrb[0].mxu0
      %v4028 = vadd.f32 %v3567, %v4027
      %4029 = vmatprep.mubr.bf16.mxu0 0
      %4030 = vmatmul.mubr.bf16.gmra.mrb[0].mxu0 %v3908
      %v4031 = vpop.f32.mrb[0].mxu0
      %v4032 = vadd.f32 %v3563, %v4031
      %v4033 = vpop.f32.mrb[0].mxu0
      %v4034 = vadd.f32 %v3567, %v4033
      %v4035 = vpop.f32.mrb[0].mxu0
      %v4036 = vadd.f32 %v3563, %v4035
      %v4037 = vpop.f32.mrb[0].mxu0
      %v4038 = vadd.f32 %v3567, %v4037
      %4039 = vmatprep.mubr.bf16.mxu0 0
      %4040 = vmatmul.mubr.bf16.gmra.mrb[0].mxu0 %v3911
      %v4041 = vpop.f32.mrb[0].mxu0
      %v4042 = vadd.f32 %v3563, %v4041
      %v4043 = vpop.f32.mrb[0].mxu0
      %v4044 = vadd.f32 %v3567, %v4043
      %v4045 = vpop.f32.mrb[0].mxu0
      %v4046 = vadd.f32 %v3563, %v4045
      %v4047 = vpop.f32.mrb[0].mxu0
      %v4048 = vadd.f32 %v3567, %v4047
      %4049 = vmatprep.mubr.bf16.mxu0 0
      %4050 = vmatmul.mubr.bf16.gmra.mrb[0].mxu0 %v3914
      %v4051 = vpop.f32.mrb[0].mxu0
      %v4052 = vadd.f32 %v3563, %v4051
      %v4053 = vpop.f32.mrb[0].mxu0
      %v4054 = vadd.f32 %v3567, %v4053
      %v4055 = vpop.f32.mrb[0].mxu0
      %v4056 = vadd.f32 %v3563, %v4055
      %v4057 = vpop.f32.mrb[0].mxu0
      %v4058 = vadd.f32 %v3567, %v4057
      %4059 = vmatprep.mubr.bf16.mxu0 0
      %4060 = vmatmul.mubr.bf16.gmra.mrb[0].mxu0 %v3917
      %v4061 = vpop.f32.mrb[0].mxu0
      %v4062 = vadd.f32 %v3563, %v4061
      %v4063 = vpop.f32.mrb[0].mxu0
      %v4064 = vadd.f32 %v3567, %v4063
      %v4065 = vpop.f32.mrb[0].mxu0
      %v4066 = vadd.f32 %v3563, %v4065
      %v4067 = vpop.f32.mrb[0].mxu0
      %v4068 = vadd.f32 %v3567, %v4067
      %4069 = vmatprep.mubr.bf16.mxu0 0
      %4070 = vmatmul.mubr.bf16.gmra.mrb[0].mxu0 %v3920
      %v4071 = vpop.f32.mrb[0].mxu0
      %v4072 = vadd.f32 %v3563, %v4071
      %v4073 = vpop.f32.mrb[0].mxu0
      %v4074 = vadd.f32 %v3567, %v4073
      %v4075 = vpop.f32.mrb[0].mxu0
      %v4076 = vadd.f32 %v3563, %v4075
      %v4077 = vpop.f32.mrb[0].mxu0
      %v4078 = vadd.f32 %v3567, %v4077
      %4079 = vmatprep.mubr.bf16.mxu0 0
      %4080 = vmatmul.mubr.bf16.gmra.mrb[0].mxu0 %v3923
      %v4081 = vpop.f32.mrb[0].mxu0
      %v4082 = vadd.f32 %v3563, %v4081
      %v4083 = vpop.f32.mrb[0].mxu0
      %v4084 = vadd.f32 %v3567, %v4083
      %v4085 = vpop.f32.mrb[0].mxu0
      %v4086 = vadd.f32 %v3563, %v4085
      %v4087 = vpop.f32.mrb[0].mxu0
      %v4088 = vadd.f32 %v3567, %v4087
      %4089 = vmatprep.mubr.bf16.mxu0 0
      %4090 = vmatmul.mubr.bf16.gmra.mrb[0].mxu0 %v3926
      %v4091 = vpop.f32.mrb[0].mxu0
      %v4092 = vadd.f32 %v3563, %v4091
      %v4093 = vpop.f32.mrb[0].mxu0
      %v4094 = vadd.f32 %v3567, %v4093
      %v4095 = vpop.f32.mrb[0].mxu0
      %v4096 = vadd.f32 %v3563, %v4095
      %v4097 = vpop.f32.mrb[0].mxu0
      %v4098 = vadd.f32 %v3567, %v4097
      %4099 = vmatprep.mubr.bf16.mxu0 0
      %4100 = vmatmul.mubr.bf16.gmra.mrb[0].mxu0 %v3929
      %v4101 = vpop.f32.mrb[0].mxu0
      %v4102 = vadd.f32 %v3563, %v4101
      %v4103 = vpop.f32.mrb[0].mxu0
      %v4104 = vadd.f32 %v3567, %v4103
      %v4105 = vpop.f32.mrb[0].mxu0
      %v4106 = vadd.f32 %v3563, %v4105
      %v4107 = vpop.f32.mrb[0].mxu0
      %v4108 = vadd.f32 %v3567, %v4107
      %4109 = vmatprep.mubr.bf16.mxu0 0
      %4110 = vmatmul.mubr.bf16.gmra.mrb[0].mxu0 %v3932
      %v4111 = vpop.f32.mrb[0].mxu0
      %v4112 = vadd.f32 %v3563, %v4111
      %v4113 = vpop.f32.mrb[0].mxu0
      %v4114 = vadd.f32 %v3567, %v4113
      %v4115 = vpop.f32.mrb[0].mxu0
      %v4116 = vadd.f32 %v3563, %v4115
      %v4117 = vpop.f32.mrb[0].mxu0
      %v4118 = vadd.f32 %v3567, %v4117
      %4119 = vmatprep.mubr.bf16.mxu0 0
      %4120 = vmatmul.mubr.bf16.gmra.mrb[0].mxu0 %v3935
      %v4121 = vpop.f32.mrb[0].mxu0
      %v4122 = vadd.f32 %v3563, %v4121
      %v4123 = vpop.f32.mrb[0].mxu0
      %v4124 = vadd.f32 %v3567, %v4123
      %v4125 = vpop.f32.mrb[0].mxu0
      %v4126 = vadd.f32 %v3563, %v4125
      %v4127 = vpop.f32.mrb[0].mxu0
      %v4128 = vadd.f32 %v3567, %v4127
      %4129 = vdwg.mxu0
      %4130 = vmatprep.subr.bf16.mxu0 %v3788
      %4131 = vmatpush1.bf16.msra.mxu0 %v3787
      %4132 = vmatprep.subr.bf16.mxu0 %v3801
      %4133 = vmatpush1.bf16.msra.mxu0 %v3800
      %4134 = vmatprep.subr.bf16.mxu0 %v3814
      %4135 = vmatpush1.bf16.msra.mxu0 %v3813
      %4136 = vmatprep.subr.bf16.mxu0 %v3827
      %4137 = vmatpush1.bf16.msra.mxu0 %v3826
      %4138 = vmatprep.subr.bf16.mxu0 0
      %4139 = vmatpush1.bf16.msra.mxu0 0
      %4140 = vmatprep.subr.bf16.mxu0 0
      %4141 = vmatpush1.bf16.msra.mxu0 0
      %4142 = vmatprep.subr.bf16.mxu0 0
      %4143 = vmatpush1.bf16.msra.mxu0 0
      %4144 = vmatprep.subr.bf16.mxu0 0
      %4145 = vmatpush1.bf16.msra.mxu0 0
      %4146 = vmatprep.subr.bf16.mxu0 0
      %4147 = vmatpush1.bf16.msra.mxu0 0
      %4148 = vmatprep.subr.bf16.mxu0 0
      %4149 = vmatpush1.bf16.msra.mxu0 0
      %4150 = vmatprep.subr.bf16.mxu0 0
      %4151 = vmatpush1.bf16.msra.mxu0 0
      %4152 = vmatprep.subr.bf16.mxu0 0
      %4153 = vmatpush1.bf16.msra.mxu0 0
      %4154 = vmatprep.subr.bf16.mxu0 0
      %4155 = vmatpush1.bf16.msra.mxu0 0
      %4156 = vmatprep.subr.bf16.mxu0 0
      %4157 = vmatpush1.bf16.msra.mxu0 0
      %4158 = vmatprep.subr.bf16.mxu0 0
      %4159 = vmatpush1.bf16.msra.mxu0 0
      %4160 = vmatprep.subr.bf16.mxu0 0
      %4161 = vmatpush1.bf16.msra.mxu0 0
      %4162 = vmatprep.mubr.bf16.mxu0 0
      %4163 = vmatmul.mubr.bf16.gmra.mrb[0].mxu0 %v3890
      %v4164 = vpop.f32.mrb[0].mxu0
      %v4165 = vadd.f32 %v3571, %v4164
      %v4166 = vpop.f32.mrb[0].mxu0
      %v4167 = vadd.f32 %v3575, %v4166
      %v4168 = vpop.f32.mrb[0].mxu0
      %v4169 = vadd.f32 %v3571, %v4168
      %v4170 = vpop.f32.mrb[0].mxu0
      %v4171 = vadd.f32 %v3575, %v4170
      %4172 = vmatprep.mubr.bf16.mxu0 0
      %4173 = vmatmul.mubr.bf16.gmra.mrb[0].mxu0 %v3893
      %v4174 = vpop.f32.mrb[0].mxu0
      %v4175 = vadd.f32 %v3571, %v4174
      %v4176 = vpop.f32.mrb[0].mxu0
      %v4177 = vadd.f32 %v3575, %v4176
      %v4178 = vpop.f32.mrb[0].mxu0
      %v4179 = vadd.f32 %v3571, %v4178
      %v4180 = vpop.f32.mrb[0].mxu0
      %v4181 = vadd.f32 %v3575, %v4180
      %4182 = vmatprep.mubr.bf16.mxu0 0
      %4183 = vmatmul.mubr.bf16.gmra.mrb[0].mxu0 %v3896
      %v4184 = vpop.f32.mrb[0].mxu0
      %v4185 = vadd.f32 %v3571, %v4184
      %v4186 = vpop.f32.mrb[0].mxu0
      %v4187 = vadd.f32 %v3575, %v4186
      %v4188 = vpop.f32.mrb[0].mxu0
      %v4189 = vadd.f32 %v3571, %v4188
      %v4190 = vpop.f32.mrb[0].mxu0
      %v4191 = vadd.f32 %v3575, %v4190
      %4192 = vmatprep.mubr.bf16.mxu0 0
      %4193 = vmatmul.mubr.bf16.gmra.mrb[0].mxu0 %v3899
      %v4194 = vpop.f32.mrb[0].mxu0
      %v4195 = vadd.f32 %v3571, %v4194
      %v4196 = vpop.f32.mrb[0].mxu0
      %v4197 = vadd.f32 %v3575, %v4196
      %v4198 = vpop.f32.mrb[0].mxu0
      %v4199 = vadd.f32 %v3571, %v4198
      %v4200 = vpop.f32.mrb[0].mxu0
      %v4201 = vadd.f32 %v3575, %v4200
      %4202 = vmatprep.mubr.bf16.mxu0 0
      %4203 = vmatmul.mubr.bf16.gmra.mrb[0].mxu0 %v3902
      %v4204 = vpop.f32.mrb[0].mxu0
      %v4205 = vadd.f32 %v3571, %v4204
      %v4206 = vpop.f32.mrb[0].mxu0
      %v4207 = vadd.f32 %v3575, %v4206
      %v4208 = vpop.f32.mrb[0].mxu0
      %v4209 = vadd.f32 %v3571, %v4208
      %v4210 = vpop.f32.mrb[0].mxu0
      %v4211 = vadd.f32 %v3575, %v4210
      %4212 = vmatprep.mubr.bf16.mxu0 0
      %4213 = vmatmul.mubr.bf16.gmra.mrb[0].mxu0 %v3905
      %v4214 = vpop.f32.mrb[0].mxu0
      %v4215 = vadd.f32 %v3571, %v4214
      %v4216 = vpop.f32.mrb[0].mxu0
      %v4217 = vadd.f32 %v3575, %v4216
      %v4218 = vpop.f32.mrb[0].mxu0
      %v4219 = vadd.f32 %v3571, %v4218
      %v4220 = vpop.f32.mrb[0].mxu0
      %v4221 = vadd.f32 %v3575, %v4220
      %4222 = vmatprep.mubr.bf16.mxu0 0
      %4223 = vmatmul.mubr.bf16.gmra.mrb[0].mxu0 %v3908
      %v4224 = vpop.f32.mrb[0].mxu0
      %v4225 = vadd.f32 %v3571, %v4224
      %v4226 = vpop.f32.mrb[0].mxu0
      %v4227 = vadd.f32 %v3575, %v4226
      %v4228 = vpop.f32.mrb[0].mxu0
      %v4229 = vadd.f32 %v3571, %v4228
      %v4230 = vpop.f32.mrb[0].mxu0
      %v4231 = vadd.f32 %v3575, %v4230
      %4232 = vmatprep.mubr.bf16.mxu0 0
      %4233 = vmatmul.mubr.bf16.gmra.mrb[0].mxu0 %v3911
      %v4234 = vpop.f32.mrb[0].mxu0
      %v4235 = vadd.f32 %v3571, %v4234
      %v4236 = vpop.f32.mrb[0].mxu0
      %v4237 = vadd.f32 %v3575, %v4236
      %v4238 = vpop.f32.mrb[0].mxu0
      %v4239 = vadd.f32 %v3571, %v4238
      %v4240 = vpop.f32.mrb[0].mxu0
      %v4241 = vadd.f32 %v3575, %v4240
      %4242 = vmatprep.mubr.bf16.mxu0 0
      %4243 = vmatmul.mubr.bf16.gmra.mrb[0].mxu0 %v3914
      %v4244 = vpop.f32.mrb[0].mxu0
      %v4245 = vadd.f32 %v3571, %v4244
      %v4246 = vpop.f32.mrb[0].mxu0
      %v4247 = vadd.f32 %v3575, %v4246
      %v4248 = vpop.f32.mrb[0].mxu0
      %v4249 = vadd.f32 %v3571, %v4248
      %v4250 = vpop.f32.mrb[0].mxu0
      %v4251 = vadd.f32 %v3575, %v4250
      %4252 = vmatprep.mubr.bf16.mxu0 0
      %4253 = vmatmul.mubr.bf16.gmra.mrb[0].mxu0 %v3917
      %v4254 = vpop.f32.mrb[0].mxu0
      %v4255 = vadd.f32 %v3571, %v4254
      %v4256 = vpop.f32.mrb[0].mxu0
      %v4257 = vadd.f32 %v3575, %v4256
      %v4258 = vpop.f32.mrb[0].mxu0
      %v4259 = vadd.f32 %v3571, %v4258
      %v4260 = vpop.f32.mrb[0].mxu0
      %v4261 = vadd.f32 %v3575, %v4260
      %4262 = vmatprep.mubr.bf16.mxu0 0
      %4263 = vmatmul.mubr.bf16.gmra.mrb[0].mxu0 %v3920
      %v4264 = vpop.f32.mrb[0].mxu0
      %v4265 = vadd.f32 %v3571, %v4264
      %v4266 = vpop.f32.mrb[0].mxu0
      %v4267 = vadd.f32 %v3575, %v4266
      %v4268 = vpop.f32.mrb[0].mxu0
      %v4269 = vadd.f32 %v3571, %v4268
      %v4270 = vpop.f32.mrb[0].mxu0
      %v4271 = vadd.f32 %v3575, %v4270
      %4272 = vmatprep.mubr.bf16.mxu0 0
      %4273 = vmatmul.mubr.bf16.gmra.mrb[0].mxu0 %v3923
      %v4274 = vpop.f32.mrb[0].mxu0
      %v4275 = vadd.f32 %v3571, %v4274
      %v4276 = vpop.f32.mrb[0].mxu0
      %v4277 = vadd.f32 %v3575, %v4276
      %v4278 = vpop.f32.mrb[0].mxu0
      %v4279 = vadd.f32 %v3571, %v4278
      %v4280 = vpop.f32.mrb[0].mxu0
      %v4281 = vadd.f32 %v3575, %v4280
      %4282 = vmatprep.mubr.bf16.mxu0 0
      %4283 = vmatmul.mubr.bf16.gmra.mrb[0].mxu0 %v3926
      %v4284 = vpop.f32.mrb[0].mxu0
      %v4285 = vadd.f32 %v3571, %v4284
      %v4286 = vpop.f32.mrb[0].mxu0
      %v4287 = vadd.f32 %v3575, %v4286
      %v4288 = vpop.f32.mrb[0].mxu0
      %v4289 = vadd.f32 %v3571, %v4288
      %v4290 = vpop.f32.mrb[0].mxu0
      %v4291 = vadd.f32 %v3575, %v4290
      %4292 = vmatprep.mubr.bf16.mxu0 0
      %4293 = vmatmul.mubr.bf16.gmra.mrb[0].mxu0 %v3929
      %v4294 = vpop.f32.mrb[0].mxu0
      %v4295 = vadd.f32 %v3571, %v4294
      %v4296 = vpop.f32.mrb[0].mxu0
      %v4297 = vadd.f32 %v3575, %v4296
      %v4298 = vpop.f32.mrb[0].mxu0
      %v4299 = vadd.f32 %v3571, %v4298
      %v4300 = vpop.f32.mrb[0].mxu0
      %v4301 = vadd.f32 %v3575, %v4300
      %4302 = vmatprep.mubr.bf16.mxu0 0
      %4303 = vmatmul.mubr.bf16.gmra.mrb[0].mxu0 %v3932
      %v4304 = vpop.f32.mrb[0].mxu0
      %v4305 = vadd.f32 %v3571, %v4304
      %v4306 = vpop.f32.mrb[0].mxu0
      %v4307 = vadd.f32 %v3575, %v4306
      %v4308 = vpop.f32.mrb[0].mxu0
      %v4309 = vadd.f32 %v3571, %v4308
      %v4310 = vpop.f32.mrb[0].mxu0
      %v4311 = vadd.f32 %v3575, %v4310
      %4312 = vmatprep.mubr.bf16.mxu0 0
      %4313 = vmatmul.mubr.bf16.gmra.mrb[0].mxu0 %v3935
      %v4314 = vpop.f32.mrb[0].mxu0
      %v4315 = vadd.f32 %v3571, %v4314
      %v4316 = vpop.f32.mrb[0].mxu0
      %v4317 = vadd.f32 %v3575, %v4316
      %v4318 = vpop.f32.mrb[0].mxu0
      %v4319 = vadd.f32 %v3571, %v4318
      %v4320 = vpop.f32.mrb[0].mxu0
      %v4321 = vadd.f32 %v3575, %v4320
      %4322 = vdwg.mxu0
      %4323 = vmatprep.subr.bf16.mxu0 %v3790
      %4324 = vmatpush1.bf16.msra.mxu0 %v3789
      %4325 = vmatprep.subr.bf16.mxu0 %v3803
      %4326 = vmatpush1.bf16.msra.mxu0 %v3802
      %4327 = vmatprep.subr.bf16.mxu0 %v3816
      %4328 = vmatpush1.bf16.msra.mxu0 %v3815
      %4329 = vmatprep.subr.bf16.mxu0 %v3829
      %4330 = vmatpush1.bf16.msra.mxu0 %v3828
      %4331 = vmatprep.subr.bf16.mxu0 0
      %4332 = vmatpush1.bf16.msra.mxu0 0
      %4333 = vmatprep.subr.bf16.mxu0 0
      %4334 = vmatpush1.bf16.msra.mxu0 0
      %4335 = vmatprep.subr.bf16.mxu0 0
      %4336 = vmatpush1.bf16.msra.mxu0 0
      %4337 = vmatprep.subr.bf16.mxu0 0
      %4338 = vmatpush1.bf16.msra.mxu0 0
      %4339 = vmatprep.subr.bf16.mxu0 0
      %4340 = vmatpush1.bf16.msra.mxu0 0
      %4341 = vmatprep.subr.bf16.mxu0 0
      %4342 = vmatpush1.bf16.msra.mxu0 0
      %4343 = vmatprep.subr.bf16.mxu0 0
      %4344 = vmatpush1.bf16.msra.mxu0 0
      %4345 = vmatprep.subr.bf16.mxu0 0
      %4346 = vmatpush1.bf16.msra.mxu0 0
      %4347 = vmatprep.subr.bf16.mxu0 0
      %4348 = vmatpush1.bf16.msra.mxu0 0
      %4349 = vmatprep.subr.bf16.mxu0 0
      %4350 = vmatpush1.bf16.msra.mxu0 0
      %4351 = vmatprep.subr.bf16.mxu0 0
      %4352 = vmatpush1.bf16.msra.mxu0 0
      %4353 = vmatprep.subr.bf16.mxu0 0
      %4354 = vmatpush1.bf16.msra.mxu0 0
      %4355 = vmatprep.mubr.bf16.mxu0 0
      %4356 = vmatmul.mubr.bf16.gmra.mrb[0].mxu0 %v3890
      %v4357 = vpop.f32.mrb[0].mxu0
      %v4358 = vadd.f32 %v3579, %v4357
      %v4359 = vpop.f32.mrb[0].mxu0
      %v4360 = vadd.f32 %v3583, %v4359
      %v4361 = vpop.f32.mrb[0].mxu0
      %v4362 = vadd.f32 %v3579, %v4361
      %v4363 = vpop.f32.mrb[0].mxu0
      %v4364 = vadd.f32 %v3583, %v4363
      %4365 = vmatprep.mubr.bf16.mxu0 0
      %4366 = vmatmul.mubr.bf16.gmra.mrb[0].mxu0 %v3893
      %v4367 = vpop.f32.mrb[0].mxu0
      %v4368 = vadd.f32 %v3579, %v4367
      %v4369 = vpop.f32.mrb[0].mxu0
      %v4370 = vadd.f32 %v3583, %v4369
      %v4371 = vpop.f32.mrb[0].mxu0
      %v4372 = vadd.f32 %v3579, %v4371
      %v4373 = vpop.f32.mrb[0].mxu0
      %v4374 = vadd.f32 %v3583, %v4373
      %4375 = vmatprep.mubr.bf16.mxu0 0
      %4376 = vmatmul.mubr.bf16.gmra.mrb[0].mxu0 %v3896
      %v4377 = vpop.f32.mrb[0].mxu0
      %v4378 = vadd.f32 %v3579, %v4377
      %v4379 = vpop.f32.mrb[0].mxu0
      %v4380 = vadd.f32 %v3583, %v4379
      %v4381 = vpop.f32.mrb[0].mxu0
      %v4382 = vadd.f32 %v3579, %v4381
      %v4383 = vpop.f32.mrb[0].mxu0
      %v4384 = vadd.f32 %v3583, %v4383
      %4385 = vmatprep.mubr.bf16.mxu0 0
      %4386 = vmatmul.mubr.bf16.gmra.mrb[0].mxu0 %v3899
      %v4387 = vpop.f32.mrb[0].mxu0
      %v4388 = vadd.f32 %v3579, %v4387
      %v4389 = vpop.f32.mrb[0].mxu0
      %v4390 = vadd.f32 %v3583, %v4389
      %v4391 = vpop.f32.mrb[0].mxu0
      %v4392 = vadd.f32 %v3579, %v4391
      %v4393 = vpop.f32.mrb[0].mxu0
      %v4394 = vadd.f32 %v3583, %v4393
      %4395 = vmatprep.mubr.bf16.mxu0 0
      %4396 = vmatmul.mubr.bf16.gmra.mrb[0].mxu0 %v3902
      %v4397 = vpop.f32.mrb[0].mxu0
      %v4398 = vadd.f32 %v3579, %v4397
      %v4399 = vpop.f32.mrb[0].mxu0
      %v4400 = vadd.f32 %v3583, %v4399
      %v4401 = vpop.f32.mrb[0].mxu0
      %v4402 = vadd.f32 %v3579, %v4401
      %v4403 = vpop.f32.mrb[0].mxu0
      %v4404 = vadd.f32 %v3583, %v4403
      %4405 = vmatprep.mubr.bf16.mxu0 0
      %4406 = vmatmul.mubr.bf16.gmra.mrb[0].mxu0 %v3905
      %v4407 = vpop.f32.mrb[0].mxu0
      %v4408 = vadd.f32 %v3579, %v4407
      %v4409 = vpop.f32.mrb[0].mxu0
      %v4410 = vadd.f32 %v3583, %v4409
      %v4411 = vpop.f32.mrb[0].mxu0
      %v4412 = vadd.f32 %v3579, %v4411
      %v4413 = vpop.f32.mrb[0].mxu0
      %v4414 = vadd.f32 %v3583, %v4413
      %4415 = vmatprep.mubr.bf16.mxu0 0
      %4416 = vmatmul.mubr.bf16.gmra.mrb[0].mxu0 %v3908
      %v4417 = vpop.f32.mrb[0].mxu0
      %v4418 = vadd.f32 %v3579, %v4417
      %v4419 = vpop.f32.mrb[0].mxu0
      %v4420 = vadd.f32 %v3583, %v4419
      %v4421 = vpop.f32.mrb[0].mxu0
      %v4422 = vadd.f32 %v3579, %v4421
      %v4423 = vpop.f32.mrb[0].mxu0
      %v4424 = vadd.f32 %v3583, %v4423
      %4425 = vmatprep.mubr.bf16.mxu0 0
      %4426 = vmatmul.mubr.bf16.gmra.mrb[0].mxu0 %v3911
      %v4427 = vpop.f32.mrb[0].mxu0
      %v4428 = vadd.f32 %v3579, %v4427
      %v4429 = vpop.f32.mrb[0].mxu0
      %v4430 = vadd.f32 %v3583, %v4429
      %v4431 = vpop.f32.mrb[0].mxu0
      %v4432 = vadd.f32 %v3579, %v4431
      %v4433 = vpop.f32.mrb[0].mxu0
      %v4434 = vadd.f32 %v3583, %v4433
      %4435 = vmatprep.mubr.bf16.mxu0 0
      %4436 = vmatmul.mubr.bf16.gmra.mrb[0].mxu0 %v3914
      %v4437 = vpop.f32.mrb[0].mxu0
      %v4438 = vadd.f32 %v3579, %v4437
      %v4439 = vpop.f32.mrb[0].mxu0
      %v4440 = vadd.f32 %v3583, %v4439
      %v4441 = vpop.f32.mrb[0].mxu0
      %v4442 = vadd.f32 %v3579, %v4441
      %v4443 = vpop.f32.mrb[0].mxu0
      %v4444 = vadd.f32 %v3583, %v4443
      %4445 = vmatprep.mubr.bf16.mxu0 0
      %4446 = vmatmul.mubr.bf16.gmra.mrb[0].mxu0 %v3917
      %v4447 = vpop.f32.mrb[0].mxu0
      %v4448 = vadd.f32 %v3579, %v4447
      %v4449 = vpop.f32.mrb[0].mxu0
      %v4450 = vadd.f32 %v3583, %v4449
      %v4451 = vpop.f32.mrb[0].mxu0
      %v4452 = vadd.f32 %v3579, %v4451
      %v4453 = vpop.f32.mrb[0].mxu0
      %v4454 = vadd.f32 %v3583, %v4453
      %4455 = vmatprep.mubr.bf16.mxu0 0
      %4456 = vmatmul.mubr.bf16.gmra.mrb[0].mxu0 %v3920
      %v4457 = vpop.f32.mrb[0].mxu0
      %v4458 = vadd.f32 %v3579, %v4457
      %v4459 = vpop.f32.mrb[0].mxu0
      %v4460 = vadd.f32 %v3583, %v4459
      %v4461 = vpop.f32.mrb[0].mxu0
      %v4462 = vadd.f32 %v3579, %v4461
      %v4463 = vpop.f32.mrb[0].mxu0
      %v4464 = vadd.f32 %v3583, %v4463
      %4465 = vmatprep.mubr.bf16.mxu0 0
      %4466 = vmatmul.mubr.bf16.gmra.mrb[0].mxu0 %v3923
      %v4467 = vpop.f32.mrb[0].mxu0
      %v4468 = vadd.f32 %v3579, %v4467
      %v4469 = vpop.f32.mrb[0].mxu0
      %v4470 = vadd.f32 %v3583, %v4469
      %v4471 = vpop.f32.mrb[0].mxu0
      %v4472 = vadd.f32 %v3579, %v4471
      %v4473 = vpop.f32.mrb[0].mxu0
      %v4474 = vadd.f32 %v3583, %v4473
      %4475 = vmatprep.mubr.bf16.mxu0 0
      %4476 = vmatmul.mubr.bf16.gmra.mrb[0].mxu0 %v3926
      %v4477 = vpop.f32.mrb[0].mxu0
      %v4478 = vadd.f32 %v3579, %v4477
      %v4479 = vpop.f32.mrb[0].mxu0
      %v4480 = vadd.f32 %v3583, %v4479
      %v4481 = vpop.f32.mrb[0].mxu0
      %v4482 = vadd.f32 %v3579, %v4481
      %v4483 = vpop.f32.mrb[0].mxu0
      %v4484 = vadd.f32 %v3583, %v4483
      %4485 = vmatprep.mubr.bf16.mxu0 0
      %4486 = vmatmul.mubr.bf16.gmra.mrb[0].mxu0 %v3929
      %v4487 = vpop.f32.mrb[0].mxu0
      %v4488 = vadd.f32 %v3579, %v4487
      %v4489 = vpop.f32.mrb[0].mxu0
      %v4490 = vadd.f32 %v3583, %v4489
      %v4491 = vpop.f32.mrb[0].mxu0
      %v4492 = vadd.f32 %v3579, %v4491
      %v4493 = vpop.f32.mrb[0].mxu0
      %v4494 = vadd.f32 %v3583, %v4493
      %4495 = vmatprep.mubr.bf16.mxu0 0
      %4496 = vmatmul.mubr.bf16.gmra.mrb[0].mxu0 %v3932
      %v4497 = vpop.f32.mrb[0].mxu0
      %v4498 = vadd.f32 %v3579, %v4497
      %v4499 = vpop.f32.mrb[0].mxu0
      %v4500 = vadd.f32 %v3583, %v4499
      %v4501 = vpop.f32.mrb[0].mxu0
      %v4502 = vadd.f32 %v3579, %v4501
      %v4503 = vpop.f32.mrb[0].mxu0
      %v4504 = vadd.f32 %v3583, %v4503
      %4505 = vmatprep.mubr.bf16.mxu0 0
      %4506 = vmatmul.mubr.bf16.gmra.mrb[0].mxu0 %v3935
      %v4507 = vpop.f32.mrb[0].mxu0
      %v4508 = vadd.f32 %v3579, %v4507
      %v4509 = vpop.f32.mrb[0].mxu0
      %v4510 = vadd.f32 %v3583, %v4509
      %v4511 = vpop.f32.mrb[0].mxu0
      %v4512 = vadd.f32 %v3579, %v4511
      %v4513 = vpop.f32.mrb[0].mxu0
      %v4514 = vadd.f32 %v3583, %v4513
      %4515 = vdwg.mxu0
      %4516 = vmatprep.subr.bf16.mxu0 %v3792
      %4517 = vmatpush1.bf16.msra.mxu0 %v3791
      %4518 = vmatprep.subr.bf16.mxu0 %v3805
      %4519 = vmatpush1.bf16.msra.mxu0 %v3804
      %4520 = vmatprep.subr.bf16.mxu0 %v3818
      %4521 = vmatpush1.bf16.msra.mxu0 %v3817
      %4522 = vmatprep.subr.bf16.mxu0 %v3831
      %4523 = vmatpush1.bf16.msra.mxu0 %v3830
      %4524 = vmatprep.subr.bf16.mxu0 0
      %4525 = vmatpush1.bf16.msra.mxu0 0
      %4526 = vmatprep.subr.bf16.mxu0 0
      %4527 = vmatpush1.bf16.msra.mxu0 0
      %4528 = vmatprep.subr.bf16.mxu0 0
      %4529 = vmatpush1.bf16.msra.mxu0 0
      %4530 = vmatprep.subr.bf16.mxu0 0
      %4531 = vmatpush1.bf16.msra.mxu0 0
      %4532 = vmatprep.subr.bf16.mxu0 0
      %4533 = vmatpush1.bf16.msra.mxu0 0
      %4534 = vmatprep.subr.bf16.mxu0 0
      %4535 = vmatpush1.bf16.msra.mxu0 0
      %4536 = vmatprep.subr.bf16.mxu0 0
      %4537 = vmatpush1.bf16.msra.mxu0 0
      %4538 = vmatprep.subr.bf16.mxu0 0
      %4539 = vmatpush1.bf16.msra.mxu0 0
      %4540 = vmatprep.subr.bf16.mxu0 0
      %4541 = vmatpush1.bf16.msra.mxu0 0
      %4542 = vmatprep.subr.bf16.mxu0 0
      %4543 = vmatpush1.bf16.msra.mxu0 0
      %4544 = vmatprep.subr.bf16.mxu0 0
      %4545 = vmatpush1.bf16.msra.mxu0 0
      %4546 = vmatprep.subr.bf16.mxu0 0
      %4547 = vmatpush1.bf16.msra.mxu0 0
      %4548 = vmatprep.mubr.bf16.mxu0 0
      %4549 = vmatmul.mubr.bf16.gmra.mrb[0].mxu0 %v3890
      %v4550 = vpop.f32.mrb[0].mxu0
      %v4551 = vadd.f32 %v3587, %v4550
      %v4552 = vpop.f32.mrb[0].mxu0
      %v4553 = vadd.f32 %v3591, %v4552
      %v4554 = vpop.f32.mrb[0].mxu0
      %v4555 = vadd.f32 %v3587, %v4554
      %v4556 = vpop.f32.mrb[0].mxu0
      %v4557 = vadd.f32 %v3591, %v4556
      %4558 = vmatprep.mubr.bf16.mxu0 0
      %4559 = vmatmul.mubr.bf16.gmra.mrb[0].mxu0 %v3893
      %v4560 = vpop.f32.mrb[0].mxu0
      %v4561 = vadd.f32 %v3587, %v4560
      %v4562 = vpop.f32.mrb[0].mxu0
      %v4563 = vadd.f32 %v3591, %v4562
      %v4564 = vpop.f32.mrb[0].mxu0
      %v4565 = vadd.f32 %v3587, %v4564
      %v4566 = vpop.f32.mrb[0].mxu0
      %v4567 = vadd.f32 %v3591, %v4566
      %4568 = vmatprep.mubr.bf16.mxu0 0
      %4569 = vmatmul.mubr.bf16.gmra.mrb[0].mxu0 %v3896
      %v4570 = vpop.f32.mrb[0].mxu0
      %v4571 = vadd.f32 %v3587, %v4570
      %v4572 = vpop.f32.mrb[0].mxu0
      %v4573 = vadd.f32 %v3591, %v4572
      %v4574 = vpop.f32.mrb[0].mxu0
      %v4575 = vadd.f32 %v3587, %v4574
      %v4576 = vpop.f32.mrb[0].mxu0
      %v4577 = vadd.f32 %v3591, %v4576
      %4578 = vmatprep.mubr.bf16.mxu0 0
      %4579 = vmatmul.mubr.bf16.gmra.mrb[0].mxu0 %v3899
      %v4580 = vpop.f32.mrb[0].mxu0
      %v4581 = vadd.f32 %v3587, %v4580
      %v4582 = vpop.f32.mrb[0].mxu0
      %v4583 = vadd.f32 %v3591, %v4582
      %v4584 = vpop.f32.mrb[0].mxu0
      %v4585 = vadd.f32 %v3587, %v4584
      %v4586 = vpop.f32.mrb[0].mxu0
      %v4587 = vadd.f32 %v3591, %v4586
      %4588 = vmatprep.mubr.bf16.mxu0 0
      %4589 = vmatmul.mubr.bf16.gmra.mrb[0].mxu0 %v3902
      %v4590 = vpop.f32.mrb[0].mxu0
      %v4591 = vadd.f32 %v3587, %v4590
      %v4592 = vpop.f32.mrb[0].mxu0
      %v4593 = vadd.f32 %v3591, %v4592
      %v4594 = vpop.f32.mrb[0].mxu0
      %v4595 = vadd.f32 %v3587, %v4594
      %v4596 = vpop.f32.mrb[0].mxu0
      %v4597 = vadd.f32 %v3591, %v4596
      %4598 = vmatprep.mubr.bf16.mxu0 0
      %4599 = vmatmul.mubr.bf16.gmra.mrb[0].mxu0 %v3905
      %v4600 = vpop.f32.mrb[0].mxu0
      %v4601 = vadd.f32 %v3587, %v4600
      %v4602 = vpop.f32.mrb[0].mxu0
      %v4603 = vadd.f32 %v3591, %v4602
      %v4604 = vpop.f32.mrb[0].mxu0
      %v4605 = vadd.f32 %v3587, %v4604
      %v4606 = vpop.f32.mrb[0].mxu0
      %v4607 = vadd.f32 %v3591, %v4606
      %4608 = vmatprep.mubr.bf16.mxu0 0
      %4609 = vmatmul.mubr.bf16.gmra.mrb[0].mxu0 %v3908
      %v4610 = vpop.f32.mrb[0].mxu0
      %v4611 = vadd.f32 %v3587, %v4610
      %v4612 = vpop.f32.mrb[0].mxu0
      %v4613 = vadd.f32 %v3591, %v4612
      %v4614 = vpop.f32.mrb[0].mxu0
      %v4615 = vadd.f32 %v3587, %v4614
      %v4616 = vpop.f32.mrb[0].mxu0
      %v4617 = vadd.f32 %v3591, %v4616
      %4618 = vmatprep.mubr.bf16.mxu0 0
      %4619 = vmatmul.mubr.bf16.gmra.mrb[0].mxu0 %v3911
      %v4620 = vpop.f32.mrb[0].mxu0
      %v4621 = vadd.f32 %v3587, %v4620
      %v4622 = vpop.f32.mrb[0].mxu0
      %v4623 = vadd.f32 %v3591, %v4622
      %v4624 = vpop.f32.mrb[0].mxu0
      %v4625 = vadd.f32 %v3587, %v4624
      %v4626 = vpop.f32.mrb[0].mxu0
      %v4627 = vadd.f32 %v3591, %v4626
      %4628 = vmatprep.mubr.bf16.mxu0 0
      %4629 = vmatmul.mubr.bf16.gmra.mrb[0].mxu0 %v3914
      %v4630 = vpop.f32.mrb[0].mxu0
      %v4631 = vadd.f32 %v3587, %v4630
      %v4632 = vpop.f32.mrb[0].mxu0
      %v4633 = vadd.f32 %v3591, %v4632
      %v4634 = vpop.f32.mrb[0].mxu0
      %v4635 = vadd.f32 %v3587, %v4634
      %v4636 = vpop.f32.mrb[0].mxu0
      %v4637 = vadd.f32 %v3591, %v4636
      %4638 = vmatprep.mubr.bf16.mxu0 0
      %4639 = vmatmul.mubr.bf16.gmra.mrb[0].mxu0 %v3917
      %v4640 = vpop.f32.mrb[0].mxu0
      %v4641 = vadd.f32 %v3587, %v4640
      %v4642 = vpop.f32.mrb[0].mxu0
      %v4643 = vadd.f32 %v3591, %v4642
      %v4644 = vpop.f32.mrb[0].mxu0
      %v4645 = vadd.f32 %v3587, %v4644
      %v4646 = vpop.f32.mrb[0].mxu0
      %v4647 = vadd.f32 %v3591, %v4646
      %4648 = vmatprep.mubr.bf16.mxu0 0
      %4649 = vmatmul.mubr.bf16.gmra.mrb[0].mxu0 %v3920
      %v4650 = vpop.f32.mrb[0].mxu0
      %v4651 = vadd.f32 %v3587, %v4650
      %v4652 = vpop.f32.mrb[0].mxu0
      %v4653 = vadd.f32 %v3591, %v4652
      %v4654 = vpop.f32.mrb[0].mxu0
      %v4655 = vadd.f32 %v3587, %v4654
      %v4656 = vpop.f32.mrb[0].mxu0
      %v4657 = vadd.f32 %v3591, %v4656
      %4658 = vmatprep.mubr.bf16.mxu0 0
      %4659 = vmatmul.mubr.bf16.gmra.mrb[0].mxu0 %v3923
      %v4660 = vpop.f32.mrb[0].mxu0
      %v4661 = vadd.f32 %v3587, %v4660
      %v4662 = vpop.f32.mrb[0].mxu0
      %v4663 = vadd.f32 %v3591, %v4662
      %v4664 = vpop.f32.mrb[0].mxu0
      %v4665 = vadd.f32 %v3587, %v4664
      %v4666 = vpop.f32.mrb[0].mxu0
      %v4667 = vadd.f32 %v3591, %v4666
      %4668 = vmatprep.mubr.bf16.mxu0 0
      %4669 = vmatmul.mubr.bf16.gmra.mrb[0].mxu0 %v3926
      %v4670 = vpop.f32.mrb[0].mxu0
      %v4671 = vadd.f32 %v3587, %v4670
      %v4672 = vpop.f32.mrb[0].mxu0
      %v4673 = vadd.f32 %v3591, %v4672
      %v4674 = vpop.f32.mrb[0].mxu0
      %v4675 = vadd.f32 %v3587, %v4674
      %v4676 = vpop.f32.mrb[0].mxu0
      %v4677 = vadd.f32 %v3591, %v4676
      %4678 = vmatprep.mubr.bf16.mxu0 0
      %4679 = vmatmul.mubr.bf16.gmra.mrb[0].mxu0 %v3929
      %v4680 = vpop.f32.mrb[0].mxu0
      %v4681 = vadd.f32 %v3587, %v4680
      %v4682 = vpop.f32.mrb[0].mxu0
      %v4683 = vadd.f32 %v3591, %v4682
      %v4684 = vpop.f32.mrb[0].mxu0
      %v4685 = vadd.f32 %v3587, %v4684
      %v4686 = vpop.f32.mrb[0].mxu0
      %v4687 = vadd.f32 %v3591, %v4686
      %4688 = vmatprep.mubr.bf16.mxu0 0
      %4689 = vmatmul.mubr.bf16.gmra.mrb[0].mxu0 %v3932
      %v4690 = vpop.f32.mrb[0].mxu0
      %v4691 = vadd.f32 %v3587, %v4690
      %v4692 = vpop.f32.mrb[0].mxu0
      %v4693 = vadd.f32 %v3591, %v4692
      %v4694 = vpop.f32.mrb[0].mxu0
      %v4695 = vadd.f32 %v3587, %v4694
      %v4696 = vpop.f32.mrb[0].mxu0
      %v4697 = vadd.f32 %v3591, %v4696
      %4698 = vmatprep.mubr.bf16.mxu0 0
      %4699 = vmatmul.mubr.bf16.gmra.mrb[0].mxu0 %v3935
      %v4700 = vpop.f32.mrb[0].mxu0
      %v4701 = vadd.f32 %v3587, %v4700
      %v4702 = vpop.f32.mrb[0].mxu0
      %v4703 = vadd.f32 %v3591, %v4702
      %v4704 = vpop.f32.mrb[0].mxu0
      %v4705 = vadd.f32 %v3587, %v4704
      %v4706 = vpop.f32.mrb[0].mxu0
      %v4707 = vadd.f32 %v3591, %v4706
      %4708 = vdwg.mxu0
      %4709 = vmatprep.subr.bf16.mxu0 %v3794
      %4710 = vmatpush1.bf16.msra.mxu0 %v3793
      %4711 = vmatprep.subr.bf16.mxu0 %v3807
      %4712 = vmatpush1.bf16.msra.mxu0 %v3806
      %4713 = vmatprep.subr.bf16.mxu0 %v3820
      %4714 = vmatpush1.bf16.msra.mxu0 %v3819
      %4715 = vmatprep.subr.bf16.mxu0 %v3833
      %4716 = vmatpush1.bf16.msra.mxu0 %v3832
      %4717 = vmatprep.subr.bf16.mxu0 0
      %4718 = vmatpush1.bf16.msra.mxu0 0
      %4719 = vmatprep.subr.bf16.mxu0 0
      %4720 = vmatpush1.bf16.msra.mxu0 0
      %4721 = vmatprep.subr.bf16.mxu0 0
      %4722 = vmatpush1.bf16.msra.mxu0 0
      %4723 = vmatprep.subr.bf16.mxu0 0
      %4724 = vmatpush1.bf16.msra.mxu0 0
      %4725 = vmatprep.subr.bf16.mxu0 0
      %4726 = vmatpush1.bf16.msra.mxu0 0
      %4727 = vmatprep.subr.bf16.mxu0 0
      %4728 = vmatpush1.bf16.msra.mxu0 0
      %4729 = vmatprep.subr.bf16.mxu0 0
      %4730 = vmatpush1.bf16.msra.mxu0 0
      %4731 = vmatprep.subr.bf16.mxu0 0
      %4732 = vmatpush1.bf16.msra.mxu0 0
      %4733 = vmatprep.subr.bf16.mxu0 0
      %4734 = vmatpush1.bf16.msra.mxu0 0
      %4735 = vmatprep.subr.bf16.mxu0 0
      %4736 = vmatpush1.bf16.msra.mxu0 0
      %4737 = vmatprep.subr.bf16.mxu0 0
      %4738 = vmatpush1.bf16.msra.mxu0 0
      %4739 = vmatprep.subr.bf16.mxu0 0
      %4740 = vmatpush1.bf16.msra.mxu0 0
      %4741 = vmatprep.mubr.bf16.mxu0 0
      %4742 = vmatmul.mubr.bf16.gmra.mrb[0].mxu0 %v3890
      %v4743 = vpop.f32.mrb[0].mxu0
      %v4744 = vadd.f32 %v3595, %v4743
      %v4745 = vpop.f32.mrb[0].mxu0
      %v4746 = vadd.f32 %v3599, %v4745
      %v4747 = vpop.f32.mrb[0].mxu0
      %v4748 = vadd.f32 %v3595, %v4747
      %v4749 = vpop.f32.mrb[0].mxu0
      %v4750 = vadd.f32 %v3599, %v4749
      %4751 = vmatprep.mubr.bf16.mxu0 0
      %4752 = vmatmul.mubr.bf16.gmra.mrb[0].mxu0 %v3893
      %v4753 = vpop.f32.mrb[0].mxu0
      %v4754 = vadd.f32 %v3595, %v4753
      %v4755 = vpop.f32.mrb[0].mxu0
      %v4756 = vadd.f32 %v3599, %v4755
      %v4757 = vpop.f32.mrb[0].mxu0
      %v4758 = vadd.f32 %v3595, %v4757
      %v4759 = vpop.f32.mrb[0].mxu0
      %v4760 = vadd.f32 %v3599, %v4759
      %4761 = vmatprep.mubr.bf16.mxu0 0
      %4762 = vmatmul.mubr.bf16.gmra.mrb[0].mxu0 %v3896
      %v4763 = vpop.f32.mrb[0].mxu0
      %v4764 = vadd.f32 %v3595, %v4763
      %v4765 = vpop.f32.mrb[0].mxu0
      %v4766 = vadd.f32 %v3599, %v4765
      %v4767 = vpop.f32.mrb[0].mxu0
      %v4768 = vadd.f32 %v3595, %v4767
      %v4769 = vpop.f32.mrb[0].mxu0
      %v4770 = vadd.f32 %v3599, %v4769
      %4771 = vmatprep.mubr.bf16.mxu0 0
      %4772 = vmatmul.mubr.bf16.gmra.mrb[0].mxu0 %v3899
      %v4773 = vpop.f32.mrb[0].mxu0
      %v4774 = vadd.f32 %v3595, %v4773
      %v4775 = vpop.f32.mrb[0].mxu0
      %v4776 = vadd.f32 %v3599, %v4775
      %v4777 = vpop.f32.mrb[0].mxu0
      %v4778 = vadd.f32 %v3595, %v4777
      %v4779 = vpop.f32.mrb[0].mxu0
      %v4780 = vadd.f32 %v3599, %v4779
      %4781 = vmatprep.mubr.bf16.mxu0 0
      %4782 = vmatmul.mubr.bf16.gmra.mrb[0].mxu0 %v3902
      %v4783 = vpop.f32.mrb[0].mxu0
      %v4784 = vadd.f32 %v3595, %v4783
      %v4785 = vpop.f32.mrb[0].mxu0
      %v4786 = vadd.f32 %v3599, %v4785
      %v4787 = vpop.f32.mrb[0].mxu0
      %v4788 = vadd.f32 %v3595, %v4787
      %v4789 = vpop.f32.mrb[0].mxu0
      %v4790 = vadd.f32 %v3599, %v4789
      %4791 = vmatprep.mubr.bf16.mxu0 0
      %4792 = vmatmul.mubr.bf16.gmra.mrb[0].mxu0 %v3905
      %v4793 = vpop.f32.mrb[0].mxu0
      %v4794 = vadd.f32 %v3595, %v4793
      %v4795 = vpop.f32.mrb[0].mxu0
      %v4796 = vadd.f32 %v3599, %v4795
      %v4797 = vpop.f32.mrb[0].mxu0
      %v4798 = vadd.f32 %v3595, %v4797
      %v4799 = vpop.f32.mrb[0].mxu0
      %v4800 = vadd.f32 %v3599, %v4799
      %4801 = vmatprep.mubr.bf16.mxu0 0
      %4802 = vmatmul.mubr.bf16.gmra.mrb[0].mxu0 %v3908
      %v4803 = vpop.f32.mrb[0].mxu0
      %v4804 = vadd.f32 %v3595, %v4803
      %v4805 = vpop.f32.mrb[0].mxu0
      %v4806 = vadd.f32 %v3599, %v4805
      %v4807 = vpop.f32.mrb[0].mxu0
      %v4808 = vadd.f32 %v3595, %v4807
      %v4809 = vpop.f32.mrb[0].mxu0
      %v4810 = vadd.f32 %v3599, %v4809
      %4811 = vmatprep.mubr.bf16.mxu0 0
      %4812 = vmatmul.mubr.bf16.gmra.mrb[0].mxu0 %v3911
      %v4813 = vpop.f32.mrb[0].mxu0
      %v4814 = vadd.f32 %v3595, %v4813
      %v4815 = vpop.f32.mrb[0].mxu0
      %v4816 = vadd.f32 %v3599, %v4815
      %v4817 = vpop.f32.mrb[0].mxu0
      %v4818 = vadd.f32 %v3595, %v4817
      %v4819 = vpop.f32.mrb[0].mxu0
      %v4820 = vadd.f32 %v3599, %v4819
      %4821 = vmatprep.mubr.bf16.mxu0 0
      %4822 = vmatmul.mubr.bf16.gmra.mrb[0].mxu0 %v3914
      %v4823 = vpop.f32.mrb[0].mxu0
      %v4824 = vadd.f32 %v3595, %v4823
      %v4825 = vpop.f32.mrb[0].mxu0
      %v4826 = vadd.f32 %v3599, %v4825
      %v4827 = vpop.f32.mrb[0].mxu0
      %v4828 = vadd.f32 %v3595, %v4827
      %v4829 = vpop.f32.mrb[0].mxu0
      %v4830 = vadd.f32 %v3599, %v4829
      %4831 = vmatprep.mubr.bf16.mxu0 0
      %4832 = vmatmul.mubr.bf16.gmra.mrb[0].mxu0 %v3917
      %v4833 = vpop.f32.mrb[0].mxu0
      %v4834 = vadd.f32 %v3595, %v4833
      %v4835 = vpop.f32.mrb[0].mxu0
      %v4836 = vadd.f32 %v3599, %v4835
      %v4837 = vpop.f32.mrb[0].mxu0
      %v4838 = vadd.f32 %v3595, %v4837
      %v4839 = vpop.f32.mrb[0].mxu0
      %v4840 = vadd.f32 %v3599, %v4839
      %4841 = vmatprep.mubr.bf16.mxu0 0
      %4842 = vmatmul.mubr.bf16.gmra.mrb[0].mxu0 %v3920
      %v4843 = vpop.f32.mrb[0].mxu0
      %v4844 = vadd.f32 %v3595, %v4843
      %v4845 = vpop.f32.mrb[0].mxu0
      %v4846 = vadd.f32 %v3599, %v4845
      %v4847 = vpop.f32.mrb[0].mxu0
      %v4848 = vadd.f32 %v3595, %v4847
      %v4849 = vpop.f32.mrb[0].mxu0
      %v4850 = vadd.f32 %v3599, %v4849
      %4851 = vmatprep.mubr.bf16.mxu0 0
      %4852 = vmatmul.mubr.bf16.gmra.mrb[0].mxu0 %v3923
      %v4853 = vpop.f32.mrb[0].mxu0
      %v4854 = vadd.f32 %v3595, %v4853
      %v4855 = vpop.f32.mrb[0].mxu0
      %v4856 = vadd.f32 %v3599, %v4855
      %v4857 = vpop.f32.mrb[0].mxu0
      %v4858 = vadd.f32 %v3595, %v4857
      %v4859 = vpop.f32.mrb[0].mxu0
      %v4860 = vadd.f32 %v3599, %v4859
      %4861 = vmatprep.mubr.bf16.mxu0 0
      %4862 = vmatmul.mubr.bf16.gmra.mrb[0].mxu0 %v3926
      %v4863 = vpop.f32.mrb[0].mxu0
      %v4864 = vadd.f32 %v3595, %v4863
      %v4865 = vpop.f32.mrb[0].mxu0
      %v4866 = vadd.f32 %v3599, %v4865
      %v4867 = vpop.f32.mrb[0].mxu0
      %v4868 = vadd.f32 %v3595, %v4867
      %v4869 = vpop.f32.mrb[0].mxu0
      %v4870 = vadd.f32 %v3599, %v4869
      %4871 = vmatprep.mubr.bf16.mxu0 0
      %4872 = vmatmul.mubr.bf16.gmra.mrb[0].mxu0 %v3929
      %v4873 = vpop.f32.mrb[0].mxu0
      %v4874 = vadd.f32 %v3595, %v4873
      %v4875 = vpop.f32.mrb[0].mxu0
      %v4876 = vadd.f32 %v3599, %v4875
      %v4877 = vpop.f32.mrb[0].mxu0
      %v4878 = vadd.f32 %v3595, %v4877
      %v4879 = vpop.f32.mrb[0].mxu0
      %v4880 = vadd.f32 %v3599, %v4879
      %4881 = vmatprep.mubr.bf16.mxu0 0
      %4882 = vmatmul.mubr.bf16.gmra.mrb[0].mxu0 %v3932
      %v4883 = vpop.f32.mrb[0].mxu0
      %v4884 = vadd.f32 %v3595, %v4883
      %v4885 = vpop.f32.mrb[0].mxu0
      %v4886 = vadd.f32 %v3599, %v4885
      %v4887 = vpop.f32.mrb[0].mxu0
      %v4888 = vadd.f32 %v3595, %v4887
      %v4889 = vpop.f32.mrb[0].mxu0
      %v4890 = vadd.f32 %v3599, %v4889
      %4891 = vmatprep.mubr.bf16.mxu0 0
      %4892 = vmatmul.mubr.bf16.gmra.mrb[0].mxu0 %v3935
      %v4893 = vpop.f32.mrb[0].mxu0
      %v4894 = vadd.f32 %v3595, %v4893
      %v4895 = vpop.f32.mrb[0].mxu0
      %v4896 = vadd.f32 %v3599, %v4895
      %v4897 = vpop.f32.mrb[0].mxu0
      %v4898 = vadd.f32 %v3595, %v4897
      %v4899 = vpop.f32.mrb[0].mxu0
      %v4900 = vadd.f32 %v3599, %v4899
      %4901 = vdwg.mxu0
      %4902 = vmatprep.subr.bf16.mxu0 %v3796
      %4903 = vmatpush1.bf16.msra.mxu0 %v3795
      %4904 = vmatprep.subr.bf16.mxu0 %v3809
      %4905 = vmatpush1.bf16.msra.mxu0 %v3808
      %4906 = vmatprep.subr.bf16.mxu0 %v3822
      %4907 = vmatpush1.bf16.msra.mxu0 %v3821
      %4908 = vmatprep.subr.bf16.mxu0 %v3835
      %4909 = vmatpush1.bf16.msra.mxu0 %v3834
      %4910 = vmatprep.subr.bf16.mxu0 0
      %4911 = vmatpush1.bf16.msra.mxu0 0
      %4912 = vmatprep.subr.bf16.mxu0 0
      %4913 = vmatpush1.bf16.msra.mxu0 0
      %4914 = vmatprep.subr.bf16.mxu0 0
      %4915 = vmatpush1.bf16.msra.mxu0 0
      %4916 = vmatprep.subr.bf16.mxu0 0
      %4917 = vmatpush1.bf16.msra.mxu0 0
      %4918 = vmatprep.subr.bf16.mxu0 0
      %4919 = vmatpush1.bf16.msra.mxu0 0
      %4920 = vmatprep.subr.bf16.mxu0 0
      %4921 = vmatpush1.bf16.msra.mxu0 0
      %4922 = vmatprep.subr.bf16.mxu0 0
      %4923 = vmatpush1.bf16.msra.mxu0 0
      %4924 = vmatprep.subr.bf16.mxu0 0
      %4925 = vmatpush1.bf16.msra.mxu0 0
      %4926 = vmatprep.subr.bf16.mxu0 0
      %4927 = vmatpush1.bf16.msra.mxu0 0
      %4928 = vmatprep.subr.bf16.mxu0 0
      %4929 = vmatpush1.bf16.msra.mxu0 0
      %4930 = vmatprep.subr.bf16.mxu0 0
      %4931 = vmatpush1.bf16.msra.mxu0 0
      %4932 = vmatprep.subr.bf16.mxu0 0
      %4933 = vmatpush1.bf16.msra.mxu0 0
      %4934 = vmatprep.mubr.bf16.mxu0 0
      %4935 = vmatmul.mubr.bf16.gmra.mrb[0].mxu0 %v3890
      %v4936 = vpop.f32.mrb[0].mxu0
      %v4937 = vadd.f32 %v3603, %v4936
      %v4938 = vpop.f32.mrb[0].mxu0
      %v4939 = vadd.f32 %v3607, %v4938
      %v4940 = vpop.f32.mrb[0].mxu0
      %v4941 = vadd.f32 %v3603, %v4940
      %v4942 = vpop.f32.mrb[0].mxu0
      %v4943 = vadd.f32 %v3607, %v4942
      %4944 = vmatprep.mubr.bf16.mxu0 0
      %4945 = vmatmul.mubr.bf16.gmra.mrb[0].mxu0 %v3893
      %v4946 = vpop.f32.mrb[0].mxu0
      %v4947 = vadd.f32 %v3603, %v4946
      %v4948 = vpop.f32.mrb[0].mxu0
      %v4949 = vadd.f32 %v3607, %v4948
      %v4950 = vpop.f32.mrb[0].mxu0
      %v4951 = vadd.f32 %v3603, %v4950
      %v4952 = vpop.f32.mrb[0].mxu0
      %v4953 = vadd.f32 %v3607, %v4952
      %4954 = vmatprep.mubr.bf16.mxu0 0
      %4955 = vmatmul.mubr.bf16.gmra.mrb[0].mxu0 %v3896
      %v4956 = vpop.f32.mrb[0].mxu0
      %v4957 = vadd.f32 %v3603, %v4956
      %v4958 = vpop.f32.mrb[0].mxu0
      %v4959 = vadd.f32 %v3607, %v4958
      %v4960 = vpop.f32.mrb[0].mxu0
      %v4961 = vadd.f32 %v3603, %v4960
      %v4962 = vpop.f32.mrb[0].mxu0
      %v4963 = vadd.f32 %v3607, %v4962
      %4964 = vmatprep.mubr.bf16.mxu0 0
      %4965 = vmatmul.mubr.bf16.gmra.mrb[0].mxu0 %v3899
      %v4966 = vpop.f32.mrb[0].mxu0
      %v4967 = vadd.f32 %v3603, %v4966
      %v4968 = vpop.f32.mrb[0].mxu0
      %v4969 = vadd.f32 %v3607, %v4968
      %v4970 = vpop.f32.mrb[0].mxu0
      %v4971 = vadd.f32 %v3603, %v4970
      %v4972 = vpop.f32.mrb[0].mxu0
      %v4973 = vadd.f32 %v3607, %v4972
      %4974 = vmatprep.mubr.bf16.mxu0 0
      %4975 = vmatmul.mubr.bf16.gmra.mrb[0].mxu0 %v3902
      %v4976 = vpop.f32.mrb[0].mxu0
      %v4977 = vadd.f32 %v3603, %v4976
      %v4978 = vpop.f32.mrb[0].mxu0
      %v4979 = vadd.f32 %v3607, %v4978
      %v4980 = vpop.f32.mrb[0].mxu0
      %v4981 = vadd.f32 %v3603, %v4980
      %v4982 = vpop.f32.mrb[0].mxu0
      %v4983 = vadd.f32 %v3607, %v4982
      %4984 = vmatprep.mubr.bf16.mxu0 0
      %4985 = vmatmul.mubr.bf16.gmra.mrb[0].mxu0 %v3905
      %v4986 = vpop.f32.mrb[0].mxu0
      %v4987 = vadd.f32 %v3603, %v4986
      %v4988 = vpop.f32.mrb[0].mxu0
      %v4989 = vadd.f32 %v3607, %v4988
      %v4990 = vpop.f32.mrb[0].mxu0
      %v4991 = vadd.f32 %v3603, %v4990
      %v4992 = vpop.f32.mrb[0].mxu0
      %v4993 = vadd.f32 %v3607, %v4992
      %4994 = vmatprep.mubr.bf16.mxu0 0
      %4995 = vmatmul.mubr.bf16.gmra.mrb[0].mxu0 %v3908
      %v4996 = vpop.f32.mrb[0].mxu0
      %v4997 = vadd.f32 %v3603, %v4996
      %v4998 = vpop.f32.mrb[0].mxu0
      %v4999 = vadd.f32 %v3607, %v4998
      %v5000 = vpop.f32.mrb[0].mxu0
      %v5001 = vadd.f32 %v3603, %v5000
      %v5002 = vpop.f32.mrb[0].mxu0
      %v5003 = vadd.f32 %v3607, %v5002
      %5004 = vmatprep.mubr.bf16.mxu0 0
      %5005 = vmatmul.mubr.bf16.gmra.mrb[0].mxu0 %v3911
      %v5006 = vpop.f32.mrb[0].mxu0
      %v5007 = vadd.f32 %v3603, %v5006
      %v5008 = vpop.f32.mrb[0].mxu0
      %v5009 = vadd.f32 %v3607, %v5008
      %v5010 = vpop.f32.mrb[0].mxu0
      %v5011 = vadd.f32 %v3603, %v5010
      %v5012 = vpop.f32.mrb[0].mxu0
      %v5013 = vadd.f32 %v3607, %v5012
      %5014 = vmatprep.mubr.bf16.mxu0 0
      %5015 = vmatmul.mubr.bf16.gmra.mrb[0].mxu0 %v3914
      %v5016 = vpop.f32.mrb[0].mxu0
      %v5017 = vadd.f32 %v3603, %v5016
      %v5018 = vpop.f32.mrb[0].mxu0
      %v5019 = vadd.f32 %v3607, %v5018
      %v5020 = vpop.f32.mrb[0].mxu0
      %v5021 = vadd.f32 %v3603, %v5020
      %v5022 = vpop.f32.mrb[0].mxu0
      %v5023 = vadd.f32 %v3607, %v5022
      %5024 = vmatprep.mubr.bf16.mxu0 0
      %5025 = vmatmul.mubr.bf16.gmra.mrb[0].mxu0 %v3917
      %v5026 = vpop.f32.mrb[0].mxu0
      %v5027 = vadd.f32 %v3603, %v5026
      %v5028 = vpop.f32.mrb[0].mxu0
      %v5029 = vadd.f32 %v3607, %v5028
      %v5030 = vpop.f32.mrb[0].mxu0
      %v5031 = vadd.f32 %v3603, %v5030
      %v5032 = vpop.f32.mrb[0].mxu0
      %v5033 = vadd.f32 %v3607, %v5032
      %5034 = vmatprep.mubr.bf16.mxu0 0
      %5035 = vmatmul.mubr.bf16.gmra.mrb[0].mxu0 %v3920
      %v5036 = vpop.f32.mrb[0].mxu0
      %v5037 = vadd.f32 %v3603, %v5036
      %v5038 = vpop.f32.mrb[0].mxu0
      %v5039 = vadd.f32 %v3607, %v5038
      %v5040 = vpop.f32.mrb[0].mxu0
      %v5041 = vadd.f32 %v3603, %v5040
      %v5042 = vpop.f32.mrb[0].mxu0
      %v5043 = vadd.f32 %v3607, %v5042
      %5044 = vmatprep.mubr.bf16.mxu0 0
      %5045 = vmatmul.mubr.bf16.gmra.mrb[0].mxu0 %v3923
      %v5046 = vpop.f32.mrb[0].mxu0
      %v5047 = vadd.f32 %v3603, %v5046
      %v5048 = vpop.f32.mrb[0].mxu0
      %v5049 = vadd.f32 %v3607, %v5048
      %v5050 = vpop.f32.mrb[0].mxu0
      %v5051 = vadd.f32 %v3603, %v5050
      %v5052 = vpop.f32.mrb[0].mxu0
      %v5053 = vadd.f32 %v3607, %v5052
      %5054 = vmatprep.mubr.bf16.mxu0 0
      %5055 = vmatmul.mubr.bf16.gmra.mrb[0].mxu0 %v3926
      %v5056 = vpop.f32.mrb[0].mxu0
      %v5057 = vadd.f32 %v3603, %v5056
      %v5058 = vpop.f32.mrb[0].mxu0
      %v5059 = vadd.f32 %v3607, %v5058
      %v5060 = vpop.f32.mrb[0].mxu0
      %v5061 = vadd.f32 %v3603, %v5060
      %v5062 = vpop.f32.mrb[0].mxu0
      %v5063 = vadd.f32 %v3607, %v5062
      %5064 = vmatprep.mubr.bf16.mxu0 0
      %5065 = vmatmul.mubr.bf16.gmra.mrb[0].mxu0 %v3929
      %v5066 = vpop.f32.mrb[0].mxu0
      %v5067 = vadd.f32 %v3603, %v5066
      %v5068 = vpop.f32.mrb[0].mxu0
      %v5069 = vadd.f32 %v3607, %v5068
      %v5070 = vpop.f32.mrb[0].mxu0
      %v5071 = vadd.f32 %v3603, %v5070
      %v5072 = vpop.f32.mrb[0].mxu0
      %v5073 = vadd.f32 %v3607, %v5072
      %5074 = vmatprep.mubr.bf16.mxu0 0
      %5075 = vmatmul.mubr.bf16.gmra.mrb[0].mxu0 %v3932
      %v5076 = vpop.f32.mrb[0].mxu0
      %v5077 = vadd.f32 %v3603, %v5076
      %v5078 = vpop.f32.mrb[0].mxu0
      %v5079 = vadd.f32 %v3607, %v5078
      %v5080 = vpop.f32.mrb[0].mxu0
      %v5081 = vadd.f32 %v3603, %v5080
      %v5082 = vpop.f32.mrb[0].mxu0
      %v5083 = vadd.f32 %v3607, %v5082
      %5084 = vmatprep.mubr.bf16.mxu0 0
      %5085 = vmatmul.mubr.bf16.gmra.mrb[0].mxu0 %v3935
      %v5086 = vpop.f32.mrb[0].mxu0
      %v5087 = vadd.f32 %v3603, %v5086
      %v5088 = vpop.f32.mrb[0].mxu0
      %v5089 = vadd.f32 %v3607, %v5088
      %v5090 = vpop.f32.mrb[0].mxu0
      %v5091 = vadd.f32 %v3603, %v5090
      %v5092 = vpop.f32.mrb[0].mxu0
      %v5093 = vadd.f32 %v3607, %v5092
      %5094 = vdwg.mxu0
      %5095 = vmatprep.subr.bf16.mxu0 0
      %5096 = vmatpush1.bf16.msra.mxu0 %v3797
      %5097 = vmatprep.subr.bf16.mxu0 0
      %5098 = vmatpush1.bf16.msra.mxu0 %v3810
      %5099 = vmatprep.subr.bf16.mxu0 0
      %5100 = vmatpush1.bf16.msra.mxu0 %v3823
      %5101 = vmatprep.subr.bf16.mxu0 0
      %5102 = vmatpush1.bf16.msra.mxu0 %v3836
      %5103 = vmatprep.subr.bf16.mxu0 0
      %5104 = vmatpush1.bf16.msra.mxu0 0
      %5105 = vmatprep.subr.bf16.mxu0 0
      %5106 = vmatpush1.bf16.msra.mxu0 0
      %5107 = vmatprep.subr.bf16.mxu0 0
      %5108 = vmatpush1.bf16.msra.mxu0 0
      %5109 = vmatprep.subr.bf16.mxu0 0
      %5110 = vmatpush1.bf16.msra.mxu0 0
      %5111 = vmatprep.subr.bf16.mxu0 0
      %5112 = vmatpush1.bf16.msra.mxu0 0
      %5113 = vmatprep.subr.bf16.mxu0 0
      %5114 = vmatpush1.bf16.msra.mxu0 0
      %5115 = vmatprep.subr.bf16.mxu0 0
      %5116 = vmatpush1.bf16.msra.mxu0 0
      %5117 = vmatprep.subr.bf16.mxu0 0
      %5118 = vmatpush1.bf16.msra.mxu0 0
      %5119 = vmatprep.subr.bf16.mxu0 0
      %5120 = vmatpush1.bf16.msra.mxu0 0
      %5121 = vmatprep.subr.bf16.mxu0 0
      %5122 = vmatpush1.bf16.msra.mxu0 0
      %5123 = vmatprep.subr.bf16.mxu0 0
      %5124 = vmatpush1.bf16.msra.mxu0 0
      %5125 = vmatprep.subr.bf16.mxu0 0
      %5126 = vmatpush1.bf16.msra.mxu0 0
      %5127 = vmatprep.mubr.bf16.mxu0 0
      %5128 = vmatmul.mubr.bf16.gmra.mrb[0].mxu0 %v3890
      %v5129 = vpop.f32.mrb[0].mxu0
      %v5130 = vadd.f32 %v3611, %v5129
      %v5131 = vpop.f32.mrb[0].mxu0
      %v5132 = vpop.f32.mrb[0].mxu0
      %v5133 = vadd.f32 %v3611, %v5132
      %v5134 = vpop.f32.mrb[0].mxu0
      %5135 = vmatprep.mubr.bf16.mxu0 0
      %5136 = vmatmul.mubr.bf16.gmra.mrb[0].mxu0 %v3893
      %v5137 = vpop.f32.mrb[0].mxu0
      %v5138 = vadd.f32 %v3611, %v5137
      %v5139 = vpop.f32.mrb[0].mxu0
      %v5140 = vpop.f32.mrb[0].mxu0
      %v5141 = vadd.f32 %v3611, %v5140
      %v5142 = vpop.f32.mrb[0].mxu0
      %5143 = vmatprep.mubr.bf16.mxu0 0
      %5144 = vmatmul.mubr.bf16.gmra.mrb[0].mxu0 %v3896
      %v5145 = vpop.f32.mrb[0].mxu0
      %v5146 = vadd.f32 %v3611, %v5145
      %v5147 = vpop.f32.mrb[0].mxu0
      %v5148 = vpop.f32.mrb[0].mxu0
      %v5149 = vadd.f32 %v3611, %v5148
      %v5150 = vpop.f32.mrb[0].mxu0
      %5151 = vmatprep.mubr.bf16.mxu0 0
      %5152 = vmatmul.mubr.bf16.gmra.mrb[0].mxu0 %v3899
      %v5153 = vpop.f32.mrb[0].mxu0
      %v5154 = vadd.f32 %v3611, %v5153
      %v5155 = vpop.f32.mrb[0].mxu0
      %v5156 = vpop.f32.mrb[0].mxu0
      %v5157 = vadd.f32 %v3611, %v5156
      %v5158 = vpop.f32.mrb[0].mxu0
      %5159 = vmatprep.mubr.bf16.mxu0 0
      %5160 = vmatmul.mubr.bf16.gmra.mrb[0].mxu0 %v3902
      %v5161 = vpop.f32.mrb[0].mxu0
      %v5162 = vadd.f32 %v3611, %v5161
      %v5163 = vpop.f32.mrb[0].mxu0
      %v5164 = vpop.f32.mrb[0].mxu0
      %v5165 = vadd.f32 %v3611, %v5164
      %v5166 = vpop.f32.mrb[0].mxu0
      %5167 = vmatprep.mubr.bf16.mxu0 0
      %5168 = vmatmul.mubr.bf16.gmra.mrb[0].mxu0 %v3905
      %v5169 = vpop.f32.mrb[0].mxu0
      %v5170 = vadd.f32 %v3611, %v5169
      %v5171 = vpop.f32.mrb[0].mxu0
      %v5172 = vpop.f32.mrb[0].mxu0
      %v5173 = vadd.f32 %v3611, %v5172
      %v5174 = vpop.f32.mrb[0].mxu0
      %5175 = vmatprep.mubr.bf16.mxu0 0
      %5176 = vmatmul.mubr.bf16.gmra.mrb[0].mxu0 %v3908
      %v5177 = vpop.f32.mrb[0].mxu0
      %v5178 = vadd.f32 %v3611, %v5177
      %v5179 = vpop.f32.mrb[0].mxu0
      %v5180 = vpop.f32.mrb[0].mxu0
      %v5181 = vadd.f32 %v3611, %v5180
      %v5182 = vpop.f32.mrb[0].mxu0
      %5183 = vmatprep.mubr.bf16.mxu0 0
      %5184 = vmatmul.mubr.bf16.gmra.mrb[0].mxu0 %v3911
      %v5185 = vpop.f32.mrb[0].mxu0
      %v5186 = vadd.f32 %v3611, %v5185
      %v5187 = vpop.f32.mrb[0].mxu0
      %v5188 = vpop.f32.mrb[0].mxu0
      %v5189 = vadd.f32 %v3611, %v5188
      %v5190 = vpop.f32.mrb[0].mxu0
      %5191 = vmatprep.mubr.bf16.mxu0 0
      %5192 = vmatmul.mubr.bf16.gmra.mrb[0].mxu0 %v3914
      %v5193 = vpop.f32.mrb[0].mxu0
      %v5194 = vadd.f32 %v3611, %v5193
      %v5195 = vpop.f32.mrb[0].mxu0
      %v5196 = vpop.f32.mrb[0].mxu0
      %v5197 = vadd.f32 %v3611, %v5196
      %v5198 = vpop.f32.mrb[0].mxu0
      %5199 = vmatprep.mubr.bf16.mxu0 0
      %5200 = vmatmul.mubr.bf16.gmra.mrb[0].mxu0 %v3917
      %v5201 = vpop.f32.mrb[0].mxu0
      %v5202 = vadd.f32 %v3611, %v5201
      %v5203 = vpop.f32.mrb[0].mxu0
      %v5204 = vpop.f32.mrb[0].mxu0
      %v5205 = vadd.f32 %v3611, %v5204
      %v5206 = vpop.f32.mrb[0].mxu0
      %5207 = vmatprep.mubr.bf16.mxu0 0
      %5208 = vmatmul.mubr.bf16.gmra.mrb[0].mxu0 %v3920
      %v5209 = vpop.f32.mrb[0].mxu0
      %v5210 = vadd.f32 %v3611, %v5209
      %v5211 = vpop.f32.mrb[0].mxu0
      %v5212 = vpop.f32.mrb[0].mxu0
      %v5213 = vadd.f32 %v3611, %v5212
      %v5214 = vpop.f32.mrb[0].mxu0
      %5215 = vmatprep.mubr.bf16.mxu0 0
      %5216 = vmatmul.mubr.bf16.gmra.mrb[0].mxu0 %v3923
      %v5217 = vpop.f32.mrb[0].mxu0
      %v5218 = vadd.f32 %v3611, %v5217
      %v5219 = vpop.f32.mrb[0].mxu0
      %v5220 = vpop.f32.mrb[0].mxu0
      %v5221 = vadd.f32 %v3611, %v5220
      %v5222 = vpop.f32.mrb[0].mxu0
      %5223 = vmatprep.mubr.bf16.mxu0 0
      %5224 = vmatmul.mubr.bf16.gmra.mrb[0].mxu0 %v3926
      %v5225 = vpop.f32.mrb[0].mxu0
      %v5226 = vadd.f32 %v3611, %v5225
      %v5227 = vpop.f32.mrb[0].mxu0
      %v5228 = vpop.f32.mrb[0].mxu0
      %v5229 = vadd.f32 %v3611, %v5228
      %v5230 = vpop.f32.mrb[0].mxu0
      %5231 = vmatprep.mubr.bf16.mxu0 0
      %5232 = vmatmul.mubr.bf16.gmra.mrb[0].mxu0 %v3929
      %v5233 = vpop.f32.mrb[0].mxu0
      %v5234 = vadd.f32 %v3611, %v5233
      %v5235 = vpop.f32.mrb[0].mxu0
      %v5236 = vpop.f32.mrb[0].mxu0
      %v5237 = vadd.f32 %v3611, %v5236
      %v5238 = vpop.f32.mrb[0].mxu0
      %5239 = vmatprep.mubr.bf16.mxu0 0
      %5240 = vmatmul.mubr.bf16.gmra.mrb[0].mxu0 %v3932
      %v5241 = vpop.f32.mrb[0].mxu0
      %v5242 = vadd.f32 %v3611, %v5241
      %v5243 = vpop.f32.mrb[0].mxu0
      %v5244 = vpop.f32.mrb[0].mxu0
      %v5245 = vadd.f32 %v3611, %v5244
      %v5246 = vpop.f32.mrb[0].mxu0
      %5247 = vmatprep.mubr.bf16.mxu0 0
      %5248 = vmatmul.mubr.bf16.gmra.mrb[0].mxu0 %v3935
      %v5249 = vpop.f32.mrb[0].mxu0
      %v5250 = vadd.f32 %v3611, %v5249
      %v5251 = vpop.f32.mrb[0].mxu0
      %v5252 = vpop.f32.mrb[0].mxu0
      %v5253 = vadd.f32 %v3611, %v5252
      %v5254 = vpop.f32.mrb[0].mxu0
      %5255 = vdwg.mxu0
      %v5256 = vmax.f32 %v3972, 0.0
      %v5257 = vmax.f32 %v3974, 0.0
      %v5258 = vmax.f32 %v4165, 0.0
      %v5259 = vmax.f32 %v4167, 0.0
      %v5260 = vmax.f32 %v4358, 0.0
      %v5261 = vmax.f32 %v4360, 0.0
      %v5262 = vmax.f32 %v4551, 0.0
      %v5263 = vmax.f32 %v4553, 0.0
      %v5264 = vmax.f32 %v4744, 0.0
      %v5265 = vmax.f32 %v4746, 0.0
      %v5266 = vmax.f32 %v4937, 0.0
      %v5267 = vmax.f32 %v4939, 0.0
      %v5268 = vmax.f32 %v5130, 0.0
      %v5269 = vmax.f32 %v3976, 0.0
      %v5270 = vmax.f32 %v3978, 0.0
      %v5271 = vmax.f32 %v4169, 0.0
      %v5272 = vmax.f32 %v4171, 0.0
      %v5273 = vmax.f32 %v4362, 0.0
      %v5274 = vmax.f32 %v4364, 0.0
      %v5275 = vmax.f32 %v4555, 0.0
      %v5276 = vmax.f32 %v4557, 0.0
      %v5277 = vmax.f32 %v4748, 0.0
      %v5278 = vmax.f32 %v4750, 0.0
      %v5279 = vmax.f32 %v4941, 0.0
      %v5280 = vmax.f32 %v4943, 0.0
      %v5281 = vmax.f32 %v5133, 0.0
      %v5282 = vmax.f32 %v3982, 0.0
      %v5283 = vmax.f32 %v3984, 0.0
      %v5284 = vmax.f32 %v4175, 0.0
      %v5285 = vmax.f32 %v4177, 0.0
      %v5286 = vmax.f32 %v4368, 0.0
      %v5287 = vmax.f32 %v4370, 0.0
      %v5288 = vmax.f32 %v4561, 0.0
      %v5289 = vmax.f32 %v4563, 0.0
      %v5290 = vmax.f32 %v4754, 0.0
      %v5291 = vmax.f32 %v4756, 0.0
      %v5292 = vmax.f32 %v4947, 0.0
      %v5293 = vmax.f32 %v4949, 0.0
      %v5294 = vmax.f32 %v5138, 0.0
      %v5295 = vmax.f32 %v3986, 0.0
      %v5296 = vmax.f32 %v3988, 0.0
      %v5297 = vmax.f32 %v4179, 0.0
      %v5298 = vmax.f32 %v4181, 0.0
      %v5299 = vmax.f32 %v4372, 0.0
      %v5300 = vmax.f32 %v4374, 0.0
      %v5301 = vmax.f32 %v4565, 0.0
      %v5302 = vmax.f32 %v4567, 0.0
      %v5303 = vmax.f32 %v4758, 0.0
      %v5304 = vmax.f32 %v4760, 0.0
      %v5305 = vmax.f32 %v4951, 0.0
      %v5306 = vmax.f32 %v4953, 0.0
      %v5307 = vmax.f32 %v5141, 0.0
      %v5308 = vmax.f32 %v3992, 0.0
      %v5309 = vmax.f32 %v3994, 0.0
      %v5310 = vmax.f32 %v4185, 0.0
      %v5311 = vmax.f32 %v4187, 0.0
      %v5312 = vmax.f32 %v4378, 0.0
      %v5313 = vmax.f32 %v4380, 0.0
      %v5314 = vmax.f32 %v4571, 0.0
      %v5315 = vmax.f32 %v4573, 0.0
      %v5316 = vmax.f32 %v4764, 0.0
      %v5317 = vmax.f32 %v4766, 0.0
      %v5318 = vmax.f32 %v4957, 0.0
      %v5319 = vmax.f32 %v4959, 0.0
      %v5320 = vmax.f32 %v5146, 0.0
      %v5321 = vmax.f32 %v3996, 0.0
      %v5322 = vmax.f32 %v3998, 0.0
      %v5323 = vmax.f32 %v4189, 0.0
      %v5324 = vmax.f32 %v4191, 0.0
      %v5325 = vmax.f32 %v4382, 0.0
      %v5326 = vmax.f32 %v4384, 0.0
      %v5327 = vmax.f32 %v4575, 0.0
      %v5328 = vmax.f32 %v4577, 0.0
      %v5329 = vmax.f32 %v4768, 0.0
      %v5330 = vmax.f32 %v4770, 0.0
      %v5331 = vmax.f32 %v4961, 0.0
      %v5332 = vmax.f32 %v4963, 0.0
      %v5333 = vmax.f32 %v5149, 0.0
      %v5334 = vmax.f32 %v4002, 0.0
      %v5335 = vmax.f32 %v4004, 0.0
      %v5336 = vmax.f32 %v4195, 0.0
      %v5337 = vmax.f32 %v4197, 0.0
      %v5338 = vmax.f32 %v4388, 0.0
      %v5339 = vmax.f32 %v4390, 0.0
      %v5340 = vmax.f32 %v4581, 0.0
      %v5341 = vmax.f32 %v4583, 0.0
      %v5342 = vmax.f32 %v4774, 0.0
      %v5343 = vmax.f32 %v4776, 0.0
      %v5344 = vmax.f32 %v4967, 0.0
      %v5345 = vmax.f32 %v4969, 0.0
      %v5346 = vmax.f32 %v5154, 0.0
      %v5347 = vmax.f32 %v4006, 0.0
      %v5348 = vmax.f32 %v4008, 0.0
      %v5349 = vmax.f32 %v4199, 0.0
      %v5350 = vmax.f32 %v4201, 0.0
      %v5351 = vmax.f32 %v4392, 0.0
      %v5352 = vmax.f32 %v4394, 0.0
      %v5353 = vmax.f32 %v4585, 0.0
      %v5354 = vmax.f32 %v4587, 0.0
      %v5355 = vmax.f32 %v4778, 0.0
      %v5356 = vmax.f32 %v4780, 0.0
      %v5357 = vmax.f32 %v4971, 0.0
      %v5358 = vmax.f32 %v4973, 0.0
      %v5359 = vmax.f32 %v5157, 0.0
      %v5360 = vmax.f32 %v4012, 0.0
      %v5361 = vmax.f32 %v4014, 0.0
      %v5362 = vmax.f32 %v4205, 0.0
      %v5363 = vmax.f32 %v4207, 0.0
      %v5364 = vmax.f32 %v4398, 0.0
      %v5365 = vmax.f32 %v4400, 0.0
      %v5366 = vmax.f32 %v4591, 0.0
      %v5367 = vmax.f32 %v4593, 0.0
      %v5368 = vmax.f32 %v4784, 0.0
      %v5369 = vmax.f32 %v4786, 0.0
      %v5370 = vmax.f32 %v4977, 0.0
      %v5371 = vmax.f32 %v4979, 0.0
      %v5372 = vmax.f32 %v5162, 0.0
      %v5373 = vmax.f32 %v4016, 0.0
      %v5374 = vmax.f32 %v4018, 0.0
      %v5375 = vmax.f32 %v4209, 0.0
      %v5376 = vmax.f32 %v4211, 0.0
      %v5377 = vmax.f32 %v4402, 0.0
      %v5378 = vmax.f32 %v4404, 0.0
      %v5379 = vmax.f32 %v4595, 0.0
      %v5380 = vmax.f32 %v4597, 0.0
      %v5381 = vmax.f32 %v4788, 0.0
      %v5382 = vmax.f32 %v4790, 0.0
      %v5383 = vmax.f32 %v4981, 0.0
      %v5384 = vmax.f32 %v4983, 0.0
      %v5385 = vmax.f32 %v5165, 0.0
      %v5386 = vmax.f32 %v4022, 0.0
      %v5387 = vmax.f32 %v4024, 0.0
      %v5388 = vmax.f32 %v4215, 0.0
      %v5389 = vmax.f32 %v4217, 0.0
      %v5390 = vmax.f32 %v4408, 0.0
      %v5391 = vmax.f32 %v4410, 0.0
      %v5392 = vmax.f32 %v4601, 0.0
      %v5393 = vmax.f32 %v4603, 0.0
      %v5394 = vmax.f32 %v4794, 0.0
      %v5395 = vmax.f32 %v4796, 0.0
      %v5396 = vmax.f32 %v4987, 0.0
      %v5397 = vmax.f32 %v4989, 0.0
      %v5398 = vmax.f32 %v5170, 0.0
      %v5399 = vmax.f32 %v4026, 0.0
      %v5400 = vmax.f32 %v4028, 0.0
      %v5401 = vmax.f32 %v4219, 0.0
      %v5402 = vmax.f32 %v4221, 0.0
      %v5403 = vmax.f32 %v4412, 0.0
      %v5404 = vmax.f32 %v4414, 0.0
      %v5405 = vmax.f32 %v4605, 0.0
      %v5406 = vmax.f32 %v4607, 0.0
      %v5407 = vmax.f32 %v4798, 0.0
      %v5408 = vmax.f32 %v4800, 0.0
      %v5409 = vmax.f32 %v4991, 0.0
      %v5410 = vmax.f32 %v4993, 0.0
      %v5411 = vmax.f32 %v5173, 0.0
      %v5412 = vmax.f32 %v4032, 0.0
      %v5413 = vmax.f32 %v4034, 0.0
      %v5414 = vmax.f32 %v4225, 0.0
      %v5415 = vmax.f32 %v4227, 0.0
      %v5416 = vmax.f32 %v4418, 0.0
      %v5417 = vmax.f32 %v4420, 0.0
      %v5418 = vmax.f32 %v4611, 0.0
      %v5419 = vmax.f32 %v4613, 0.0
      %v5420 = vmax.f32 %v4804, 0.0
      %v5421 = vmax.f32 %v4806, 0.0
      %v5422 = vmax.f32 %v4997, 0.0
      %v5423 = vmax.f32 %v4999, 0.0
      %v5424 = vmax.f32 %v5178, 0.0
      %v5425 = vmax.f32 %v4036, 0.0
      %v5426 = vmax.f32 %v4038, 0.0
      %v5427 = vmax.f32 %v4229, 0.0
      %v5428 = vmax.f32 %v4231, 0.0
      %v5429 = vmax.f32 %v4422, 0.0
      %v5430 = vmax.f32 %v4424, 0.0
      %v5431 = vmax.f32 %v4615, 0.0
      %v5432 = vmax.f32 %v4617, 0.0
      %v5433 = vmax.f32 %v4808, 0.0
      %v5434 = vmax.f32 %v4810, 0.0
      %v5435 = vmax.f32 %v5001, 0.0
      %v5436 = vmax.f32 %v5003, 0.0
      %v5437 = vmax.f32 %v5181, 0.0
      %v5438 = vmax.f32 %v4042, 0.0
      %v5439 = vmax.f32 %v4044, 0.0
      %v5440 = vmax.f32 %v4235, 0.0
      %v5441 = vmax.f32 %v4237, 0.0
      %v5442 = vmax.f32 %v4428, 0.0
      %v5443 = vmax.f32 %v4430, 0.0
      %v5444 = vmax.f32 %v4621, 0.0
      %v5445 = vmax.f32 %v4623, 0.0
      %v5446 = vmax.f32 %v4814, 0.0
      %v5447 = vmax.f32 %v4816, 0.0
      %v5448 = vmax.f32 %v5007, 0.0
      %v5449 = vmax.f32 %v5009, 0.0
      %v5450 = vmax.f32 %v5186, 0.0
      %v5451 = vmax.f32 %v4046, 0.0
      %v5452 = vmax.f32 %v4048, 0.0
      %v5453 = vmax.f32 %v4239, 0.0
      %v5454 = vmax.f32 %v4241, 0.0
      %v5455 = vmax.f32 %v4432, 0.0
      %v5456 = vmax.f32 %v4434, 0.0
      %v5457 = vmax.f32 %v4625, 0.0
      %v5458 = vmax.f32 %v4627, 0.0
      %v5459 = vmax.f32 %v4818, 0.0
      %v5460 = vmax.f32 %v4820, 0.0
      %v5461 = vmax.f32 %v5011, 0.0
      %v5462 = vmax.f32 %v5013, 0.0
      %v5463 = vmax.f32 %v5189, 0.0
      %v5464 = vmax.f32 %v4052, 0.0
      %v5465 = vmax.f32 %v4054, 0.0
      %v5466 = vmax.f32 %v4245, 0.0
      %v5467 = vmax.f32 %v4247, 0.0
      %v5468 = vmax.f32 %v4438, 0.0
      %v5469 = vmax.f32 %v4440, 0.0
      %v5470 = vmax.f32 %v4631, 0.0
      %v5471 = vmax.f32 %v4633, 0.0
      %v5472 = vmax.f32 %v4824, 0.0
      %v5473 = vmax.f32 %v4826, 0.0
      %v5474 = vmax.f32 %v5017, 0.0
      %v5475 = vmax.f32 %v5019, 0.0
      %v5476 = vmax.f32 %v5194, 0.0
      %v5477 = vmax.f32 %v4056, 0.0
      %v5478 = vmax.f32 %v4058, 0.0
      %v5479 = vmax.f32 %v4249, 0.0
      %v5480 = vmax.f32 %v4251, 0.0
      %v5481 = vmax.f32 %v4442, 0.0
      %v5482 = vmax.f32 %v4444, 0.0
      %v5483 = vmax.f32 %v4635, 0.0
      %v5484 = vmax.f32 %v4637, 0.0
      %v5485 = vmax.f32 %v4828, 0.0
      %v5486 = vmax.f32 %v4830, 0.0
      %v5487 = vmax.f32 %v5021, 0.0
      %v5488 = vmax.f32 %v5023, 0.0
      %v5489 = vmax.f32 %v5197, 0.0
      %v5490 = vmax.f32 %v4062, 0.0
      %v5491 = vmax.f32 %v4064, 0.0
      %v5492 = vmax.f32 %v4255, 0.0
      %v5493 = vmax.f32 %v4257, 0.0
      %v5494 = vmax.f32 %v4448, 0.0
      %v5495 = vmax.f32 %v4450, 0.0
      %v5496 = vmax.f32 %v4641, 0.0
      %v5497 = vmax.f32 %v4643, 0.0
      %v5498 = vmax.f32 %v4834, 0.0
      %v5499 = vmax.f32 %v4836, 0.0
      %v5500 = vmax.f32 %v5027, 0.0
      %v5501 = vmax.f32 %v5029, 0.0
      %v5502 = vmax.f32 %v5202, 0.0
      %v5503 = vmax.f32 %v4066, 0.0
      %v5504 = vmax.f32 %v4068, 0.0
      %v5505 = vmax.f32 %v4259, 0.0
      %v5506 = vmax.f32 %v4261, 0.0
      %v5507 = vmax.f32 %v4452, 0.0
      %v5508 = vmax.f32 %v4454, 0.0
      %v5509 = vmax.f32 %v4645, 0.0
      %v5510 = vmax.f32 %v4647, 0.0
      %v5511 = vmax.f32 %v4838, 0.0
      %v5512 = vmax.f32 %v4840, 0.0
      %v5513 = vmax.f32 %v5031, 0.0
      %v5514 = vmax.f32 %v5033, 0.0
      %v5515 = vmax.f32 %v5205, 0.0
      %v5516 = vmax.f32 %v4072, 0.0
      %v5517 = vmax.f32 %v4074, 0.0
      %v5518 = vmax.f32 %v4265, 0.0
      %v5519 = vmax.f32 %v4267, 0.0
      %v5520 = vmax.f32 %v4458, 0.0
      %v5521 = vmax.f32 %v4460, 0.0
      %v5522 = vmax.f32 %v4651, 0.0
      %v5523 = vmax.f32 %v4653, 0.0
      %v5524 = vmax.f32 %v4844, 0.0
      %v5525 = vmax.f32 %v4846, 0.0
      %v5526 = vmax.f32 %v5037, 0.0
      %v5527 = vmax.f32 %v5039, 0.0
      %v5528 = vmax.f32 %v5210, 0.0
      %v5529 = vmax.f32 %v4076, 0.0
      %v5530 = vmax.f32 %v4078, 0.0
      %v5531 = vmax.f32 %v4269, 0.0
      %v5532 = vmax.f32 %v4271, 0.0
      %v5533 = vmax.f32 %v4462, 0.0
      %v5534 = vmax.f32 %v4464, 0.0
      %v5535 = vmax.f32 %v4655, 0.0
      %v5536 = vmax.f32 %v4657, 0.0
      %v5537 = vmax.f32 %v4848, 0.0
      %v5538 = vmax.f32 %v4850, 0.0
      %v5539 = vmax.f32 %v5041, 0.0
      %v5540 = vmax.f32 %v5043, 0.0
      %v5541 = vmax.f32 %v5213, 0.0
      %v5542 = vmax.f32 %v4082, 0.0
      %v5543 = vmax.f32 %v4084, 0.0
      %v5544 = vmax.f32 %v4275, 0.0
      %v5545 = vmax.f32 %v4277, 0.0
      %v5546 = vmax.f32 %v4468, 0.0
      %v5547 = vmax.f32 %v4470, 0.0
      %v5548 = vmax.f32 %v4661, 0.0
      %v5549 = vmax.f32 %v4663, 0.0
      %v5550 = vmax.f32 %v4854, 0.0
      %v5551 = vmax.f32 %v4856, 0.0
      %v5552 = vmax.f32 %v5047, 0.0
      %v5553 = vmax.f32 %v5049, 0.0
      %v5554 = vmax.f32 %v5218, 0.0
      %v5555 = vmax.f32 %v4086, 0.0
      %v5556 = vmax.f32 %v4088, 0.0
      %v5557 = vmax.f32 %v4279, 0.0
      %v5558 = vmax.f32 %v4281, 0.0
      %v5559 = vmax.f32 %v4472, 0.0
      %v5560 = vmax.f32 %v4474, 0.0
      %v5561 = vmax.f32 %v4665, 0.0
      %v5562 = vmax.f32 %v4667, 0.0
      %v5563 = vmax.f32 %v4858, 0.0
      %v5564 = vmax.f32 %v4860, 0.0
      %v5565 = vmax.f32 %v5051, 0.0
      %v5566 = vmax.f32 %v5053, 0.0
      %v5567 = vmax.f32 %v5221, 0.0
      %v5568 = vmax.f32 %v4092, 0.0
      %v5569 = vmax.f32 %v4094, 0.0
      %v5570 = vmax.f32 %v4285, 0.0
      %v5571 = vmax.f32 %v4287, 0.0
      %v5572 = vmax.f32 %v4478, 0.0
      %v5573 = vmax.f32 %v4480, 0.0
      %v5574 = vmax.f32 %v4671, 0.0
      %v5575 = vmax.f32 %v4673, 0.0
      %v5576 = vmax.f32 %v4864, 0.0
      %v5577 = vmax.f32 %v4866, 0.0
      %v5578 = vmax.f32 %v5057, 0.0
      %v5579 = vmax.f32 %v5059, 0.0
      %v5580 = vmax.f32 %v5226, 0.0
      %v5581 = vmax.f32 %v4096, 0.0
      %v5582 = vmax.f32 %v4098, 0.0
      %v5583 = vmax.f32 %v4289, 0.0
      %v5584 = vmax.f32 %v4291, 0.0
      %v5585 = vmax.f32 %v4482, 0.0
      %v5586 = vmax.f32 %v4484, 0.0
      %v5587 = vmax.f32 %v4675, 0.0
      %v5588 = vmax.f32 %v4677, 0.0
      %v5589 = vmax.f32 %v4868, 0.0
      %v5590 = vmax.f32 %v4870, 0.0
      %v5591 = vmax.f32 %v5061, 0.0
      %v5592 = vmax.f32 %v5063, 0.0
      %v5593 = vmax.f32 %v5229, 0.0
      %v5594 = vmax.f32 %v4102, 0.0
      %v5595 = vmax.f32 %v4104, 0.0
      %v5596 = vmax.f32 %v4295, 0.0
      %v5597 = vmax.f32 %v4297, 0.0
      %v5598 = vmax.f32 %v4488, 0.0
      %v5599 = vmax.f32 %v4490, 0.0
      %v5600 = vmax.f32 %v4681, 0.0
      %v5601 = vmax.f32 %v4683, 0.0
      %v5602 = vmax.f32 %v4874, 0.0
      %v5603 = vmax.f32 %v4876, 0.0
      %v5604 = vmax.f32 %v5067, 0.0
      %v5605 = vmax.f32 %v5069, 0.0
      %v5606 = vmax.f32 %v5234, 0.0
      %v5607 = vmax.f32 %v4106, 0.0
      %v5608 = vmax.f32 %v4108, 0.0
      %v5609 = vmax.f32 %v4299, 0.0
      %v5610 = vmax.f32 %v4301, 0.0
      %v5611 = vmax.f32 %v4492, 0.0
      %v5612 = vmax.f32 %v4494, 0.0
      %v5613 = vmax.f32 %v4685, 0.0
      %v5614 = vmax.f32 %v4687, 0.0
      %v5615 = vmax.f32 %v4878, 0.0
      %v5616 = vmax.f32 %v4880, 0.0
      %v5617 = vmax.f32 %v5071, 0.0
      %v5618 = vmax.f32 %v5073, 0.0
      %v5619 = vmax.f32 %v5237, 0.0
      %v5620 = vmax.f32 %v4112, 0.0
      %v5621 = vmax.f32 %v4114, 0.0
      %v5622 = vmax.f32 %v4305, 0.0
      %v5623 = vmax.f32 %v4307, 0.0
      %v5624 = vmax.f32 %v4498, 0.0
      %v5625 = vmax.f32 %v4500, 0.0
      %v5626 = vmax.f32 %v4691, 0.0
      %v5627 = vmax.f32 %v4693, 0.0
      %v5628 = vmax.f32 %v4884, 0.0
      %v5629 = vmax.f32 %v4886, 0.0
      %v5630 = vmax.f32 %v5077, 0.0
      %v5631 = vmax.f32 %v5079, 0.0
      %v5632 = vmax.f32 %v5242, 0.0
      %v5633 = vmax.f32 %v4116, 0.0
      %v5634 = vmax.f32 %v4118, 0.0
      %v5635 = vmax.f32 %v4309, 0.0
      %v5636 = vmax.f32 %v4311, 0.0
      %v5637 = vmax.f32 %v4502, 0.0
      %v5638 = vmax.f32 %v4504, 0.0
      %v5639 = vmax.f32 %v4695, 0.0
      %v5640 = vmax.f32 %v4697, 0.0
      %v5641 = vmax.f32 %v4888, 0.0
      %v5642 = vmax.f32 %v4890, 0.0
      %v5643 = vmax.f32 %v5081, 0.0
      %v5644 = vmax.f32 %v5083, 0.0
      %v5645 = vmax.f32 %v5245, 0.0
      %v5646 = vmax.f32 %v4122, 0.0
      %v5647 = vmax.f32 %v4124, 0.0
      %v5648 = vmax.f32 %v4315, 0.0
      %v5649 = vmax.f32 %v4317, 0.0
      %v5650 = vmax.f32 %v4508, 0.0
      %v5651 = vmax.f32 %v4510, 0.0
      %v5652 = vmax.f32 %v4701, 0.0
      %v5653 = vmax.f32 %v4703, 0.0
      %v5654 = vmax.f32 %v4894, 0.0
      %v5655 = vmax.f32 %v4896, 0.0
      %v5656 = vmax.f32 %v5087, 0.0
      %v5657 = vmax.f32 %v5089, 0.0
      %v5658 = vmax.f32 %v5250, 0.0
      %v5659 = vmax.f32 %v4126, 0.0
      %v5660 = vmax.f32 %v4128, 0.0
      %v5661 = vmax.f32 %v4319, 0.0
      %v5662 = vmax.f32 %v4321, 0.0
      %v5663 = vmax.f32 %v4512, 0.0
      %v5664 = vmax.f32 %v4514, 0.0
      %v5665 = vmax.f32 %v4705, 0.0
      %v5666 = vmax.f32 %v4707, 0.0
      %v5667 = vmax.f32 %v4898, 0.0
      %v5668 = vmax.f32 %v4900, 0.0
      %v5669 = vmax.f32 %v5091, 0.0
      %v5670 = vmax.f32 %v5093, 0.0
      %v5671 = vmax.f32 %v5253, 0.0
      %v5672 = vadd.f32 %v5256, %v5269
      %v5673 = vadd.f32 %v5672, %v5282
      %v5674 = vadd.f32 %v5673, %v5295
      %v5675 = vrot.slane %v5674, 4
      %v5676 = vadd.f32 %v5674, %v5675
      %v5677 = vrot.slane %v5676, 2
      %v5678 = vadd.f32 %v5676, %v5677
      %v5679 = vrot.slane %v5678, 1
      %v5680 = vadd.f32 %v5678, %v5679
      %v5681 = vadd.f32 %v5257, %v5270
      %v5682 = vadd.f32 %v5681, %v5283
      %v5683 = vadd.f32 %v5682, %v5296
      %v5684 = vrot.slane %v5683, 4
      %v5685 = vadd.f32 %v5683, %v5684
      %v5686 = vrot.slane %v5685, 2
      %v5687 = vadd.f32 %v5685, %v5686
      %v5688 = vrot.slane %v5687, 1
      %v5689 = vadd.f32 %v5687, %v5688
      %v5690 = vadd.f32 %v5258, %v5271
      %v5691 = vadd.f32 %v5690, %v5284
      %v5692 = vadd.f32 %v5691, %v5297
      %v5693 = vrot.slane %v5692, 4
      %v5694 = vadd.f32 %v5692, %v5693
      %v5695 = vrot.slane %v5694, 2
      %v5696 = vadd.f32 %v5694, %v5695
      %v5697 = vrot.slane %v5696, 1
      %v5698 = vadd.f32 %v5696, %v5697
      %v5699 = vadd.f32 %v5259, %v5272
      %v5700 = vadd.f32 %v5699, %v5285
      %v5701 = vadd.f32 %v5700, %v5298
      %v5702 = vrot.slane %v5701, 4
      %v5703 = vadd.f32 %v5701, %v5702
      %v5704 = vrot.slane %v5703, 2
      %v5705 = vadd.f32 %v5703, %v5704
      %v5706 = vrot.slane %v5705, 1
      %v5707 = vadd.f32 %v5705, %v5706
      %v5708 = vadd.f32 %v5260, %v5273
      %v5709 = vadd.f32 %v5708, %v5286
      %v5710 = vadd.f32 %v5709, %v5299
      %v5711 = vrot.slane %v5710, 4
      %v5712 = vadd.f32 %v5710, %v5711
      %v5713 = vrot.slane %v5712, 2
      %v5714 = vadd.f32 %v5712, %v5713
      %v5715 = vrot.slane %v5714, 1
      %v5716 = vadd.f32 %v5714, %v5715
      %v5717 = vadd.f32 %v5261, %v5274
      %v5718 = vadd.f32 %v5717, %v5287
      %v5719 = vadd.f32 %v5718, %v5300
      %v5720 = vrot.slane %v5719, 4
      %v5721 = vadd.f32 %v5719, %v5720
      %v5722 = vrot.slane %v5721, 2
      %v5723 = vadd.f32 %v5721, %v5722
      %v5724 = vrot.slane %v5723, 1
      %v5725 = vadd.f32 %v5723, %v5724
      %v5726 = vadd.f32 %v5262, %v5275
      %v5727 = vadd.f32 %v5726, %v5288
      %v5728 = vadd.f32 %v5727, %v5301
      %v5729 = vrot.slane %v5728, 4
      %v5730 = vadd.f32 %v5728, %v5729
      %v5731 = vrot.slane %v5730, 2
      %v5732 = vadd.f32 %v5730, %v5731
      %v5733 = vrot.slane %v5732, 1
      %v5734 = vadd.f32 %v5732, %v5733
      %v5735 = vadd.f32 %v5263, %v5276
      %v5736 = vadd.f32 %v5735, %v5289
      %v5737 = vadd.f32 %v5736, %v5302
      %v5738 = vrot.slane %v5737, 4
      %v5739 = vadd.f32 %v5737, %v5738
      %v5740 = vrot.slane %v5739, 2
      %v5741 = vadd.f32 %v5739, %v5740
      %v5742 = vrot.slane %v5741, 1
      %v5743 = vadd.f32 %v5741, %v5742
      %v5744 = vadd.f32 %v5264, %v5277
      %v5745 = vadd.f32 %v5744, %v5290
      %v5746 = vadd.f32 %v5745, %v5303
      %v5747 = vrot.slane %v5746, 4
      %v5748 = vadd.f32 %v5746, %v5747
      %v5749 = vrot.slane %v5748, 2
      %v5750 = vadd.f32 %v5748, %v5749
      %v5751 = vrot.slane %v5750, 1
      %v5752 = vadd.f32 %v5750, %v5751
      %v5753 = vadd.f32 %v5265, %v5278
      %v5754 = vadd.f32 %v5753, %v5291
      %v5755 = vadd.f32 %v5754, %v5304
      %v5756 = vrot.slane %v5755, 4
      %v5757 = vadd.f32 %v5755, %v5756
      %v5758 = vrot.slane %v5757, 2
      %v5759 = vadd.f32 %v5757, %v5758
      %v5760 = vrot.slane %v5759, 1
      %v5761 = vadd.f32 %v5759, %v5760
      %v5762 = vadd.f32 %v5266, %v5279
      %v5763 = vadd.f32 %v5762, %v5292
      %v5764 = vadd.f32 %v5763, %v5305
      %v5765 = vrot.slane %v5764, 4
      %v5766 = vadd.f32 %v5764, %v5765
      %v5767 = vrot.slane %v5766, 2
      %v5768 = vadd.f32 %v5766, %v5767
      %v5769 = vrot.slane %v5768, 1
      %v5770 = vadd.f32 %v5768, %v5769
      %v5771 = vadd.f32 %v5267, %v5280
      %v5772 = vadd.f32 %v5771, %v5293
      %v5773 = vadd.f32 %v5772, %v5306
      %v5774 = vrot.slane %v5773, 4
      %v5775 = vadd.f32 %v5773, %v5774
      %v5776 = vrot.slane %v5775, 2
      %v5777 = vadd.f32 %v5775, %v5776
      %v5778 = vrot.slane %v5777, 1
      %v5779 = vadd.f32 %v5777, %v5778
      %v5780 = vadd.f32 %v5268, %v5281
      %v5781 = vadd.f32 %v5780, %v5294
      %v5782 = vadd.f32 %v5781, %v5307
      %v5783 = vrot.slane %v5782, 4
      %v5784 = vadd.f32 %v5782, %v5783
      %v5785 = vrot.slane %v5784, 2
      %v5786 = vadd.f32 %v5784, %v5785
      %v5787 = vrot.slane %v5786, 1
      %v5788 = vadd.f32 %v5786, %v5787
      %v5789 = vadd.f32 %v5308, %v5321
      %v5790 = vadd.f32 %v5789, %v5334
      %v5791 = vadd.f32 %v5790, %v5347
      %v5792 = vrot.slane %v5791, 4
      %v5793 = vadd.f32 %v5791, %v5792
      %v5794 = vrot.slane %v5793, 2
      %v5795 = vadd.f32 %v5793, %v5794
      %v5796 = vrot.slane %v5795, 1
      %v5797 = vadd.f32 %v5795, %v5796
      %v5798 = vadd.f32 %v5309, %v5322
      %v5799 = vadd.f32 %v5798, %v5335
      %v5800 = vadd.f32 %v5799, %v5348
      %v5801 = vrot.slane %v5800, 4
      %v5802 = vadd.f32 %v5800, %v5801
      %v5803 = vrot.slane %v5802, 2
      %v5804 = vadd.f32 %v5802, %v5803
      %v5805 = vrot.slane %v5804, 1
      %v5806 = vadd.f32 %v5804, %v5805
      %v5807 = vadd.f32 %v5310, %v5323
      %v5808 = vadd.f32 %v5807, %v5336
      %v5809 = vadd.f32 %v5808, %v5349
      %v5810 = vrot.slane %v5809, 4
      %v5811 = vadd.f32 %v5809, %v5810
      %v5812 = vrot.slane %v5811, 2
      %v5813 = vadd.f32 %v5811, %v5812
      %v5814 = vrot.slane %v5813, 1
      %v5815 = vadd.f32 %v5813, %v5814
      %v5816 = vadd.f32 %v5311, %v5324
      %v5817 = vadd.f32 %v5816, %v5337
      %v5818 = vadd.f32 %v5817, %v5350
      %v5819 = vrot.slane %v5818, 4
      %v5820 = vadd.f32 %v5818, %v5819
      %v5821 = vrot.slane %v5820, 2
      %v5822 = vadd.f32 %v5820, %v5821
      %v5823 = vrot.slane %v5822, 1
      %v5824 = vadd.f32 %v5822, %v5823
      %v5825 = vadd.f32 %v5312, %v5325
      %v5826 = vadd.f32 %v5825, %v5338
      %v5827 = vadd.f32 %v5826, %v5351
      %v5828 = vrot.slane %v5827, 4
      %v5829 = vadd.f32 %v5827, %v5828
      %v5830 = vrot.slane %v5829, 2
      %v5831 = vadd.f32 %v5829, %v5830
      %v5832 = vrot.slane %v5831, 1
      %v5833 = vadd.f32 %v5831, %v5832
      %v5834 = vadd.f32 %v5313, %v5326
      %v5835 = vadd.f32 %v5834, %v5339
      %v5836 = vadd.f32 %v5835, %v5352
      %v5837 = vrot.slane %v5836, 4
      %v5838 = vadd.f32 %v5836, %v5837
      %v5839 = vrot.slane %v5838, 2
      %v5840 = vadd.f32 %v5838, %v5839
      %v5841 = vrot.slane %v5840, 1
      %v5842 = vadd.f32 %v5840, %v5841
      %v5843 = vadd.f32 %v5314, %v5327
      %v5844 = vadd.f32 %v5843, %v5340
      %v5845 = vadd.f32 %v5844, %v5353
      %v5846 = vrot.slane %v5845, 4
      %v5847 = vadd.f32 %v5845, %v5846
      %v5848 = vrot.slane %v5847, 2
      %v5849 = vadd.f32 %v5847, %v5848
      %v5850 = vrot.slane %v5849, 1
      %v5851 = vadd.f32 %v5849, %v5850
      %v5852 = vadd.f32 %v5315, %v5328
      %v5853 = vadd.f32 %v5852, %v5341
      %v5854 = vadd.f32 %v5853, %v5354
      %v5855 = vrot.slane %v5854, 4
      %v5856 = vadd.f32 %v5854, %v5855
      %v5857 = vrot.slane %v5856, 2
      %v5858 = vadd.f32 %v5856, %v5857
      %v5859 = vrot.slane %v5858, 1
      %v5860 = vadd.f32 %v5858, %v5859
      %v5861 = vadd.f32 %v5316, %v5329
      %v5862 = vadd.f32 %v5861, %v5342
      %v5863 = vadd.f32 %v5862, %v5355
      %v5864 = vrot.slane %v5863, 4
      %v5865 = vadd.f32 %v5863, %v5864
      %v5866 = vrot.slane %v5865, 2
      %v5867 = vadd.f32 %v5865, %v5866
      %v5868 = vrot.slane %v5867, 1
      %v5869 = vadd.f32 %v5867, %v5868
      %v5870 = vadd.f32 %v5317, %v5330
      %v5871 = vadd.f32 %v5870, %v5343
      %v5872 = vadd.f32 %v5871, %v5356
      %v5873 = vrot.slane %v5872, 4
      %v5874 = vadd.f32 %v5872, %v5873
      %v5875 = vrot.slane %v5874, 2
      %v5876 = vadd.f32 %v5874, %v5875
      %v5877 = vrot.slane %v5876, 1
      %v5878 = vadd.f32 %v5876, %v5877
      %v5879 = vadd.f32 %v5318, %v5331
      %v5880 = vadd.f32 %v5879, %v5344
      %v5881 = vadd.f32 %v5880, %v5357
      %v5882 = vrot.slane %v5881, 4
      %v5883 = vadd.f32 %v5881, %v5882
      %v5884 = vrot.slane %v5883, 2
      %v5885 = vadd.f32 %v5883, %v5884
      %v5886 = vrot.slane %v5885, 1
      %v5887 = vadd.f32 %v5885, %v5886
      %v5888 = vadd.f32 %v5319, %v5332
      %v5889 = vadd.f32 %v5888, %v5345
      %v5890 = vadd.f32 %v5889, %v5358
      %v5891 = vrot.slane %v5890, 4
      %v5892 = vadd.f32 %v5890, %v5891
      %v5893 = vrot.slane %v5892, 2
      %v5894 = vadd.f32 %v5892, %v5893
      %v5895 = vrot.slane %v5894, 1
      %v5896 = vadd.f32 %v5894, %v5895
      %v5897 = vadd.f32 %v5320, %v5333
      %v5898 = vadd.f32 %v5897, %v5346
      %v5899 = vadd.f32 %v5898, %v5359
      %v5900 = vrot.slane %v5899, 4
      %v5901 = vadd.f32 %v5899, %v5900
      %v5902 = vrot.slane %v5901, 2
      %v5903 = vadd.f32 %v5901, %v5902
      %v5904 = vrot.slane %v5903, 1
      %v5905 = vadd.f32 %v5903, %v5904
      %v5906 = vadd.f32 %v5360, %v5373
      %v5907 = vadd.f32 %v5906, %v5386
      %v5908 = vadd.f32 %v5907, %v5399
      %v5909 = vrot.slane %v5908, 4
      %v5910 = vadd.f32 %v5908, %v5909
      %v5911 = vrot.slane %v5910, 2
      %v5912 = vadd.f32 %v5910, %v5911
      %v5913 = vrot.slane %v5912, 1
      %v5914 = vadd.f32 %v5912, %v5913
      %v5915 = vadd.f32 %v5361, %v5374
      %v5916 = vadd.f32 %v5915, %v5387
      %v5917 = vadd.f32 %v5916, %v5400
      %v5918 = vrot.slane %v5917, 4
      %v5919 = vadd.f32 %v5917, %v5918
      %v5920 = vrot.slane %v5919, 2
      %v5921 = vadd.f32 %v5919, %v5920
      %v5922 = vrot.slane %v5921, 1
      %v5923 = vadd.f32 %v5921, %v5922
      %v5924 = vadd.f32 %v5362, %v5375
      %v5925 = vadd.f32 %v5924, %v5388
      %v5926 = vadd.f32 %v5925, %v5401
      %v5927 = vrot.slane %v5926, 4
      %v5928 = vadd.f32 %v5926, %v5927
      %v5929 = vrot.slane %v5928, 2
      %v5930 = vadd.f32 %v5928, %v5929
      %v5931 = vrot.slane %v5930, 1
      %v5932 = vadd.f32 %v5930, %v5931
      %v5933 = vadd.f32 %v5363, %v5376
      %v5934 = vadd.f32 %v5933, %v5389
      %v5935 = vadd.f32 %v5934, %v5402
      %v5936 = vrot.slane %v5935, 4
      %v5937 = vadd.f32 %v5935, %v5936
      %v5938 = vrot.slane %v5937, 2
      %v5939 = vadd.f32 %v5937, %v5938
      %v5940 = vrot.slane %v5939, 1
      %v5941 = vadd.f32 %v5939, %v5940
      %v5942 = vadd.f32 %v5364, %v5377
      %v5943 = vadd.f32 %v5942, %v5390
      %v5944 = vadd.f32 %v5943, %v5403
      %v5945 = vrot.slane %v5944, 4
      %v5946 = vadd.f32 %v5944, %v5945
      %v5947 = vrot.slane %v5946, 2
      %v5948 = vadd.f32 %v5946, %v5947
      %v5949 = vrot.slane %v5948, 1
      %v5950 = vadd.f32 %v5948, %v5949
      %v5951 = vadd.f32 %v5365, %v5378
      %v5952 = vadd.f32 %v5951, %v5391
      %v5953 = vadd.f32 %v5952, %v5404
      %v5954 = vrot.slane %v5953, 4
      %v5955 = vadd.f32 %v5953, %v5954
      %v5956 = vrot.slane %v5955, 2
      %v5957 = vadd.f32 %v5955, %v5956
      %v5958 = vrot.slane %v5957, 1
      %v5959 = vadd.f32 %v5957, %v5958
      %v5960 = vadd.f32 %v5366, %v5379
      %v5961 = vadd.f32 %v5960, %v5392
      %v5962 = vadd.f32 %v5961, %v5405
      %v5963 = vrot.slane %v5962, 4
      %v5964 = vadd.f32 %v5962, %v5963
      %v5965 = vrot.slane %v5964, 2
      %v5966 = vadd.f32 %v5964, %v5965
      %v5967 = vrot.slane %v5966, 1
      %v5968 = vadd.f32 %v5966, %v5967
      %v5969 = vadd.f32 %v5367, %v5380
      %v5970 = vadd.f32 %v5969, %v5393
      %v5971 = vadd.f32 %v5970, %v5406
      %v5972 = vrot.slane %v5971, 4
      %v5973 = vadd.f32 %v5971, %v5972
      %v5974 = vrot.slane %v5973, 2
      %v5975 = vadd.f32 %v5973, %v5974
      %v5976 = vrot.slane %v5975, 1
      %v5977 = vadd.f32 %v5975, %v5976
      %v5978 = vadd.f32 %v5368, %v5381
      %v5979 = vadd.f32 %v5978, %v5394
      %v5980 = vadd.f32 %v5979, %v5407
      %v5981 = vrot.slane %v5980, 4
      %v5982 = vadd.f32 %v5980, %v5981
      %v5983 = vrot.slane %v5982, 2
      %v5984 = vadd.f32 %v5982, %v5983
      %v5985 = vrot.slane %v5984, 1
      %v5986 = vadd.f32 %v5984, %v5985
      %v5987 = vadd.f32 %v5369, %v5382
      %v5988 = vadd.f32 %v5987, %v5395
      %v5989 = vadd.f32 %v5988, %v5408
      %v5990 = vrot.slane %v5989, 4
      %v5991 = vadd.f32 %v5989, %v5990
      %v5992 = vrot.slane %v5991, 2
      %v5993 = vadd.f32 %v5991, %v5992
      %v5994 = vrot.slane %v5993, 1
      %v5995 = vadd.f32 %v5993, %v5994
      %v5996 = vadd.f32 %v5370, %v5383
      %v5997 = vadd.f32 %v5996, %v5396
      %v5998 = vadd.f32 %v5997, %v5409
      %v5999 = vrot.slane %v5998, 4
      %v6000 = vadd.f32 %v5998, %v5999
      %v6001 = vrot.slane %v6000, 2
      %v6002 = vadd.f32 %v6000, %v6001
      %v6003 = vrot.slane %v6002, 1
      %v6004 = vadd.f32 %v6002, %v6003
      %v6005 = vadd.f32 %v5371, %v5384
      %v6006 = vadd.f32 %v6005, %v5397
      %v6007 = vadd.f32 %v6006, %v5410
      %v6008 = vrot.slane %v6007, 4
      %v6009 = vadd.f32 %v6007, %v6008
      %v6010 = vrot.slane %v6009, 2
      %v6011 = vadd.f32 %v6009, %v6010
      %v6012 = vrot.slane %v6011, 1
      %v6013 = vadd.f32 %v6011, %v6012
      %v6014 = vadd.f32 %v5372, %v5385
      %v6015 = vadd.f32 %v6014, %v5398
      %v6016 = vadd.f32 %v6015, %v5411
      %v6017 = vrot.slane %v6016, 4
      %v6018 = vadd.f32 %v6016, %v6017
      %v6019 = vrot.slane %v6018, 2
      %v6020 = vadd.f32 %v6018, %v6019
      %v6021 = vrot.slane %v6020, 1
      %v6022 = vadd.f32 %v6020, %v6021
      %v6023 = vadd.f32 %v5412, %v5425
      %v6024 = vadd.f32 %v6023, %v5438
      %v6025 = vadd.f32 %v6024, %v5451
      %v6026 = vrot.slane %v6025, 4
      %v6027 = vadd.f32 %v6025, %v6026
      %v6028 = vrot.slane %v6027, 2
      %v6029 = vadd.f32 %v6027, %v6028
      %v6030 = vrot.slane %v6029, 1
      %v6031 = vadd.f32 %v6029, %v6030
      %v6032 = vadd.f32 %v5413, %v5426
      %v6033 = vadd.f32 %v6032, %v5439
      %v6034 = vadd.f32 %v6033, %v5452
      %v6035 = vrot.slane %v6034, 4
      %v6036 = vadd.f32 %v6034, %v6035
      %v6037 = vrot.slane %v6036, 2
      %v6038 = vadd.f32 %v6036, %v6037
      %v6039 = vrot.slane %v6038, 1
      %v6040 = vadd.f32 %v6038, %v6039
      %v6041 = vadd.f32 %v5414, %v5427
      %v6042 = vadd.f32 %v6041, %v5440
      %v6043 = vadd.f32 %v6042, %v5453
      %v6044 = vrot.slane %v6043, 4
      %v6045 = vadd.f32 %v6043, %v6044
      %v6046 = vrot.slane %v6045, 2
      %v6047 = vadd.f32 %v6045, %v6046
      %v6048 = vrot.slane %v6047, 1
      %v6049 = vadd.f32 %v6047, %v6048
      %v6050 = vadd.f32 %v5415, %v5428
      %v6051 = vadd.f32 %v6050, %v5441
      %v6052 = vadd.f32 %v6051, %v5454
      %v6053 = vrot.slane %v6052, 4
      %v6054 = vadd.f32 %v6052, %v6053
      %v6055 = vrot.slane %v6054, 2
      %v6056 = vadd.f32 %v6054, %v6055
      %v6057 = vrot.slane %v6056, 1
      %v6058 = vadd.f32 %v6056, %v6057
      %v6059 = vadd.f32 %v5416, %v5429
      %v6060 = vadd.f32 %v6059, %v5442
      %v6061 = vadd.f32 %v6060, %v5455
      %v6062 = vrot.slane %v6061, 4
      %v6063 = vadd.f32 %v6061, %v6062
      %v6064 = vrot.slane %v6063, 2
      %v6065 = vadd.f32 %v6063, %v6064
      %v6066 = vrot.slane %v6065, 1
      %v6067 = vadd.f32 %v6065, %v6066
      %v6068 = vadd.f32 %v5417, %v5430
      %v6069 = vadd.f32 %v6068, %v5443
      %v6070 = vadd.f32 %v6069, %v5456
      %v6071 = vrot.slane %v6070, 4
      %v6072 = vadd.f32 %v6070, %v6071
      %v6073 = vrot.slane %v6072, 2
      %v6074 = vadd.f32 %v6072, %v6073
      %v6075 = vrot.slane %v6074, 1
      %v6076 = vadd.f32 %v6074, %v6075
      %v6077 = vadd.f32 %v5418, %v5431
      %v6078 = vadd.f32 %v6077, %v5444
      %v6079 = vadd.f32 %v6078, %v5457
      %v6080 = vrot.slane %v6079, 4
      %v6081 = vadd.f32 %v6079, %v6080
      %v6082 = vrot.slane %v6081, 2
      %v6083 = vadd.f32 %v6081, %v6082
      %v6084 = vrot.slane %v6083, 1
      %v6085 = vadd.f32 %v6083, %v6084
      %v6086 = vadd.f32 %v5419, %v5432
      %v6087 = vadd.f32 %v6086, %v5445
      %v6088 = vadd.f32 %v6087, %v5458
      %v6089 = vrot.slane %v6088, 4
      %v6090 = vadd.f32 %v6088, %v6089
      %v6091 = vrot.slane %v6090, 2
      %v6092 = vadd.f32 %v6090, %v6091
      %v6093 = vrot.slane %v6092, 1
      %v6094 = vadd.f32 %v6092, %v6093
      %v6095 = vadd.f32 %v5420, %v5433
      %v6096 = vadd.f32 %v6095, %v5446
      %v6097 = vadd.f32 %v6096, %v5459
      %v6098 = vrot.slane %v6097, 4
      %v6099 = vadd.f32 %v6097, %v6098
      %v6100 = vrot.slane %v6099, 2
      %v6101 = vadd.f32 %v6099, %v6100
      %v6102 = vrot.slane %v6101, 1
      %v6103 = vadd.f32 %v6101, %v6102
      %v6104 = vadd.f32 %v5421, %v5434
      %v6105 = vadd.f32 %v6104, %v5447
      %v6106 = vadd.f32 %v6105, %v5460
      %v6107 = vrot.slane %v6106, 4
      %v6108 = vadd.f32 %v6106, %v6107
      %v6109 = vrot.slane %v6108, 2
      %v6110 = vadd.f32 %v6108, %v6109
      %v6111 = vrot.slane %v6110, 1
      %v6112 = vadd.f32 %v6110, %v6111
      %v6113 = vadd.f32 %v5422, %v5435
      %v6114 = vadd.f32 %v6113, %v5448
      %v6115 = vadd.f32 %v6114, %v5461
      %v6116 = vrot.slane %v6115, 4
      %v6117 = vadd.f32 %v6115, %v6116
      %v6118 = vrot.slane %v6117, 2
      %v6119 = vadd.f32 %v6117, %v6118
      %v6120 = vrot.slane %v6119, 1
      %v6121 = vadd.f32 %v6119, %v6120
      %v6122 = vadd.f32 %v5423, %v5436
      %v6123 = vadd.f32 %v6122, %v5449
      %v6124 = vadd.f32 %v6123, %v5462
      %v6125 = vrot.slane %v6124, 4
      %v6126 = vadd.f32 %v6124, %v6125
      %v6127 = vrot.slane %v6126, 2
      %v6128 = vadd.f32 %v6126, %v6127
      %v6129 = vrot.slane %v6128, 1
      %v6130 = vadd.f32 %v6128, %v6129
      %v6131 = vadd.f32 %v5424, %v5437
      %v6132 = vadd.f32 %v6131, %v5450
      %v6133 = vadd.f32 %v6132, %v5463
      %v6134 = vrot.slane %v6133, 4
      %v6135 = vadd.f32 %v6133, %v6134
      %v6136 = vrot.slane %v6135, 2
      %v6137 = vadd.f32 %v6135, %v6136
      %v6138 = vrot.slane %v6137, 1
      %v6139 = vadd.f32 %v6137, %v6138
      %v6140 = vadd.f32 %v5464, %v5477
      %v6141 = vadd.f32 %v6140, %v5490
      %v6142 = vadd.f32 %v6141, %v5503
      %v6143 = vrot.slane %v6142, 4
      %v6144 = vadd.f32 %v6142, %v6143
      %v6145 = vrot.slane %v6144, 2
      %v6146 = vadd.f32 %v6144, %v6145
      %v6147 = vrot.slane %v6146, 1
      %v6148 = vadd.f32 %v6146, %v6147
      %v6149 = vadd.f32 %v5465, %v5478
      %v6150 = vadd.f32 %v6149, %v5491
      %v6151 = vadd.f32 %v6150, %v5504
      %v6152 = vrot.slane %v6151, 4
      %v6153 = vadd.f32 %v6151, %v6152
      %v6154 = vrot.slane %v6153, 2
      %v6155 = vadd.f32 %v6153, %v6154
      %v6156 = vrot.slane %v6155, 1
      %v6157 = vadd.f32 %v6155, %v6156
      %v6158 = vadd.f32 %v5466, %v5479
      %v6159 = vadd.f32 %v6158, %v5492
      %v6160 = vadd.f32 %v6159, %v5505
      %v6161 = vrot.slane %v6160, 4
      %v6162 = vadd.f32 %v6160, %v6161
      %v6163 = vrot.slane %v6162, 2
      %v6164 = vadd.f32 %v6162, %v6163
      %v6165 = vrot.slane %v6164, 1
      %v6166 = vadd.f32 %v6164, %v6165
      %v6167 = vadd.f32 %v5467, %v5480
      %v6168 = vadd.f32 %v6167, %v5493
      %v6169 = vadd.f32 %v6168, %v5506
      %v6170 = vrot.slane %v6169, 4
      %v6171 = vadd.f32 %v6169, %v6170
      %v6172 = vrot.slane %v6171, 2
      %v6173 = vadd.f32 %v6171, %v6172
      %v6174 = vrot.slane %v6173, 1
      %v6175 = vadd.f32 %v6173, %v6174
      %v6176 = vadd.f32 %v5468, %v5481
      %v6177 = vadd.f32 %v6176, %v5494
      %v6178 = vadd.f32 %v6177, %v5507
      %v6179 = vrot.slane %v6178, 4
      %v6180 = vadd.f32 %v6178, %v6179
      %v6181 = vrot.slane %v6180, 2
      %v6182 = vadd.f32 %v6180, %v6181
      %v6183 = vrot.slane %v6182, 1
      %v6184 = vadd.f32 %v6182, %v6183
      %v6185 = vadd.f32 %v5469, %v5482
      %v6186 = vadd.f32 %v6185, %v5495
      %v6187 = vadd.f32 %v6186, %v5508
      %v6188 = vrot.slane %v6187, 4
      %v6189 = vadd.f32 %v6187, %v6188
      %v6190 = vrot.slane %v6189, 2
      %v6191 = vadd.f32 %v6189, %v6190
      %v6192 = vrot.slane %v6191, 1
      %v6193 = vadd.f32 %v6191, %v6192
      %v6194 = vadd.f32 %v5470, %v5483
      %v6195 = vadd.f32 %v6194, %v5496
      %v6196 = vadd.f32 %v6195, %v5509
      %v6197 = vrot.slane %v6196, 4
      %v6198 = vadd.f32 %v6196, %v6197
      %v6199 = vrot.slane %v6198, 2
      %v6200 = vadd.f32 %v6198, %v6199
      %v6201 = vrot.slane %v6200, 1
      %v6202 = vadd.f32 %v6200, %v6201
      %v6203 = vadd.f32 %v5471, %v5484
      %v6204 = vadd.f32 %v6203, %v5497
      %v6205 = vadd.f32 %v6204, %v5510
      %v6206 = vrot.slane %v6205, 4
      %v6207 = vadd.f32 %v6205, %v6206
      %v6208 = vrot.slane %v6207, 2
      %v6209 = vadd.f32 %v6207, %v6208
      %v6210 = vrot.slane %v6209, 1
      %v6211 = vadd.f32 %v6209, %v6210
      %v6212 = vadd.f32 %v5472, %v5485
      %v6213 = vadd.f32 %v6212, %v5498
      %v6214 = vadd.f32 %v6213, %v5511
      %v6215 = vrot.slane %v6214, 4
      %v6216 = vadd.f32 %v6214, %v6215
      %v6217 = vrot.slane %v6216, 2
      %v6218 = vadd.f32 %v6216, %v6217
      %v6219 = vrot.slane %v6218, 1
      %v6220 = vadd.f32 %v6218, %v6219
      %v6221 = vadd.f32 %v5473, %v5486
      %v6222 = vadd.f32 %v6221, %v5499
      %v6223 = vadd.f32 %v6222, %v5512
      %v6224 = vrot.slane %v6223, 4
      %v6225 = vadd.f32 %v6223, %v6224
      %v6226 = vrot.slane %v6225, 2
      %v6227 = vadd.f32 %v6225, %v6226
      %v6228 = vrot.slane %v6227, 1
      %v6229 = vadd.f32 %v6227, %v6228
      %v6230 = vadd.f32 %v5474, %v5487
      %v6231 = vadd.f32 %v6230, %v5500
      %v6232 = vadd.f32 %v6231, %v5513
      %v6233 = vrot.slane %v6232, 4
      %v6234 = vadd.f32 %v6232, %v6233
      %v6235 = vrot.slane %v6234, 2
      %v6236 = vadd.f32 %v6234, %v6235
      %v6237 = vrot.slane %v6236, 1
      %v6238 = vadd.f32 %v6236, %v6237
      %v6239 = vadd.f32 %v5475, %v5488
      %v6240 = vadd.f32 %v6239, %v5501
      %v6241 = vadd.f32 %v6240, %v5514
      %v6242 = vrot.slane %v6241, 4
      %v6243 = vadd.f32 %v6241, %v6242
      %v6244 = vrot.slane %v6243, 2
      %v6245 = vadd.f32 %v6243, %v6244
      %v6246 = vrot.slane %v6245, 1
      %v6247 = vadd.f32 %v6245, %v6246
      %v6248 = vadd.f32 %v5476, %v5489
      %v6249 = vadd.f32 %v6248, %v5502
      %v6250 = vadd.f32 %v6249, %v5515
      %v6251 = vrot.slane %v6250, 4
      %v6252 = vadd.f32 %v6250, %v6251
      %v6253 = vrot.slane %v6252, 2
      %v6254 = vadd.f32 %v6252, %v6253
      %v6255 = vrot.slane %v6254, 1
      %v6256 = vadd.f32 %v6254, %v6255
      %v6257 = vadd.f32 %v5516, %v5529
      %v6258 = vadd.f32 %v6257, %v5542
      %v6259 = vadd.f32 %v6258, %v5555
      %v6260 = vrot.slane %v6259, 4
      %v6261 = vadd.f32 %v6259, %v6260
      %v6262 = vrot.slane %v6261, 2
      %v6263 = vadd.f32 %v6261, %v6262
      %v6264 = vrot.slane %v6263, 1
      %v6265 = vadd.f32 %v6263, %v6264
      %v6266 = vadd.f32 %v5517, %v5530
      %v6267 = vadd.f32 %v6266, %v5543
      %v6268 = vadd.f32 %v6267, %v5556
      %v6269 = vrot.slane %v6268, 4
      %v6270 = vadd.f32 %v6268, %v6269
      %v6271 = vrot.slane %v6270, 2
      %v6272 = vadd.f32 %v6270, %v6271
      %v6273 = vrot.slane %v6272, 1
      %v6274 = vadd.f32 %v6272, %v6273
      %v6275 = vadd.f32 %v5518, %v5531
      %v6276 = vadd.f32 %v6275, %v5544
      %v6277 = vadd.f32 %v6276, %v5557
      %v6278 = vrot.slane %v6277, 4
      %v6279 = vadd.f32 %v6277, %v6278
      %v6280 = vrot.slane %v6279, 2
      %v6281 = vadd.f32 %v6279, %v6280
      %v6282 = vrot.slane %v6281, 1
      %v6283 = vadd.f32 %v6281, %v6282
      %v6284 = vadd.f32 %v5519, %v5532
      %v6285 = vadd.f32 %v6284, %v5545
      %v6286 = vadd.f32 %v6285, %v5558
      %v6287 = vrot.slane %v6286, 4
      %v6288 = vadd.f32 %v6286, %v6287
      %v6289 = vrot.slane %v6288, 2
      %v6290 = vadd.f32 %v6288, %v6289
      %v6291 = vrot.slane %v6290, 1
      %v6292 = vadd.f32 %v6290, %v6291
      %v6293 = vadd.f32 %v5520, %v5533
      %v6294 = vadd.f32 %v6293, %v5546
      %v6295 = vadd.f32 %v6294, %v5559
      %v6296 = vrot.slane %v6295, 4
      %v6297 = vadd.f32 %v6295, %v6296
      %v6298 = vrot.slane %v6297, 2
      %v6299 = vadd.f32 %v6297, %v6298
      %v6300 = vrot.slane %v6299, 1
      %v6301 = vadd.f32 %v6299, %v6300
      %v6302 = vadd.f32 %v5521, %v5534
      %v6303 = vadd.f32 %v6302, %v5547
      %v6304 = vadd.f32 %v6303, %v5560
      %v6305 = vrot.slane %v6304, 4
      %v6306 = vadd.f32 %v6304, %v6305
      %v6307 = vrot.slane %v6306, 2
      %v6308 = vadd.f32 %v6306, %v6307
      %v6309 = vrot.slane %v6308, 1
      %v6310 = vadd.f32 %v6308, %v6309
      %v6311 = vadd.f32 %v5522, %v5535
      %v6312 = vadd.f32 %v6311, %v5548
      %v6313 = vadd.f32 %v6312, %v5561
      %v6314 = vrot.slane %v6313, 4
      %v6315 = vadd.f32 %v6313, %v6314
      %v6316 = vrot.slane %v6315, 2
      %v6317 = vadd.f32 %v6315, %v6316
      %v6318 = vrot.slane %v6317, 1
      %v6319 = vadd.f32 %v6317, %v6318
      %v6320 = vadd.f32 %v5523, %v5536
      %v6321 = vadd.f32 %v6320, %v5549
      %v6322 = vadd.f32 %v6321, %v5562
      %v6323 = vrot.slane %v6322, 4
      %v6324 = vadd.f32 %v6322, %v6323
      %v6325 = vrot.slane %v6324, 2
      %v6326 = vadd.f32 %v6324, %v6325
      %v6327 = vrot.slane %v6326, 1
      %v6328 = vadd.f32 %v6326, %v6327
      %v6329 = vadd.f32 %v5524, %v5537
      %v6330 = vadd.f32 %v6329, %v5550
      %v6331 = vadd.f32 %v6330, %v5563
      %v6332 = vrot.slane %v6331, 4
      %v6333 = vadd.f32 %v6331, %v6332
      %v6334 = vrot.slane %v6333, 2
      %v6335 = vadd.f32 %v6333, %v6334
      %v6336 = vrot.slane %v6335, 1
      %v6337 = vadd.f32 %v6335, %v6336
      %v6338 = vadd.f32 %v5525, %v5538
      %v6339 = vadd.f32 %v6338, %v5551
      %v6340 = vadd.f32 %v6339, %v5564
      %v6341 = vrot.slane %v6340, 4
      %v6342 = vadd.f32 %v6340, %v6341
      %v6343 = vrot.slane %v6342, 2
      %v6344 = vadd.f32 %v6342, %v6343
      %v6345 = vrot.slane %v6344, 1
      %v6346 = vadd.f32 %v6344, %v6345
      %v6347 = vadd.f32 %v5526, %v5539
      %v6348 = vadd.f32 %v6347, %v5552
      %v6349 = vadd.f32 %v6348, %v5565
      %v6350 = vrot.slane %v6349, 4
      %v6351 = vadd.f32 %v6349, %v6350
      %v6352 = vrot.slane %v6351, 2
      %v6353 = vadd.f32 %v6351, %v6352
      %v6354 = vrot.slane %v6353, 1
      %v6355 = vadd.f32 %v6353, %v6354
      %v6356 = vadd.f32 %v5527, %v5540
      %v6357 = vadd.f32 %v6356, %v5553
      %v6358 = vadd.f32 %v6357, %v5566
      %v6359 = vrot.slane %v6358, 4
      %v6360 = vadd.f32 %v6358, %v6359
      %v6361 = vrot.slane %v6360, 2
      %v6362 = vadd.f32 %v6360, %v6361
      %v6363 = vrot.slane %v6362, 1
      %v6364 = vadd.f32 %v6362, %v6363
      %v6365 = vadd.f32 %v5528, %v5541
      %v6366 = vadd.f32 %v6365, %v5554
      %v6367 = vadd.f32 %v6366, %v5567
      %v6368 = vrot.slane %v6367, 4
      %v6369 = vadd.f32 %v6367, %v6368
      %v6370 = vrot.slane %v6369, 2
      %v6371 = vadd.f32 %v6369, %v6370
      %v6372 = vrot.slane %v6371, 1
      %v6373 = vadd.f32 %v6371, %v6372
      %v6374 = vadd.f32 %v5568, %v5581
      %v6375 = vadd.f32 %v6374, %v5594
      %v6376 = vadd.f32 %v6375, %v5607
      %v6377 = vrot.slane %v6376, 4
      %v6378 = vadd.f32 %v6376, %v6377
      %v6379 = vrot.slane %v6378, 2
      %v6380 = vadd.f32 %v6378, %v6379
      %v6381 = vrot.slane %v6380, 1
      %v6382 = vadd.f32 %v6380, %v6381
      %v6383 = vadd.f32 %v5569, %v5582
      %v6384 = vadd.f32 %v6383, %v5595
      %v6385 = vadd.f32 %v6384, %v5608
      %v6386 = vrot.slane %v6385, 4
      %v6387 = vadd.f32 %v6385, %v6386
      %v6388 = vrot.slane %v6387, 2
      %v6389 = vadd.f32 %v6387, %v6388
      %v6390 = vrot.slane %v6389, 1
      %v6391 = vadd.f32 %v6389, %v6390
      %v6392 = vadd.f32 %v5570, %v5583
      %v6393 = vadd.f32 %v6392, %v5596
      %v6394 = vadd.f32 %v6393, %v5609
      %v6395 = vrot.slane %v6394, 4
      %v6396 = vadd.f32 %v6394, %v6395
      %v6397 = vrot.slane %v6396, 2
      %v6398 = vadd.f32 %v6396, %v6397
      %v6399 = vrot.slane %v6398, 1
      %v6400 = vadd.f32 %v6398, %v6399
      %v6401 = vadd.f32 %v5571, %v5584
      %v6402 = vadd.f32 %v6401, %v5597
      %v6403 = vadd.f32 %v6402, %v5610
      %v6404 = vrot.slane %v6403, 4
      %v6405 = vadd.f32 %v6403, %v6404
      %v6406 = vrot.slane %v6405, 2
      %v6407 = vadd.f32 %v6405, %v6406
      %v6408 = vrot.slane %v6407, 1
      %v6409 = vadd.f32 %v6407, %v6408
      %v6410 = vadd.f32 %v5572, %v5585
      %v6411 = vadd.f32 %v6410, %v5598
      %v6412 = vadd.f32 %v6411, %v5611
      %v6413 = vrot.slane %v6412, 4
      %v6414 = vadd.f32 %v6412, %v6413
      %v6415 = vrot.slane %v6414, 2
      %v6416 = vadd.f32 %v6414, %v6415
      %v6417 = vrot.slane %v6416, 1
      %v6418 = vadd.f32 %v6416, %v6417
      %v6419 = vadd.f32 %v5573, %v5586
      %v6420 = vadd.f32 %v6419, %v5599
      %v6421 = vadd.f32 %v6420, %v5612
      %v6422 = vrot.slane %v6421, 4
      %v6423 = vadd.f32 %v6421, %v6422
      %v6424 = vrot.slane %v6423, 2
      %v6425 = vadd.f32 %v6423, %v6424
      %v6426 = vrot.slane %v6425, 1
      %v6427 = vadd.f32 %v6425, %v6426
      %v6428 = vadd.f32 %v5574, %v5587
      %v6429 = vadd.f32 %v6428, %v5600
      %v6430 = vadd.f32 %v6429, %v5613
      %v6431 = vrot.slane %v6430, 4
      %v6432 = vadd.f32 %v6430, %v6431
      %v6433 = vrot.slane %v6432, 2
      %v6434 = vadd.f32 %v6432, %v6433
      %v6435 = vrot.slane %v6434, 1
      %v6436 = vadd.f32 %v6434, %v6435
      %v6437 = vadd.f32 %v5575, %v5588
      %v6438 = vadd.f32 %v6437, %v5601
      %v6439 = vadd.f32 %v6438, %v5614
      %v6440 = vrot.slane %v6439, 4
      %v6441 = vadd.f32 %v6439, %v6440
      %v6442 = vrot.slane %v6441, 2
      %v6443 = vadd.f32 %v6441, %v6442
      %v6444 = vrot.slane %v6443, 1
      %v6445 = vadd.f32 %v6443, %v6444
      %v6446 = vadd.f32 %v5576, %v5589
      %v6447 = vadd.f32 %v6446, %v5602
      %v6448 = vadd.f32 %v6447, %v5615
      %v6449 = vrot.slane %v6448, 4
      %v6450 = vadd.f32 %v6448, %v6449
      %v6451 = vrot.slane %v6450, 2
      %v6452 = vadd.f32 %v6450, %v6451
      %v6453 = vrot.slane %v6452, 1
      %v6454 = vadd.f32 %v6452, %v6453
      %v6455 = vadd.f32 %v5577, %v5590
      %v6456 = vadd.f32 %v6455, %v5603
      %v6457 = vadd.f32 %v6456, %v5616
      %v6458 = vrot.slane %v6457, 4
      %v6459 = vadd.f32 %v6457, %v6458
      %v6460 = vrot.slane %v6459, 2
      %v6461 = vadd.f32 %v6459, %v6460
      %v6462 = vrot.slane %v6461, 1
      %v6463 = vadd.f32 %v6461, %v6462
      %v6464 = vadd.f32 %v5578, %v5591
      %v6465 = vadd.f32 %v6464, %v5604
      %v6466 = vadd.f32 %v6465, %v5617
      %v6467 = vrot.slane %v6466, 4
      %v6468 = vadd.f32 %v6466, %v6467
      %v6469 = vrot.slane %v6468, 2
      %v6470 = vadd.f32 %v6468, %v6469
      %v6471 = vrot.slane %v6470, 1
      %v6472 = vadd.f32 %v6470, %v6471
      %v6473 = vadd.f32 %v5579, %v5592
      %v6474 = vadd.f32 %v6473, %v5605
      %v6475 = vadd.f32 %v6474, %v5618
      %v6476 = vrot.slane %v6475, 4
      %v6477 = vadd.f32 %v6475, %v6476
      %v6478 = vrot.slane %v6477, 2
      %v6479 = vadd.f32 %v6477, %v6478
      %v6480 = vrot.slane %v6479, 1
      %v6481 = vadd.f32 %v6479, %v6480
      %v6482 = vadd.f32 %v5580, %v5593
      %v6483 = vadd.f32 %v6482, %v5606
      %v6484 = vadd.f32 %v6483, %v5619
      %v6485 = vrot.slane %v6484, 4
      %v6486 = vadd.f32 %v6484, %v6485
      %v6487 = vrot.slane %v6486, 2
      %v6488 = vadd.f32 %v6486, %v6487
      %v6489 = vrot.slane %v6488, 1
      %v6490 = vadd.f32 %v6488, %v6489
      %v6491 = vadd.f32 %v5620, %v5633
      %v6492 = vadd.f32 %v6491, %v5646
      %v6493 = vadd.f32 %v6492, %v5659
      %v6494 = vrot.slane %v6493, 4
      %v6495 = vadd.f32 %v6493, %v6494
      %v6496 = vrot.slane %v6495, 2
      %v6497 = vadd.f32 %v6495, %v6496
      %v6498 = vrot.slane %v6497, 1
      %v6499 = vadd.f32 %v6497, %v6498
      %v6500 = vadd.f32 %v5621, %v5634
      %v6501 = vadd.f32 %v6500, %v5647
      %v6502 = vadd.f32 %v6501, %v5660
      %v6503 = vrot.slane %v6502, 4
      %v6504 = vadd.f32 %v6502, %v6503
      %v6505 = vrot.slane %v6504, 2
      %v6506 = vadd.f32 %v6504, %v6505
      %v6507 = vrot.slane %v6506, 1
      %v6508 = vadd.f32 %v6506, %v6507
      %v6509 = vadd.f32 %v5622, %v5635
      %v6510 = vadd.f32 %v6509, %v5648
      %v6511 = vadd.f32 %v6510, %v5661
      %v6512 = vrot.slane %v6511, 4
      %v6513 = vadd.f32 %v6511, %v6512
      %v6514 = vrot.slane %v6513, 2
      %v6515 = vadd.f32 %v6513, %v6514
      %v6516 = vrot.slane %v6515, 1
      %v6517 = vadd.f32 %v6515, %v6516
      %v6518 = vadd.f32 %v5623, %v5636
      %v6519 = vadd.f32 %v6518, %v5649
      %v6520 = vadd.f32 %v6519, %v5662
      %v6521 = vrot.slane %v6520, 4
      %v6522 = vadd.f32 %v6520, %v6521
      %v6523 = vrot.slane %v6522, 2
      %v6524 = vadd.f32 %v6522, %v6523
      %v6525 = vrot.slane %v6524, 1
      %v6526 = vadd.f32 %v6524, %v6525
      %v6527 = vadd.f32 %v5624, %v5637
      %v6528 = vadd.f32 %v6527, %v5650
      %v6529 = vadd.f32 %v6528, %v5663
      %v6530 = vrot.slane %v6529, 4
      %v6531 = vadd.f32 %v6529, %v6530
      %v6532 = vrot.slane %v6531, 2
      %v6533 = vadd.f32 %v6531, %v6532
      %v6534 = vrot.slane %v6533, 1
      %v6535 = vadd.f32 %v6533, %v6534
      %v6536 = vadd.f32 %v5625, %v5638
      %v6537 = vadd.f32 %v6536, %v5651
      %v6538 = vadd.f32 %v6537, %v5664
      %v6539 = vrot.slane %v6538, 4
      %v6540 = vadd.f32 %v6538, %v6539
      %v6541 = vrot.slane %v6540, 2
      %v6542 = vadd.f32 %v6540, %v6541
      %v6543 = vrot.slane %v6542, 1
      %v6544 = vadd.f32 %v6542, %v6543
      %v6545 = vadd.f32 %v5626, %v5639
      %v6546 = vadd.f32 %v6545, %v5652
      %v6547 = vadd.f32 %v6546, %v5665
      %v6548 = vrot.slane %v6547, 4
      %v6549 = vadd.f32 %v6547, %v6548
      %v6550 = vrot.slane %v6549, 2
      %v6551 = vadd.f32 %v6549, %v6550
      %v6552 = vrot.slane %v6551, 1
      %v6553 = vadd.f32 %v6551, %v6552
      %v6554 = vadd.f32 %v5627, %v5640
      %v6555 = vadd.f32 %v6554, %v5653
      %v6556 = vadd.f32 %v6555, %v5666
      %v6557 = vrot.slane %v6556, 4
      %v6558 = vadd.f32 %v6556, %v6557
      %v6559 = vrot.slane %v6558, 2
      %v6560 = vadd.f32 %v6558, %v6559
      %v6561 = vrot.slane %v6560, 1
      %v6562 = vadd.f32 %v6560, %v6561
      %v6563 = vadd.f32 %v5628, %v5641
      %v6564 = vadd.f32 %v6563, %v5654
      %v6565 = vadd.f32 %v6564, %v5667
      %v6566 = vrot.slane %v6565, 4
      %v6567 = vadd.f32 %v6565, %v6566
      %v6568 = vrot.slane %v6567, 2
      %v6569 = vadd.f32 %v6567, %v6568
      %v6570 = vrot.slane %v6569, 1
      %v6571 = vadd.f32 %v6569, %v6570
      %v6572 = vadd.f32 %v5629, %v5642
      %v6573 = vadd.f32 %v6572, %v5655
      %v6574 = vadd.f32 %v6573, %v5668
      %v6575 = vrot.slane %v6574, 4
      %v6576 = vadd.f32 %v6574, %v6575
      %v6577 = vrot.slane %v6576, 2
      %v6578 = vadd.f32 %v6576, %v6577
      %v6579 = vrot.slane %v6578, 1
      %v6580 = vadd.f32 %v6578, %v6579
      %v6581 = vadd.f32 %v5630, %v5643
      %v6582 = vadd.f32 %v6581, %v5656
      %v6583 = vadd.f32 %v6582, %v5669
      %v6584 = vrot.slane %v6583, 4
      %v6585 = vadd.f32 %v6583, %v6584
      %v6586 = vrot.slane %v6585, 2
      %v6587 = vadd.f32 %v6585, %v6586
      %v6588 = vrot.slane %v6587, 1
      %v6589 = vadd.f32 %v6587, %v6588
      %v6590 = vadd.f32 %v5631, %v5644
      %v6591 = vadd.f32 %v6590, %v5657
      %v6592 = vadd.f32 %v6591, %v5670
      %v6593 = vrot.slane %v6592, 4
      %v6594 = vadd.f32 %v6592, %v6593
      %v6595 = vrot.slane %v6594, 2
      %v6596 = vadd.f32 %v6594, %v6595
      %v6597 = vrot.slane %v6596, 1
      %v6598 = vadd.f32 %v6596, %v6597
      %v6599 = vadd.f32 %v5632, %v5645
      %v6600 = vadd.f32 %v6599, %v5658
      %v6601 = vadd.f32 %v6600, %v5671
      %v6602 = vrot.slane %v6601, 4
      %v6603 = vadd.f32 %v6601, %v6602
      %v6604 = vrot.slane %v6603, 2
      %v6605 = vadd.f32 %v6603, %v6604
      %v6606 = vrot.slane %v6605, 1
      %v6607 = vadd.f32 %v6605, %v6606
      %v6608 = vld [vmem:[%s5] sm:$0xff]
      %v6609 = vld [vmem:[%s5 + $0x8] sm:$0xff]
      %v6610 = vld [vmem:[%s5 + $0x10] sm:$0xff]
      %v6611 = vld [vmem:[%s5 + $0x18] sm:$0xff]
      %v6612 = vld [vmem:[%s5 + $0x20] sm:$0xff]
      %v6613 = vld [vmem:[%s5 + $0x28] sm:$0xff]
      %v6614 = vld [vmem:[%s5 + $0x30] sm:$0xff]
      %v6615 = vld [vmem:[%s5 + $0x38] sm:$0xff]
      %v6616 = vld [vmem:[%s5 + $0x40] sm:$0xff]
      %v6617 = vld [vmem:[%s5 + $0x48] sm:$0xff]
      %v6618 = vld [vmem:[%s5 + $0x50] sm:$0xff]
      %v6619 = vld [vmem:[%s5 + $0x58] sm:$0xff]
      %v6620 = vld [vmem:[%s5 + $0x60] sm:$0xff]
      %v6621 = vld [vmem:[%s5 + $0x68] sm:$0xff]
      %v6622 = vld [vmem:[%s5 + $0x70] sm:$0xff]
      %v6623 = vld [vmem:[%s5 + $0x78] sm:$0xff]
      %v6624 = vld [vmem:[%s5 + $0x80] sm:$0xff]
      %v6625 = vld [vmem:[%s5 + $0x88] sm:$0xff]
      %v6626 = vld [vmem:[%s5 + $0x90] sm:$0xff]
      %v6627 = vld [vmem:[%s5 + $0x98] sm:$0xff]
      %v6628 = vld [vmem:[%s5 + $0xa0] sm:$0xff]
      %v6629 = vld [vmem:[%s5 + $0xa8] sm:$0xff]
      %v6630 = vld [vmem:[%s5 + $0xb0] sm:$0xff]
      %v6631 = vld [vmem:[%s5 + $0xb8] sm:$0xff]
      %v6632 = vld [vmem:[%s5 + $0xc0] sm:$0xff]
      %v6633 = vld [vmem:[%s5 + $0xc8] sm:$0xff]
      %v6634 = vld [vmem:[%s5 + $0xd0] sm:$0xff]
      %v6635 = vld [vmem:[%s5 + $0xd8] sm:$0xff]
      %v6636 = vld [vmem:[%s5 + $0xe0] sm:$0xff]
      %v6637 = vld [vmem:[%s5 + $0xe8] sm:$0xff]
      %v6638 = vld [vmem:[%s5 + $0xf0] sm:$0xff]
      %v6639 = vld [vmem:[%s5 + $0xf8] sm:$0xff]
      %v6640 = vld [vmem:[%s5 + $0x100] sm:$0xff]
      %v6641 = vld [vmem:[%s5 + $0x108] sm:$0xff]
      %v6642 = vld [vmem:[%s5 + $0x110] sm:$0xff]
      %v6643 = vld [vmem:[%s5 + $0x118] sm:$0xff]
      %v6644 = vld [vmem:[%s5 + $0x120] sm:$0xff]
      %v6645 = vld [vmem:[%s5 + $0x128] sm:$0xff]
      %v6646 = vld [vmem:[%s5 + $0x130] sm:$0xff]
      %v6647 = vld [vmem:[%s5 + $0x138] sm:$0xff]
      %v6648 = vld [vmem:[%s5 + $0x140] sm:$0xff]
      %v6649 = vld [vmem:[%s5 + $0x148] sm:$0xff]
      %v6650 = vld [vmem:[%s5 + $0x150] sm:$0xff]
      %v6651 = vld [vmem:[%s5 + $0x158] sm:$0xff]
      %v6652 = vld [vmem:[%s5 + $0x160] sm:$0xff]
      %v6653 = vld [vmem:[%s5 + $0x168] sm:$0xff]
      %v6654 = vld [vmem:[%s5 + $0x170] sm:$0xff]
      %v6655 = vld [vmem:[%s5 + $0x178] sm:$0xff]
      %v6656 = vld [vmem:[%s5 + $0x180] sm:$0xff]
      %v6657 = vld [vmem:[%s5 + $0x188] sm:$0xff]
      %v6658 = vld [vmem:[%s5 + $0x190] sm:$0xff]
      %v6659 = vld [vmem:[%s5 + $0x198] sm:$0xff]
      %v6660 = vld [vmem:[%s5 + $0x1a0] sm:$0xff]
      %v6661 = vld [vmem:[%s5 + $0x1a8] sm:$0xff]
      %v6662 = vld [vmem:[%s5 + $0x1b0] sm:$0xff]
      %v6663 = vld [vmem:[%s5 + $0x1b8] sm:$0xff]
      %v6664 = vld [vmem:[%s5 + $0x1c0] sm:$0xff]
      %v6665 = vld [vmem:[%s5 + $0x1c8] sm:$0xff]
      %v6666 = vld [vmem:[%s5 + $0x1d0] sm:$0xff]
      %v6667 = vld [vmem:[%s5 + $0x1d8] sm:$0xff]
      %v6668 = vld [vmem:[%s5 + $0x1e0] sm:$0xff]
      %v6669 = vld [vmem:[%s5 + $0x1e8] sm:$0xff]
      %v6670 = vld [vmem:[%s5 + $0x1f0] sm:$0xff]
      %v6671 = vld [vmem:[%s5 + $0x1f8] sm:$0xff]
      %v6672 = vld [vmem:[%s5 + $0x200] sm:$0xff]
      %v6673 = vld [vmem:[%s5 + $0x208] sm:$0xff]
      %v6674 = vld [vmem:[%s5 + $0x210] sm:$0xff]
      %v6675 = vld [vmem:[%s5 + $0x218] sm:$0xff]
      %v6676 = vld [vmem:[%s5 + $0x220] sm:$0xff]
      %v6677 = vld [vmem:[%s5 + $0x228] sm:$0xff]
      %v6678 = vld [vmem:[%s5 + $0x230] sm:$0xff]
      %v6679 = vld [vmem:[%s5 + $0x238] sm:$0xff]
      %v6680 = vld [vmem:[%s5 + $0x240] sm:$0xff]
      %v6681 = vld [vmem:[%s5 + $0x248] sm:$0xff]
      %v6682 = vld [vmem:[%s5 + $0x250] sm:$0xff]
      %v6683 = vld [vmem:[%s5 + $0x258] sm:$0xff]
      %v6684 = vld [vmem:[%s5 + $0x260] sm:$0xff]
      %v6685 = vld [vmem:[%s5 + $0x268] sm:$0xff]
      %v6686 = vld [vmem:[%s5 + $0x270] sm:$0xff]
      %v6687 = vld [vmem:[%s5 + $0x278] sm:$0xff]
      %v6688 = vld [vmem:[%s5 + $0x280] sm:$0xff]
      %v6689 = vld [vmem:[%s5 + $0x288] sm:$0xff]
      %v6690 = vld [vmem:[%s5 + $0x290] sm:$0xff]
      %v6691 = vld [vmem:[%s5 + $0x298] sm:$0xff]
      %v6692 = vld [vmem:[%s5 + $0x2a0] sm:$0xff]
      %v6693 = vld [vmem:[%s5 + $0x2a8] sm:$0xff]
      %v6694 = vld [vmem:[%s5 + $0x2b0] sm:$0xff]
      %v6695 = vld [vmem:[%s5 + $0x2b8] sm:$0xff]
      %v6696 = vld [vmem:[%s5 + $0x2c0] sm:$0xff]
      %v6697 = vld [vmem:[%s5 + $0x2c8] sm:$0xff]
      %v6698 = vld [vmem:[%s5 + $0x2d0] sm:$0xff]
      %v6699 = vld [vmem:[%s5 + $0x2d8] sm:$0xff]
      %v6700 = vld [vmem:[%s5 + $0x2e0] sm:$0xff]
      %v6701 = vld [vmem:[%s5 + $0x2e8] sm:$0xff]
      %v6702 = vld [vmem:[%s5 + $0x2f0] sm:$0xff]
      %v6703 = vld [vmem:[%s5 + $0x2f8] sm:$0xff]
      %v6704 = vld [vmem:[%s5 + $0x300] sm:$0xff]
      %v6705 = vld [vmem:[%s5 + $0x308] sm:$0xff]
      %v6706 = vld [vmem:[%s5 + $0x310] sm:$0xff]
      %v6707 = vld [vmem:[%s5 + $0x318] sm:$0xff]
      %v6708 = vld [vmem:[%s5 + $0x320] sm:$0xff]
      %v6709 = vld [vmem:[%s5 + $0x328] sm:$0xff]
      %v6710 = vld [vmem:[%s5 + $0x330] sm:$0xff]
      %v6711 = vld [vmem:[%s5 + $0x338] sm:$0xff]
      %v6712 = vld [vmem:[%s5 + $0x340] sm:$0xff]
      %v6713 = vld [vmem:[%s5 + $0x348] sm:$0xff]
      %v6714 = vld [vmem:[%s5 + $0x350] sm:$0xff]
      %v6715 = vld [vmem:[%s5 + $0x358] sm:$0xff]
      %v6716 = vld [vmem:[%s5 + $0x360] sm:$0xff]
      %v6717 = vld [vmem:[%s5 + $0x368] sm:$0xff]
      %v6718 = vld [vmem:[%s5 + $0x370] sm:$0xff]
      %v6719 = vld [vmem:[%s5 + $0x378] sm:$0xff]
      %v6720 = vld [vmem:[%s5 + $0x380] sm:$0xff]
      %v6721 = vld [vmem:[%s5 + $0x388] sm:$0xff]
      %v6722 = vld [vmem:[%s5 + $0x390] sm:$0xff]
      %v6723 = vld [vmem:[%s5 + $0x398] sm:$0xff]
      %v6724 = vld [vmem:[%s5 + $0x3a0] sm:$0xff]
      %v6725 = vld [vmem:[%s5 + $0x3a8] sm:$0xff]
      %v6726 = vld [vmem:[%s5 + $0x3b0] sm:$0xff]
      %v6727 = vld [vmem:[%s5 + $0x3b8] sm:$0xff]
      %v6728 = vld [vmem:[%s5 + $0x3c0] sm:$0xff]
      %v6729 = vld [vmem:[%s5 + $0x3c8] sm:$0xff]
      %v6730 = vld [vmem:[%s5 + $0x3d0] sm:$0xff]
      %v6731 = vld [vmem:[%s5 + $0x3d8] sm:$0xff]
      %v6732 = vld [vmem:[%s5 + $0x3e0] sm:$0xff]
      %v6733 = vld [vmem:[%s5 + $0x3e8] sm:$0xff]
      %v6734 = vld [vmem:[%s5 + $0x3f0] sm:$0xff]
      %v6735 = vld [vmem:[%s5 + $0x3f8] sm:$0xff]
      %v6736 = vld [vmem:[%s5 + $0x400] sm:$0xff]
      %v6737 = vld [vmem:[%s5 + $0x408] sm:$0xff]
      %v6738 = vld [vmem:[%s5 + $0x410] sm:$0xff]
      %v6739 = vld [vmem:[%s5 + $0x418] sm:$0xff]
      %v6740 = vld [vmem:[%s5 + $0x420] sm:$0xff]
      %v6741 = vld [vmem:[%s5 + $0x428] sm:$0xff]
      %v6742 = vld [vmem:[%s5 + $0x430] sm:$0xff]
      %v6743 = vld [vmem:[%s5 + $0x438] sm:$0xff]
      %v6744 = vld [vmem:[%s5 + $0x440] sm:$0xff]
      %v6745 = vld [vmem:[%s5 + $0x448] sm:$0xff]
      %v6746 = vld [vmem:[%s5 + $0x450] sm:$0xff]
      %v6747 = vld [vmem:[%s5 + $0x458] sm:$0xff]
      %v6748 = vld [vmem:[%s5 + $0x460] sm:$0xff]
      %v6749 = vld [vmem:[%s5 + $0x468] sm:$0xff]
      %v6750 = vld [vmem:[%s5 + $0x470] sm:$0xff]
      %v6751 = vld [vmem:[%s5 + $0x478] sm:$0xff]
      %v6752 = vld [vmem:[%s5 + $0x480] sm:$0xff]
      %v6753 = vld [vmem:[%s5 + $0x488] sm:$0xff]
      %v6754 = vld [vmem:[%s5 + $0x490] sm:$0xff]
      %v6755 = vld [vmem:[%s5 + $0x498] sm:$0xff]
      %v6756 = vld [vmem:[%s5 + $0x4a0] sm:$0xff]
      %v6757 = vld [vmem:[%s5 + $0x4a8] sm:$0xff]
      %v6758 = vld [vmem:[%s5 + $0x4b0] sm:$0xff]
      %v6759 = vld [vmem:[%s5 + $0x4b8] sm:$0xff]
      %v6760 = vld [vmem:[%s5 + $0x4c0] sm:$0xff]
      %v6761 = vld [vmem:[%s5 + $0x4c8] sm:$0xff]
      %v6762 = vld [vmem:[%s5 + $0x4d0] sm:$0xff]
      %v6763 = vld [vmem:[%s5 + $0x4d8] sm:$0xff]
      %v6764 = vld [vmem:[%s5 + $0x4e0] sm:$0xff]
      %v6765 = vld [vmem:[%s5 + $0x4e8] sm:$0xff]
      %v6766 = vld [vmem:[%s5 + $0x4f0] sm:$0xff]
      %v6767 = vld [vmem:[%s5 + $0x4f8] sm:$0xff]
      %v6768 = vld [vmem:[%s5 + $0x500] sm:$0xff]
      %v6769 = vld [vmem:[%s5 + $0x508] sm:$0xff]
      %v6770 = vld [vmem:[%s5 + $0x510] sm:$0xff]
      %v6771 = vld [vmem:[%s5 + $0x518] sm:$0xff]
      %v6772 = vld [vmem:[%s5 + $0x520] sm:$0xff]
      %v6773 = vld [vmem:[%s5 + $0x528] sm:$0xff]
      %v6774 = vld [vmem:[%s5 + $0x530] sm:$0xff]
      %v6775 = vld [vmem:[%s5 + $0x538] sm:$0xff]
      %v6776 = vld [vmem:[%s5 + $0x540] sm:$0xff]
      %v6777 = vld [vmem:[%s5 + $0x548] sm:$0xff]
      %v6778 = vld [vmem:[%s5 + $0x550] sm:$0xff]
      %v6779 = vld [vmem:[%s5 + $0x558] sm:$0xff]
      %v6780 = vld [vmem:[%s5 + $0x560] sm:$0xff]
      %v6781 = vld [vmem:[%s5 + $0x568] sm:$0xff]
      %v6782 = vld [vmem:[%s5 + $0x570] sm:$0xff]
      %v6783 = vld [vmem:[%s5 + $0x578] sm:$0xff]
      %v6784 = vld [vmem:[%s5 + $0x580] sm:$0xff]
      %v6785 = vld [vmem:[%s5 + $0x588] sm:$0xff]
      %v6786 = vld [vmem:[%s5 + $0x590] sm:$0xff]
      %v6787 = vld [vmem:[%s5 + $0x598] sm:$0xff]
      %v6788 = vld [vmem:[%s5 + $0x5a0] sm:$0xff]
      %v6789 = vld [vmem:[%s5 + $0x5a8] sm:$0xff]
      %v6790 = vld [vmem:[%s5 + $0x5b0] sm:$0xff]
      %v6791 = vld [vmem:[%s5 + $0x5b8] sm:$0xff]
      %v6792 = vld [vmem:[%s5 + $0x5c0] sm:$0xff]
      %v6793 = vld [vmem:[%s5 + $0x5c8] sm:$0xff]
      %v6794 = vld [vmem:[%s5 + $0x5d0] sm:$0xff]
      %v6795 = vld [vmem:[%s5 + $0x5d8] sm:$0xff]
      %v6796 = vld [vmem:[%s5 + $0x5e0] sm:$0xff]
      %v6797 = vld [vmem:[%s5 + $0x5e8] sm:$0xff]
      %v6798 = vld [vmem:[%s5 + $0x5f0] sm:$0xff]
      %v6799 = vld [vmem:[%s5 + $0x5f8] sm:$0xff]
      %v6800 = vld [vmem:[%s5 + $0x600] sm:$0xff]
      %v6801 = vld [vmem:[%s5 + $0x608] sm:$0xff]
      %v6802 = vld [vmem:[%s5 + $0x610] sm:$0xff]
      %v6803 = vld [vmem:[%s5 + $0x618] sm:$0xff]
      %v6804 = vld [vmem:[%s5 + $0x620] sm:$0xff]
      %v6805 = vld [vmem:[%s5 + $0x628] sm:$0xff]
      %v6806 = vld [vmem:[%s5 + $0x630] sm:$0xff]
      %v6807 = vld [vmem:[%s5 + $0x638] sm:$0xff]
      %v6808 = vld [vmem:[%s5 + $0x640] sm:$0xff]
      %v6809 = vld [vmem:[%s5 + $0x648] sm:$0xff]
      %v6810 = vld [vmem:[%s5 + $0x650] sm:$0xff]
      %v6811 = vld [vmem:[%s5 + $0x658] sm:$0xff]
      %v6812 = vld [vmem:[%s5 + $0x660] sm:$0xff]
      %v6813 = vld [vmem:[%s5 + $0x668] sm:$0xff]
      %v6814 = vld [vmem:[%s5 + $0x670] sm:$0xff]
      %v6815 = vld [vmem:[%s5 + $0x678] sm:$0xff]
      %vm6920 = vcmask 1041409
      %v6921 = vsel %vm6920, %v5797, %v5680
      %vm6922 = vcmask 1042434
      %v6923 = vsel %vm6922, %v5914, %v6921
      %vm6924 = vcmask 1043459
      %v6925 = vsel %vm6924, %v6031, %v6923
      %vm6926 = vcmask 1044484
      %v6927 = vsel %vm6926, %v6148, %v6925
      %vm6928 = vcmask 1045509
      %v6929 = vsel %vm6928, %v6265, %v6927
      %vm6930 = vcmask 1046534
      %v6931 = vsel %vm6930, %v6382, %v6929
      %vm6932 = vcmask 1047559
      %v6933 = vsel %vm6932, %v6499, %v6931
      %v6934 = vsel %vm6920, %v5806, %v5689
      %v6935 = vsel %vm6922, %v5923, %v6934
      %v6936 = vsel %vm6924, %v6040, %v6935
      %v6937 = vsel %vm6926, %v6157, %v6936
      %v6938 = vsel %vm6928, %v6274, %v6937
      %v6939 = vsel %vm6930, %v6391, %v6938
      %v6940 = vsel %vm6932, %v6508, %v6939
      %v6941 = vsel %vm6920, %v5815, %v5698
      %v6942 = vsel %vm6922, %v5932, %v6941
      %v6943 = vsel %vm6924, %v6049, %v6942
      %v6944 = vsel %vm6926, %v6166, %v6943
      %v6945 = vsel %vm6928, %v6283, %v6944
      %v6946 = vsel %vm6930, %v6400, %v6945
      %v6947 = vsel %vm6932, %v6517, %v6946
      %v6948 = vsel %vm6920, %v5824, %v5707
      %v6949 = vsel %vm6922, %v5941, %v6948
      %v6950 = vsel %vm6924, %v6058, %v6949
      %v6951 = vsel %vm6926, %v6175, %v6950
      %v6952 = vsel %vm6928, %v6292, %v6951
      %v6953 = vsel %vm6930, %v6409, %v6952
      %v6954 = vsel %vm6932, %v6526, %v6953
      %v6955 = vsel %vm6920, %v5833, %v5716
      %v6956 = vsel %vm6922, %v5950, %v6955
      %v6957 = vsel %vm6924, %v6067, %v6956
      %v6958 = vsel %vm6926, %v6184, %v6957
      %v6959 = vsel %vm6928, %v6301, %v6958
      %v6960 = vsel %vm6930, %v6418, %v6959
      %v6961 = vsel %vm6932, %v6535, %v6960
      %v6962 = vsel %vm6920, %v5842, %v5725
      %v6963 = vsel %vm6922, %v5959, %v6962
      %v6964 = vsel %vm6924, %v6076, %v6963
      %v6965 = vsel %vm6926, %v6193, %v6964
      %v6966 = vsel %vm6928, %v6310, %v6965
      %v6967 = vsel %vm6930, %v6427, %v6966
      %v6968 = vsel %vm6932, %v6544, %v6967
      %v6969 = vsel %vm6920, %v5851, %v5734
      %v6970 = vsel %vm6922, %v5968, %v6969
      %v6971 = vsel %vm6924, %v6085, %v6970
      %v6972 = vsel %vm6926, %v6202, %v6971
      %v6973 = vsel %vm6928, %v6319, %v6972
      %v6974 = vsel %vm6930, %v6436, %v6973
      %v6975 = vsel %vm6932, %v6553, %v6974
      %v6976 = vsel %vm6920, %v5860, %v5743
      %v6977 = vsel %vm6922, %v5977, %v6976
      %v6978 = vsel %vm6924, %v6094, %v6977
      %v6979 = vsel %vm6926, %v6211, %v6978
      %v6980 = vsel %vm6928, %v6328, %v6979
      %v6981 = vsel %vm6930, %v6445, %v6980
      %v6982 = vsel %vm6932, %v6562, %v6981
      %v6983 = vsel %vm6920, %v5869, %v5752
      %v6984 = vsel %vm6922, %v5986, %v6983
      %v6985 = vsel %vm6924, %v6103, %v6984
      %v6986 = vsel %vm6926, %v6220, %v6985
      %v6987 = vsel %vm6928, %v6337, %v6986
      %v6988 = vsel %vm6930, %v6454, %v6987
      %v6989 = vsel %vm6932, %v6571, %v6988
      %v6990 = vsel %vm6920, %v5878, %v5761
      %v6991 = vsel %vm6922, %v5995, %v6990
      %v6992 = vsel %vm6924, %v6112, %v6991
      %v6993 = vsel %vm6926, %v6229, %v6992
      %v6994 = vsel %vm6928, %v6346, %v6993
      %v6995 = vsel %vm6930, %v6463, %v6994
      %v6996 = vsel %vm6932, %v6580, %v6995
      %v6997 = vsel %vm6920, %v5887, %v5770
      %v6998 = vsel %vm6922, %v6004, %v6997
      %v6999 = vsel %vm6924, %v6121, %v6998
      %v7000 = vsel %vm6926, %v6238, %v6999
      %v7001 = vsel %vm6928, %v6355, %v7000
      %v7002 = vsel %vm6930, %v6472, %v7001
      %v7003 = vsel %vm6932, %v6589, %v7002
      %v7004 = vsel %vm6920, %v5896, %v5779
      %v7005 = vsel %vm6922, %v6013, %v7004
      %v7006 = vsel %vm6924, %v6130, %v7005
      %v7007 = vsel %vm6926, %v6247, %v7006
      %v7008 = vsel %vm6928, %v6364, %v7007
      %v7009 = vsel %vm6930, %v6481, %v7008
      %v7010 = vsel %vm6932, %v6598, %v7009
      %v7011 = vsel %vm6920, %v5905, %v5788
      %v7012 = vsel %vm6922, %v6022, %v7011
      %v7013 = vsel %vm6924, %v6139, %v7012
      %v7014 = vsel %vm6926, %v6256, %v7013
      %v7015 = vsel %vm6928, %v6373, %v7014
      %v7016 = vsel %vm6930, %v6490, %v7015
      %v7017 = vsel %vm6932, %v6607, %v7016
      %7031 = vmatprep.subr.mxu0 0.0
      %7032 = vmatpush1.msra.mxu0 %v6608
      %7033 = vmatprep.subr.mxu0 0.0
      %7034 = vmatpush1.msra.mxu0 %v6609
      %7035 = vmatprep.subr.mxu0 0.0
      %7036 = vmatpush1.msra.mxu0 %v6610
      %7037 = vmatprep.subr.mxu0 0.0
      %7038 = vmatpush1.msra.mxu0 %v6611
      %7039 = vmatprep.subr.mxu0 0.0
      %7040 = vmatpush1.msra.mxu0 %v6612
      %7041 = vmatprep.subr.mxu0 0.0
      %7042 = vmatpush1.msra.mxu0 %v6613
      %7043 = vmatprep.subr.mxu0 0.0
      %7044 = vmatpush1.msra.mxu0 %v6614
      %7045 = vmatprep.subr.mxu0 0.0
      %7046 = vmatpush1.msra.mxu0 %v6615
      %7047 = vmatprep.subr.mxu0 0.0
      %7048 = vmatpush1.msra.mxu0 %v6616
      %7049 = vmatprep.subr.mxu0 0.0
      %7050 = vmatpush1.msra.mxu0 %v6617
      %7051 = vmatprep.subr.mxu0 0.0
      %7052 = vmatpush1.msra.mxu0 %v6618
      %7053 = vmatprep.subr.mxu0 0.0
      %7054 = vmatpush1.msra.mxu0 %v6619
      %7055 = vmatprep.subr.mxu0 0.0
      %7056 = vmatpush1.msra.mxu0 %v6620
      %7057 = vmatprep.subr.mxu0 0.0
      %7058 = vmatpush1.msra.mxu0 %v6621
      %7059 = vmatprep.subr.mxu0 0.0
      %7060 = vmatpush1.msra.mxu0 %v6622
      %7061 = vmatprep.subr.mxu0 0.0
      %7062 = vmatpush1.msra.mxu0 %v6623
      %7063 = vmatprep.subr.mxu0 0.0
      %7064 = vmatpush1.msra.mxu0 %v6624
      %7065 = vmatprep.subr.mxu0 0.0
      %7066 = vmatpush1.msra.mxu0 %v6625
      %7067 = vmatprep.subr.mxu0 0.0
      %7068 = vmatpush1.msra.mxu0 %v6626
      %7069 = vmatprep.subr.mxu0 0.0
      %7070 = vmatpush1.msra.mxu0 %v6627
      %7071 = vmatprep.subr.mxu0 0.0
      %7072 = vmatpush1.msra.mxu0 %v6628
      %7073 = vmatprep.subr.mxu0 0.0
      %7074 = vmatpush1.msra.mxu0 %v6629
      %7075 = vmatprep.subr.mxu0 0.0
      %7076 = vmatpush1.msra.mxu0 %v6630
      %7077 = vmatprep.subr.mxu0 0.0
      %7078 = vmatpush1.msra.mxu0 %v6631
      %7079 = vmatprep.subr.mxu0 0.0
      %7080 = vmatpush1.msra.mxu0 %v6632
      %7081 = vmatprep.subr.mxu0 0.0
      %7082 = vmatpush1.msra.mxu0 %v6633
      %7083 = vmatprep.subr.mxu0 0.0
      %7084 = vmatpush1.msra.mxu0 %v6634
      %7085 = vmatprep.subr.mxu0 0.0
      %7086 = vmatpush1.msra.mxu0 %v6635
      %7087 = vmatprep.subr.mxu0 0.0
      %7088 = vmatpush1.msra.mxu0 %v6636
      %7089 = vmatprep.subr.mxu0 0.0
      %7090 = vmatpush1.msra.mxu0 %v6637
      %7091 = vmatprep.subr.mxu0 0.0
      %7092 = vmatpush1.msra.mxu0 %v6638
      %7093 = vmatprep.subr.mxu0 0.0
      %7094 = vmatpush1.msra.mxu0 %v6639
      %7095 = vmatprep.mubr.f32.mxu0 %v6940
      %7096 = vmatmul.mubr.f32.gmra.mrb[0].mxu0 %v6933
      %v7097 = vpop.f32.mrb[0].mxu0
      %v7098 = vadd.f32 0.0, %v7097
      %v7099 = vpop.f32.mrb[0].mxu0
      %7100 = vdwg.mxu0
      %7101 = vmatprep.subr.mxu0 0.0
      %7102 = vmatpush1.msra.mxu0 %v6640
      %7103 = vmatprep.subr.mxu0 0.0
      %7104 = vmatpush1.msra.mxu0 %v6641
      %7105 = vmatprep.subr.mxu0 0.0
      %7106 = vmatpush1.msra.mxu0 %v6642
      %7107 = vmatprep.subr.mxu0 0.0
      %7108 = vmatpush1.msra.mxu0 %v6643
      %7109 = vmatprep.subr.mxu0 0.0
      %7110 = vmatpush1.msra.mxu0 %v6644
      %7111 = vmatprep.subr.mxu0 0.0
      %7112 = vmatpush1.msra.mxu0 %v6645
      %7113 = vmatprep.subr.mxu0 0.0
      %7114 = vmatpush1.msra.mxu0 %v6646
      %7115 = vmatprep.subr.mxu0 0.0
      %7116 = vmatpush1.msra.mxu0 %v6647
      %7117 = vmatprep.subr.mxu0 0.0
      %7118 = vmatpush1.msra.mxu0 %v6648
      %7119 = vmatprep.subr.mxu0 0.0
      %7120 = vmatpush1.msra.mxu0 %v6649
      %7121 = vmatprep.subr.mxu0 0.0
      %7122 = vmatpush1.msra.mxu0 %v6650
      %7123 = vmatprep.subr.mxu0 0.0
      %7124 = vmatpush1.msra.mxu0 %v6651
      %7125 = vmatprep.subr.mxu0 0.0
      %7126 = vmatpush1.msra.mxu0 %v6652
      %7127 = vmatprep.subr.mxu0 0.0
      %7128 = vmatpush1.msra.mxu0 %v6653
      %7129 = vmatprep.subr.mxu0 0.0
      %7130 = vmatpush1.msra.mxu0 %v6654
      %7131 = vmatprep.subr.mxu0 0.0
      %7132 = vmatpush1.msra.mxu0 %v6655
      %7133 = vmatprep.subr.mxu0 0.0
      %7134 = vmatpush1.msra.mxu0 %v6656
      %7135 = vmatprep.subr.mxu0 0.0
      %7136 = vmatpush1.msra.mxu0 %v6657
      %7137 = vmatprep.subr.mxu0 0.0
      %7138 = vmatpush1.msra.mxu0 %v6658
      %7139 = vmatprep.subr.mxu0 0.0
      %7140 = vmatpush1.msra.mxu0 %v6659
      %7141 = vmatprep.subr.mxu0 0.0
      %7142 = vmatpush1.msra.mxu0 %v6660
      %7143 = vmatprep.subr.mxu0 0.0
      %7144 = vmatpush1.msra.mxu0 %v6661
      %7145 = vmatprep.subr.mxu0 0.0
      %7146 = vmatpush1.msra.mxu0 %v6662
      %7147 = vmatprep.subr.mxu0 0.0
      %7148 = vmatpush1.msra.mxu0 %v6663
      %7149 = vmatprep.subr.mxu0 0.0
      %7150 = vmatpush1.msra.mxu0 %v6664
      %7151 = vmatprep.subr.mxu0 0.0
      %7152 = vmatpush1.msra.mxu0 %v6665
      %7153 = vmatprep.subr.mxu0 0.0
      %7154 = vmatpush1.msra.mxu0 %v6666
      %7155 = vmatprep.subr.mxu0 0.0
      %7156 = vmatpush1.msra.mxu0 %v6667
      %7157 = vmatprep.subr.mxu0 0.0
      %7158 = vmatpush1.msra.mxu0 %v6668
      %7159 = vmatprep.subr.mxu0 0.0
      %7160 = vmatpush1.msra.mxu0 %v6669
      %7161 = vmatprep.subr.mxu0 0.0
      %7162 = vmatpush1.msra.mxu0 %v6670
      %7163 = vmatprep.subr.mxu0 0.0
      %7164 = vmatpush1.msra.mxu0 %v6671
      %7165 = vmatprep.mubr.f32.mxu0 %v6954
      %7166 = vmatmul.mubr.f32.gmra.mrb[0].mxu0 %v6947
      %v7167 = vpop.f32.mrb[0].mxu0
      %v7168 = vadd.f32 %v7098, %v7167
      %v7169 = vpop.f32.mrb[0].mxu0
      %7170 = vdwg.mxu0
      %7171 = vmatprep.subr.mxu0 0.0
      %7172 = vmatpush1.msra.mxu0 %v6672
      %7173 = vmatprep.subr.mxu0 0.0
      %7174 = vmatpush1.msra.mxu0 %v6673
      %7175 = vmatprep.subr.mxu0 0.0
      %7176 = vmatpush1.msra.mxu0 %v6674
      %7177 = vmatprep.subr.mxu0 0.0
      %7178 = vmatpush1.msra.mxu0 %v6675
      %7179 = vmatprep.subr.mxu0 0.0
      %7180 = vmatpush1.msra.mxu0 %v6676
      %7181 = vmatprep.subr.mxu0 0.0
      %7182 = vmatpush1.msra.mxu0 %v6677
      %7183 = vmatprep.subr.mxu0 0.0
      %7184 = vmatpush1.msra.mxu0 %v6678
      %7185 = vmatprep.subr.mxu0 0.0
      %7186 = vmatpush1.msra.mxu0 %v6679
      %7187 = vmatprep.subr.mxu0 0.0
      %7188 = vmatpush1.msra.mxu0 %v6680
      %7189 = vmatprep.subr.mxu0 0.0
      %7190 = vmatpush1.msra.mxu0 %v6681
      %7191 = vmatprep.subr.mxu0 0.0
      %7192 = vmatpush1.msra.mxu0 %v6682
      %7193 = vmatprep.subr.mxu0 0.0
      %7194 = vmatpush1.msra.mxu0 %v6683
      %7195 = vmatprep.subr.mxu0 0.0
      %7196 = vmatpush1.msra.mxu0 %v6684
      %7197 = vmatprep.subr.mxu0 0.0
      %7198 = vmatpush1.msra.mxu0 %v6685
      %7199 = vmatprep.subr.mxu0 0.0
      %7200 = vmatpush1.msra.mxu0 %v6686
      %7201 = vmatprep.subr.mxu0 0.0
      %7202 = vmatpush1.msra.mxu0 %v6687
      %7203 = vmatprep.subr.mxu0 0.0
      %7204 = vmatpush1.msra.mxu0 %v6688
      %7205 = vmatprep.subr.mxu0 0.0
      %7206 = vmatpush1.msra.mxu0 %v6689
      %7207 = vmatprep.subr.mxu0 0.0
      %7208 = vmatpush1.msra.mxu0 %v6690
      %7209 = vmatprep.subr.mxu0 0.0
      %7210 = vmatpush1.msra.mxu0 %v6691
      %7211 = vmatprep.subr.mxu0 0.0
      %7212 = vmatpush1.msra.mxu0 %v6692
      %7213 = vmatprep.subr.mxu0 0.0
      %7214 = vmatpush1.msra.mxu0 %v6693
      %7215 = vmatprep.subr.mxu0 0.0
      %7216 = vmatpush1.msra.mxu0 %v6694
      %7217 = vmatprep.subr.mxu0 0.0
      %7218 = vmatpush1.msra.mxu0 %v6695
      %7219 = vmatprep.subr.mxu0 0.0
      %7220 = vmatpush1.msra.mxu0 %v6696
      %7221 = vmatprep.subr.mxu0 0.0
      %7222 = vmatpush1.msra.mxu0 %v6697
      %7223 = vmatprep.subr.mxu0 0.0
      %7224 = vmatpush1.msra.mxu0 %v6698
      %7225 = vmatprep.subr.mxu0 0.0
      %7226 = vmatpush1.msra.mxu0 %v6699
      %7227 = vmatprep.subr.mxu0 0.0
      %7228 = vmatpush1.msra.mxu0 %v6700
      %7229 = vmatprep.subr.mxu0 0.0
      %7230 = vmatpush1.msra.mxu0 %v6701
      %7231 = vmatprep.subr.mxu0 0.0
      %7232 = vmatpush1.msra.mxu0 %v6702
      %7233 = vmatprep.subr.mxu0 0.0
      %7234 = vmatpush1.msra.mxu0 %v6703
      %7235 = vmatprep.mubr.f32.mxu0 %v6968
      %7236 = vmatmul.mubr.f32.gmra.mrb[0].mxu0 %v6961
      %v7237 = vpop.f32.mrb[0].mxu0
      %v7238 = vadd.f32 %v7168, %v7237
      %v7239 = vpop.f32.mrb[0].mxu0
      %7240 = vdwg.mxu0
      %7241 = vmatprep.subr.mxu0 0.0
      %7242 = vmatpush1.msra.mxu0 %v6704
      %7243 = vmatprep.subr.mxu0 0.0
      %7244 = vmatpush1.msra.mxu0 %v6705
      %7245 = vmatprep.subr.mxu0 0.0
      %7246 = vmatpush1.msra.mxu0 %v6706
      %7247 = vmatprep.subr.mxu0 0.0
      %7248 = vmatpush1.msra.mxu0 %v6707
      %7249 = vmatprep.subr.mxu0 0.0
      %7250 = vmatpush1.msra.mxu0 %v6708
      %7251 = vmatprep.subr.mxu0 0.0
      %7252 = vmatpush1.msra.mxu0 %v6709
      %7253 = vmatprep.subr.mxu0 0.0
      %7254 = vmatpush1.msra.mxu0 %v6710
      %7255 = vmatprep.subr.mxu0 0.0
      %7256 = vmatpush1.msra.mxu0 %v6711
      %7257 = vmatprep.subr.mxu0 0.0
      %7258 = vmatpush1.msra.mxu0 %v6712
      %7259 = vmatprep.subr.mxu0 0.0
      %7260 = vmatpush1.msra.mxu0 %v6713
      %7261 = vmatprep.subr.mxu0 0.0
      %7262 = vmatpush1.msra.mxu0 %v6714
      %7263 = vmatprep.subr.mxu0 0.0
      %7264 = vmatpush1.msra.mxu0 %v6715
      %7265 = vmatprep.subr.mxu0 0.0
      %7266 = vmatpush1.msra.mxu0 %v6716
      %7267 = vmatprep.subr.mxu0 0.0
      %7268 = vmatpush1.msra.mxu0 %v6717
      %7269 = vmatprep.subr.mxu0 0.0
      %7270 = vmatpush1.msra.mxu0 %v6718
      %7271 = vmatprep.subr.mxu0 0.0
      %7272 = vmatpush1.msra.mxu0 %v6719
      %7273 = vmatprep.subr.mxu0 0.0
      %7274 = vmatpush1.msra.mxu0 %v6720
      %7275 = vmatprep.subr.mxu0 0.0
      %7276 = vmatpush1.msra.mxu0 %v6721
      %7277 = vmatprep.subr.mxu0 0.0
      %7278 = vmatpush1.msra.mxu0 %v6722
      %7279 = vmatprep.subr.mxu0 0.0
      %7280 = vmatpush1.msra.mxu0 %v6723
      %7281 = vmatprep.subr.mxu0 0.0
      %7282 = vmatpush1.msra.mxu0 %v6724
      %7283 = vmatprep.subr.mxu0 0.0
      %7284 = vmatpush1.msra.mxu0 %v6725
      %7285 = vmatprep.subr.mxu0 0.0
      %7286 = vmatpush1.msra.mxu0 %v6726
      %7287 = vmatprep.subr.mxu0 0.0
      %7288 = vmatpush1.msra.mxu0 %v6727
      %7289 = vmatprep.subr.mxu0 0.0
      %7290 = vmatpush1.msra.mxu0 %v6728
      %7291 = vmatprep.subr.mxu0 0.0
      %7292 = vmatpush1.msra.mxu0 %v6729
      %7293 = vmatprep.subr.mxu0 0.0
      %7294 = vmatpush1.msra.mxu0 %v6730
      %7295 = vmatprep.subr.mxu0 0.0
      %7296 = vmatpush1.msra.mxu0 %v6731
      %7297 = vmatprep.subr.mxu0 0.0
      %7298 = vmatpush1.msra.mxu0 %v6732
      %7299 = vmatprep.subr.mxu0 0.0
      %7300 = vmatpush1.msra.mxu0 %v6733
      %7301 = vmatprep.subr.mxu0 0.0
      %7302 = vmatpush1.msra.mxu0 %v6734
      %7303 = vmatprep.subr.mxu0 0.0
      %7304 = vmatpush1.msra.mxu0 %v6735
      %7305 = vmatprep.mubr.f32.mxu0 %v6982
      %7306 = vmatmul.mubr.f32.gmra.mrb[0].mxu0 %v6975
      %v7307 = vpop.f32.mrb[0].mxu0
      %v7308 = vadd.f32 %v7238, %v7307
      %v7309 = vpop.f32.mrb[0].mxu0
      %7310 = vdwg.mxu0
      %7311 = vmatprep.subr.mxu0 0.0
      %7312 = vmatpush1.msra.mxu0 %v6736
      %7313 = vmatprep.subr.mxu0 0.0
      %7314 = vmatpush1.msra.mxu0 %v6737
      %7315 = vmatprep.subr.mxu0 0.0
      %7316 = vmatpush1.msra.mxu0 %v6738
      %7317 = vmatprep.subr.mxu0 0.0
      %7318 = vmatpush1.msra.mxu0 %v6739
      %7319 = vmatprep.subr.mxu0 0.0
      %7320 = vmatpush1.msra.mxu0 %v6740
      %7321 = vmatprep.subr.mxu0 0.0
      %7322 = vmatpush1.msra.mxu0 %v6741
      %7323 = vmatprep.subr.mxu0 0.0
      %7324 = vmatpush1.msra.mxu0 %v6742
      %7325 = vmatprep.subr.mxu0 0.0
      %7326 = vmatpush1.msra.mxu0 %v6743
      %7327 = vmatprep.subr.mxu0 0.0
      %7328 = vmatpush1.msra.mxu0 %v6744
      %7329 = vmatprep.subr.mxu0 0.0
      %7330 = vmatpush1.msra.mxu0 %v6745
      %7331 = vmatprep.subr.mxu0 0.0
      %7332 = vmatpush1.msra.mxu0 %v6746
      %7333 = vmatprep.subr.mxu0 0.0
      %7334 = vmatpush1.msra.mxu0 %v6747
      %7335 = vmatprep.subr.mxu0 0.0
      %7336 = vmatpush1.msra.mxu0 %v6748
      %7337 = vmatprep.subr.mxu0 0.0
      %7338 = vmatpush1.msra.mxu0 %v6749
      %7339 = vmatprep.subr.mxu0 0.0
      %7340 = vmatpush1.msra.mxu0 %v6750
      %7341 = vmatprep.subr.mxu0 0.0
      %7342 = vmatpush1.msra.mxu0 %v6751
      %7343 = vmatprep.subr.mxu0 0.0
      %7344 = vmatpush1.msra.mxu0 %v6752
      %7345 = vmatprep.subr.mxu0 0.0
      %7346 = vmatpush1.msra.mxu0 %v6753
      %7347 = vmatprep.subr.mxu0 0.0
      %7348 = vmatpush1.msra.mxu0 %v6754
      %7349 = vmatprep.subr.mxu0 0.0
      %7350 = vmatpush1.msra.mxu0 %v6755
      %7351 = vmatprep.subr.mxu0 0.0
      %7352 = vmatpush1.msra.mxu0 %v6756
      %7353 = vmatprep.subr.mxu0 0.0
      %7354 = vmatpush1.msra.mxu0 %v6757
      %7355 = vmatprep.subr.mxu0 0.0
      %7356 = vmatpush1.msra.mxu0 %v6758
      %7357 = vmatprep.subr.mxu0 0.0
      %7358 = vmatpush1.msra.mxu0 %v6759
      %7359 = vmatprep.subr.mxu0 0.0
      %7360 = vmatpush1.msra.mxu0 %v6760
      %7361 = vmatprep.subr.mxu0 0.0
      %7362 = vmatpush1.msra.mxu0 %v6761
      %7363 = vmatprep.subr.mxu0 0.0
      %7364 = vmatpush1.msra.mxu0 %v6762
      %7365 = vmatprep.subr.mxu0 0.0
      %7366 = vmatpush1.msra.mxu0 %v6763
      %7367 = vmatprep.subr.mxu0 0.0
      %7368 = vmatpush1.msra.mxu0 %v6764
      %7369 = vmatprep.subr.mxu0 0.0
      %7370 = vmatpush1.msra.mxu0 %v6765
      %7371 = vmatprep.subr.mxu0 0.0
      %7372 = vmatpush1.msra.mxu0 %v6766
      %7373 = vmatprep.subr.mxu0 0.0
      %7374 = vmatpush1.msra.mxu0 %v6767
      %7375 = vmatprep.mubr.f32.mxu0 %v6996
      %7376 = vmatmul.mubr.f32.gmra.mrb[0].mxu0 %v6989
      %v7377 = vpop.f32.mrb[0].mxu0
      %v7378 = vadd.f32 %v7308, %v7377
      %v7379 = vpop.f32.mrb[0].mxu0
      %7380 = vdwg.mxu0
      %7381 = vmatprep.subr.mxu0 0.0
      %7382 = vmatpush1.msra.mxu0 %v6768
      %7383 = vmatprep.subr.mxu0 0.0
      %7384 = vmatpush1.msra.mxu0 %v6769
      %7385 = vmatprep.subr.mxu0 0.0
      %7386 = vmatpush1.msra.mxu0 %v6770
      %7387 = vmatprep.subr.mxu0 0.0
      %7388 = vmatpush1.msra.mxu0 %v6771
      %7389 = vmatprep.subr.mxu0 0.0
      %7390 = vmatpush1.msra.mxu0 %v6772
      %7391 = vmatprep.subr.mxu0 0.0
      %7392 = vmatpush1.msra.mxu0 %v6773
      %7393 = vmatprep.subr.mxu0 0.0
      %7394 = vmatpush1.msra.mxu0 %v6774
      %7395 = vmatprep.subr.mxu0 0.0
      %7396 = vmatpush1.msra.mxu0 %v6775
      %7397 = vmatprep.subr.mxu0 0.0
      %7398 = vmatpush1.msra.mxu0 %v6776
      %7399 = vmatprep.subr.mxu0 0.0
      %7400 = vmatpush1.msra.mxu0 %v6777
      %7401 = vmatprep.subr.mxu0 0.0
      %7402 = vmatpush1.msra.mxu0 %v6778
      %7403 = vmatprep.subr.mxu0 0.0
      %7404 = vmatpush1.msra.mxu0 %v6779
      %7405 = vmatprep.subr.mxu0 0.0
      %7406 = vmatpush1.msra.mxu0 %v6780
      %7407 = vmatprep.subr.mxu0 0.0
      %7408 = vmatpush1.msra.mxu0 %v6781
      %7409 = vmatprep.subr.mxu0 0.0
      %7410 = vmatpush1.msra.mxu0 %v6782
      %7411 = vmatprep.subr.mxu0 0.0
      %7412 = vmatpush1.msra.mxu0 %v6783
      %7413 = vmatprep.subr.mxu0 0.0
      %7414 = vmatpush1.msra.mxu0 %v6784
      %7415 = vmatprep.subr.mxu0 0.0
      %7416 = vmatpush1.msra.mxu0 %v6785
      %7417 = vmatprep.subr.mxu0 0.0
      %7418 = vmatpush1.msra.mxu0 %v6786
      %7419 = vmatprep.subr.mxu0 0.0
      %7420 = vmatpush1.msra.mxu0 %v6787
      %7421 = vmatprep.subr.mxu0 0.0
      %7422 = vmatpush1.msra.mxu0 %v6788
      %7423 = vmatprep.subr.mxu0 0.0
      %7424 = vmatpush1.msra.mxu0 %v6789
      %7425 = vmatprep.subr.mxu0 0.0
      %7426 = vmatpush1.msra.mxu0 %v6790
      %7427 = vmatprep.subr.mxu0 0.0
      %7428 = vmatpush1.msra.mxu0 %v6791
      %7429 = vmatprep.subr.mxu0 0.0
      %7430 = vmatpush1.msra.mxu0 %v6792
      %7431 = vmatprep.subr.mxu0 0.0
      %7432 = vmatpush1.msra.mxu0 %v6793
      %7433 = vmatprep.subr.mxu0 0.0
      %7434 = vmatpush1.msra.mxu0 %v6794
      %7435 = vmatprep.subr.mxu0 0.0
      %7436 = vmatpush1.msra.mxu0 %v6795
      %7437 = vmatprep.subr.mxu0 0.0
      %7438 = vmatpush1.msra.mxu0 %v6796
      %7439 = vmatprep.subr.mxu0 0.0
      %7440 = vmatpush1.msra.mxu0 %v6797
      %7441 = vmatprep.subr.mxu0 0.0
      %7442 = vmatpush1.msra.mxu0 %v6798
      %7443 = vmatprep.subr.mxu0 0.0
      %7444 = vmatpush1.msra.mxu0 %v6799
      %7445 = vmatprep.mubr.f32.mxu0 %v7010
      %7446 = vmatmul.mubr.f32.gmra.mrb[0].mxu0 %v7003
      %v7447 = vpop.f32.mrb[0].mxu0
      %v7448 = vadd.f32 %v7378, %v7447
      %v7449 = vpop.f32.mrb[0].mxu0
      %7450 = vdwg.mxu0
      %7451 = vmatprep.subr.mxu0 0.0
      %7452 = vmatpush1.msra.mxu0 %v6800
      %7453 = vmatprep.subr.mxu0 0.0
      %7454 = vmatpush1.msra.mxu0 %v6801
      %7455 = vmatprep.subr.mxu0 0.0
      %7456 = vmatpush1.msra.mxu0 %v6802
      %7457 = vmatprep.subr.mxu0 0.0
      %7458 = vmatpush1.msra.mxu0 %v6803
      %7459 = vmatprep.subr.mxu0 0.0
      %7460 = vmatpush1.msra.mxu0 %v6804
      %7461 = vmatprep.subr.mxu0 0.0
      %7462 = vmatpush1.msra.mxu0 %v6805
      %7463 = vmatprep.subr.mxu0 0.0
      %7464 = vmatpush1.msra.mxu0 %v6806
      %7465 = vmatprep.subr.mxu0 0.0
      %7466 = vmatpush1.msra.mxu0 %v6807
      %7467 = vmatprep.subr.mxu0 0.0
      %7468 = vmatpush1.msra.mxu0 %v6808
      %7469 = vmatprep.subr.mxu0 0.0
      %7470 = vmatpush1.msra.mxu0 %v6809
      %7471 = vmatprep.subr.mxu0 0.0
      %7472 = vmatpush1.msra.mxu0 %v6810
      %7473 = vmatprep.subr.mxu0 0.0
      %7474 = vmatpush1.msra.mxu0 %v6811
      %7475 = vmatprep.subr.mxu0 0.0
      %7476 = vmatpush1.msra.mxu0 %v6812
      %7477 = vmatprep.subr.mxu0 0.0
      %7478 = vmatpush1.msra.mxu0 %v6813
      %7479 = vmatprep.subr.mxu0 0.0
      %7480 = vmatpush1.msra.mxu0 %v6814
      %7481 = vmatprep.subr.mxu0 0.0
      %7482 = vmatpush1.msra.mxu0 %v6815
      %7483 = vmatprep.subr.mxu0 0.0
      %7484 = vmatpush1.msra.mxu0 0.0
      %7485 = vmatprep.subr.mxu0 0.0
      %7486 = vmatpush1.msra.mxu0 0.0
      %7487 = vmatprep.subr.mxu0 0.0
      %7488 = vmatpush1.msra.mxu0 0.0
      %7489 = vmatprep.subr.mxu0 0.0
      %7490 = vmatpush1.msra.mxu0 0.0
      %7491 = vmatprep.subr.mxu0 0.0
      %7492 = vmatpush1.msra.mxu0 0.0
      %7493 = vmatprep.subr.mxu0 0.0
      %7494 = vmatpush1.msra.mxu0 0.0
      %7495 = vmatprep.subr.mxu0 0.0
      %7496 = vmatpush1.msra.mxu0 0.0
      %7497 = vmatprep.subr.mxu0 0.0
      %7498 = vmatpush1.msra.mxu0 0.0
      %7499 = vmatprep.subr.mxu0 0.0
      %7500 = vmatpush1.msra.mxu0 0.0
      %7501 = vmatprep.subr.mxu0 0.0
      %7502 = vmatpush1.msra.mxu0 0.0
      %7503 = vmatprep.subr.mxu0 0.0
      %7504 = vmatpush1.msra.mxu0 0.0
      %7505 = vmatprep.subr.mxu0 0.0
      %7506 = vmatpush1.msra.mxu0 0.0
      %7507 = vmatprep.subr.mxu0 0.0
      %7508 = vmatpush1.msra.mxu0 0.0
      %7509 = vmatprep.subr.mxu0 0.0
      %7510 = vmatpush1.msra.mxu0 0.0
      %7511 = vmatprep.subr.mxu0 0.0
      %7512 = vmatpush1.msra.mxu0 0.0
      %7513 = vmatprep.subr.mxu0 0.0
      %7514 = vmatpush1.msra.mxu0 0.0
      %7515 = vmatprep.mubr.f32.mxu0 0.0
      %7516 = vmatmul.mubr.f32.gmra.mrb[0].mxu0 %v7017
      %v7517 = vpop.f32.mrb[0].mxu0
      %v7518 = vadd.f32 %v7448, %v7517
      %v7519 = vpop.f32.mrb[0].mxu0
      %7520 = vdwg.mxu0
      %v7521 = vrot.slane %v7518, 4
      %v7522 = vadd.f32 %v7518, %v7521
      %v7523 = vrot.slane %v7522, 2
      %v7524 = vadd.f32 %v7522, %v7523
      %v7525 = vrot.slane %v7524, 1
      %v7526 = vadd.f32 %v7524, %v7525
      %v7527 = vmul.f32 %v7526, 0.00390625
      %v7528 = vld [vmem:[%s6] sm:$0x1]
      %v7529 = vadd.f32 %v7527, %v7528
      %v7530 = vlaneseq
      %v7531 = vshrl.u32 %v7530, 7
      %v7532 = vsub.s32 0, %v7531
      %v7533 = vrot.slane %v7529, %v7532
      %7534 = vst [vmem:[%s276] sm:$0xff] %v7533
      %p7535 = scmp.lt.s32.totalorder %s18, 1
      %s7536 = scalar_select %p7535, %s18, 1
      %s7537 = smul.addr %s7536, 8
      %s7538 = scalar_lea.vmem %s7, %s7537
      // Predicated region
      $region49: #{two_stage_weld_forward.1} parent=47 // pred_check
        %p7539 = pneg %p188
      $region50: #{two_stage_weld_forward.1} parent=47 // pred_check_branch
        %7541 = sbr.rel (%p7539) target = $region52
      $region51: #{two_stage_weld_forward.1} parent=47 // pred_region
        _
      $region52: #{two_stage_weld_forward.1} parent=47 // pred_fallthru
        _
    $region48: #{two_stage_weld_forward.1} parent=5 // pred_fallthru
      _
    %p7542 = scmp.le.s32.totalorder 2, %s13
    // Predicated region
    $region53: #{two_stage_weld_forward.1} parent=5 // pred_check
      %p7543 = pneg %p7542
    $region54: #{two_stage_weld_forward.1} parent=5 // pred_check_branch
      %7545 = sbr.rel (%p7543) target = $region56
    $region55: #{two_stage_weld_forward.1} parent=5 // pred_region
      %s7546 = ssub.s32 %s13, 2
      // Predicated region
      $region57: #{two_stage_weld_forward.1} parent=55 // pred_check
        %p7547 = pneg %p194
      $region58: #{two_stage_weld_forward.1} parent=55 // pred_check_branch
        %7549 = sbr.rel (%p7547) target = $region60
      $region59: #{two_stage_weld_forward.1} parent=55 // pred_region
        %p7550 = scmp.lt.s32.totalorder %s19, 1
        %s7551 = scalar_select %p7550, %s19, 1
        %s7552 = smul.addr %s7551, 8
        %s7553 = scalar_lea.vmem %s7, %s7552
      $region60: #{two_stage_weld_forward.1} parent=55 // pred_fallthru
        _
    $region56: #{two_stage_weld_forward.1} parent=5 // pred_fallthru
      _
  $region6: #{two_stage_weld_forward.1} parent=0 // loop_footer
    %s17 = sadd.s32 1, %s13
  $region7: #{two_stage_weld_forward.1} parent=0 // loop_footer_branch
    %12 = sbr.rel target = $region3
  $region8: #{two_stage_weld_forward.1} parent=0 // loop_exit
    _

</llo_original>
